<compile_context>
chip_gen: v6e
topology: v6e:2x2x1
jax: 0.10.0
libtpu: 0.0.40
codegen_flags: <defaults>
</compile_context>

<pallas_src>
import jax
import jax.numpy as jnp
from jax.experimental import pallas as pl
from jax.experimental.pallas import tpu as pltpu

_EPS = 1e-5
_VMEM_LIMIT = 32 * 1024 * 1024  # explicit, safe on v5e/v6e/v7x (tiles are ~few MiB)


# ----------------------------------------------------------------------------
# tile-size helpers
# ----------------------------------------------------------------------------
def _pick_row_tile(dim, pref=512):
    """Largest multiple-of-8 divisor of `dim` that is <= pref (or full dim)."""
    if dim <= pref:
        return dim
    t = pref - (pref % 8)
    while t >= 8:
        if dim % t == 0:
            return t
        t -= 8
    return dim


def _pick_lane_tile(dim, pref=512):
    """Largest multiple-of-128 divisor of `dim` that is <= pref (or full dim)."""
    if dim <= pref:
        return dim
    t = pref - (pref % 128)
    while t >= 128:
        if dim % t == 0:
            return t
        t -= 128
    return dim


# ----------------------------------------------------------------------------
# Pallas kernels
# ----------------------------------------------------------------------------
def _matmul_kernel(x_ref, w_ref, o_ref):
    # bf16 operands on the MXU, f32 accumulate.
    o_ref[...] = jnp.dot(
        x_ref[...].astype(jnp.bfloat16), w_ref[...],
        preferred_element_type=jnp.float32)


def _bn_relu_matmul_kernel(x_ref, scale_ref, shift_ref, w_ref, o_ref):
    # Fused BatchNorm-apply + ReLU prologue (f32, VPU) then bf16 MXU matmul.
    x = jnp.maximum(x_ref[...] * scale_ref[...] + shift_ref[...], 0.0)
    o_ref[...] = jnp.dot(
        x.astype(jnp.bfloat16), w_ref[...],
        preferred_element_type=jnp.float32)


def _bn_stats_kernel(x_ref, sum_ref, sq_ref):
    # Accumulate per-channel sum / sum-of-squares across R tiles.
    @pl.when(pl.program_id(0) == 0)
    def _():
        sum_ref[...] = jnp.zeros_like(sum_ref)
        sq_ref[...] = jnp.zeros_like(sq_ref)

    x = x_ref[...]
    sum_ref[...] += jnp.sum(x, axis=0, keepdims=True)
    sq_ref[...] += jnp.sum(x * x, axis=0, keepdims=True)


def _tanh_kernel(x_ref, o_ref):
    o_ref[...] = jnp.tanh(x_ref[...])


# ----------------------------------------------------------------------------
# Pallas wrappers
# ----------------------------------------------------------------------------
def pallas_matmul(x, w_bf16, scale=None, shift=None):
    """(M,K) f32 @ (K,Nout) bf16 -> (M,Nout) f32, optionally with a fused
    BN-apply(scale, shift) + ReLU prologue on x."""
    M, K = x.shape
    K2, Nout = w_bf16.shape
    assert K == K2
    tm = _pick_row_tile(M, 512)
    tn = _pick_lane_tile(Nout, 512)
    grid = (M // tm, Nout // tn)

    # j (output-column tile) is the inner grid axis -> the x tile stays
    # resident across j; only the weight tile is re-streamed.
    x_spec = pl.BlockSpec((tm, K), lambda i, j: (i, 0))
    w_spec = pl.BlockSpec((K, tn), lambda i, j: (0, j))
    o_spec = pl.BlockSpec((tm, tn), lambda i, j: (i, j))
    cp = pltpu.CompilerParams(
        dimension_semantics=("parallel", "parallel"),
        vmem_limit_bytes=_VMEM_LIMIT)

    if scale is None:
        return pl.pallas_call(
            _matmul_kernel,
            out_shape=jax.ShapeDtypeStruct((M, Nout), jnp.float32),
            grid=grid,
            in_specs=[x_spec, w_spec],
            out_specs=o_spec,
            compiler_params=cp,
        )(x, w_bf16)

    vec_spec = pl.BlockSpec((1, K), lambda i, j: (0, 0))
    return pl.pallas_call(
        _bn_relu_matmul_kernel,
        out_shape=jax.ShapeDtypeStruct((M, Nout), jnp.float32),
        grid=grid,
        in_specs=[x_spec, vec_spec, vec_spec, w_spec],
        out_specs=o_spec,
        compiler_params=cp,
    )(x, scale.reshape(1, K), shift.reshape(1, K), w_bf16)


def pallas_bn_stats(x2):
    """x2: (R, C) f32 -> (sum, sumsq), each (C,) f32 (R-tiled reduction)."""
    R, C = x2.shape
    tr = _pick_row_tile(R, 1024)
    s, sq = pl.pallas_call(
        _bn_stats_kernel,
        out_shape=(jax.ShapeDtypeStruct((1, C), jnp.float32),
                   jax.ShapeDtypeStruct((1, C), jnp.float32)),
        grid=(R // tr,),
        in_specs=[pl.BlockSpec((tr, C), lambda i: (i, 0))],
        out_specs=(pl.BlockSpec((1, C), lambda i: (0, 0)),
                   pl.BlockSpec((1, C), lambda i: (0, 0))),
        compiler_params=pltpu.CompilerParams(
            dimension_semantics=("arbitrary",),
            vmem_limit_bytes=_VMEM_LIMIT),
    )(x2)
    return s[0], sq[0]


def pallas_tanh_flat(x2):
    """Elementwise tanh on a lane-dense (R, C) view (C multiple of 128)."""
    R, C = x2.shape
    tr = _pick_row_tile(R, 512)
    return pl.pallas_call(
        _tanh_kernel,
        out_shape=jax.ShapeDtypeStruct((R, C), jnp.float32),
        grid=(R // tr,),
        in_specs=[pl.BlockSpec((tr, C), lambda i: (i, 0))],
        out_specs=pl.BlockSpec((tr, C), lambda i: (i, 0)),
        compiler_params=pltpu.CompilerParams(
            dimension_semantics=("parallel",),
            vmem_limit_bytes=_VMEM_LIMIT),
    )(x2)


# ----------------------------------------------------------------------------
# JAX glue: phase-grouped col2im for stride=2, k=4, pad=1 (NHWC)
# ----------------------------------------------------------------------------
# TODO(synk): the col2im overlap-add and NHWC reshapes stay in plain XLA
# (pure indexing glue); only compute-heavy ops run in Pallas.
def _col2im_s2k4p1(y, N, H, W, cout):
    """y: (N*H*W, cout*16) -> NHWC (N, 2H, 2W, cout)."""
    # column index = c*16 + kh*4 + kw ; split kh=(qh,ph), kw=(qw,pw)
    y = y.reshape(N, H, W, cout, 2, 2, 2, 2)            # n h w c qh ph qw pw
    y = jnp.transpose(y, (0, 4, 1, 5, 6, 2, 7, 3))      # n qh h ph qw w pw c
    y = y.reshape(N, 2, 2 * H, 2, 2 * W, cout)
    blocks = []
    for qh in range(2):
        for qw in range(2):
            blk = y[:, qh, :, qw, :, :]                 # (N, 2H, 2W, cout)
            blk = jnp.pad(blk, ((0, 0),
                                (2 * qh, 2 - 2 * qh),
                                (2 * qw, 2 - 2 * qw),
                                (0, 0)))
            blocks.append(blk)
    out = blocks[0] + blocks[1] + blocks[2] + blocks[3]  # (N, 2H+2, 2W+2, cout)
    return out[:, 1:2 * H + 1, 1:2 * W + 1, :]           # crop padding=1


# ----------------------------------------------------------------------------
# Generator
# ----------------------------------------------------------------------------
_LAYER_CFG = [
    # (Cin, Cout, k, stride, pad, has_bn)
    (100, 512, 4, 1, 0, True),
    (512, 256, 4, 2, 1, True),
    (256, 128, 4, 2, 1, True),
    (128, 64, 4, 2, 1, True),
    (64, 3, 4, 2, 1, False),
]


def init_generator_params(key):
    params = []
    for (cin, cout, k, _, _, has_bn) in _LAYER_CFG:
        key, wk = jax.random.split(key)
        # PyTorch ConvTranspose2d weight layout: (Cin, Cout, kH, kW), DCGAN init.
        w = 0.02 * jax.random.normal(wk, (cin, cout, k, k), jnp.float32)
        if has_bn:
            gamma = jnp.ones((cout,), jnp.float32)
            beta = jnp.zeros((cout,), jnp.float32)
        else:
            gamma = beta = None
        params.append((w, gamma, beta))
    return params


def _bn_scale_shift(x2, gamma, beta):
    """Training-mode BatchNorm2d stats (biased var) -> per-channel scale/shift."""
    R = x2.shape[0]
    s, sq = pallas_bn_stats(x2)
    mean = s / R
    var = jnp.maximum(sq / R - mean * mean, 0.0)
    inv = gamma * jax.lax.rsqrt(var + _EPS)
    return inv, beta - mean * inv


def generator_forward(params, z):
    N = z.shape[0]

    # ---- Layer 1: ConvTranspose2d(100, 512, 4, 1, 0): (N,100,1,1) -> (N,4,4,512) NHWC
    w1, g1, b1 = params[0]
    z2 = z.reshape(N, 100)
    w1_2 = w1.reshape(100, 512 * 16).astype(jnp.bfloat16)
    y = pallas_matmul(z2, w1_2)                               # (N, 512*16)
    h = jnp.transpose(y.reshape(N, 512, 4, 4), (0, 2, 3, 1))  # NHWC
    H = W = 4
    gamma, beta = g1, b1

    # ---- Layers 2..5: fused BN+ReLU prologue + matmul, then phase-grouped col2im
    for li in range(1, 5):
        w, g_next, b_next = params[li]
        cin, cout, k, _, _, _ = _LAYER_CFG[li]
        x2 = h.reshape(N * H * W, cin)
        scale, shift = _bn_scale_shift(x2, gamma, beta)

        w2 = w.reshape(cin, cout * k * k)
        n_cols = cout * k * k
        n_pad = (-n_cols) % 128                   # lane-dense output (layer 5: 48->128)
        if n_pad:
            w2 = jnp.pad(w2, ((0, 0), (0, n_pad)))
        y = pallas_matmul(x2, w2.astype(jnp.bfloat16), scale, shift)
        if n_pad:
            y = y[:, :n_cols]

        h = _col2im_s2k4p1(y, N, H, W, cout)      # NHWC (N, 2H, 2W, cout)
        H, W = 2 * H, 2 * W
        gamma, beta = g_next, b_next

    # ---- Final Tanh on a lane-dense flat view, then NCHW output
    total = N * H * W * 3                          # N * 12288, multiple of 1024
    flat = h.reshape(total // 1024, 1024)
    out = pallas_tanh_flat(flat).reshape(N, H, W, 3)
    return jnp.transpose(out, (0, 3, 1, 2))        # (N, 3, 64, 64)


# ----------------------------------------------------------------------------
if __name__ == "__main__":
    key = jax.random.PRNGKey(0)
    pkey, zkey = jax.random.split(key)
    params = init_generator_params(pkey)

    batch = 2
    z = jax.random.normal(zkey, (batch, 100, 1, 1), jnp.float32)

    fwd = jax.jit(generator_forward)
    out = fwd(params, z)
    out = jax.block_until_ready(out)

    assert out.shape == (batch, 3, 64, 64), out.shape
    assert out.dtype == jnp.float32
    assert bool(jnp.all(jnp.isfinite(out)))
    assert bool(jnp.all(jnp.abs(out) <= 1.0))  # tanh range
    print("KERNEL_OK")
</pallas_src>

<mosaic_0001>
module attributes {stable_mosaic.version = 11 : i64} {
  func.func @_matmul_kernel(%arg0: i32, %arg1: i32, %arg2: memref<2x100xf32, #tpu.memory_space<vmem>>, %arg3: memref<100x512xbf16, #tpu.memory_space<vmem>>, %arg4: memref<2x512xf32, #tpu.memory_space<vmem>>) attributes {dimension_semantics = [#tpu.dimension_semantics<parallel>, #tpu.dimension_semantics<parallel>], iteration_bounds = array<i64: 1, 16>, scalar_prefetch = 0 : i64, scratch_operands = 0 : i64, tpu.core_type = #tpu.core_type<tc>, window_params = [{transform_indices = @transform_0, window_bounds = array<i64: 2, 100>}, {transform_indices = @transform_1, window_bounds = array<i64: 100, 512>}, {transform_indices = @transform_2, window_bounds = array<i64: 2, 512>}]} {
    %c0 = arith.constant 0 : index
    %c0_0 = arith.constant 0 : index
    %0 = vector.load %arg2[%c0, %c0_0] : memref<2x100xf32, #tpu.memory_space<vmem>>, vector<2x100xf32>
    %1 = arith.truncf %0 : vector<2x100xf32> to vector<2x100xbf16>
    %c0_1 = arith.constant 0 : index
    %c0_2 = arith.constant 0 : index
    %2 = vector.load %arg3[%c0_1, %c0_2] : memref<100x512xbf16, #tpu.memory_space<vmem>>, vector<100x512xbf16>
    %cst = arith.constant dense<0.000000e+00> : vector<2x512xf32>
    %3 = tpu.matmul %1, %2, %cst {dimension_numbers = #tpu.dot_dimension_numbers<[1], [0], [0], [1], [0, 0, 1, 1], [], []>} : vector<2x100xbf16>, vector<100x512xbf16>, vector<2x512xf32> -> vector<2x512xf32>
    %c0_3 = arith.constant 0 : index
    %c0_4 = arith.constant 0 : index
    %4 = vector.load %arg4[%c0_3, %c0_4] : memref<2x512xf32, #tpu.memory_space<vmem>>, vector<2x512xf32>
    tpu.vector_store %arg4[%c0_3, %c0_4], %3 {strides = array<i32>} : memref<2x512xf32, #tpu.memory_space<vmem>>, vector<2x512xf32>,
    return
  }
  func.func @transform_0(%arg0: i32, %arg1: i32) -> (i32, i32) {
    %c0_i32 = arith.constant 0 : i32
    %c0_i32_0 = arith.constant 0 : i32
    return %arg0, %c0_i32 : i32, i32
  }
  func.func @transform_1(%arg0: i32, %arg1: i32) -> (i32, i32) {
    %c0_i32 = arith.constant 0 : i32
    %c0_i32_0 = arith.constant 0 : i32
    return %c0_i32, %arg1 : i32, i32
  }
  func.func @transform_2(%arg0: i32, %arg1: i32) -> (i32, i32) {
    %c0_i32 = arith.constant 0 : i32
    return %arg0, %arg1 : i32, i32
  }
}

module attributes {stable_mosaic.version = 11 : i64} {
  func.func @_bn_stats_kernel(%arg0: i32, %arg1: memref<32x512xf32, #tpu.memory_space<vmem>>, %arg2: memref<1x512xf32, #tpu.memory_space<vmem>>, %arg3: memref<1x512xf32, #tpu.memory_space<vmem>>) attributes {dimension_semantics = [#tpu.dimension_semantics<arbitrary>], iteration_bounds = array<i64: 1>, scalar_prefetch = 0 : i64, scratch_operands = 0 : i64, tpu.core_type = #tpu.core_type<tc>, window_params = [{transform_indices = @transform_0, window_bounds = array<i64: 32, 512>}, {pipeline_mode = #tpu.pipeline_mode<synchronous>, transform_indices = @transform_1, window_bounds = array<i64: 1, 512>}, {pipeline_mode = #tpu.pipeline_mode<synchronous>, transform_indices = @transform_2, window_bounds = array<i64: 1, 512>}]} {
    %c0_i32 = arith.constant 0 : i32
    %0 = arith.cmpi eq, %arg0, %c0_i32 : i32
    %1 = arith.extui %0 : i1 to i32
    %c0_i32_0 = arith.constant 0 : i32
    %2 = arith.cmpi ne, %1, %c0_i32_0 : i32
    scf.if %2 {
      %cst_11 = arith.constant 0.000000e+00 : f32
      %15 = vector.broadcast %cst_11 : f32 to vector<1x512xf32>
      %c0_12 = arith.constant 0 : index
      %c0_13 = arith.constant 0 : index
      %16 = vector.load %arg2[%c0_12, %c0_13] : memref<1x512xf32, #tpu.memory_space<vmem>>, vector<1x512xf32>
      tpu.vector_store %arg2[%c0_12, %c0_13], %15 {strides = array<i32>} : memref<1x512xf32, #tpu.memory_space<vmem>>, vector<1x512xf32>,
      %cst_14 = arith.constant 0.000000e+00 : f32
      %17 = vector.broadcast %cst_14 : f32 to vector<1x512xf32>
      %c0_15 = arith.constant 0 : index
      %c0_16 = arith.constant 0 : index
      %18 = vector.load %arg3[%c0_15, %c0_16] : memref<1x512xf32, #tpu.memory_space<vmem>>, vector<1x512xf32>
      tpu.vector_store %arg3[%c0_15, %c0_16], %17 {strides = array<i32>} : memref<1x512xf32, #tpu.memory_space<vmem>>, vector<1x512xf32>,
    } else {
    }
    %c0 = arith.constant 0 : index
    %c0_1 = arith.constant 0 : index
    %3 = vector.load %arg1[%c0, %c0_1] : memref<32x512xf32, #tpu.memory_space<vmem>>, vector<32x512xf32>
    %c0_2 = arith.constant 0 : index
    %c0_3 = arith.constant 0 : index
    %4 = vector.load %arg2[%c0_2, %c0_3] : memref<1x512xf32, #tpu.memory_space<vmem>>, vector<1x512xf32>
    %cst = arith.constant dense<0.000000e+00> : vector<512xf32>
    %5 = vector.multi_reduction <add>, %3, %cst [0] : vector<32x512xf32> to vector<512xf32>
    %6 = vector.shape_cast %5 : vector<512xf32> to vector<1x512xf32>
    %7 = arith.addf %4, %6 : vector<1x512xf32>
    %c0_4 = arith.constant 0 : index
    %c0_5 = arith.constant 0 : index
    %8 = vector.load %arg2[%c0_4, %c0_5] : memref<1x512xf32, #tpu.memory_space<vmem>>, vector<1x512xf32>
    tpu.vector_store %arg2[%c0_4, %c0_5], %7 {strides = array<i32>} : memref<1x512xf32, #tpu.memory_space<vmem>>, vector<1x512xf32>,
    %c0_6 = arith.constant 0 : index
    %c0_7 = arith.constant 0 : index
    %9 = vector.load %arg3[%c0_6, %c0_7] : memref<1x512xf32, #tpu.memory_space<vmem>>, vector<1x512xf32>
    %10 = arith.mulf %3, %3 : vector<32x512xf32>
    %cst_8 = arith.constant dense<0.000000e+00> : vector<512xf32>
    %11 = vector.multi_reduction <add>, %10, %cst_8 [0] : vector<32x512xf32> to vector<512xf32>
    %12 = vector.shape_cast %11 : vector<512xf32> to vector<1x512xf32>
    %13 = arith.addf %9, %12 : vector<1x512xf32>
    %c0_9 = arith.constant 0 : index
    %c0_10 = arith.constant 0 : index
    %14 = vector.load %arg3[%c0_9, %c0_10] : memref<1x512xf32, #tpu.memory_space<vmem>>, vector<1x512xf32>
    tpu.vector_store %arg3[%c0_9, %c0_10], %13 {strides = array<i32>} : memref<1x512xf32, #tpu.memory_space<vmem>>, vector<1x512xf32>,
    return
  }
  func.func @transform_0(%arg0: i32) -> (i32, i32) {
    %c0_i32 = arith.constant 0 : i32
    %c0_i32_0 = arith.constant 0 : i32
    return %arg0, %c0_i32 : i32, i32
  }
  func.func @transform_1(%arg0: i32) -> (i32, i32) {
    %c0_i32 = arith.constant 0 : i32
    %c0_i32_0 = arith.constant 0 : i32
    %c0_i32_1 = arith.constant 0 : i32
    return %c0_i32, %c0_i32_0 : i32, i32
  }
  func.func @transform_2(%arg0: i32) -> (i32, i32) {
    %c0_i32 = arith.constant 0 : i32
    %c0_i32_0 = arith.constant 0 : i32
    %c0_i32_1 = arith.constant 0 : i32
    return %c0_i32, %c0_i32_0 : i32, i32
  }
}

module attributes {stable_mosaic.version = 11 : i64} {
  func.func @_bn_relu_matmul_kernel(%arg0: i32, %arg1: i32, %arg2: memref<32x512xf32, #tpu.memory_space<vmem>>, %arg3: memref<1x512xf32, #tpu.memory_space<vmem>>, %arg4: memref<1x512xf32, #tpu.memory_space<vmem>>, %arg5: memref<512x512xbf16, #tpu.memory_space<vmem>>, %arg6: memref<32x512xf32, #tpu.memory_space<vmem>>) attributes {dimension_semantics = [#tpu.dimension_semantics<parallel>, #tpu.dimension_semantics<parallel>], iteration_bounds = array<i64: 1, 8>, scalar_prefetch = 0 : i64, scratch_operands = 0 : i64, tpu.core_type = #tpu.core_type<tc>, window_params = [{transform_indices = @transform_0, window_bounds = array<i64: 32, 512>}, {pipeline_mode = #tpu.pipeline_mode<synchronous>, transform_indices = @transform_1, window_bounds = array<i64: 1, 512>}, {pipeline_mode = #tpu.pipeline_mode<synchronous>, transform_indices = @transform_2, window_bounds = array<i64: 1, 512>}, {transform_indices = @transform_3, window_bounds = array<i64: 512, 512>}, {transform_indices = @transform_4, window_bounds = array<i64: 32, 512>}]} {
    %c0 = arith.constant 0 : index
    %c0_0 = arith.constant 0 : index
    %0 = vector.load %arg2[%c0, %c0_0] : memref<32x512xf32, #tpu.memory_space<vmem>>, vector<32x512xf32>
    %c0_1 = arith.constant 0 : index
    %c0_2 = arith.constant 0 : index
    %1 = vector.load %arg3[%c0_1, %c0_2] : memref<1x512xf32, #tpu.memory_space<vmem>>, vector<1x512xf32>
    %2 = vector.broadcast %1 : vector<1x512xf32> to vector<32x512xf32>
    %3 = arith.mulf %0, %2 : vector<32x512xf32>
    %c0_3 = arith.constant 0 : index
    %c0_4 = arith.constant 0 : index
    %4 = vector.load %arg4[%c0_3, %c0_4] : memref<1x512xf32, #tpu.memory_space<vmem>>, vector<1x512xf32>
    %5 = vector.broadcast %4 : vector<1x512xf32> to vector<32x512xf32>
    %6 = arith.addf %3, %5 : vector<32x512xf32>
    %cst = arith.constant 0.000000e+00 : f32
    %7 = vector.broadcast %cst : f32 to vector<32x512xf32>
    %8 = arith.maximumf %6, %7 : vector<32x512xf32>
    %9 = arith.truncf %8 : vector<32x512xf32> to vector<32x512xbf16>
    %c0_5 = arith.constant 0 : index
    %c0_6 = arith.constant 0 : index
    %10 = vector.load %arg5[%c0_5, %c0_6] : memref<512x512xbf16, #tpu.memory_space<vmem>>, vector<512x512xbf16>
    %cst_7 = arith.constant dense<0.000000e+00> : vector<32x512xf32>
    %11 = tpu.matmul %9, %10, %cst_7 {dimension_numbers = #tpu.dot_dimension_numbers<[1], [0], [0], [1], [0, 0, 1, 1], [], []>} : vector<32x512xbf16>, vector<512x512xbf16>, vector<32x512xf32> -> vector<32x512xf32>
    %c0_8 = arith.constant 0 : index
    %c0_9 = arith.constant 0 : index
    %12 = vector.load %arg6[%c0_8, %c0_9] : memref<32x512xf32, #tpu.memory_space<vmem>>, vector<32x512xf32>
    tpu.vector_store %arg6[%c0_8, %c0_9], %11 {strides = array<i32>} : memref<32x512xf32, #tpu.memory_space<vmem>>, vector<32x512xf32>,
    return
  }
  func.func @transform_0(%arg0: i32, %arg1: i32) -> (i32, i32) {
    %c0_i32 = arith.constant 0 : i32
    %c0_i32_0 = arith.constant 0 : i32
    return %arg0, %c0_i32 : i32, i32
  }
  func.func @transform_1(%arg0: i32, %arg1: i32) -> (i32, i32) {
    %c0_i32 = arith.constant 0 : i32
    %c0_i32_0 = arith.constant 0 : i32
    %c0_i32_1 = arith.constant 0 : i32
    return %c0_i32, %c0_i32_0 : i32, i32
  }
  func.func @transform_2(%arg0: i32, %arg1: i32) -> (i32, i32) {
    %c0_i32 = arith.constant 0 : i32
    %c0_i32_0 = arith.constant 0 : i32
    %c0_i32_1 = arith.constant 0 : i32
    return %c0_i32, %c0_i32_0 : i32, i32
  }
  func.func @transform_3(%arg0: i32, %arg1: i32) -> (i32, i32) {
    %c0_i32 = arith.constant 0 : i32
    %c0_i32_0 = arith.constant 0 : i32
    return %c0_i32, %arg1 : i32, i32
  }
  func.func @transform_4(%arg0: i32, %arg1: i32) -> (i32, i32) {
    %c0_i32 = arith.constant 0 : i32
    return %arg0, %arg1 : i32, i32
  }
}

module attributes {stable_mosaic.version = 11 : i64} {
  func.func @_bn_stats_kernel(%arg0: i32, %arg1: memref<128x256xf32, #tpu.memory_space<vmem>>, %arg2: memref<1x256xf32, #tpu.memory_space<vmem>>, %arg3: memref<1x256xf32, #tpu.memory_space<vmem>>) attributes {dimension_semantics = [#tpu.dimension_semantics<arbitrary>], iteration_bounds = array<i64: 1>, scalar_prefetch = 0 : i64, scratch_operands = 0 : i64, tpu.core_type = #tpu.core_type<tc>, window_params = [{transform_indices = @transform_0, window_bounds = array<i64: 128, 256>}, {pipeline_mode = #tpu.pipeline_mode<synchronous>, transform_indices = @transform_1, window_bounds = array<i64: 1, 256>}, {pipeline_mode = #tpu.pipeline_mode<synchronous>, transform_indices = @transform_2, window_bounds = array<i64: 1, 256>}]} {
    %c0_i32 = arith.constant 0 : i32
    %0 = arith.cmpi eq, %arg0, %c0_i32 : i32
    %1 = arith.extui %0 : i1 to i32
    %c0_i32_0 = arith.constant 0 : i32
    %2 = arith.cmpi ne, %1, %c0_i32_0 : i32
    scf.if %2 {
      %cst_11 = arith.constant 0.000000e+00 : f32
      %15 = vector.broadcast %cst_11 : f32 to vector<1x256xf32>
      %c0_12 = arith.constant 0 : index
      %c0_13 = arith.constant 0 : index
      %16 = vector.load %arg2[%c0_12, %c0_13] : memref<1x256xf32, #tpu.memory_space<vmem>>, vector<1x256xf32>
      tpu.vector_store %arg2[%c0_12, %c0_13], %15 {strides = array<i32>} : memref<1x256xf32, #tpu.memory_space<vmem>>, vector<1x256xf32>,
      %cst_14 = arith.constant 0.000000e+00 : f32
      %17 = vector.broadcast %cst_14 : f32 to vector<1x256xf32>
      %c0_15 = arith.constant 0 : index
      %c0_16 = arith.constant 0 : index
      %18 = vector.load %arg3[%c0_15, %c0_16] : memref<1x256xf32, #tpu.memory_space<vmem>>, vector<1x256xf32>
      tpu.vector_store %arg3[%c0_15, %c0_16], %17 {strides = array<i32>} : memref<1x256xf32, #tpu.memory_space<vmem>>, vector<1x256xf32>,
    } else {
    }
    %c0 = arith.constant 0 : index
    %c0_1 = arith.constant 0 : index
    %3 = vector.load %arg1[%c0, %c0_1] : memref<128x256xf32, #tpu.memory_space<vmem>>, vector<128x256xf32>
    %c0_2 = arith.constant 0 : index
    %c0_3 = arith.constant 0 : index
    %4 = vector.load %arg2[%c0_2, %c0_3] : memref<1x256xf32, #tpu.memory_space<vmem>>, vector<1x256xf32>
    %cst = arith.constant dense<0.000000e+00> : vector<256xf32>
    %5 = vector.multi_reduction <add>, %3, %cst [0] : vector<128x256xf32> to vector<256xf32>
    %6 = vector.shape_cast %5 : vector<256xf32> to vector<1x256xf32>
    %7 = arith.addf %4, %6 : vector<1x256xf32>
    %c0_4 = arith.constant 0 : index
    %c0_5 = arith.constant 0 : index
    %8 = vector.load %arg2[%c0_4, %c0_5] : memref<1x256xf32, #tpu.memory_space<vmem>>, vector<1x256xf32>
    tpu.vector_store %arg2[%c0_4, %c0_5], %7 {strides = array<i32>} : memref<1x256xf32, #tpu.memory_space<vmem>>, vector<1x256xf32>,
    %c0_6 = arith.constant 0 : index
    %c0_7 = arith.constant 0 : index
    %9 = vector.load %arg3[%c0_6, %c0_7] : memref<1x256xf32, #tpu.memory_space<vmem>>, vector<1x256xf32>
    %10 = arith.mulf %3, %3 : vector<128x256xf32>
    %cst_8 = arith.constant dense<0.000000e+00> : vector<256xf32>
    %11 = vector.multi_reduction <add>, %10, %cst_8 [0] : vector<128x256xf32> to vector<256xf32>
    %12 = vector.shape_cast %11 : vector<256xf32> to vector<1x256xf32>
    %13 = arith.addf %9, %12 : vector<1x256xf32>
    %c0_9 = arith.constant 0 : index
    %c0_10 = arith.constant 0 : index
    %14 = vector.load %arg3[%c0_9, %c0_10] : memref<1x256xf32, #tpu.memory_space<vmem>>, vector<1x256xf32>
    tpu.vector_store %arg3[%c0_9, %c0_10], %13 {strides = array<i32>} : memref<1x256xf32, #tpu.memory_space<vmem>>, vector<1x256xf32>,
    return
  }
  func.func @transform_0(%arg0: i32) -> (i32, i32) {
    %c0_i32 = arith.constant 0 : i32
    %c0_i32_0 = arith.constant 0 : i32
    return %arg0, %c0_i32 : i32, i32
  }
  func.func @transform_1(%arg0: i32) -> (i32, i32) {
    %c0_i32 = arith.constant 0 : i32
    %c0_i32_0 = arith.constant 0 : i32
    %c0_i32_1 = arith.constant 0 : i32
    return %c0_i32, %c0_i32_0 : i32, i32
  }
  func.func @transform_2(%arg0: i32) -> (i32, i32) {
    %c0_i32 = arith.constant 0 : i32
    %c0_i32_0 = arith.constant 0 : i32
    %c0_i32_1 = arith.constant 0 : i32
    return %c0_i32, %c0_i32_0 : i32, i32
  }
}

module attributes {stable_mosaic.version = 11 : i64} {
  func.func @_bn_relu_matmul_kernel(%arg0: i32, %arg1: i32, %arg2: memref<128x256xf32, #tpu.memory_space<vmem>>, %arg3: memref<1x256xf32, #tpu.memory_space<vmem>>, %arg4: memref<1x256xf32, #tpu.memory_space<vmem>>, %arg5: memref<256x512xbf16, #tpu.memory_space<vmem>>, %arg6: memref<128x512xf32, #tpu.memory_space<vmem>>) attributes {dimension_semantics = [#tpu.dimension_semantics<parallel>, #tpu.dimension_semantics<parallel>], iteration_bounds = array<i64: 1, 4>, scalar_prefetch = 0 : i64, scratch_operands = 0 : i64, tpu.core_type = #tpu.core_type<tc>, window_params = [{transform_indices = @transform_0, window_bounds = array<i64: 128, 256>}, {pipeline_mode = #tpu.pipeline_mode<synchronous>, transform_indices = @transform_1, window_bounds = array<i64: 1, 256>}, {pipeline_mode = #tpu.pipeline_mode<synchronous>, transform_indices = @transform_2, window_bounds = array<i64: 1, 256>}, {transform_indices = @transform_3, window_bounds = array<i64: 256, 512>}, {transform_indices = @transform_4, window_bounds = array<i64: 128, 512>}]} {
    %c0 = arith.constant 0 : index
    %c0_0 = arith.constant 0 : index
    %0 = vector.load %arg2[%c0, %c0_0] : memref<128x256xf32, #tpu.memory_space<vmem>>, vector<128x256xf32>
    %c0_1 = arith.constant 0 : index
    %c0_2 = arith.constant 0 : index
    %1 = vector.load %arg3[%c0_1, %c0_2] : memref<1x256xf32, #tpu.memory_space<vmem>>, vector<1x256xf32>
    %2 = vector.broadcast %1 : vector<1x256xf32> to vector<128x256xf32>
    %3 = arith.mulf %0, %2 : vector<128x256xf32>
    %c0_3 = arith.constant 0 : index
    %c0_4 = arith.constant 0 : index
    %4 = vector.load %arg4[%c0_3, %c0_4] : memref<1x256xf32, #tpu.memory_space<vmem>>, vector<1x256xf32>
    %5 = vector.broadcast %4 : vector<1x256xf32> to vector<128x256xf32>
    %6 = arith.addf %3, %5 : vector<128x256xf32>
    %cst = arith.constant 0.000000e+00 : f32
    %7 = vector.broadcast %cst : f32 to vector<128x256xf32>
    %8 = arith.maximumf %6, %7 : vector<128x256xf32>
    %9 = arith.truncf %8 : vector<128x256xf32> to vector<128x256xbf16>
    %c0_5 = arith.constant 0 : index
    %c0_6 = arith.constant 0 : index
    %10 = vector.load %arg5[%c0_5, %c0_6] : memref<256x512xbf16, #tpu.memory_space<vmem>>, vector<256x512xbf16>
    %cst_7 = arith.constant dense<0.000000e+00> : vector<128x512xf32>
    %11 = tpu.matmul %9, %10, %cst_7 {dimension_numbers = #tpu.dot_dimension_numbers<[1], [0], [0], [1], [0, 0, 1, 1], [], []>} : vector<128x256xbf16>, vector<256x512xbf16>, vector<128x512xf32> -> vector<128x512xf32>
    %c0_8 = arith.constant 0 : index
    %c0_9 = arith.constant 0 : index
    %12 = vector.load %arg6[%c0_8, %c0_9] : memref<128x512xf32, #tpu.memory_space<vmem>>, vector<128x512xf32>
    tpu.vector_store %arg6[%c0_8, %c0_9], %11 {strides = array<i32>} : memref<128x512xf32, #tpu.memory_space<vmem>>, vector<128x512xf32>,
    return
  }
  func.func @transform_0(%arg0: i32, %arg1: i32) -> (i32, i32) {
    %c0_i32 = arith.constant 0 : i32
    %c0_i32_0 = arith.constant 0 : i32
    return %arg0, %c0_i32 : i32, i32
  }
  func.func @transform_1(%arg0: i32, %arg1: i32) -> (i32, i32) {
    %c0_i32 = arith.constant 0 : i32
    %c0_i32_0 = arith.constant 0 : i32
    %c0_i32_1 = arith.constant 0 : i32
    return %c0_i32, %c0_i32_0 : i32, i32
  }
  func.func @transform_2(%arg0: i32, %arg1: i32) -> (i32, i32) {
    %c0_i32 = arith.constant 0 : i32
    %c0_i32_0 = arith.constant 0 : i32
    %c0_i32_1 = arith.constant 0 : i32
    return %c0_i32, %c0_i32_0 : i32, i32
  }
  func.func @transform_3(%arg0: i32, %arg1: i32) -> (i32, i32) {
    %c0_i32 = arith.constant 0 : i32
    %c0_i32_0 = arith.constant 0 : i32
    return %c0_i32, %arg1 : i32, i32
  }
  func.func @transform_4(%arg0: i32, %arg1: i32) -> (i32, i32) {
    %c0_i32 = arith.constant 0 : i32
    return %arg0, %arg1 : i32, i32
  }
}

module attributes {stable_mosaic.version = 11 : i64} {
  func.func @_bn_stats_kernel(%arg0: i32, %arg1: memref<512x128xf32, #tpu.memory_space<vmem>>, %arg2: memref<1x128xf32, #tpu.memory_space<vmem>>, %arg3: memref<1x128xf32, #tpu.memory_space<vmem>>) attributes {dimension_semantics = [#tpu.dimension_semantics<arbitrary>], iteration_bounds = array<i64: 1>, scalar_prefetch = 0 : i64, scratch_operands = 0 : i64, tpu.core_type = #tpu.core_type<tc>, window_params = [{transform_indices = @transform_0, window_bounds = array<i64: 512, 128>}, {pipeline_mode = #tpu.pipeline_mode<synchronous>, transform_indices = @transform_1, window_bounds = array<i64: 1, 128>}, {pipeline_mode = #tpu.pipeline_mode<synchronous>, transform_indices = @transform_2, window_bounds = array<i64: 1, 128>}]} {
    %c0_i32 = arith.constant 0 : i32
    %0 = arith.cmpi eq, %arg0, %c0_i32 : i32
    %1 = arith.extui %0 : i1 to i32
    %c0_i32_0 = arith.constant 0 : i32
    %2 = arith.cmpi ne, %1, %c0_i32_0 : i32
    scf.if %2 {
      %cst_11 = arith.constant 0.000000e+00 : f32
      %15 = vector.broadcast %cst_11 : f32 to vector<1x128xf32>
      %c0_12 = arith.constant 0 : index
      %c0_13 = arith.constant 0 : index
      %16 = vector.load %arg2[%c0_12, %c0_13] : memref<1x128xf32, #tpu.memory_space<vmem>>, vector<1x128xf32>
      tpu.vector_store %arg2[%c0_12, %c0_13], %15 {strides = array<i32>} : memref<1x128xf32, #tpu.memory_space<vmem>>, vector<1x128xf32>,
      %cst_14 = arith.constant 0.000000e+00 : f32
      %17 = vector.broadcast %cst_14 : f32 to vector<1x128xf32>
      %c0_15 = arith.constant 0 : index
      %c0_16 = arith.constant 0 : index
      %18 = vector.load %arg3[%c0_15, %c0_16] : memref<1x128xf32, #tpu.memory_space<vmem>>, vector<1x128xf32>
      tpu.vector_store %arg3[%c0_15, %c0_16], %17 {strides = array<i32>} : memref<1x128xf32, #tpu.memory_space<vmem>>, vector<1x128xf32>,
    } else {
    }
    %c0 = arith.constant 0 : index
    %c0_1 = arith.constant 0 : index
    %3 = vector.load %arg1[%c0, %c0_1] : memref<512x128xf32, #tpu.memory_space<vmem>>, vector<512x128xf32>
    %c0_2 = arith.constant 0 : index
    %c0_3 = arith.constant 0 : index
    %4 = vector.load %arg2[%c0_2, %c0_3] : memref<1x128xf32, #tpu.memory_space<vmem>>, vector<1x128xf32>
    %cst = arith.constant dense<0.000000e+00> : vector<128xf32>
    %5 = vector.multi_reduction <add>, %3, %cst [0] : vector<512x128xf32> to vector<128xf32>
    %6 = vector.shape_cast %5 : vector<128xf32> to vector<1x128xf32>
    %7 = arith.addf %4, %6 : vector<1x128xf32>
    %c0_4 = arith.constant 0 : index
    %c0_5 = arith.constant 0 : index
    %8 = vector.load %arg2[%c0_4, %c0_5] : memref<1x128xf32, #tpu.memory_space<vmem>>, vector<1x128xf32>
    tpu.vector_store %arg2[%c0_4, %c0_5], %7 {strides = array<i32>} : memref<1x128xf32, #tpu.memory_space<vmem>>, vector<1x128xf32>,
    %c0_6 = arith.constant 0 : index
    %c0_7 = arith.constant 0 : index
    %9 = vector.load %arg3[%c0_6, %c0_7] : memref<1x128xf32, #tpu.memory_space<vmem>>, vector<1x128xf32>
    %10 = arith.mulf %3, %3 : vector<512x128xf32>
    %cst_8 = arith.constant dense<0.000000e+00> : vector<128xf32>
    %11 = vector.multi_reduction <add>, %10, %cst_8 [0] : vector<512x128xf32> to vector<128xf32>
    %12 = vector.shape_cast %11 : vector<128xf32> to vector<1x128xf32>
    %13 = arith.addf %9, %12 : vector<1x128xf32>
    %c0_9 = arith.constant 0 : index
    %c0_10 = arith.constant 0 : index
    %14 = vector.load %arg3[%c0_9, %c0_10] : memref<1x128xf32, #tpu.memory_space<vmem>>, vector<1x128xf32>
    tpu.vector_store %arg3[%c0_9, %c0_10], %13 {strides = array<i32>} : memref<1x128xf32, #tpu.memory_space<vmem>>, vector<1x128xf32>,
    return
  }
  func.func @transform_0(%arg0: i32) -> (i32, i32) {
    %c0_i32 = arith.constant 0 : i32
    %c0_i32_0 = arith.constant 0 : i32
    return %arg0, %c0_i32 : i32, i32
  }
  func.func @transform_1(%arg0: i32) -> (i32, i32) {
    %c0_i32 = arith.constant 0 : i32
    %c0_i32_0 = arith.constant 0 : i32
    %c0_i32_1 = arith.constant 0 : i32
    return %c0_i32, %c0_i32_0 : i32, i32
  }
  func.func @transform_2(%arg0: i32) -> (i32, i32) {
    %c0_i32 = arith.constant 0 : i32
    %c0_i32_0 = arith.constant 0 : i32
    %c0_i32_1 = arith.constant 0 : i32
    return %c0_i32, %c0_i32_0 : i32, i32
  }
}

module attributes {stable_mosaic.version = 11 : i64} {
  func.func @_bn_relu_matmul_kernel(%arg0: i32, %arg1: i32, %arg2: memref<512x128xf32, #tpu.memory_space<vmem>>, %arg3: memref<1x128xf32, #tpu.memory_space<vmem>>, %arg4: memref<1x128xf32, #tpu.memory_space<vmem>>, %arg5: memref<128x512xbf16, #tpu.memory_space<vmem>>, %arg6: memref<512x512xf32, #tpu.memory_space<vmem>>) attributes {dimension_semantics = [#tpu.dimension_semantics<parallel>, #tpu.dimension_semantics<parallel>], iteration_bounds = array<i64: 1, 2>, scalar_prefetch = 0 : i64, scratch_operands = 0 : i64, tpu.core_type = #tpu.core_type<tc>, window_params = [{transform_indices = @transform_0, window_bounds = array<i64: 512, 128>}, {pipeline_mode = #tpu.pipeline_mode<synchronous>, transform_indices = @transform_1, window_bounds = array<i64: 1, 128>}, {pipeline_mode = #tpu.pipeline_mode<synchronous>, transform_indices = @transform_2, window_bounds = array<i64: 1, 128>}, {transform_indices = @transform_3, window_bounds = array<i64: 128, 512>}, {transform_indices = @transform_4, window_bounds = array<i64: 512, 512>}]} {
    %c0 = arith.constant 0 : index
    %c0_0 = arith.constant 0 : index
    %0 = vector.load %arg2[%c0, %c0_0] : memref<512x128xf32, #tpu.memory_space<vmem>>, vector<512x128xf32>
    %c0_1 = arith.constant 0 : index
    %c0_2 = arith.constant 0 : index
    %1 = vector.load %arg3[%c0_1, %c0_2] : memref<1x128xf32, #tpu.memory_space<vmem>>, vector<1x128xf32>
    %2 = vector.broadcast %1 : vector<1x128xf32> to vector<512x128xf32>
    %3 = arith.mulf %0, %2 : vector<512x128xf32>
    %c0_3 = arith.constant 0 : index
    %c0_4 = arith.constant 0 : index
    %4 = vector.load %arg4[%c0_3, %c0_4] : memref<1x128xf32, #tpu.memory_space<vmem>>, vector<1x128xf32>
    %5 = vector.broadcast %4 : vector<1x128xf32> to vector<512x128xf32>
    %6 = arith.addf %3, %5 : vector<512x128xf32>
    %cst = arith.constant 0.000000e+00 : f32
    %7 = vector.broadcast %cst : f32 to vector<512x128xf32>
    %8 = arith.maximumf %6, %7 : vector<512x128xf32>
    %9 = arith.truncf %8 : vector<512x128xf32> to vector<512x128xbf16>
    %c0_5 = arith.constant 0 : index
    %c0_6 = arith.constant 0 : index
    %10 = vector.load %arg5[%c0_5, %c0_6] : memref<128x512xbf16, #tpu.memory_space<vmem>>, vector<128x512xbf16>
    %cst_7 = arith.constant dense<0.000000e+00> : vector<512x512xf32>
    %11 = tpu.matmul %9, %10, %cst_7 {dimension_numbers = #tpu.dot_dimension_numbers<[1], [0], [0], [1], [0, 0, 1, 1], [], []>} : vector<512x128xbf16>, vector<128x512xbf16>, vector<512x512xf32> -> vector<512x512xf32>
    %c0_8 = arith.constant 0 : index
    %c0_9 = arith.constant 0 : index
    %12 = vector.load %arg6[%c0_8, %c0_9] : memref<512x512xf32, #tpu.memory_space<vmem>>, vector<512x512xf32>
    tpu.vector_store %arg6[%c0_8, %c0_9], %11 {strides = array<i32>} : memref<512x512xf32, #tpu.memory_space<vmem>>, vector<512x512xf32>,
    return
  }
  func.func @transform_0(%arg0: i32, %arg1: i32) -> (i32, i32) {
    %c0_i32 = arith.constant 0 : i32
    %c0_i32_0 = arith.constant 0 : i32
    return %arg0, %c0_i32 : i32, i32
  }
  func.func @transform_1(%arg0: i32, %arg1: i32) -> (i32, i32) {
    %c0_i32 = arith.constant 0 : i32
    %c0_i32_0 = arith.constant 0 : i32
    %c0_i32_1 = arith.constant 0 : i32
    return %c0_i32, %c0_i32_0 : i32, i32
  }
  func.func @transform_2(%arg0: i32, %arg1: i32) -> (i32, i32) {
    %c0_i32 = arith.constant 0 : i32
    %c0_i32_0 = arith.constant 0 : i32
    %c0_i32_1 = arith.constant 0 : i32
    return %c0_i32, %c0_i32_0 : i32, i32
  }
  func.func @transform_3(%arg0: i32, %arg1: i32) -> (i32, i32) {
    %c0_i32 = arith.constant 0 : i32
    %c0_i32_0 = arith.constant 0 : i32
    return %c0_i32, %arg1 : i32, i32
  }
  func.func @transform_4(%arg0: i32, %arg1: i32) -> (i32, i32) {
    %c0_i32 = arith.constant 0 : i32
    return %arg0, %arg1 : i32, i32
  }
}

module attributes {stable_mosaic.version = 11 : i64} {
  func.func @_bn_stats_kernel(%arg0: i32, %arg1: memref<1024x64xf32, #tpu.memory_space<vmem>>, %arg2: memref<1x64xf32, #tpu.memory_space<vmem>>, %arg3: memref<1x64xf32, #tpu.memory_space<vmem>>) attributes {dimension_semantics = [#tpu.dimension_semantics<arbitrary>], iteration_bounds = array<i64: 2>, scalar_prefetch = 0 : i64, scratch_operands = 0 : i64, tpu.core_type = #tpu.core_type<tc>, window_params = [{transform_indices = @transform_0, window_bounds = array<i64: 1024, 64>}, {pipeline_mode = #tpu.pipeline_mode<synchronous>, transform_indices = @transform_1, window_bounds = array<i64: 1, 64>}, {pipeline_mode = #tpu.pipeline_mode<synchronous>, transform_indices = @transform_2, window_bounds = array<i64: 1, 64>}]} {
    %c0_i32 = arith.constant 0 : i32
    %0 = arith.cmpi eq, %arg0, %c0_i32 : i32
    %1 = arith.extui %0 : i1 to i32
    %c0_i32_0 = arith.constant 0 : i32
    %2 = arith.cmpi ne, %1, %c0_i32_0 : i32
    scf.if %2 {
      %cst_11 = arith.constant 0.000000e+00 : f32
      %15 = vector.broadcast %cst_11 : f32 to vector<1x64xf32>
      %c0_12 = arith.constant 0 : index
      %c0_13 = arith.constant 0 : index
      %16 = vector.load %arg2[%c0_12, %c0_13] : memref<1x64xf32, #tpu.memory_space<vmem>>, vector<1x64xf32>
      tpu.vector_store %arg2[%c0_12, %c0_13], %15 {strides = array<i32>} : memref<1x64xf32, #tpu.memory_space<vmem>>, vector<1x64xf32>,
      %cst_14 = arith.constant 0.000000e+00 : f32
      %17 = vector.broadcast %cst_14 : f32 to vector<1x64xf32>
      %c0_15 = arith.constant 0 : index
      %c0_16 = arith.constant 0 : index
      %18 = vector.load %arg3[%c0_15, %c0_16] : memref<1x64xf32, #tpu.memory_space<vmem>>, vector<1x64xf32>
      tpu.vector_store %arg3[%c0_15, %c0_16], %17 {strides = array<i32>} : memref<1x64xf32, #tpu.memory_space<vmem>>, vector<1x64xf32>,
    } else {
    }
    %c0 = arith.constant 0 : index
    %c0_1 = arith.constant 0 : index
    %3 = vector.load %arg1[%c0, %c0_1] : memref<1024x64xf32, #tpu.memory_space<vmem>>, vector<1024x64xf32>
    %c0_2 = arith.constant 0 : index
    %c0_3 = arith.constant 0 : index
    %4 = vector.load %arg2[%c0_2, %c0_3] : memref<1x64xf32, #tpu.memory_space<vmem>>, vector<1x64xf32>
    %cst = arith.constant dense<0.000000e+00> : vector<64xf32>
    %5 = vector.multi_reduction <add>, %3, %cst [0] : vector<1024x64xf32> to vector<64xf32>
    %6 = vector.shape_cast %5 : vector<64xf32> to vector<1x64xf32>
    %7 = arith.addf %4, %6 : vector<1x64xf32>
    %c0_4 = arith.constant 0 : index
    %c0_5 = arith.constant 0 : index
    %8 = vector.load %arg2[%c0_4, %c0_5] : memref<1x64xf32, #tpu.memory_space<vmem>>, vector<1x64xf32>
    tpu.vector_store %arg2[%c0_4, %c0_5], %7 {strides = array<i32>} : memref<1x64xf32, #tpu.memory_space<vmem>>, vector<1x64xf32>,
    %c0_6 = arith.constant 0 : index
    %c0_7 = arith.constant 0 : index
    %9 = vector.load %arg3[%c0_6, %c0_7] : memref<1x64xf32, #tpu.memory_space<vmem>>, vector<1x64xf32>
    %10 = arith.mulf %3, %3 : vector<1024x64xf32>
    %cst_8 = arith.constant dense<0.000000e+00> : vector<64xf32>
    %11 = vector.multi_reduction <add>, %10, %cst_8 [0] : vector<1024x64xf32> to vector<64xf32>
    %12 = vector.shape_cast %11 : vector<64xf32> to vector<1x64xf32>
    %13 = arith.addf %9, %12 : vector<1x64xf32>
    %c0_9 = arith.constant 0 : index
    %c0_10 = arith.constant 0 : index
    %14 = vector.load %arg3[%c0_9, %c0_10] : memref<1x64xf32, #tpu.memory_space<vmem>>, vector<1x64xf32>
    tpu.vector_store %arg3[%c0_9, %c0_10], %13 {strides = array<i32>} : memref<1x64xf32, #tpu.memory_space<vmem>>, vector<1x64xf32>,
    return
  }
  func.func @transform_0(%arg0: i32) -> (i32, i32) {
    %c0_i32 = arith.constant 0 : i32
    %c0_i32_0 = arith.constant 0 : i32
    return %arg0, %c0_i32 : i32, i32
  }
  func.func @transform_1(%arg0: i32) -> (i32, i32) {
    %c0_i32 = arith.constant 0 : i32
    %c0_i32_0 = arith.constant 0 : i32
    %c0_i32_1 = arith.constant 0 : i32
    return %c0_i32, %c0_i32_0 : i32, i32
  }
  func.func @transform_2(%arg0: i32) -> (i32, i32) {
    %c0_i32 = arith.constant 0 : i32
    %c0_i32_0 = arith.constant 0 : i32
    %c0_i32_1 = arith.constant 0 : i32
    return %c0_i32, %c0_i32_0 : i32, i32
  }
}

module attributes {stable_mosaic.version = 11 : i64} {
  func.func @_bn_relu_matmul_kernel(%arg0: i32, %arg1: i32, %arg2: memref<512x64xf32, #tpu.memory_space<vmem>>, %arg3: memref<1x64xf32, #tpu.memory_space<vmem>>, %arg4: memref<1x64xf32, #tpu.memory_space<vmem>>, %arg5: memref<64x128xbf16, #tpu.memory_space<vmem>>, %arg6: memref<512x128xf32, #tpu.memory_space<vmem>>) attributes {dimension_semantics = [#tpu.dimension_semantics<parallel>, #tpu.dimension_semantics<parallel>], iteration_bounds = array<i64: 4, 1>, scalar_prefetch = 0 : i64, scratch_operands = 0 : i64, tpu.core_type = #tpu.core_type<tc>, window_params = [{transform_indices = @transform_0, window_bounds = array<i64: 512, 64>}, {pipeline_mode = #tpu.pipeline_mode<synchronous>, transform_indices = @transform_1, window_bounds = array<i64: 1, 64>}, {pipeline_mode = #tpu.pipeline_mode<synchronous>, transform_indices = @transform_2, window_bounds = array<i64: 1, 64>}, {transform_indices = @transform_3, window_bounds = array<i64: 64, 128>}, {transform_indices = @transform_4, window_bounds = array<i64: 512, 128>}]} {
    %c0 = arith.constant 0 : index
    %c0_0 = arith.constant 0 : index
    %0 = vector.load %arg2[%c0, %c0_0] : memref<512x64xf32, #tpu.memory_space<vmem>>, vector<512x64xf32>
    %c0_1 = arith.constant 0 : index
    %c0_2 = arith.constant 0 : index
    %1 = vector.load %arg3[%c0_1, %c0_2] : memref<1x64xf32, #tpu.memory_space<vmem>>, vector<1x64xf32>
    %2 = vector.broadcast %1 : vector<1x64xf32> to vector<512x64xf32>
    %3 = arith.mulf %0, %2 : vector<512x64xf32>
    %c0_3 = arith.constant 0 : index
    %c0_4 = arith.constant 0 : index
    %4 = vector.load %arg4[%c0_3, %c0_4] : memref<1x64xf32, #tpu.memory_space<vmem>>, vector<1x64xf32>
    %5 = vector.broadcast %4 : vector<1x64xf32> to vector<512x64xf32>
    %6 = arith.addf %3, %5 : vector<512x64xf32>
    %cst = arith.constant 0.000000e+00 : f32
    %7 = vector.broadcast %cst : f32 to vector<512x64xf32>
    %8 = arith.maximumf %6, %7 : vector<512x64xf32>
    %9 = arith.truncf %8 : vector<512x64xf32> to vector<512x64xbf16>
    %c0_5 = arith.constant 0 : index
    %c0_6 = arith.constant 0 : index
    %10 = vector.load %arg5[%c0_5, %c0_6] : memref<64x128xbf16, #tpu.memory_space<vmem>>, vector<64x128xbf16>
    %cst_7 = arith.constant dense<0.000000e+00> : vector<512x128xf32>
    %11 = tpu.matmul %9, %10, %cst_7 {dimension_numbers = #tpu.dot_dimension_numbers<[1], [0], [0], [1], [0, 0, 1, 1], [], []>} : vector<512x64xbf16>, vector<64x128xbf16>, vector<512x128xf32> -> vector<512x128xf32>
    %c0_8 = arith.constant 0 : index
    %c0_9 = arith.constant 0 : index
    %12 = vector.load %arg6[%c0_8, %c0_9] : memref<512x128xf32, #tpu.memory_space<vmem>>, vector<512x128xf32>
    tpu.vector_store %arg6[%c0_8, %c0_9], %11 {strides = array<i32>} : memref<512x128xf32, #tpu.memory_space<vmem>>, vector<512x128xf32>,
    return
  }
  func.func @transform_0(%arg0: i32, %arg1: i32) -> (i32, i32) {
    %c0_i32 = arith.constant 0 : i32
    %c0_i32_0 = arith.constant 0 : i32
    return %arg0, %c0_i32 : i32, i32
  }
  func.func @transform_1(%arg0: i32, %arg1: i32) -> (i32, i32) {
    %c0_i32 = arith.constant 0 : i32
    %c0_i32_0 = arith.constant 0 : i32
    %c0_i32_1 = arith.constant 0 : i32
    return %c0_i32, %c0_i32_0 : i32, i32
  }
  func.func @transform_2(%arg0: i32, %arg1: i32) -> (i32, i32) {
    %c0_i32 = arith.constant 0 : i32
    %c0_i32_0 = arith.constant 0 : i32
    %c0_i32_1 = arith.constant 0 : i32
    return %c0_i32, %c0_i32_0 : i32, i32
  }
  func.func @transform_3(%arg0: i32, %arg1: i32) -> (i32, i32) {
    %c0_i32 = arith.constant 0 : i32
    %c0_i32_0 = arith.constant 0 : i32
    return %c0_i32, %arg1 : i32, i32
  }
  func.func @transform_4(%arg0: i32, %arg1: i32) -> (i32, i32) {
    %c0_i32 = arith.constant 0 : i32
    return %arg0, %arg1 : i32, i32
  }
}

module attributes {stable_mosaic.version = 11 : i64} {
  func.func @_tanh_kernel(%arg0: i32, %arg1: memref<24x1024xf32, #tpu.memory_space<vmem>>, %arg2: memref<24x1024xf32, #tpu.memory_space<vmem>>) attributes {dimension_semantics = [#tpu.dimension_semantics<parallel>], iteration_bounds = array<i64: 1>, scalar_prefetch = 0 : i64, scratch_operands = 0 : i64, tpu.core_type = #tpu.core_type<tc>, window_params = [{transform_indices = @transform_0, window_bounds = array<i64: 24, 1024>}, {transform_indices = @transform_1, window_bounds = array<i64: 24, 1024>}]} {
    %c0 = arith.constant 0 : index
    %c0_0 = arith.constant 0 : index
    %0 = vector.load %arg1[%c0, %c0_0] : memref<24x1024xf32, #tpu.memory_space<vmem>>, vector<24x1024xf32>
    %1 = math.tanh %0 : vector<24x1024xf32>
    %c0_1 = arith.constant 0 : index
    %c0_2 = arith.constant 0 : index
    %2 = vector.load %arg2[%c0_1, %c0_2] : memref<24x1024xf32, #tpu.memory_space<vmem>>, vector<24x1024xf32>
    tpu.vector_store %arg2[%c0_1, %c0_2], %1 {strides = array<i32>} : memref<24x1024xf32, #tpu.memory_space<vmem>>, vector<24x1024xf32>,
    return
  }
  func.func @transform_0(%arg0: i32) -> (i32, i32) {
    %c0_i32 = arith.constant 0 : i32
    %c0_i32_0 = arith.constant 0 : i32
    return %arg0, %c0_i32 : i32, i32
  }
  func.func @transform_1(%arg0: i32) -> (i32, i32) {
    %c0_i32 = arith.constant 0 : i32
    %c0_i32_0 = arith.constant 0 : i32
    return %arg0, %c0_i32 : i32, i32
  }
}

</mosaic_0001>

<llo_original>
// kernel: generator_forward.10
$region0: #{generator_forward.10}
  #allocation0 [shape = 'u32[]', space=smem, size = 0x4, offset = 0x4, fixed_abs, tag = 'smem constant byte address 0x4 - core index']
  #allocation1 [shape = 'u32[144,128]{1,0:T(1,128)}', space=vmem, size = 0x12000, scoped, tag = 'internal scratch']
  %s0 = inlined_call_operand.vmem [shape: f32[2,100], index: 0, kind: input, shape index: {}]
  %s1 = inlined_call_operand.vmem [shape: bf16[100,8192], index: 1, kind: input, shape index: {}]
  %s2 = inlined_call_operand.vmem [shape: f32[2,8192], index: 2, kind: output, shape index: {}]
  %s3 = sld [smem:[#allocation0]]
  $region64: #{generator_forward.10} parent=0
    _
  %s5 = ssub.s32 1, %s3
  %s6 = scalar_select 0, %s5, %s3
  $region1: #{generator_forward.10} parent=0
    #allocation2 [shape = 'u8[212992]{0}', space=vmem, size = 0x34000, scoped, tag = 'input window, operand 1']
    loop: start=0, step=1, limit=18
    $region2: #{generator_forward.10} parent=1 // loop_pre_header
      _
    $region3: #{generator_forward.10} parent=1 // loop_header
      %s8 = sphi 0, %s12
      %p9 = scmp.ge.s32.totalorder %s8, 18
      %s15 = sphi 0, %s27
      %s16 = sphi 0, %s23
      %s17 = sphi 0, %s15
      %s18 = sphi 0, %s16
      %s19 = sphi 0, %s17
      %s20 = sphi 0, %s18
      %s30 = sphi 0, %s32
      %s33 = sphi 0, %s30
      %s34 = sphi 0, %s33
      %s50 = sphi 0, %s34
      %s56 = sphi 0, %s58
      %s59 = sphi 0, %s56
      %s60 = sphi 0, %s59
      %s76 = sphi 0, %s60
      %s84 = sphi 0, %s86
      %s87 = sphi 0, %s84
      %s88 = sphi 0, %s87
      %s104 = sphi 0, %s88
    $region4: #{generator_forward.10} parent=1 // loop_header_branch
      %11 = sbr.rel (%p9) target = $region8
    $region5: #{generator_forward.10} parent=1 // loop_body
      %s13 = ssub.s32 %s8, 1
      %s14 = ssub.s32 %s8, 2
      %s21 = sadd.s32 1, %s16
      %p22 = scmp.ge.s32.totalorder %s21, 16
      %s23 = scalar_select %p22, 0, %s21
      %s24 = sadd.s32 1, %s15
      %s25 = scalar_select %p22, %s24, %s15
      %p26 = scmp.ge.s32.totalorder %s25, 1
      %s27 = scalar_select %p26, 0, %s25
      %s28 = ssub.s32 %s15, %s27
      %p29 = scmp.eq.s32.totalorder %s28, 0
      %s31 = sadd.s32 %s30, 1
      %s32 = scalar_select %p29, %s30, %s31
      %p35 = pneg %p29
      %p36 = scmp.eq.s32.totalorder %s8, 15
      %p37 = por %p35, %p36
      %p38 = scmp.ne.s32.totalorder %s30, %s33
      %p39 = scmp.eq.s32.totalorder %s8, 0
      %p40 = por %p38, %p39
      %p41 = scmp.ne.s32.totalorder %s30, %s33
      %p42 = scmp.eq.s32.totalorder %s13, 15
      %p43 = por %p41, %p42
      %p44 = scmp.ne.s32.totalorder %s33, %s34
      %p45 = scmp.eq.s32.totalorder %s13, 0
      %p46 = por %p44, %p45
      %p47 = scmp.ne.s32.totalorder %s33, %s34
      %p48 = scmp.eq.s32.totalorder %s14, 15
      %p49 = por %p47, %p48
      %p51 = scmp.ne.s32.totalorder %s34, %s50
      %p52 = scmp.eq.s32.totalorder %s14, 0
      %p53 = por %p51, %p52
      %s54 = ssub.s32 %s16, %s23
      %p55 = scmp.eq.s32.totalorder %s54, 0
      %s57 = sadd.s32 %s56, 1
      %s58 = scalar_select %p55, %s56, %s57
      %p61 = pneg %p55
      %p62 = scmp.eq.s32.totalorder %s8, 15
      %p63 = por %p61, %p62
      %p64 = scmp.ne.s32.totalorder %s56, %s59
      %p65 = scmp.eq.s32.totalorder %s8, 0
      %p66 = por %p64, %p65
      %p67 = scmp.ne.s32.totalorder %s56, %s59
      %p68 = scmp.eq.s32.totalorder %s13, 15
      %p69 = por %p67, %p68
      %p70 = scmp.ne.s32.totalorder %s59, %s60
      %p71 = scmp.eq.s32.totalorder %s13, 0
      %p72 = por %p70, %p71
      %p73 = scmp.ne.s32.totalorder %s59, %s60
      %p74 = scmp.eq.s32.totalorder %s14, 15
      %p75 = por %p73, %p74
      %p77 = scmp.ne.s32.totalorder %s60, %s76
      %p78 = scmp.eq.s32.totalorder %s14, 0
      %p79 = por %p77, %p78
      %s80 = ssub.s32 %s15, %s27
      %s81 = ssub.s32 %s16, %s23
      %s82 = sor.u32 %s80, %s81
      %p83 = scmp.eq.s32.totalorder %s82, 0
      %s85 = sadd.s32 %s84, 1
      %s86 = scalar_select %p83, %s84, %s85
      %p89 = pneg %p83
      %p90 = scmp.eq.s32.totalorder %s8, 15
      %p91 = por %p89, %p90
      %p92 = scmp.ne.s32.totalorder %s84, %s87
      %p93 = scmp.eq.s32.totalorder %s8, 0
      %p94 = por %p92, %p93
      %p95 = scmp.ne.s32.totalorder %s84, %s87
      %p96 = scmp.eq.s32.totalorder %s13, 15
      %p97 = por %p95, %p96
      %p98 = scmp.ne.s32.totalorder %s87, %s88
      %p99 = scmp.eq.s32.totalorder %s13, 0
      %p100 = por %p98, %p99
      %p101 = scmp.ne.s32.totalorder %s87, %s88
      %p102 = scmp.eq.s32.totalorder %s14, 15
      %p103 = por %p101, %p102
      %p105 = scmp.ne.s32.totalorder %s88, %s104
      %p106 = scmp.eq.s32.totalorder %s14, 0
      %p107 = por %p105, %p106
      %p108 = scmp.le.s32.totalorder 1, %s8
      %p109 = scmp.lt.s32.totalorder %s8, 17
      %p110 = pnand %p108, %p109
      %p111 = pneg %p110
      // Predicated region
      $region9: #{generator_forward.10} parent=5 // pred_check
        _
      $region10: #{generator_forward.10} parent=5 // pred_check_branch
        %113 = sbr.rel (%p110) target = $region12
      $region11: #{generator_forward.10} parent=5 // pred_region
        %s114 = ssub.s32 %s8, 1
        // Predicated region
        $region13: #{generator_forward.10} parent=11 // pred_check
          %p115 = pneg %p46
        $region14: #{generator_forward.10} parent=11 // pred_check_branch
          %117 = sbr.rel (%p115) target = $region16
        $region15: #{generator_forward.10} parent=11 // pred_region
          %p118 = scmp.lt.s32.totalorder %s17, 0
          %s119 = scalar_select %p118, %s17, 0
          %s120 = smul.addr %s119, 2
          %s121 = scalar_lea.vmem %s0, %s120
        $region16: #{generator_forward.10} parent=11 // pred_fallthru
          _
      $region12: #{generator_forward.10} parent=5 // pred_fallthru
        _
      %p122 = scmp.lt.s32.totalorder %s8, 16
      // Predicated region
      $region17: #{generator_forward.10} parent=5 // pred_check
        %p123 = pneg %p122
      $region18: #{generator_forward.10} parent=5 // pred_check_branch
        %125 = sbr.rel (%p123) target = $region20
      $region19: #{generator_forward.10} parent=5 // pred_region
        // Predicated region
        $region21: #{generator_forward.10} parent=19 // pred_check
          %p126 = pneg %p66
        $region22: #{generator_forward.10} parent=19 // pred_check_branch
          %128 = sbr.rel (%p126) target = $region24
        $region23: #{generator_forward.10} parent=19 // pred_region
          %s129 = sand.u32 %s56, 1
          %s130 = sand.u32 %s56, 1
          %s131 = smul.addr %s130, 208
          %s132 = scalar_lea.vmem [#allocation2], %s131
          %s133 = smul.u32 4, %s16
          %s134 = smul.addr %s133, 4
          %s135 = scalar_lea.vmem %s1, %s134
          // Predicated region
          $region25: #{generator_forward.10} parent=23 // pred_check
            _
          $region26: #{generator_forward.10} parent=23 // pred_check_branch
            %137 = sbr.rel (0) target = $region28
          $region27: #{generator_forward.10} parent=23 // pred_region
            // Predicated region
            $region29: #{generator_forward.10} parent=27 // pred_check
              _
            $region30: #{generator_forward.10} parent=27 // pred_check_branch
              %139 = sbr.rel (0) target = $region32
            $region31: #{generator_forward.10} parent=27 // pred_region
              loop: start=0, step=1, limit=1
              $region33: #{generator_forward.10} parent=31 // loop_pre_header
                _
              $region34: #{generator_forward.10} parent=31 // loop_header
                %s141 = sphi 0, %s145
                %p142 = scmp.ge.s32.totalorder %s141, 1
                %s146 = sphi %s135, %s135
                %s147 = sphi %s132, %s132
              $region35: #{generator_forward.10} parent=31 // loop_header_branch
                %144 = sbr.rel (%p142) target = $region39
              $region36: #{generator_forward.10} parent=31 // loop_body
                %v148 = vld [vmem:[%s146] sm:$0xff]
                %149 = vst [vmem:[%s147] sm:$0xff] %v148
                %v150 = vld [vmem:[%s146 + $0x8] sm:$0xff]
                %151 = vst [vmem:[%s147 + $0x8] sm:$0xff] %v150
                %v152 = vld [vmem:[%s146 + $0x100] sm:$0xff]
                %153 = vst [vmem:[%s147 + $0x10] sm:$0xff] %v152
                %v154 = vld [vmem:[%s146 + $0x108] sm:$0xff]
                %155 = vst [vmem:[%s147 + $0x18] sm:$0xff] %v154
                %v156 = vld [vmem:[%s146 + $0x200] sm:$0xff]
                %157 = vst [vmem:[%s147 + $0x20] sm:$0xff] %v156
                %v158 = vld [vmem:[%s146 + $0x208] sm:$0xff]
                %159 = vst [vmem:[%s147 + $0x28] sm:$0xff] %v158
                %v160 = vld [vmem:[%s146 + $0x300] sm:$0xff]
                %161 = vst [vmem:[%s147 + $0x30] sm:$0xff] %v160
                %v162 = vld [vmem:[%s146 + $0x308] sm:$0xff]
                %163 = vst [vmem:[%s147 + $0x38] sm:$0xff] %v162
                %v164 = vld [vmem:[%s146 + $0x400] sm:$0xff]
                %165 = vst [vmem:[%s147 + $0x40] sm:$0xff] %v164
                %v166 = vld [vmem:[%s146 + $0x408] sm:$0xff]
                %167 = vst [vmem:[%s147 + $0x48] sm:$0xff] %v166
                %v168 = vld [vmem:[%s146 + $0x500] sm:$0xff]
                %169 = vst [vmem:[%s147 + $0x50] sm:$0xff] %v168
                %v170 = vld [vmem:[%s146 + $0x508] sm:$0xff]
                %171 = vst [vmem:[%s147 + $0x58] sm:$0xff] %v170
                %v172 = vld [vmem:[%s146 + $0x600] sm:$0xff]
                %173 = vst [vmem:[%s147 + $0x60] sm:$0xff] %v172
                %v174 = vld [vmem:[%s146 + $0x608] sm:$0xff]
                %175 = vst [vmem:[%s147 + $0x68] sm:$0xff] %v174
                %v176 = vld [vmem:[%s146 + $0x700] sm:$0xff]
                %177 = vst [vmem:[%s147 + $0x70] sm:$0xff] %v176
                %v178 = vld [vmem:[%s146 + $0x708] sm:$0xff]
                %179 = vst [vmem:[%s147 + $0x78] sm:$0xff] %v178
                %v180 = vld [vmem:[%s146 + $0x800] sm:$0xff]
                %181 = vst [vmem:[%s147 + $0x80] sm:$0xff] %v180
                %v182 = vld [vmem:[%s146 + $0x808] sm:$0xff]
                %183 = vst [vmem:[%s147 + $0x88] sm:$0xff] %v182
                %v184 = vld [vmem:[%s146 + $0x900] sm:$0xff]
                %185 = vst [vmem:[%s147 + $0x90] sm:$0xff] %v184
                %v186 = vld [vmem:[%s146 + $0x908] sm:$0xff]
                %187 = vst [vmem:[%s147 + $0x98] sm:$0xff] %v186
                %v188 = vld [vmem:[%s146 + $0xa00] sm:$0xff]
                %189 = vst [vmem:[%s147 + $0xa0] sm:$0xff] %v188
                %v190 = vld [vmem:[%s146 + $0xa08] sm:$0xff]
                %191 = vst [vmem:[%s147 + $0xa8] sm:$0xff] %v190
                %v192 = vld [vmem:[%s146 + $0xb00] sm:$0xff]
                %193 = vst [vmem:[%s147 + $0xb0] sm:$0xff] %v192
                %v194 = vld [vmem:[%s146 + $0xb08] sm:$0xff]
                %195 = vst [vmem:[%s147 + $0xb8] sm:$0xff] %v194
                %v196 = vld [vmem:[%s146 + $0xc00] sm:$0xff]
                %197 = vst [vmem:[%s147 + $0xc0] sm:$0xff] %v196
                %v198 = vld [vmem:[%s146 + $0xc08] sm:$0xff]
                %199 = vst [vmem:[%s147 + $0xc8] sm:$0xff] %v198
              $region37: #{generator_forward.10} parent=31 // loop_footer
                %s145 = sadd.s32 1, %s141
              $region38: #{generator_forward.10} parent=31 // loop_footer_branch
                %140 = sbr.rel target = $region34
              $region39: #{generator_forward.10} parent=31 // loop_exit
                _
            $region32: #{generator_forward.10} parent=27 // pred_fallthru
              _
            // Predicated region
            $region40: #{generator_forward.10} parent=27 // pred_check
              _
            $region41: #{generator_forward.10} parent=27 // pred_check_branch
              %201 = sbr.rel target = $region43
            $region42: #{generator_forward.10} parent=27 // pred_region
              _
            $region43: #{generator_forward.10} parent=27 // pred_fallthru
              _
          $region28: #{generator_forward.10} parent=23 // pred_fallthru
            _
          %202 = vnop
        $region24: #{generator_forward.10} parent=19 // pred_fallthru
          _
      $region20: #{generator_forward.10} parent=5 // pred_fallthru
        _
      %p203 = scmp.le.s32.totalorder 1, %s8
      %p204 = scmp.lt.s32.totalorder %s8, 17
      %p205 = pnand %p203, %p204
      %p206 = pneg %p205
      // Predicated region
      $region44: #{generator_forward.10} parent=5 // pred_check
        _
      $region45: #{generator_forward.10} parent=5 // pred_check_branch
        %208 = sbr.rel (%p205) target = $region47
      $region46: #{generator_forward.10} parent=5 // pred_region
        %s209 = ssub.s32 %s8, 1
        %s210 = sand.u32 %s59, 1
        %s211 = sand.u32 %s59, 1
        %s212 = smul.addr %s211, 208
        %s213 = scalar_lea.vmem [#allocation2], %s212
        // Predicated region
        $region48: #{generator_forward.10} parent=46 // pred_check
          %p214 = pneg %p72
        $region49: #{generator_forward.10} parent=46 // pred_check_branch
          %216 = sbr.rel (%p214) target = $region51
        $region50: #{generator_forward.10} parent=46 // pred_region
          _
        $region51: #{generator_forward.10} parent=46 // pred_fallthru
          _
        %p217 = scmp.lt.s32.totalorder %s17, 0
        %s218 = scalar_select %p217, %s17, 0
        %s219 = smul.addr %s218, 2
        %s220 = scalar_lea.vmem %s0, %s219
        %p221 = pneg %p46
        %p222 = pneg %p43
        %s223 = sand.u32 %s59, 1
        %s224 = sand.u32 %s59, 1
        %s225 = smul.addr %s224, 208
        %s226 = scalar_lea.vmem [#allocation2], %s225
        %p227 = pneg %p72
        %p228 = pneg %p69
        %p229 = pneg %p100
        %p230 = pneg %p97
        %s231 = smul.u32 4, %s18
        %p232 = scmp.lt.s32.totalorder %s17, 0
        %s233 = scalar_select %p232, %s17, 0
        %p234 = scmp.lt.s32.totalorder %s231, 63
        %s235 = scalar_select %p234, %s231, 63
        %s236 = smul.addr %s233, 64
        %s237 = sadd.s32 %s235, %s236
        %s238 = smul.addr %s237, 2
        %s239 = scalar_lea.vmem %s2, %s238
        %p240 = scmp.lt.s32.totalorder %s17, 0
        %s241 = scalar_select %p240, %s17, 0
        %s242 = smul.addr %s241, 2
        %s243 = scalar_lea.vmem %s0, %s242
        %s244 = smul.u32 4, %s18
        %s245 = smul.u32 4, %s18
        %p246 = scmp.lt.s32.totalorder %s17, 0
        %s247 = scalar_select %p246, %s17, 0
        %p248 = scmp.lt.s32.totalorder %s245, 63
        %s249 = scalar_select %p248, %s245, 63
        %s250 = smul.addr %s247, 64
        %s251 = sadd.s32 %s249, %s250
        %s252 = smul.addr %s251, 2
        %s253 = scalar_lea.vmem %s2, %s252
        %s254 = smul.u32 4, %s18
        %v256 = vld [vmem:[%s243] sm:$0x3]
        %v257 = vpack.c.bf16 %v256, %v256
        %v258 = vld [vmem:[%s213] sm:$0xff]
        %v259 = vld [vmem:[%s213 + $0x8] sm:$0xff]
        %v260 = vld [vmem:[%s213 + $0x10] sm:$0xff]
        %v261 = vld [vmem:[%s213 + $0x18] sm:$0xff]
        %v262 = vld [vmem:[%s213 + $0x20] sm:$0xff]
        %v263 = vld [vmem:[%s213 + $0x28] sm:$0xff]
        %v264 = vld [vmem:[%s213 + $0x30] sm:$0xff]
        %v265 = vld [vmem:[%s213 + $0x38] sm:$0xff]
        %v266 = vld [vmem:[%s213 + $0x40] sm:$0xff]
        %v267 = vld [vmem:[%s213 + $0x48] sm:$0xff]
        %v268 = vld [vmem:[%s213 + $0x50] sm:$0xff]
        %v269 = vld [vmem:[%s213 + $0x58] sm:$0xff]
        %v270 = vld [vmem:[%s213 + $0x60] sm:$0xff]
        %v271 = vld [vmem:[%s213 + $0x68] sm:$0xff]
        %v272 = vld [vmem:[%s213 + $0x70] sm:$0xff]
        %v273 = vld [vmem:[%s213 + $0x78] sm:$0xff]
        %v274 = vld [vmem:[%s213 + $0x80] sm:$0xff]
        %v275 = vld [vmem:[%s213 + $0x88] sm:$0xff]
        %v276 = vld [vmem:[%s213 + $0x90] sm:$0xff]
        %v277 = vld [vmem:[%s213 + $0x98] sm:$0xff]
        %v278 = vld [vmem:[%s213 + $0xa0] sm:$0xff]
        %v279 = vld [vmem:[%s213 + $0xa8] sm:$0xff]
        %v280 = vld [vmem:[%s213 + $0xb0] sm:$0xff]
        %v281 = vld [vmem:[%s213 + $0xb8] sm:$0xff]
        %v282 = vld [vmem:[%s213 + $0xc0] sm:$0x33]
        %v283 = vld [vmem:[%s213 + $0xc8] sm:$0x33]
        %v310 = vunpack.c.l.b16 %v258
        %v311 = vunpack.c.h.b16 %v258
        %v312 = vunpack.c.l.b16 %v259
        %v313 = vunpack.c.h.b16 %v259
        %v314 = vunpack.c.l.b16 %v260
        %v315 = vunpack.c.h.b16 %v260
        %v316 = vunpack.c.l.b16 %v261
        %v317 = vunpack.c.h.b16 %v261
        %v318 = vunpack.c.l.b16 %v262
        %v319 = vunpack.c.h.b16 %v262
        %v320 = vunpack.c.l.b16 %v263
        %v321 = vunpack.c.h.b16 %v263
        %v322 = vunpack.c.l.b16 %v264
        %v323 = vunpack.c.h.b16 %v264
        %v324 = vunpack.c.l.b16 %v265
        %v325 = vunpack.c.h.b16 %v265
        %v326 = vunpack.c.l.b16 %v266
        %v327 = vunpack.c.h.b16 %v266
        %v328 = vunpack.c.l.b16 %v267
        %v329 = vunpack.c.h.b16 %v267
        %v330 = vunpack.c.l.b16 %v268
        %v331 = vunpack.c.h.b16 %v268
        %v332 = vunpack.c.l.b16 %v269
        %v333 = vunpack.c.h.b16 %v269
        %v334 = vunpack.c.l.b16 %v270
        %v335 = vunpack.c.h.b16 %v270
        %v336 = vunpack.c.l.b16 %v271
        %v337 = vunpack.c.h.b16 %v271
        %v338 = vunpack.c.l.b16 %v272
        %v339 = vunpack.c.h.b16 %v272
        %v340 = vunpack.c.l.b16 %v273
        %v341 = vunpack.c.h.b16 %v273
        %v342 = vunpack.c.l.b16 %v274
        %v343 = vunpack.c.h.b16 %v274
        %v344 = vunpack.c.l.b16 %v275
        %v345 = vunpack.c.h.b16 %v275
        %v346 = vunpack.c.l.b16 %v276
        %v347 = vunpack.c.h.b16 %v276
        %v348 = vunpack.c.l.b16 %v277
        %v349 = vunpack.c.h.b16 %v277
        %v350 = vunpack.c.l.b16 %v278
        %v351 = vunpack.c.h.b16 %v278
        %v352 = vunpack.c.l.b16 %v279
        %v353 = vunpack.c.h.b16 %v279
        %v354 = vunpack.c.l.b16 %v280
        %v355 = vunpack.c.h.b16 %v280
        %v356 = vunpack.c.l.b16 %v281
        %v357 = vunpack.c.h.b16 %v281
        %v358 = vunpack.c.l.b16 %v282
        %v359 = vunpack.c.h.b16 %v282
        %v360 = vunpack.c.l.b16 %v283
        %v361 = vunpack.c.h.b16 %v283
        %v362 = vpack.c.b16 %v314, %v310
        %v363 = vpack.c.b16 %v315, %v311
        %v364 = vpack.c.b16 %v316, %v312
        %v365 = vpack.c.b16 %v317, %v313
        %v366 = vpack.c.b16 %v322, %v318
        %v367 = vpack.c.b16 %v323, %v319
        %v368 = vpack.c.b16 %v324, %v320
        %v369 = vpack.c.b16 %v325, %v321
        %v370 = vpack.c.b16 %v330, %v326
        %v371 = vpack.c.b16 %v331, %v327
        %v372 = vpack.c.b16 %v332, %v328
        %v373 = vpack.c.b16 %v333, %v329
        %v374 = vpack.c.b16 %v338, %v334
        %v375 = vpack.c.b16 %v339, %v335
        %v376 = vpack.c.b16 %v340, %v336
        %v377 = vpack.c.b16 %v341, %v337
        %v378 = vpack.c.b16 %v346, %v342
        %v379 = vpack.c.b16 %v347, %v343
        %v380 = vpack.c.b16 %v348, %v344
        %v381 = vpack.c.b16 %v349, %v345
        %v382 = vpack.c.b16 %v354, %v350
        %v383 = vpack.c.b16 %v355, %v351
        %v384 = vpack.c.b16 %v356, %v352
        %v385 = vpack.c.b16 %v357, %v353
        %v386 = vpack.c.b16 %v358, %v358
        %v387 = vpack.c.b16 %v359, %v359
        %v388 = vpack.c.b16 %v360, %v360
        %v389 = vpack.c.b16 %v361, %v361
        %vm414 = vcmask 818176
        %v416 = vsel %vm414, %v257, 0
        %vm418 = vcmask 1041408
        %v420 = vsel %vm418, %v386, 0
        %v423 = vsel %vm418, %v387, 0
        %v426 = vsel %vm418, %v388, 0
        %v429 = vsel %vm418, %v389, 0
        %431 = vmatprep.subr.bf16.mxu0 0
        %432 = vmatpush1.bf16.msra.mxu0 0
        %433 = vmatprep.subr.bf16.mxu0 %v423
        %434 = vmatpush1.bf16.msra.mxu0 %v420
        %435 = vmatprep.subr.bf16.mxu0 %v383
        %436 = vmatpush1.bf16.msra.mxu0 %v382
        %437 = vmatprep.subr.bf16.mxu0 %v379
        %438 = vmatpush1.bf16.msra.mxu0 %v378
        %439 = vmatprep.subr.bf16.mxu0 %v375
        %440 = vmatpush1.bf16.msra.mxu0 %v374
        %441 = vmatprep.subr.bf16.mxu0 %v371
        %442 = vmatpush1.bf16.msra.mxu0 %v370
        %443 = vmatprep.subr.bf16.mxu0 %v367
        %444 = vmatpush1.bf16.msra.mxu0 %v366
        %445 = vmatprep.subr.bf16.mxu0 %v363
        %446 = vmatpush1.bf16.msra.mxu0 %v362
        %447 = vmatprep.subr.bf16.mxu0 0
        %448 = vmatpush2.bf16.msra.mxu0 0
        %449 = vmatprep.subr.bf16.mxu0 0
        %450 = vmatpush2.bf16.msra.mxu0 0
        %451 = vmatprep.subr.bf16.mxu0 0
        %452 = vmatpush2.bf16.msra.mxu0 0
        %453 = vmatprep.subr.bf16.mxu0 0
        %454 = vmatpush2.bf16.msra.mxu0 0
        %455 = vmatprep.subr.bf16.mxu0 0
        %456 = vmatpush2.bf16.msra.mxu0 0
        %457 = vmatprep.subr.bf16.mxu0 0
        %458 = vmatpush2.bf16.msra.mxu0 0
        %459 = vmatprep.subr.bf16.mxu0 0
        %460 = vmatpush2.bf16.msra.mxu0 0
        %461 = vmatprep.subr.bf16.mxu0 0
        %462 = vmatpush2.bf16.msra.mxu0 0
        %463 = vmatprep.mubr.bf16.mxu0 0
        %464 = vmatmul.mubr.bf16.gmra.mxu0 %v416
        %v465 = vpop.f32.mrf.mxu0
        %v466 = vadd.f32 0.0, %v465
        %v467 = vpop.f32.mrf.mxu0
        %v468 = vadd.f32 0.0, %v467
        %v469 = vpop.f32.mrf.mxu0
        %v470 = vpop.f32.mrf.mxu0
        %471 = vdwg.mxu0
        %472 = vmatprep.subr.bf16.mxu0 0
        %473 = vmatpush1.bf16.msra.mxu0 0
        %474 = vmatprep.subr.bf16.mxu0 %v429
        %475 = vmatpush1.bf16.msra.mxu0 %v426
        %476 = vmatprep.subr.bf16.mxu0 %v385
        %477 = vmatpush1.bf16.msra.mxu0 %v384
        %478 = vmatprep.subr.bf16.mxu0 %v381
        %479 = vmatpush1.bf16.msra.mxu0 %v380
        %480 = vmatprep.subr.bf16.mxu0 %v377
        %481 = vmatpush1.bf16.msra.mxu0 %v376
        %482 = vmatprep.subr.bf16.mxu0 %v373
        %483 = vmatpush1.bf16.msra.mxu0 %v372
        %484 = vmatprep.subr.bf16.mxu0 %v369
        %485 = vmatpush1.bf16.msra.mxu0 %v368
        %486 = vmatprep.subr.bf16.mxu0 %v365
        %487 = vmatpush1.bf16.msra.mxu0 %v364
        %488 = vmatprep.subr.bf16.mxu0 0
        %489 = vmatpush2.bf16.msra.mxu0 0
        %490 = vmatprep.subr.bf16.mxu0 0
        %491 = vmatpush2.bf16.msra.mxu0 0
        %492 = vmatprep.subr.bf16.mxu0 0
        %493 = vmatpush2.bf16.msra.mxu0 0
        %494 = vmatprep.subr.bf16.mxu0 0
        %495 = vmatpush2.bf16.msra.mxu0 0
        %496 = vmatprep.subr.bf16.mxu0 0
        %497 = vmatpush2.bf16.msra.mxu0 0
        %498 = vmatprep.subr.bf16.mxu0 0
        %499 = vmatpush2.bf16.msra.mxu0 0
        %500 = vmatprep.subr.bf16.mxu0 0
        %501 = vmatpush2.bf16.msra.mxu0 0
        %502 = vmatprep.subr.bf16.mxu0 0
        %503 = vmatpush2.bf16.msra.mxu0 0
        %504 = vmatprep.mubr.bf16.mxu0 0
        %505 = vmatmul.mubr.bf16.gmra.mxu0 %v416
        %v506 = vpop.f32.mrf.mxu0
        %v507 = vadd.f32 0.0, %v506
        %v508 = vpop.f32.mrf.mxu0
        %v509 = vadd.f32 0.0, %v508
        %v510 = vpop.f32.mrf.mxu0
        %v511 = vpop.f32.mrf.mxu0
        %512 = vdwg.mxu0
        %v517 = vcombine.low %v466, %v468
        %v518 = vcombine.low %v507, %v509
        %v520 = vunpack.c.l.s4 1983009808
        %v521 = vunpack.c.0.s8 %v520
        %v522 = vlaneseq
        %v523 = vshrl.u32 %v522, 7
        %v524 = vsub.s32 %v521, %v523
        %v525 = vrot.slane %v517, %v524
        %v527 = vunpack.c.l.s4 1983009808
        %v528 = vunpack.c.0.s8 %v527
        %v529 = vlaneseq
        %v530 = vshrl.u32 %v529, 7
        %v531 = vsub.s32 %v528, %v530
        %v532 = vrot.slane %v518, %v531
        %v533 = vcombine.low %v525, %v532
        %535 = vst [vmem:[%s253] sm:$0xff] %v533
        %s536 = smul.u32 4, %s18
        %p537 = scmp.lt.s32.totalorder %s17, 0
        %s538 = scalar_select %p537, %s17, 0
        %p539 = scmp.lt.s32.totalorder %s536, 63
        %s540 = scalar_select %p539, %s536, 63
        %s541 = smul.addr %s538, 64
        %s542 = sadd.s32 %s540, %s541
        %s543 = smul.addr %s542, 2
        %s544 = scalar_lea.vmem %s2, %s543
        // Predicated region
        $region52: #{generator_forward.10} parent=46 // pred_check
          %p545 = pneg %p97
        $region53: #{generator_forward.10} parent=46 // pred_check_branch
          %547 = sbr.rel (%p545) target = $region55
        $region54: #{generator_forward.10} parent=46 // pred_region
          %s548 = smul.u32 4, %s18
        $region55: #{generator_forward.10} parent=46 // pred_fallthru
          _
      $region47: #{generator_forward.10} parent=5 // pred_fallthru
        _
      %p549 = scmp.le.s32.totalorder 2, %s8
      // Predicated region
      $region56: #{generator_forward.10} parent=5 // pred_check
        %p550 = pneg %p549
      $region57: #{generator_forward.10} parent=5 // pred_check_branch
        %552 = sbr.rel (%p550) target = $region59
      $region58: #{generator_forward.10} parent=5 // pred_region
        %s553 = ssub.s32 %s8, 2
        // Predicated region
        $region60: #{generator_forward.10} parent=58 // pred_check
          %p554 = pneg %p103
        $region61: #{generator_forward.10} parent=58 // pred_check_branch
          %556 = sbr.rel (%p554) target = $region63
        $region62: #{generator_forward.10} parent=58 // pred_region
          %s557 = smul.u32 4, %s20
          %p558 = scmp.lt.s32.totalorder %s19, 0
          %s559 = scalar_select %p558, %s19, 0
          %p560 = scmp.lt.s32.totalorder %s557, 63
          %s561 = scalar_select %p560, %s557, 63
          %s562 = smul.addr %s559, 64
          %s563 = sadd.s32 %s561, %s562
          %s564 = smul.addr %s563, 2
          %s565 = scalar_lea.vmem %s2, %s564
        $region63: #{generator_forward.10} parent=58 // pred_fallthru
          _
      $region59: #{generator_forward.10} parent=5 // pred_fallthru
        _
    $region6: #{generator_forward.10} parent=1 // loop_footer
      %s12 = sadd.s32 1, %s8
    $region7: #{generator_forward.10} parent=1 // loop_footer_branch
      %7 = sbr.rel target = $region3
    $region8: #{generator_forward.10} parent=1 // loop_exit
      _

// kernel: generator_forward.11
$region0: #{generator_forward.11}
  #allocation0 [shape = 'u32[]', space=smem, size = 0x4, offset = 0x4, fixed_abs, tag = 'smem constant byte address 0x4 - core index']
  #allocation1 [shape = 'u32[144,128]{1,0:T(1,128)}', space=vmem, size = 0x12000, scoped, tag = 'internal scratch']
  %s0 = inlined_call_operand.vmem [shape: f32[32,512], index: 0, kind: input, shape index: {}]
  %s1 = inlined_call_operand.vmem [shape: f32[1,512], index: 1, kind: output, shape index: {0}]
  %s2 = inlined_call_operand.vmem [shape: f32[1,512], index: 2, kind: output, shape index: {1}]
  %3 = xla_tuple %s1, %s2
  %s4 = sld [smem:[#allocation0]]
  $region26: #{generator_forward.11} parent=0
    _
  %s6 = ssub.s32 1, %s4
  %s7 = scalar_select 0, %s6, %s4
  // Predicated region
  $region2: #{generator_forward.11} parent=0 // pred_check
    _
  $region3: #{generator_forward.11} parent=0 // pred_check_branch
    %9 = sbr.rel (0) target = $region5
  $region4: #{generator_forward.11} parent=0 // pred_region
    _
  $region5: #{generator_forward.11} parent=0 // pred_fallthru
    _
  %p10 = scmp.eq.s32.totalorder 0, 0
  // Predicated region
  $region6: #{generator_forward.11} parent=0 // pred_check
    %p11 = pneg %p10
  $region7: #{generator_forward.11} parent=0 // pred_check_branch
    %13 = sbr.rel (%p11) target = $region9
  $region8: #{generator_forward.11} parent=0 // pred_region
    %v14 = vlaneseq
    %vm15 = vcmp.ge.s32.totalorder %v14, 0
    %vm16 = vcmp.lt.s32.totalorder %v14, 512
    %vm17 = vmand %vm15, %vm16
    %18 = vst.msk [vmem:[%s1] sm:$0xf] %vm17, 0.0
    %19 = vst.msk [vmem:[%s2] sm:$0xf] %vm17, 0.0
  $region9: #{generator_forward.11} parent=0 // pred_fallthru
    _
  %v20 = vld [vmem:[%s0] sm:$0xff]
  %v21 = vld [vmem:[%s0 + $0x8] sm:$0xff]
  %v22 = vld [vmem:[%s0 + $0x10] sm:$0xff]
  %v23 = vld [vmem:[%s0 + $0x18] sm:$0xff]
  %v24 = vld [vmem:[%s0 + $0x20] sm:$0xff]
  %v25 = vld [vmem:[%s0 + $0x28] sm:$0xff]
  %v26 = vld [vmem:[%s0 + $0x30] sm:$0xff]
  %v27 = vld [vmem:[%s0 + $0x38] sm:$0xff]
  %v28 = vld [vmem:[%s0 + $0x40] sm:$0xff]
  %v29 = vld [vmem:[%s0 + $0x48] sm:$0xff]
  %v30 = vld [vmem:[%s0 + $0x50] sm:$0xff]
  %v31 = vld [vmem:[%s0 + $0x58] sm:$0xff]
  %v32 = vld [vmem:[%s0 + $0x60] sm:$0xff]
  %v33 = vld [vmem:[%s0 + $0x68] sm:$0xff]
  %v34 = vld [vmem:[%s0 + $0x70] sm:$0xff]
  %v35 = vld [vmem:[%s0 + $0x78] sm:$0xff]
  %v36 = vld [vmem:[%s1] sm:$0xf]
  %v37 = vadd.f32 %v20, %v24
  %v38 = vadd.f32 %v37, %v28
  %v39 = vadd.f32 %v38, %v32
  %v40 = vrot.slane %v39, 4
  %v41 = vadd.f32 %v39, %v40
  %v42 = vrot.slane %v41, 2
  %v43 = vadd.f32 %v41, %v42
  %v44 = vrot.slane %v43, 1
  %v45 = vadd.f32 %v43, %v44
  %v46 = vadd.f32 %v21, %v25
  %v47 = vadd.f32 %v46, %v29
  %v48 = vadd.f32 %v47, %v33
  %v49 = vrot.slane %v48, 4
  %v50 = vadd.f32 %v48, %v49
  %v51 = vrot.slane %v50, 2
  %v52 = vadd.f32 %v50, %v51
  %v53 = vrot.slane %v52, 1
  %v54 = vadd.f32 %v52, %v53
  %v55 = vadd.f32 %v22, %v26
  %v56 = vadd.f32 %v55, %v30
  %v57 = vadd.f32 %v56, %v34
  %v58 = vrot.slane %v57, 4
  %v59 = vadd.f32 %v57, %v58
  %v60 = vrot.slane %v59, 2
  %v61 = vadd.f32 %v59, %v60
  %v62 = vrot.slane %v61, 1
  %v63 = vadd.f32 %v61, %v62
  %v64 = vadd.f32 %v23, %v27
  %v65 = vadd.f32 %v64, %v31
  %v66 = vadd.f32 %v65, %v35
  %v67 = vrot.slane %v66, 4
  %v68 = vadd.f32 %v66, %v67
  %v69 = vrot.slane %v68, 2
  %v70 = vadd.f32 %v68, %v69
  %v71 = vrot.slane %v70, 1
  %v72 = vadd.f32 %v70, %v71
  %v77 = vcombine.low %v45, %v54
  %v78 = vcombine.low %v63, %v72
  %v80 = vunpack.c.l.s4 1966171168
  %v81 = vunpack.c.0.s8 %v80
  %v82 = vlaneseq
  %v83 = vshrl.u32 %v82, 7
  %v84 = vsub.s32 %v81, %v83
  %v85 = vrot.slane %v77, %v84
  %v87 = vunpack.c.l.s4 1966171168
  %v88 = vunpack.c.0.s8 %v87
  %v89 = vlaneseq
  %v90 = vshrl.u32 %v89, 7
  %v91 = vsub.s32 %v88, %v90
  %v92 = vrot.slane %v78, %v91
  %v93 = vcombine.low %v85, %v92
  %v95 = vunpack.c.l.s4 1966171168
  %v96 = vunpack.c.0.s8 %v95
  %v97 = vlaneseq
  %v98 = vshrl.u32 %v97, 7
  %v99 = vsub.s32 %v96, %v98
  %v100 = vrot.slane %v93, %v99
  %v102 = vadd.f32 %v36, %v100
  %v103 = vlaneseq
  %vm104 = vcmp.ge.s32.totalorder %v103, 0
  %vm105 = vcmp.lt.s32.totalorder %v103, 512
  %vm106 = vmand %vm104, %vm105
  %107 = vst.msk [vmem:[%s1] sm:$0xf] %vm106, %v102
  %v108 = vld [vmem:[%s2] sm:$0xf]
  %v109 = vmul.f32 %v20, %v20
  %v110 = vmul.f32 %v21, %v21
  %v111 = vmul.f32 %v22, %v22
  %v112 = vmul.f32 %v23, %v23
  %v113 = vmul.f32 %v24, %v24
  %v114 = vmul.f32 %v25, %v25
  %v115 = vmul.f32 %v26, %v26
  %v116 = vmul.f32 %v27, %v27
  %v117 = vmul.f32 %v28, %v28
  %v118 = vmul.f32 %v29, %v29
  %v119 = vmul.f32 %v30, %v30
  %v120 = vmul.f32 %v31, %v31
  %v121 = vmul.f32 %v32, %v32
  %v122 = vmul.f32 %v33, %v33
  %v123 = vmul.f32 %v34, %v34
  %v124 = vmul.f32 %v35, %v35
  %v125 = vadd.f32 %v109, %v113
  %v126 = vadd.f32 %v125, %v117
  %v127 = vadd.f32 %v126, %v121
  %v128 = vrot.slane %v127, 4
  %v129 = vadd.f32 %v127, %v128
  %v130 = vrot.slane %v129, 2
  %v131 = vadd.f32 %v129, %v130
  %v132 = vrot.slane %v131, 1
  %v133 = vadd.f32 %v131, %v132
  %v134 = vadd.f32 %v110, %v114
  %v135 = vadd.f32 %v134, %v118
  %v136 = vadd.f32 %v135, %v122
  %v137 = vrot.slane %v136, 4
  %v138 = vadd.f32 %v136, %v137
  %v139 = vrot.slane %v138, 2
  %v140 = vadd.f32 %v138, %v139
  %v141 = vrot.slane %v140, 1
  %v142 = vadd.f32 %v140, %v141
  %v143 = vadd.f32 %v111, %v115
  %v144 = vadd.f32 %v143, %v119
  %v145 = vadd.f32 %v144, %v123
  %v146 = vrot.slane %v145, 4
  %v147 = vadd.f32 %v145, %v146
  %v148 = vrot.slane %v147, 2
  %v149 = vadd.f32 %v147, %v148
  %v150 = vrot.slane %v149, 1
  %v151 = vadd.f32 %v149, %v150
  %v152 = vadd.f32 %v112, %v116
  %v153 = vadd.f32 %v152, %v120
  %v154 = vadd.f32 %v153, %v124
  %v155 = vrot.slane %v154, 4
  %v156 = vadd.f32 %v154, %v155
  %v157 = vrot.slane %v156, 2
  %v158 = vadd.f32 %v156, %v157
  %v159 = vrot.slane %v158, 1
  %v160 = vadd.f32 %v158, %v159
  %v165 = vcombine.low %v133, %v142
  %v166 = vcombine.low %v151, %v160
  %v168 = vunpack.c.l.s4 1966171168
  %v169 = vunpack.c.0.s8 %v168
  %v170 = vlaneseq
  %v171 = vshrl.u32 %v170, 7
  %v172 = vsub.s32 %v169, %v171
  %v173 = vrot.slane %v165, %v172
  %v175 = vunpack.c.l.s4 1966171168
  %v176 = vunpack.c.0.s8 %v175
  %v177 = vlaneseq
  %v178 = vshrl.u32 %v177, 7
  %v179 = vsub.s32 %v176, %v178
  %v180 = vrot.slane %v166, %v179
  %v181 = vcombine.low %v173, %v180
  %v183 = vunpack.c.l.s4 1966171168
  %v184 = vunpack.c.0.s8 %v183
  %v185 = vlaneseq
  %v186 = vshrl.u32 %v185, 7
  %v187 = vsub.s32 %v184, %v186
  %v188 = vrot.slane %v181, %v187
  %v190 = vadd.f32 %v108, %v188
  %191 = vst.msk [vmem:[%s2] sm:$0xf] %vm106, %v190
  // Predicated region
  $region10: #{generator_forward.11} parent=0 // pred_check
    _
  $region11: #{generator_forward.11} parent=0 // pred_check_branch
    %193 = sbr.rel (0) target = $region13
  $region12: #{generator_forward.11} parent=0 // pred_region
    _
  $region13: #{generator_forward.11} parent=0 // pred_fallthru
    _
  // Predicated region
  $region14: #{generator_forward.11} parent=0 // pred_check
    _
  $region15: #{generator_forward.11} parent=0 // pred_check_branch
    %195 = sbr.rel (0) target = $region17
  $region16: #{generator_forward.11} parent=0 // pred_region
    _
  $region17: #{generator_forward.11} parent=0 // pred_fallthru
    _
  // Predicated region
  $region18: #{generator_forward.11} parent=0 // pred_check
    _
  $region19: #{generator_forward.11} parent=0 // pred_check_branch
    %197 = sbr.rel (0) target = $region21
  $region20: #{generator_forward.11} parent=0 // pred_region
    _
  $region21: #{generator_forward.11} parent=0 // pred_fallthru
    _
  // Predicated region
  $region22: #{generator_forward.11} parent=0 // pred_check
    _
  $region23: #{generator_forward.11} parent=0 // pred_check_branch
    %199 = sbr.rel (0) target = $region25
  $region24: #{generator_forward.11} parent=0 // pred_region
    _
  $region25: #{generator_forward.11} parent=0 // pred_fallthru
    _

// kernel: generator_forward.12
$region0: #{generator_forward.12}
  #allocation0 [shape = 'u32[]', space=smem, size = 0x4, offset = 0x4, fixed_abs, tag = 'smem constant byte address 0x4 - core index']
  #allocation1 [shape = 'u32[144,128]{1,0:T(1,128)}', space=vmem, size = 0x12000, scoped, tag = 'internal scratch']
  %s0 = inlined_call_operand.vmem [shape: f32[32,512], index: 0, kind: input, shape index: {}]
  %s1 = inlined_call_operand.vmem [shape: f32[1,512], index: 1, kind: input, shape index: {}]
  %s2 = inlined_call_operand.vmem [shape: f32[1,512], index: 2, kind: input, shape index: {}]
  %s3 = inlined_call_operand.vmem [shape: bf16[512,4096], index: 3, kind: input, shape index: {}]
  %s4 = inlined_call_operand.vmem [shape: f32[32,4096], index: 4, kind: output, shape index: {}]
  %s5 = sld [smem:[#allocation0]]
  $region91: #{generator_forward.12} parent=0
    _
  %s7 = ssub.s32 1, %s5
  %s8 = scalar_select 0, %s7, %s5
  $region1: #{generator_forward.12} parent=0
    #allocation2 [shape = 'u8[1048576]{0}', space=vmem, size = 0x100000, scoped, tag = 'input window, operand 3']
    #allocation3 [shape = 'u8[131072]{0}', space=vmem, size = 0x20000, scoped, tag = 'output window, operand 0']
    loop: start=0, step=1, limit=10
    $region2: #{generator_forward.12} parent=1 // loop_pre_header
      _
    $region3: #{generator_forward.12} parent=1 // loop_header
      %s10 = sphi 0, %s14
      %p11 = scmp.ge.s32.totalorder %s10, 10
      %s17 = sphi 0, %s29
      %s18 = sphi 0, %s25
      %s19 = sphi 0, %s17
      %s20 = sphi 0, %s18
      %s21 = sphi 0, %s19
      %s22 = sphi 0, %s20
      %s32 = sphi 0, %s34
      %s35 = sphi 0, %s32
      %s36 = sphi 0, %s35
      %s52 = sphi 0, %s36
      %s56 = sphi 0, %s56
      %s58 = sphi 0, %s56
      %s59 = sphi 0, %s58
      %s73 = sphi 0, %s59
      %s77 = sphi 0, %s77
      %s79 = sphi 0, %s77
      %s80 = sphi 0, %s79
      %s94 = sphi 0, %s80
      %s100 = sphi 0, %s102
      %s103 = sphi 0, %s100
      %s104 = sphi 0, %s103
      %s120 = sphi 0, %s104
      %s128 = sphi 0, %s130
      %s131 = sphi 0, %s128
      %s132 = sphi 0, %s131
      %s148 = sphi 0, %s132
    $region4: #{generator_forward.12} parent=1 // loop_header_branch
      %13 = sbr.rel (%p11) target = $region8
    $region5: #{generator_forward.12} parent=1 // loop_body
      %s15 = ssub.s32 %s10, 1
      %s16 = ssub.s32 %s10, 2
      %s23 = sadd.s32 1, %s18
      %p24 = scmp.ge.s32.totalorder %s23, 8
      %s25 = scalar_select %p24, 0, %s23
      %s26 = sadd.s32 1, %s17
      %s27 = scalar_select %p24, %s26, %s17
      %p28 = scmp.ge.s32.totalorder %s27, 1
      %s29 = scalar_select %p28, 0, %s27
      %s30 = ssub.s32 %s17, %s29
      %p31 = scmp.eq.s32.totalorder %s30, 0
      %s33 = sadd.s32 %s32, 1
      %s34 = scalar_select %p31, %s32, %s33
      %p37 = pneg %p31
      %p38 = scmp.eq.s32.totalorder %s10, 7
      %p39 = por %p37, %p38
      %p40 = scmp.ne.s32.totalorder %s32, %s35
      %p41 = scmp.eq.s32.totalorder %s10, 0
      %p42 = por %p40, %p41
      %p43 = scmp.ne.s32.totalorder %s32, %s35
      %p44 = scmp.eq.s32.totalorder %s15, 7
      %p45 = por %p43, %p44
      %p46 = scmp.ne.s32.totalorder %s35, %s36
      %p47 = scmp.eq.s32.totalorder %s15, 0
      %p48 = por %p46, %p47
      %p49 = scmp.ne.s32.totalorder %s35, %s36
      %p50 = scmp.eq.s32.totalorder %s16, 7
      %p51 = por %p49, %p50
      %p53 = scmp.ne.s32.totalorder %s36, %s52
      %p54 = scmp.eq.s32.totalorder %s16, 0
      %p55 = por %p53, %p54
      %s57 = sadd.s32 %s56, 1
      %p60 = scmp.eq.s32.totalorder %s10, 7
      %p61 = scmp.ne.s32.totalorder %s56, %s58
      %p62 = scmp.eq.s32.totalorder %s10, 0
      %p63 = por %p61, %p62
      %p64 = scmp.ne.s32.totalorder %s56, %s58
      %p65 = scmp.eq.s32.totalorder %s15, 7
      %p66 = por %p64, %p65
      %p67 = scmp.ne.s32.totalorder %s58, %s59
      %p68 = scmp.eq.s32.totalorder %s15, 0
      %p69 = por %p67, %p68
      %p70 = scmp.ne.s32.totalorder %s58, %s59
      %p71 = scmp.eq.s32.totalorder %s16, 7
      %p72 = por %p70, %p71
      %p74 = scmp.ne.s32.totalorder %s59, %s73
      %p75 = scmp.eq.s32.totalorder %s16, 0
      %p76 = por %p74, %p75
      %s78 = sadd.s32 %s77, 1
      %p81 = scmp.eq.s32.totalorder %s10, 7
      %p82 = scmp.ne.s32.totalorder %s77, %s79
      %p83 = scmp.eq.s32.totalorder %s10, 0
      %p84 = por %p82, %p83
      %p85 = scmp.ne.s32.totalorder %s77, %s79
      %p86 = scmp.eq.s32.totalorder %s15, 7
      %p87 = por %p85, %p86
      %p88 = scmp.ne.s32.totalorder %s79, %s80
      %p89 = scmp.eq.s32.totalorder %s15, 0
      %p90 = por %p88, %p89
      %p91 = scmp.ne.s32.totalorder %s79, %s80
      %p92 = scmp.eq.s32.totalorder %s16, 7
      %p93 = por %p91, %p92
      %p95 = scmp.ne.s32.totalorder %s80, %s94
      %p96 = scmp.eq.s32.totalorder %s16, 0
      %p97 = por %p95, %p96
      %s98 = ssub.s32 %s18, %s25
      %p99 = scmp.eq.s32.totalorder %s98, 0
      %s101 = sadd.s32 %s100, 1
      %s102 = scalar_select %p99, %s100, %s101
      %p105 = pneg %p99
      %p106 = scmp.eq.s32.totalorder %s10, 7
      %p107 = por %p105, %p106
      %p108 = scmp.ne.s32.totalorder %s100, %s103
      %p109 = scmp.eq.s32.totalorder %s10, 0
      %p110 = por %p108, %p109
      %p111 = scmp.ne.s32.totalorder %s100, %s103
      %p112 = scmp.eq.s32.totalorder %s15, 7
      %p113 = por %p111, %p112
      %p114 = scmp.ne.s32.totalorder %s103, %s104
      %p115 = scmp.eq.s32.totalorder %s15, 0
      %p116 = por %p114, %p115
      %p117 = scmp.ne.s32.totalorder %s103, %s104
      %p118 = scmp.eq.s32.totalorder %s16, 7
      %p119 = por %p117, %p118
      %p121 = scmp.ne.s32.totalorder %s104, %s120
      %p122 = scmp.eq.s32.totalorder %s16, 0
      %p123 = por %p121, %p122
      %s124 = ssub.s32 %s17, %s29
      %s125 = ssub.s32 %s18, %s25
      %s126 = sor.u32 %s124, %s125
      %p127 = scmp.eq.s32.totalorder %s126, 0
      %s129 = sadd.s32 %s128, 1
      %s130 = scalar_select %p127, %s128, %s129
      %p133 = pneg %p127
      %p134 = scmp.eq.s32.totalorder %s10, 7
      %p135 = por %p133, %p134
      %p136 = scmp.ne.s32.totalorder %s128, %s131
      %p137 = scmp.eq.s32.totalorder %s10, 0
      %p138 = por %p136, %p137
      %p139 = scmp.ne.s32.totalorder %s128, %s131
      %p140 = scmp.eq.s32.totalorder %s15, 7
      %p141 = por %p139, %p140
      %p142 = scmp.ne.s32.totalorder %s131, %s132
      %p143 = scmp.eq.s32.totalorder %s15, 0
      %p144 = por %p142, %p143
      %p145 = scmp.ne.s32.totalorder %s131, %s132
      %p146 = scmp.eq.s32.totalorder %s16, 7
      %p147 = por %p145, %p146
      %p149 = scmp.ne.s32.totalorder %s132, %s148
      %p150 = scmp.eq.s32.totalorder %s16, 0
      %p151 = por %p149, %p150
      %p152 = scmp.le.s32.totalorder 1, %s10
      %p153 = scmp.lt.s32.totalorder %s10, 9
      %p154 = pnand %p152, %p153
      %p155 = pneg %p154
      // Predicated region
      $region9: #{generator_forward.12} parent=5 // pred_check
        _
      $region10: #{generator_forward.12} parent=5 // pred_check_branch
        %157 = sbr.rel (%p154) target = $region12
      $region11: #{generator_forward.12} parent=5 // pred_region
        %s158 = ssub.s32 %s10, 1
        // Predicated region
        $region13: #{generator_forward.12} parent=11 // pred_check
          %p159 = pneg %p48
        $region14: #{generator_forward.12} parent=11 // pred_check_branch
          %161 = sbr.rel (%p159) target = $region16
        $region15: #{generator_forward.12} parent=11 // pred_region
          %s162 = smul.u32 4, %s19
          %p163 = scmp.lt.s32.totalorder %s162, 3
          %s164 = scalar_select %p163, %s162, 3
          %s165 = smul.addr %s164, 4
          %s166 = smul.addr %s165, 8
          %s167 = scalar_lea.vmem %s0, %s166
          %s168 = smul.u32 4, %s19
        $region16: #{generator_forward.12} parent=11 // pred_fallthru
          _
        // Predicated region
        $region17: #{generator_forward.12} parent=11 // pred_check
          %p169 = pneg %p69
        $region18: #{generator_forward.12} parent=11 // pred_check_branch
          %171 = sbr.rel (%p169) target = $region20
        $region19: #{generator_forward.12} parent=11 // pred_region
          _
        $region20: #{generator_forward.12} parent=11 // pred_fallthru
          _
        // Predicated region
        $region21: #{generator_forward.12} parent=11 // pred_check
          %p172 = pneg %p90
        $region22: #{generator_forward.12} parent=11 // pred_check_branch
          %174 = sbr.rel (%p172) target = $region24
        $region23: #{generator_forward.12} parent=11 // pred_region
          _
        $region24: #{generator_forward.12} parent=11 // pred_fallthru
          _
      $region12: #{generator_forward.12} parent=5 // pred_fallthru
        _
      %p175 = scmp.lt.s32.totalorder %s10, 8
      // Predicated region
      $region25: #{generator_forward.12} parent=5 // pred_check
        %p176 = pneg %p175
      $region26: #{generator_forward.12} parent=5 // pred_check_branch
        %178 = sbr.rel (%p176) target = $region28
      $region27: #{generator_forward.12} parent=5 // pred_region
        // Predicated region
        $region29: #{generator_forward.12} parent=27 // pred_check
          %p179 = pneg %p110
        $region30: #{generator_forward.12} parent=27 // pred_check_branch
          %181 = sbr.rel (%p179) target = $region32
        $region31: #{generator_forward.12} parent=27 // pred_region
          %s182 = sand.u32 %s100, 1
          %s183 = sand.u32 %s100, 1
          %s184 = smul.addr %s183, 1024
          %s185 = scalar_lea.vmem [#allocation2], %s184
          %s186 = smul.u32 4, %s18
          %s187 = smul.addr %s186, 4
          %s188 = scalar_lea.vmem %s3, %s187
          // Predicated region
          $region33: #{generator_forward.12} parent=31 // pred_check
            _
          $region34: #{generator_forward.12} parent=31 // pred_check_branch
            %190 = sbr.rel (0) target = $region36
          $region35: #{generator_forward.12} parent=31 // pred_region
            // Predicated region
            $region37: #{generator_forward.12} parent=35 // pred_check
              _
            $region38: #{generator_forward.12} parent=35 // pred_check_branch
              %192 = sbr.rel (0) target = $region40
            $region39: #{generator_forward.12} parent=35 // pred_region
              loop: start=0, step=1, limit=1
              $region41: #{generator_forward.12} parent=39 // loop_pre_header
                _
              $region42: #{generator_forward.12} parent=39 // loop_header
                %s194 = sphi 0, %s198
                %p195 = scmp.ge.s32.totalorder %s194, 1
                %s199 = sphi %s188, %s188
                %s200 = sphi %s185, %s185
              $region43: #{generator_forward.12} parent=39 // loop_header_branch
                %197 = sbr.rel (%p195) target = $region47
              $region44: #{generator_forward.12} parent=39 // loop_body
                %v201 = vld [vmem:[%s199] sm:$0xff]
                %202 = vst [vmem:[%s200] sm:$0xff] %v201
                %v203 = vld [vmem:[%s199 + $0x8] sm:$0xff]
                %204 = vst [vmem:[%s200 + $0x8] sm:$0xff] %v203
                %v205 = vld [vmem:[%s199 + $0x80] sm:$0xff]
                %206 = vst [vmem:[%s200 + $0x10] sm:$0xff] %v205
                %v207 = vld [vmem:[%s199 + $0x88] sm:$0xff]
                %208 = vst [vmem:[%s200 + $0x18] sm:$0xff] %v207
                %v209 = vld [vmem:[%s199 + $0x100] sm:$0xff]
                %210 = vst [vmem:[%s200 + $0x20] sm:$0xff] %v209
                %v211 = vld [vmem:[%s199 + $0x108] sm:$0xff]
                %212 = vst [vmem:[%s200 + $0x28] sm:$0xff] %v211
                %v213 = vld [vmem:[%s199 + $0x180] sm:$0xff]
                %214 = vst [vmem:[%s200 + $0x30] sm:$0xff] %v213
                %v215 = vld [vmem:[%s199 + $0x188] sm:$0xff]
                %216 = vst [vmem:[%s200 + $0x38] sm:$0xff] %v215
                %v217 = vld [vmem:[%s199 + $0x200] sm:$0xff]
                %218 = vst [vmem:[%s200 + $0x40] sm:$0xff] %v217
                %v219 = vld [vmem:[%s199 + $0x208] sm:$0xff]
                %220 = vst [vmem:[%s200 + $0x48] sm:$0xff] %v219
                %v221 = vld [vmem:[%s199 + $0x280] sm:$0xff]
                %222 = vst [vmem:[%s200 + $0x50] sm:$0xff] %v221
                %v223 = vld [vmem:[%s199 + $0x288] sm:$0xff]
                %224 = vst [vmem:[%s200 + $0x58] sm:$0xff] %v223
                %v225 = vld [vmem:[%s199 + $0x300] sm:$0xff]
                %226 = vst [vmem:[%s200 + $0x60] sm:$0xff] %v225
                %v227 = vld [vmem:[%s199 + $0x308] sm:$0xff]
                %228 = vst [vmem:[%s200 + $0x68] sm:$0xff] %v227
                %v229 = vld [vmem:[%s199 + $0x380] sm:$0xff]
                %230 = vst [vmem:[%s200 + $0x70] sm:$0xff] %v229
                %v231 = vld [vmem:[%s199 + $0x388] sm:$0xff]
                %232 = vst [vmem:[%s200 + $0x78] sm:$0xff] %v231
                %v233 = vld [vmem:[%s199 + $0x400] sm:$0xff]
                %234 = vst [vmem:[%s200 + $0x80] sm:$0xff] %v233
                %v235 = vld [vmem:[%s199 + $0x408] sm:$0xff]
                %236 = vst [vmem:[%s200 + $0x88] sm:$0xff] %v235
                %v237 = vld [vmem:[%s199 + $0x480] sm:$0xff]
                %238 = vst [vmem:[%s200 + $0x90] sm:$0xff] %v237
                %v239 = vld [vmem:[%s199 + $0x488] sm:$0xff]
                %240 = vst [vmem:[%s200 + $0x98] sm:$0xff] %v239
                %v241 = vld [vmem:[%s199 + $0x500] sm:$0xff]
                %242 = vst [vmem:[%s200 + $0xa0] sm:$0xff] %v241
                %v243 = vld [vmem:[%s199 + $0x508] sm:$0xff]
                %244 = vst [vmem:[%s200 + $0xa8] sm:$0xff] %v243
                %v245 = vld [vmem:[%s199 + $0x580] sm:$0xff]
                %246 = vst [vmem:[%s200 + $0xb0] sm:$0xff] %v245
                %v247 = vld [vmem:[%s199 + $0x588] sm:$0xff]
                %248 = vst [vmem:[%s200 + $0xb8] sm:$0xff] %v247
                %v249 = vld [vmem:[%s199 + $0x600] sm:$0xff]
                %250 = vst [vmem:[%s200 + $0xc0] sm:$0xff] %v249
                %v251 = vld [vmem:[%s199 + $0x608] sm:$0xff]
                %252 = vst [vmem:[%s200 + $0xc8] sm:$0xff] %v251
                %v253 = vld [vmem:[%s199 + $0x680] sm:$0xff]
                %254 = vst [vmem:[%s200 + $0xd0] sm:$0xff] %v253
                %v255 = vld [vmem:[%s199 + $0x688] sm:$0xff]
                %256 = vst [vmem:[%s200 + $0xd8] sm:$0xff] %v255
                %v257 = vld [vmem:[%s199 + $0x700] sm:$0xff]
                %258 = vst [vmem:[%s200 + $0xe0] sm:$0xff] %v257
                %v259 = vld [vmem:[%s199 + $0x708] sm:$0xff]
                %260 = vst [vmem:[%s200 + $0xe8] sm:$0xff] %v259
                %v261 = vld [vmem:[%s199 + $0x780] sm:$0xff]
                %262 = vst [vmem:[%s200 + $0xf0] sm:$0xff] %v261
                %v263 = vld [vmem:[%s199 + $0x788] sm:$0xff]
                %264 = vst [vmem:[%s200 + $0xf8] sm:$0xff] %v263
                %v265 = vld [vmem:[%s199 + $0x800] sm:$0xff]
                %266 = vst [vmem:[%s200 + $0x100] sm:$0xff] %v265
                %v267 = vld [vmem:[%s199 + $0x808] sm:$0xff]
                %268 = vst [vmem:[%s200 + $0x108] sm:$0xff] %v267
                %v269 = vld [vmem:[%s199 + $0x880] sm:$0xff]
                %270 = vst [vmem:[%s200 + $0x110] sm:$0xff] %v269
                %v271 = vld [vmem:[%s199 + $0x888] sm:$0xff]
                %272 = vst [vmem:[%s200 + $0x118] sm:$0xff] %v271
                %v273 = vld [vmem:[%s199 + $0x900] sm:$0xff]
                %274 = vst [vmem:[%s200 + $0x120] sm:$0xff] %v273
                %v275 = vld [vmem:[%s199 + $0x908] sm:$0xff]
                %276 = vst [vmem:[%s200 + $0x128] sm:$0xff] %v275
                %v277 = vld [vmem:[%s199 + $0x980] sm:$0xff]
                %278 = vst [vmem:[%s200 + $0x130] sm:$0xff] %v277
                %v279 = vld [vmem:[%s199 + $0x988] sm:$0xff]
                %280 = vst [vmem:[%s200 + $0x138] sm:$0xff] %v279
                %v281 = vld [vmem:[%s199 + $0xa00] sm:$0xff]
                %282 = vst [vmem:[%s200 + $0x140] sm:$0xff] %v281
                %v283 = vld [vmem:[%s199 + $0xa08] sm:$0xff]
                %284 = vst [vmem:[%s200 + $0x148] sm:$0xff] %v283
                %v285 = vld [vmem:[%s199 + $0xa80] sm:$0xff]
                %286 = vst [vmem:[%s200 + $0x150] sm:$0xff] %v285
                %v287 = vld [vmem:[%s199 + $0xa88] sm:$0xff]
                %288 = vst [vmem:[%s200 + $0x158] sm:$0xff] %v287
                %v289 = vld [vmem:[%s199 + $0xb00] sm:$0xff]
                %290 = vst [vmem:[%s200 + $0x160] sm:$0xff] %v289
                %v291 = vld [vmem:[%s199 + $0xb08] sm:$0xff]
                %292 = vst [vmem:[%s200 + $0x168] sm:$0xff] %v291
                %v293 = vld [vmem:[%s199 + $0xb80] sm:$0xff]
                %294 = vst [vmem:[%s200 + $0x170] sm:$0xff] %v293
                %v295 = vld [vmem:[%s199 + $0xb88] sm:$0xff]
                %296 = vst [vmem:[%s200 + $0x178] sm:$0xff] %v295
                %v297 = vld [vmem:[%s199 + $0xc00] sm:$0xff]
                %298 = vst [vmem:[%s200 + $0x180] sm:$0xff] %v297
                %v299 = vld [vmem:[%s199 + $0xc08] sm:$0xff]
                %300 = vst [vmem:[%s200 + $0x188] sm:$0xff] %v299
                %v301 = vld [vmem:[%s199 + $0xc80] sm:$0xff]
                %302 = vst [vmem:[%s200 + $0x190] sm:$0xff] %v301
                %v303 = vld [vmem:[%s199 + $0xc88] sm:$0xff]
                %304 = vst [vmem:[%s200 + $0x198] sm:$0xff] %v303
                %v305 = vld [vmem:[%s199 + $0xd00] sm:$0xff]
                %306 = vst [vmem:[%s200 + $0x1a0] sm:$0xff] %v305
                %v307 = vld [vmem:[%s199 + $0xd08] sm:$0xff]
                %308 = vst [vmem:[%s200 + $0x1a8] sm:$0xff] %v307
                %v309 = vld [vmem:[%s199 + $0xd80] sm:$0xff]
                %310 = vst [vmem:[%s200 + $0x1b0] sm:$0xff] %v309
                %v311 = vld [vmem:[%s199 + $0xd88] sm:$0xff]
                %312 = vst [vmem:[%s200 + $0x1b8] sm:$0xff] %v311
                %v313 = vld [vmem:[%s199 + $0xe00] sm:$0xff]
                %314 = vst [vmem:[%s200 + $0x1c0] sm:$0xff] %v313
                %v315 = vld [vmem:[%s199 + $0xe08] sm:$0xff]
                %316 = vst [vmem:[%s200 + $0x1c8] sm:$0xff] %v315
                %v317 = vld [vmem:[%s199 + $0xe80] sm:$0xff]
                %318 = vst [vmem:[%s200 + $0x1d0] sm:$0xff] %v317
                %v319 = vld [vmem:[%s199 + $0xe88] sm:$0xff]
                %320 = vst [vmem:[%s200 + $0x1d8] sm:$0xff] %v319
                %v321 = vld [vmem:[%s199 + $0xf00] sm:$0xff]
                %322 = vst [vmem:[%s200 + $0x1e0] sm:$0xff] %v321
                %v323 = vld [vmem:[%s199 + $0xf08] sm:$0xff]
                %324 = vst [vmem:[%s200 + $0x1e8] sm:$0xff] %v323
                %v325 = vld [vmem:[%s199 + $0xf80] sm:$0xff]
                %326 = vst [vmem:[%s200 + $0x1f0] sm:$0xff] %v325
                %v327 = vld [vmem:[%s199 + $0xf88] sm:$0xff]
                %328 = vst [vmem:[%s200 + $0x1f8] sm:$0xff] %v327
                %v329 = vld [vmem:[%s199 + $0x1000] sm:$0xff]
                %330 = vst [vmem:[%s200 + $0x200] sm:$0xff] %v329
                %v331 = vld [vmem:[%s199 + $0x1008] sm:$0xff]
                %332 = vst [vmem:[%s200 + $0x208] sm:$0xff] %v331
                %v333 = vld [vmem:[%s199 + $0x1080] sm:$0xff]
                %334 = vst [vmem:[%s200 + $0x210] sm:$0xff] %v333
                %v335 = vld [vmem:[%s199 + $0x1088] sm:$0xff]
                %336 = vst [vmem:[%s200 + $0x218] sm:$0xff] %v335
                %v337 = vld [vmem:[%s199 + $0x1100] sm:$0xff]
                %338 = vst [vmem:[%s200 + $0x220] sm:$0xff] %v337
                %v339 = vld [vmem:[%s199 + $0x1108] sm:$0xff]
                %340 = vst [vmem:[%s200 + $0x228] sm:$0xff] %v339
                %v341 = vld [vmem:[%s199 + $0x1180] sm:$0xff]
                %342 = vst [vmem:[%s200 + $0x230] sm:$0xff] %v341
                %v343 = vld [vmem:[%s199 + $0x1188] sm:$0xff]
                %344 = vst [vmem:[%s200 + $0x238] sm:$0xff] %v343
                %v345 = vld [vmem:[%s199 + $0x1200] sm:$0xff]
                %346 = vst [vmem:[%s200 + $0x240] sm:$0xff] %v345
                %v347 = vld [vmem:[%s199 + $0x1208] sm:$0xff]
                %348 = vst [vmem:[%s200 + $0x248] sm:$0xff] %v347
                %v349 = vld [vmem:[%s199 + $0x1280] sm:$0xff]
                %350 = vst [vmem:[%s200 + $0x250] sm:$0xff] %v349
                %v351 = vld [vmem:[%s199 + $0x1288] sm:$0xff]
                %352 = vst [vmem:[%s200 + $0x258] sm:$0xff] %v351
                %v353 = vld [vmem:[%s199 + $0x1300] sm:$0xff]
                %354 = vst [vmem:[%s200 + $0x260] sm:$0xff] %v353
                %v355 = vld [vmem:[%s199 + $0x1308] sm:$0xff]
                %356 = vst [vmem:[%s200 + $0x268] sm:$0xff] %v355
                %v357 = vld [vmem:[%s199 + $0x1380] sm:$0xff]
                %358 = vst [vmem:[%s200 + $0x270] sm:$0xff] %v357
                %v359 = vld [vmem:[%s199 + $0x1388] sm:$0xff]
                %360 = vst [vmem:[%s200 + $0x278] sm:$0xff] %v359
                %v361 = vld [vmem:[%s199 + $0x1400] sm:$0xff]
                %362 = vst [vmem:[%s200 + $0x280] sm:$0xff] %v361
                %v363 = vld [vmem:[%s199 + $0x1408] sm:$0xff]
                %364 = vst [vmem:[%s200 + $0x288] sm:$0xff] %v363
                %v365 = vld [vmem:[%s199 + $0x1480] sm:$0xff]
                %366 = vst [vmem:[%s200 + $0x290] sm:$0xff] %v365
                %v367 = vld [vmem:[%s199 + $0x1488] sm:$0xff]
                %368 = vst [vmem:[%s200 + $0x298] sm:$0xff] %v367
                %v369 = vld [vmem:[%s199 + $0x1500] sm:$0xff]
                %370 = vst [vmem:[%s200 + $0x2a0] sm:$0xff] %v369
                %v371 = vld [vmem:[%s199 + $0x1508] sm:$0xff]
                %372 = vst [vmem:[%s200 + $0x2a8] sm:$0xff] %v371
                %v373 = vld [vmem:[%s199 + $0x1580] sm:$0xff]
                %374 = vst [vmem:[%s200 + $0x2b0] sm:$0xff] %v373
                %v375 = vld [vmem:[%s199 + $0x1588] sm:$0xff]
                %376 = vst [vmem:[%s200 + $0x2b8] sm:$0xff] %v375
                %v377 = vld [vmem:[%s199 + $0x1600] sm:$0xff]
                %378 = vst [vmem:[%s200 + $0x2c0] sm:$0xff] %v377
                %v379 = vld [vmem:[%s199 + $0x1608] sm:$0xff]
                %380 = vst [vmem:[%s200 + $0x2c8] sm:$0xff] %v379
                %v381 = vld [vmem:[%s199 + $0x1680] sm:$0xff]
                %382 = vst [vmem:[%s200 + $0x2d0] sm:$0xff] %v381
                %v383 = vld [vmem:[%s199 + $0x1688] sm:$0xff]
                %384 = vst [vmem:[%s200 + $0x2d8] sm:$0xff] %v383
                %v385 = vld [vmem:[%s199 + $0x1700] sm:$0xff]
                %386 = vst [vmem:[%s200 + $0x2e0] sm:$0xff] %v385
                %v387 = vld [vmem:[%s199 + $0x1708] sm:$0xff]
                %388 = vst [vmem:[%s200 + $0x2e8] sm:$0xff] %v387
                %v389 = vld [vmem:[%s199 + $0x1780] sm:$0xff]
                %390 = vst [vmem:[%s200 + $0x2f0] sm:$0xff] %v389
                %v391 = vld [vmem:[%s199 + $0x1788] sm:$0xff]
                %392 = vst [vmem:[%s200 + $0x2f8] sm:$0xff] %v391
                %v393 = vld [vmem:[%s199 + $0x1800] sm:$0xff]
                %394 = vst [vmem:[%s200 + $0x300] sm:$0xff] %v393
                %v395 = vld [vmem:[%s199 + $0x1808] sm:$0xff]
                %396 = vst [vmem:[%s200 + $0x308] sm:$0xff] %v395
                %v397 = vld [vmem:[%s199 + $0x1880] sm:$0xff]
                %398 = vst [vmem:[%s200 + $0x310] sm:$0xff] %v397
                %v399 = vld [vmem:[%s199 + $0x1888] sm:$0xff]
                %400 = vst [vmem:[%s200 + $0x318] sm:$0xff] %v399
                %v401 = vld [vmem:[%s199 + $0x1900] sm:$0xff]
                %402 = vst [vmem:[%s200 + $0x320] sm:$0xff] %v401
                %v403 = vld [vmem:[%s199 + $0x1908] sm:$0xff]
                %404 = vst [vmem:[%s200 + $0x328] sm:$0xff] %v403
                %v405 = vld [vmem:[%s199 + $0x1980] sm:$0xff]
                %406 = vst [vmem:[%s200 + $0x330] sm:$0xff] %v405
                %v407 = vld [vmem:[%s199 + $0x1988] sm:$0xff]
                %408 = vst [vmem:[%s200 + $0x338] sm:$0xff] %v407
                %v409 = vld [vmem:[%s199 + $0x1a00] sm:$0xff]
                %410 = vst [vmem:[%s200 + $0x340] sm:$0xff] %v409
                %v411 = vld [vmem:[%s199 + $0x1a08] sm:$0xff]
                %412 = vst [vmem:[%s200 + $0x348] sm:$0xff] %v411
                %v413 = vld [vmem:[%s199 + $0x1a80] sm:$0xff]
                %414 = vst [vmem:[%s200 + $0x350] sm:$0xff] %v413
                %v415 = vld [vmem:[%s199 + $0x1a88] sm:$0xff]
                %416 = vst [vmem:[%s200 + $0x358] sm:$0xff] %v415
                %v417 = vld [vmem:[%s199 + $0x1b00] sm:$0xff]
                %418 = vst [vmem:[%s200 + $0x360] sm:$0xff] %v417
                %v419 = vld [vmem:[%s199 + $0x1b08] sm:$0xff]
                %420 = vst [vmem:[%s200 + $0x368] sm:$0xff] %v419
                %v421 = vld [vmem:[%s199 + $0x1b80] sm:$0xff]
                %422 = vst [vmem:[%s200 + $0x370] sm:$0xff] %v421
                %v423 = vld [vmem:[%s199 + $0x1b88] sm:$0xff]
                %424 = vst [vmem:[%s200 + $0x378] sm:$0xff] %v423
                %v425 = vld [vmem:[%s199 + $0x1c00] sm:$0xff]
                %426 = vst [vmem:[%s200 + $0x380] sm:$0xff] %v425
                %v427 = vld [vmem:[%s199 + $0x1c08] sm:$0xff]
                %428 = vst [vmem:[%s200 + $0x388] sm:$0xff] %v427
                %v429 = vld [vmem:[%s199 + $0x1c80] sm:$0xff]
                %430 = vst [vmem:[%s200 + $0x390] sm:$0xff] %v429
                %v431 = vld [vmem:[%s199 + $0x1c88] sm:$0xff]
                %432 = vst [vmem:[%s200 + $0x398] sm:$0xff] %v431
                %v433 = vld [vmem:[%s199 + $0x1d00] sm:$0xff]
                %434 = vst [vmem:[%s200 + $0x3a0] sm:$0xff] %v433
                %v435 = vld [vmem:[%s199 + $0x1d08] sm:$0xff]
                %436 = vst [vmem:[%s200 + $0x3a8] sm:$0xff] %v435
                %v437 = vld [vmem:[%s199 + $0x1d80] sm:$0xff]
                %438 = vst [vmem:[%s200 + $0x3b0] sm:$0xff] %v437
                %v439 = vld [vmem:[%s199 + $0x1d88] sm:$0xff]
                %440 = vst [vmem:[%s200 + $0x3b8] sm:$0xff] %v439
                %v441 = vld [vmem:[%s199 + $0x1e00] sm:$0xff]
                %442 = vst [vmem:[%s200 + $0x3c0] sm:$0xff] %v441
                %v443 = vld [vmem:[%s199 + $0x1e08] sm:$0xff]
                %444 = vst [vmem:[%s200 + $0x3c8] sm:$0xff] %v443
                %v445 = vld [vmem:[%s199 + $0x1e80] sm:$0xff]
                %446 = vst [vmem:[%s200 + $0x3d0] sm:$0xff] %v445
                %v447 = vld [vmem:[%s199 + $0x1e88] sm:$0xff]
                %448 = vst [vmem:[%s200 + $0x3d8] sm:$0xff] %v447
                %v449 = vld [vmem:[%s199 + $0x1f00] sm:$0xff]
                %450 = vst [vmem:[%s200 + $0x3e0] sm:$0xff] %v449
                %v451 = vld [vmem:[%s199 + $0x1f08] sm:$0xff]
                %452 = vst [vmem:[%s200 + $0x3e8] sm:$0xff] %v451
                %v453 = vld [vmem:[%s199 + $0x1f80] sm:$0xff]
                %454 = vst [vmem:[%s200 + $0x3f0] sm:$0xff] %v453
                %v455 = vld [vmem:[%s199 + $0x1f88] sm:$0xff]
                %456 = vst [vmem:[%s200 + $0x3f8] sm:$0xff] %v455
              $region45: #{generator_forward.12} parent=39 // loop_footer
                %s198 = sadd.s32 1, %s194
              $region46: #{generator_forward.12} parent=39 // loop_footer_branch
                %193 = sbr.rel target = $region42
              $region47: #{generator_forward.12} parent=39 // loop_exit
                _
            $region40: #{generator_forward.12} parent=35 // pred_fallthru
              _
            // Predicated region
            $region48: #{generator_forward.12} parent=35 // pred_check
              _
            $region49: #{generator_forward.12} parent=35 // pred_check_branch
              %458 = sbr.rel target = $region51
            $region50: #{generator_forward.12} parent=35 // pred_region
              _
            $region51: #{generator_forward.12} parent=35 // pred_fallthru
              _
          $region36: #{generator_forward.12} parent=31 // pred_fallthru
            _
          %459 = vnop
        $region32: #{generator_forward.12} parent=27 // pred_fallthru
          _
      $region28: #{generator_forward.12} parent=5 // pred_fallthru
        _
      %p460 = scmp.le.s32.totalorder 1, %s10
      %p461 = scmp.lt.s32.totalorder %s10, 9
      %p462 = pnand %p460, %p461
      %p463 = pneg %p462
      // Predicated region
      $region52: #{generator_forward.12} parent=5 // pred_check
        _
      $region53: #{generator_forward.12} parent=5 // pred_check_branch
        %465 = sbr.rel (%p462) target = $region55
      $region54: #{generator_forward.12} parent=5 // pred_region
        %s466 = ssub.s32 %s10, 1
        %s467 = sand.u32 %s103, 1
        %s468 = sand.u32 %s103, 1
        %s469 = smul.addr %s468, 1024
        %s470 = scalar_lea.vmem [#allocation2], %s469
        // Predicated region
        $region56: #{generator_forward.12} parent=54 // pred_check
          %p471 = pneg %p116
        $region57: #{generator_forward.12} parent=54 // pred_check_branch
          %473 = sbr.rel (%p471) target = $region59
        $region58: #{generator_forward.12} parent=54 // pred_region
          _
        $region59: #{generator_forward.12} parent=54 // pred_fallthru
          _
        %s474 = smul.u32 4, %s19
        %p475 = scmp.lt.s32.totalorder %s474, 3
        %s476 = scalar_select %p475, %s474, 3
        %s477 = smul.addr %s476, 4
        %s478 = smul.addr %s477, 8
        %s479 = scalar_lea.vmem %s0, %s478
        %p480 = pneg %p48
        %p481 = pneg %p45
        %p482 = pneg %p69
        %p483 = pneg %p66
        %p484 = pneg %p90
        %p485 = pneg %p87
        %s486 = sand.u32 %s103, 1
        %s487 = sand.u32 %s103, 1
        %s488 = smul.addr %s487, 1024
        %s489 = scalar_lea.vmem [#allocation2], %s488
        %p490 = pneg %p116
        %p491 = pneg %p113
        %p492 = pneg %p144
        %p493 = pneg %p141
        %s494 = sand.u32 %s131, 1
        %s495 = sand.u32 %s131, 1
        %s496 = smul.addr %s495, 128
        %s497 = scalar_lea.vmem [#allocation3], %s496
        %s498 = smul.u32 4, %s19
        %p499 = scmp.lt.s32.totalorder %s498, 3
        %s500 = scalar_select %p499, %s498, 3
        %s501 = smul.addr %s500, 4
        %s502 = smul.addr %s501, 8
        %s503 = scalar_lea.vmem %s0, %s502
        %s504 = smul.u32 4, %s19
        %s505 = smul.u32 4, %s20
        %s506 = smul.u32 4, %s19
        %s507 = smul.u32 4, %s20
        %v508 = vld [vmem:[%s503] sm:$0xff]
        %v509 = vld [vmem:[%s503 + $0x8] sm:$0xff]
        %v510 = vld [vmem:[%s503 + $0x10] sm:$0xff]
        %v511 = vld [vmem:[%s503 + $0x18] sm:$0xff]
        %v512 = vld [vmem:[%s503 + $0x20] sm:$0xff]
        %v513 = vld [vmem:[%s503 + $0x28] sm:$0xff]
        %v514 = vld [vmem:[%s503 + $0x30] sm:$0xff]
        %v515 = vld [vmem:[%s503 + $0x38] sm:$0xff]
        %v516 = vld [vmem:[%s503 + $0x40] sm:$0xff]
        %v517 = vld [vmem:[%s503 + $0x48] sm:$0xff]
        %v518 = vld [vmem:[%s503 + $0x50] sm:$0xff]
        %v519 = vld [vmem:[%s503 + $0x58] sm:$0xff]
        %v520 = vld [vmem:[%s503 + $0x60] sm:$0xff]
        %v521 = vld [vmem:[%s503 + $0x68] sm:$0xff]
        %v522 = vld [vmem:[%s503 + $0x70] sm:$0xff]
        %v523 = vld [vmem:[%s503 + $0x78] sm:$0xff]
        %v524 = vld [vmem:[%s1] sm:$0xf]
        %v526 = vlaneseq
        %v527 = vshrl.u32 %v526, 7
        %v528 = vsub.s32 0, %v527
        %v529 = vrot.slane %v524, %v528
        %v530 = vlaneseq
        %v531 = vshrl.u32 %v530, 7
        %v532 = vsub.s32 1, %v531
        %v533 = vrot.slane %v524, %v532
        %v534 = vlaneseq
        %v535 = vshrl.u32 %v534, 7
        %v536 = vsub.s32 2, %v535
        %v537 = vrot.slane %v524, %v536
        %v538 = vlaneseq
        %v539 = vshrl.u32 %v538, 7
        %v540 = vsub.s32 3, %v539
        %v541 = vrot.slane %v524, %v540
        %v546 = vmul.f32 %v508, %v529
        %v547 = vmul.f32 %v509, %v533
        %v548 = vmul.f32 %v510, %v537
        %v549 = vmul.f32 %v511, %v541
        %v550 = vmul.f32 %v512, %v529
        %v551 = vmul.f32 %v513, %v533
        %v552 = vmul.f32 %v514, %v537
        %v553 = vmul.f32 %v515, %v541
        %v554 = vmul.f32 %v516, %v529
        %v555 = vmul.f32 %v517, %v533
        %v556 = vmul.f32 %v518, %v537
        %v557 = vmul.f32 %v519, %v541
        %v558 = vmul.f32 %v520, %v529
        %v559 = vmul.f32 %v521, %v533
        %v560 = vmul.f32 %v522, %v537
        %v561 = vmul.f32 %v523, %v541
        %v562 = vld [vmem:[%s2] sm:$0xf]
        %v564 = vlaneseq
        %v565 = vshrl.u32 %v564, 7
        %v566 = vsub.s32 0, %v565
        %v567 = vrot.slane %v562, %v566
        %v568 = vlaneseq
        %v569 = vshrl.u32 %v568, 7
        %v570 = vsub.s32 1, %v569
        %v571 = vrot.slane %v562, %v570
        %v572 = vlaneseq
        %v573 = vshrl.u32 %v572, 7
        %v574 = vsub.s32 2, %v573
        %v575 = vrot.slane %v562, %v574
        %v576 = vlaneseq
        %v577 = vshrl.u32 %v576, 7
        %v578 = vsub.s32 3, %v577
        %v579 = vrot.slane %v562, %v578
        %v584 = vadd.f32 %v546, %v567
        %v585 = vadd.f32 %v547, %v571
        %v586 = vadd.f32 %v548, %v575
        %v587 = vadd.f32 %v549, %v579
        %v588 = vadd.f32 %v550, %v567
        %v589 = vadd.f32 %v551, %v571
        %v590 = vadd.f32 %v552, %v575
        %v591 = vadd.f32 %v553, %v579
        %v592 = vadd.f32 %v554, %v567
        %v593 = vadd.f32 %v555, %v571
        %v594 = vadd.f32 %v556, %v575
        %v595 = vadd.f32 %v557, %v579
        %v596 = vadd.f32 %v558, %v567
        %v597 = vadd.f32 %v559, %v571
        %v598 = vadd.f32 %v560, %v575
        %v599 = vadd.f32 %v561, %v579
        %v600 = vmax.f32 %v584, 0.0
        %v601 = vmax.f32 %v585, 0.0
        %v602 = vmax.f32 %v586, 0.0
        %v603 = vmax.f32 %v587, 0.0
        %v604 = vmax.f32 %v588, 0.0
        %v605 = vmax.f32 %v589, 0.0
        %v606 = vmax.f32 %v590, 0.0
        %v607 = vmax.f32 %v591, 0.0
        %v608 = vmax.f32 %v592, 0.0
        %v609 = vmax.f32 %v593, 0.0
        %v610 = vmax.f32 %v594, 0.0
        %v611 = vmax.f32 %v595, 0.0
        %v612 = vmax.f32 %v596, 0.0
        %v613 = vmax.f32 %v597, 0.0
        %v614 = vmax.f32 %v598, 0.0
        %v615 = vmax.f32 %v599, 0.0
        %v616 = vpack.c.bf16 %v604, %v600
        %v617 = vpack.c.bf16 %v605, %v601
        %v618 = vpack.c.bf16 %v606, %v602
        %v619 = vpack.c.bf16 %v607, %v603
        %v620 = vpack.c.bf16 %v612, %v608
        %v621 = vpack.c.bf16 %v613, %v609
        %v622 = vpack.c.bf16 %v614, %v610
        %v623 = vpack.c.bf16 %v615, %v611
        %v624 = vld [vmem:[%s470] sm:$0xff]
        %v625 = vld [vmem:[%s470 + $0x8] sm:$0xff]
        %v626 = vld [vmem:[%s470 + $0x10] sm:$0xff]
        %v627 = vld [vmem:[%s470 + $0x18] sm:$0xff]
        %v628 = vld [vmem:[%s470 + $0x20] sm:$0xff]
        %v629 = vld [vmem:[%s470 + $0x28] sm:$0xff]
        %v630 = vld [vmem:[%s470 + $0x30] sm:$0xff]
        %v631 = vld [vmem:[%s470 + $0x38] sm:$0xff]
        %v632 = vld [vmem:[%s470 + $0x40] sm:$0xff]
        %v633 = vld [vmem:[%s470 + $0x48] sm:$0xff]
        %v634 = vld [vmem:[%s470 + $0x50] sm:$0xff]
        %v635 = vld [vmem:[%s470 + $0x58] sm:$0xff]
        %v636 = vld [vmem:[%s470 + $0x60] sm:$0xff]
        %v637 = vld [vmem:[%s470 + $0x68] sm:$0xff]
        %v638 = vld [vmem:[%s470 + $0x70] sm:$0xff]
        %v639 = vld [vmem:[%s470 + $0x78] sm:$0xff]
        %v640 = vld [vmem:[%s470 + $0x80] sm:$0xff]
        %v641 = vld [vmem:[%s470 + $0x88] sm:$0xff]
        %v642 = vld [vmem:[%s470 + $0x90] sm:$0xff]
        %v643 = vld [vmem:[%s470 + $0x98] sm:$0xff]
        %v644 = vld [vmem:[%s470 + $0xa0] sm:$0xff]
        %v645 = vld [vmem:[%s470 + $0xa8] sm:$0xff]
        %v646 = vld [vmem:[%s470 + $0xb0] sm:$0xff]
        %v647 = vld [vmem:[%s470 + $0xb8] sm:$0xff]
        %v648 = vld [vmem:[%s470 + $0xc0] sm:$0xff]
        %v649 = vld [vmem:[%s470 + $0xc8] sm:$0xff]
        %v650 = vld [vmem:[%s470 + $0xd0] sm:$0xff]
        %v651 = vld [vmem:[%s470 + $0xd8] sm:$0xff]
        %v652 = vld [vmem:[%s470 + $0xe0] sm:$0xff]
        %v653 = vld [vmem:[%s470 + $0xe8] sm:$0xff]
        %v654 = vld [vmem:[%s470 + $0xf0] sm:$0xff]
        %v655 = vld [vmem:[%s470 + $0xf8] sm:$0xff]
        %v656 = vld [vmem:[%s470 + $0x100] sm:$0xff]
        %v657 = vld [vmem:[%s470 + $0x108] sm:$0xff]
        %v658 = vld [vmem:[%s470 + $0x110] sm:$0xff]
        %v659 = vld [vmem:[%s470 + $0x118] sm:$0xff]
        %v660 = vld [vmem:[%s470 + $0x120] sm:$0xff]
        %v661 = vld [vmem:[%s470 + $0x128] sm:$0xff]
        %v662 = vld [vmem:[%s470 + $0x130] sm:$0xff]
        %v663 = vld [vmem:[%s470 + $0x138] sm:$0xff]
        %v664 = vld [vmem:[%s470 + $0x140] sm:$0xff]
        %v665 = vld [vmem:[%s470 + $0x148] sm:$0xff]
        %v666 = vld [vmem:[%s470 + $0x150] sm:$0xff]
        %v667 = vld [vmem:[%s470 + $0x158] sm:$0xff]
        %v668 = vld [vmem:[%s470 + $0x160] sm:$0xff]
        %v669 = vld [vmem:[%s470 + $0x168] sm:$0xff]
        %v670 = vld [vmem:[%s470 + $0x170] sm:$0xff]
        %v671 = vld [vmem:[%s470 + $0x178] sm:$0xff]
        %v672 = vld [vmem:[%s470 + $0x180] sm:$0xff]
        %v673 = vld [vmem:[%s470 + $0x188] sm:$0xff]
        %v674 = vld [vmem:[%s470 + $0x190] sm:$0xff]
        %v675 = vld [vmem:[%s470 + $0x198] sm:$0xff]
        %v676 = vld [vmem:[%s470 + $0x1a0] sm:$0xff]
        %v677 = vld [vmem:[%s470 + $0x1a8] sm:$0xff]
        %v678 = vld [vmem:[%s470 + $0x1b0] sm:$0xff]
        %v679 = vld [vmem:[%s470 + $0x1b8] sm:$0xff]
        %v680 = vld [vmem:[%s470 + $0x1c0] sm:$0xff]
        %v681 = vld [vmem:[%s470 + $0x1c8] sm:$0xff]
        %v682 = vld [vmem:[%s470 + $0x1d0] sm:$0xff]
        %v683 = vld [vmem:[%s470 + $0x1d8] sm:$0xff]
        %v684 = vld [vmem:[%s470 + $0x1e0] sm:$0xff]
        %v685 = vld [vmem:[%s470 + $0x1e8] sm:$0xff]
        %v686 = vld [vmem:[%s470 + $0x1f0] sm:$0xff]
        %v687 = vld [vmem:[%s470 + $0x1f8] sm:$0xff]
        %v688 = vld [vmem:[%s470 + $0x200] sm:$0xff]
        %v689 = vld [vmem:[%s470 + $0x208] sm:$0xff]
        %v690 = vld [vmem:[%s470 + $0x210] sm:$0xff]
        %v691 = vld [vmem:[%s470 + $0x218] sm:$0xff]
        %v692 = vld [vmem:[%s470 + $0x220] sm:$0xff]
        %v693 = vld [vmem:[%s470 + $0x228] sm:$0xff]
        %v694 = vld [vmem:[%s470 + $0x230] sm:$0xff]
        %v695 = vld [vmem:[%s470 + $0x238] sm:$0xff]
        %v696 = vld [vmem:[%s470 + $0x240] sm:$0xff]
        %v697 = vld [vmem:[%s470 + $0x248] sm:$0xff]
        %v698 = vld [vmem:[%s470 + $0x250] sm:$0xff]
        %v699 = vld [vmem:[%s470 + $0x258] sm:$0xff]
        %v700 = vld [vmem:[%s470 + $0x260] sm:$0xff]
        %v701 = vld [vmem:[%s470 + $0x268] sm:$0xff]
        %v702 = vld [vmem:[%s470 + $0x270] sm:$0xff]
        %v703 = vld [vmem:[%s470 + $0x278] sm:$0xff]
        %v704 = vld [vmem:[%s470 + $0x280] sm:$0xff]
        %v705 = vld [vmem:[%s470 + $0x288] sm:$0xff]
        %v706 = vld [vmem:[%s470 + $0x290] sm:$0xff]
        %v707 = vld [vmem:[%s470 + $0x298] sm:$0xff]
        %v708 = vld [vmem:[%s470 + $0x2a0] sm:$0xff]
        %v709 = vld [vmem:[%s470 + $0x2a8] sm:$0xff]
        %v710 = vld [vmem:[%s470 + $0x2b0] sm:$0xff]
        %v711 = vld [vmem:[%s470 + $0x2b8] sm:$0xff]
        %v712 = vld [vmem:[%s470 + $0x2c0] sm:$0xff]
        %v713 = vld [vmem:[%s470 + $0x2c8] sm:$0xff]
        %v714 = vld [vmem:[%s470 + $0x2d0] sm:$0xff]
        %v715 = vld [vmem:[%s470 + $0x2d8] sm:$0xff]
        %v716 = vld [vmem:[%s470 + $0x2e0] sm:$0xff]
        %v717 = vld [vmem:[%s470 + $0x2e8] sm:$0xff]
        %v718 = vld [vmem:[%s470 + $0x2f0] sm:$0xff]
        %v719 = vld [vmem:[%s470 + $0x2f8] sm:$0xff]
        %v720 = vld [vmem:[%s470 + $0x300] sm:$0xff]
        %v721 = vld [vmem:[%s470 + $0x308] sm:$0xff]
        %v722 = vld [vmem:[%s470 + $0x310] sm:$0xff]
        %v723 = vld [vmem:[%s470 + $0x318] sm:$0xff]
        %v724 = vld [vmem:[%s470 + $0x320] sm:$0xff]
        %v725 = vld [vmem:[%s470 + $0x328] sm:$0xff]
        %v726 = vld [vmem:[%s470 + $0x330] sm:$0xff]
        %v727 = vld [vmem:[%s470 + $0x338] sm:$0xff]
        %v728 = vld [vmem:[%s470 + $0x340] sm:$0xff]
        %v729 = vld [vmem:[%s470 + $0x348] sm:$0xff]
        %v730 = vld [vmem:[%s470 + $0x350] sm:$0xff]
        %v731 = vld [vmem:[%s470 + $0x358] sm:$0xff]
        %v732 = vld [vmem:[%s470 + $0x360] sm:$0xff]
        %v733 = vld [vmem:[%s470 + $0x368] sm:$0xff]
        %v734 = vld [vmem:[%s470 + $0x370] sm:$0xff]
        %v735 = vld [vmem:[%s470 + $0x378] sm:$0xff]
        %v736 = vld [vmem:[%s470 + $0x380] sm:$0xff]
        %v737 = vld [vmem:[%s470 + $0x388] sm:$0xff]
        %v738 = vld [vmem:[%s470 + $0x390] sm:$0xff]
        %v739 = vld [vmem:[%s470 + $0x398] sm:$0xff]
        %v740 = vld [vmem:[%s470 + $0x3a0] sm:$0xff]
        %v741 = vld [vmem:[%s470 + $0x3a8] sm:$0xff]
        %v742 = vld [vmem:[%s470 + $0x3b0] sm:$0xff]
        %v743 = vld [vmem:[%s470 + $0x3b8] sm:$0xff]
        %v744 = vld [vmem:[%s470 + $0x3c0] sm:$0xff]
        %v745 = vld [vmem:[%s470 + $0x3c8] sm:$0xff]
        %v746 = vld [vmem:[%s470 + $0x3d0] sm:$0xff]
        %v747 = vld [vmem:[%s470 + $0x3d8] sm:$0xff]
        %v748 = vld [vmem:[%s470 + $0x3e0] sm:$0xff]
        %v749 = vld [vmem:[%s470 + $0x3e8] sm:$0xff]
        %v750 = vld [vmem:[%s470 + $0x3f0] sm:$0xff]
        %v751 = vld [vmem:[%s470 + $0x3f8] sm:$0xff]
        %v880 = vunpack.c.l.b16 %v624
        %v881 = vunpack.c.h.b16 %v624
        %v882 = vunpack.c.l.b16 %v625
        %v883 = vunpack.c.h.b16 %v625
        %v884 = vunpack.c.l.b16 %v626
        %v885 = vunpack.c.h.b16 %v626
        %v886 = vunpack.c.l.b16 %v627
        %v887 = vunpack.c.h.b16 %v627
        %v888 = vunpack.c.l.b16 %v628
        %v889 = vunpack.c.h.b16 %v628
        %v890 = vunpack.c.l.b16 %v629
        %v891 = vunpack.c.h.b16 %v629
        %v892 = vunpack.c.l.b16 %v630
        %v893 = vunpack.c.h.b16 %v630
        %v894 = vunpack.c.l.b16 %v631
        %v895 = vunpack.c.h.b16 %v631
        %v896 = vunpack.c.l.b16 %v632
        %v897 = vunpack.c.h.b16 %v632
        %v898 = vunpack.c.l.b16 %v633
        %v899 = vunpack.c.h.b16 %v633
        %v900 = vunpack.c.l.b16 %v634
        %v901 = vunpack.c.h.b16 %v634
        %v902 = vunpack.c.l.b16 %v635
        %v903 = vunpack.c.h.b16 %v635
        %v904 = vunpack.c.l.b16 %v636
        %v905 = vunpack.c.h.b16 %v636
        %v906 = vunpack.c.l.b16 %v637
        %v907 = vunpack.c.h.b16 %v637
        %v908 = vunpack.c.l.b16 %v638
        %v909 = vunpack.c.h.b16 %v638
        %v910 = vunpack.c.l.b16 %v639
        %v911 = vunpack.c.h.b16 %v639
        %v912 = vunpack.c.l.b16 %v640
        %v913 = vunpack.c.h.b16 %v640
        %v914 = vunpack.c.l.b16 %v641
        %v915 = vunpack.c.h.b16 %v641
        %v916 = vunpack.c.l.b16 %v642
        %v917 = vunpack.c.h.b16 %v642
        %v918 = vunpack.c.l.b16 %v643
        %v919 = vunpack.c.h.b16 %v643
        %v920 = vunpack.c.l.b16 %v644
        %v921 = vunpack.c.h.b16 %v644
        %v922 = vunpack.c.l.b16 %v645
        %v923 = vunpack.c.h.b16 %v645
        %v924 = vunpack.c.l.b16 %v646
        %v925 = vunpack.c.h.b16 %v646
        %v926 = vunpack.c.l.b16 %v647
        %v927 = vunpack.c.h.b16 %v647
        %v928 = vunpack.c.l.b16 %v648
        %v929 = vunpack.c.h.b16 %v648
        %v930 = vunpack.c.l.b16 %v649
        %v931 = vunpack.c.h.b16 %v649
        %v932 = vunpack.c.l.b16 %v650
        %v933 = vunpack.c.h.b16 %v650
        %v934 = vunpack.c.l.b16 %v651
        %v935 = vunpack.c.h.b16 %v651
        %v936 = vunpack.c.l.b16 %v652
        %v937 = vunpack.c.h.b16 %v652
        %v938 = vunpack.c.l.b16 %v653
        %v939 = vunpack.c.h.b16 %v653
        %v940 = vunpack.c.l.b16 %v654
        %v941 = vunpack.c.h.b16 %v654
        %v942 = vunpack.c.l.b16 %v655
        %v943 = vunpack.c.h.b16 %v655
        %v944 = vunpack.c.l.b16 %v656
        %v945 = vunpack.c.h.b16 %v656
        %v946 = vunpack.c.l.b16 %v657
        %v947 = vunpack.c.h.b16 %v657
        %v948 = vunpack.c.l.b16 %v658
        %v949 = vunpack.c.h.b16 %v658
        %v950 = vunpack.c.l.b16 %v659
        %v951 = vunpack.c.h.b16 %v659
        %v952 = vunpack.c.l.b16 %v660
        %v953 = vunpack.c.h.b16 %v660
        %v954 = vunpack.c.l.b16 %v661
        %v955 = vunpack.c.h.b16 %v661
        %v956 = vunpack.c.l.b16 %v662
        %v957 = vunpack.c.h.b16 %v662
        %v958 = vunpack.c.l.b16 %v663
        %v959 = vunpack.c.h.b16 %v663
        %v960 = vunpack.c.l.b16 %v664
        %v961 = vunpack.c.h.b16 %v664
        %v962 = vunpack.c.l.b16 %v665
        %v963 = vunpack.c.h.b16 %v665
        %v964 = vunpack.c.l.b16 %v666
        %v965 = vunpack.c.h.b16 %v666
        %v966 = vunpack.c.l.b16 %v667
        %v967 = vunpack.c.h.b16 %v667
        %v968 = vunpack.c.l.b16 %v668
        %v969 = vunpack.c.h.b16 %v668
        %v970 = vunpack.c.l.b16 %v669
        %v971 = vunpack.c.h.b16 %v669
        %v972 = vunpack.c.l.b16 %v670
        %v973 = vunpack.c.h.b16 %v670
        %v974 = vunpack.c.l.b16 %v671
        %v975 = vunpack.c.h.b16 %v671
        %v976 = vunpack.c.l.b16 %v672
        %v977 = vunpack.c.h.b16 %v672
        %v978 = vunpack.c.l.b16 %v673
        %v979 = vunpack.c.h.b16 %v673
        %v980 = vunpack.c.l.b16 %v674
        %v981 = vunpack.c.h.b16 %v674
        %v982 = vunpack.c.l.b16 %v675
        %v983 = vunpack.c.h.b16 %v675
        %v984 = vunpack.c.l.b16 %v676
        %v985 = vunpack.c.h.b16 %v676
        %v986 = vunpack.c.l.b16 %v677
        %v987 = vunpack.c.h.b16 %v677
        %v988 = vunpack.c.l.b16 %v678
        %v989 = vunpack.c.h.b16 %v678
        %v990 = vunpack.c.l.b16 %v679
        %v991 = vunpack.c.h.b16 %v679
        %v992 = vunpack.c.l.b16 %v680
        %v993 = vunpack.c.h.b16 %v680
        %v994 = vunpack.c.l.b16 %v681
        %v995 = vunpack.c.h.b16 %v681
        %v996 = vunpack.c.l.b16 %v682
        %v997 = vunpack.c.h.b16 %v682
        %v998 = vunpack.c.l.b16 %v683
        %v999 = vunpack.c.h.b16 %v683
        %v1000 = vunpack.c.l.b16 %v684
        %v1001 = vunpack.c.h.b16 %v684
        %v1002 = vunpack.c.l.b16 %v685
        %v1003 = vunpack.c.h.b16 %v685
        %v1004 = vunpack.c.l.b16 %v686
        %v1005 = vunpack.c.h.b16 %v686
        %v1006 = vunpack.c.l.b16 %v687
        %v1007 = vunpack.c.h.b16 %v687
        %v1008 = vunpack.c.l.b16 %v688
        %v1009 = vunpack.c.h.b16 %v688
        %v1010 = vunpack.c.l.b16 %v689
        %v1011 = vunpack.c.h.b16 %v689
        %v1012 = vunpack.c.l.b16 %v690
        %v1013 = vunpack.c.h.b16 %v690
        %v1014 = vunpack.c.l.b16 %v691
        %v1015 = vunpack.c.h.b16 %v691
        %v1016 = vunpack.c.l.b16 %v692
        %v1017 = vunpack.c.h.b16 %v692
        %v1018 = vunpack.c.l.b16 %v693
        %v1019 = vunpack.c.h.b16 %v693
        %v1020 = vunpack.c.l.b16 %v694
        %v1021 = vunpack.c.h.b16 %v694
        %v1022 = vunpack.c.l.b16 %v695
        %v1023 = vunpack.c.h.b16 %v695
        %v1024 = vunpack.c.l.b16 %v696
        %v1025 = vunpack.c.h.b16 %v696
        %v1026 = vunpack.c.l.b16 %v697
        %v1027 = vunpack.c.h.b16 %v697
        %v1028 = vunpack.c.l.b16 %v698
        %v1029 = vunpack.c.h.b16 %v698
        %v1030 = vunpack.c.l.b16 %v699
        %v1031 = vunpack.c.h.b16 %v699
        %v1032 = vunpack.c.l.b16 %v700
        %v1033 = vunpack.c.h.b16 %v700
        %v1034 = vunpack.c.l.b16 %v701
        %v1035 = vunpack.c.h.b16 %v701
        %v1036 = vunpack.c.l.b16 %v702
        %v1037 = vunpack.c.h.b16 %v702
        %v1038 = vunpack.c.l.b16 %v703
        %v1039 = vunpack.c.h.b16 %v703
        %v1040 = vunpack.c.l.b16 %v704
        %v1041 = vunpack.c.h.b16 %v704
        %v1042 = vunpack.c.l.b16 %v705
        %v1043 = vunpack.c.h.b16 %v705
        %v1044 = vunpack.c.l.b16 %v706
        %v1045 = vunpack.c.h.b16 %v706
        %v1046 = vunpack.c.l.b16 %v707
        %v1047 = vunpack.c.h.b16 %v707
        %v1048 = vunpack.c.l.b16 %v708
        %v1049 = vunpack.c.h.b16 %v708
        %v1050 = vunpack.c.l.b16 %v709
        %v1051 = vunpack.c.h.b16 %v709
        %v1052 = vunpack.c.l.b16 %v710
        %v1053 = vunpack.c.h.b16 %v710
        %v1054 = vunpack.c.l.b16 %v711
        %v1055 = vunpack.c.h.b16 %v711
        %v1056 = vunpack.c.l.b16 %v712
        %v1057 = vunpack.c.h.b16 %v712
        %v1058 = vunpack.c.l.b16 %v713
        %v1059 = vunpack.c.h.b16 %v713
        %v1060 = vunpack.c.l.b16 %v714
        %v1061 = vunpack.c.h.b16 %v714
        %v1062 = vunpack.c.l.b16 %v715
        %v1063 = vunpack.c.h.b16 %v715
        %v1064 = vunpack.c.l.b16 %v716
        %v1065 = vunpack.c.h.b16 %v716
        %v1066 = vunpack.c.l.b16 %v717
        %v1067 = vunpack.c.h.b16 %v717
        %v1068 = vunpack.c.l.b16 %v718
        %v1069 = vunpack.c.h.b16 %v718
        %v1070 = vunpack.c.l.b16 %v719
        %v1071 = vunpack.c.h.b16 %v719
        %v1072 = vunpack.c.l.b16 %v720
        %v1073 = vunpack.c.h.b16 %v720
        %v1074 = vunpack.c.l.b16 %v721
        %v1075 = vunpack.c.h.b16 %v721
        %v1076 = vunpack.c.l.b16 %v722
        %v1077 = vunpack.c.h.b16 %v722
        %v1078 = vunpack.c.l.b16 %v723
        %v1079 = vunpack.c.h.b16 %v723
        %v1080 = vunpack.c.l.b16 %v724
        %v1081 = vunpack.c.h.b16 %v724
        %v1082 = vunpack.c.l.b16 %v725
        %v1083 = vunpack.c.h.b16 %v725
        %v1084 = vunpack.c.l.b16 %v726
        %v1085 = vunpack.c.h.b16 %v726
        %v1086 = vunpack.c.l.b16 %v727
        %v1087 = vunpack.c.h.b16 %v727
        %v1088 = vunpack.c.l.b16 %v728
        %v1089 = vunpack.c.h.b16 %v728
        %v1090 = vunpack.c.l.b16 %v729
        %v1091 = vunpack.c.h.b16 %v729
        %v1092 = vunpack.c.l.b16 %v730
        %v1093 = vunpack.c.h.b16 %v730
        %v1094 = vunpack.c.l.b16 %v731
        %v1095 = vunpack.c.h.b16 %v731
        %v1096 = vunpack.c.l.b16 %v732
        %v1097 = vunpack.c.h.b16 %v732
        %v1098 = vunpack.c.l.b16 %v733
        %v1099 = vunpack.c.h.b16 %v733
        %v1100 = vunpack.c.l.b16 %v734
        %v1101 = vunpack.c.h.b16 %v734
        %v1102 = vunpack.c.l.b16 %v735
        %v1103 = vunpack.c.h.b16 %v735
        %v1104 = vunpack.c.l.b16 %v736
        %v1105 = vunpack.c.h.b16 %v736
        %v1106 = vunpack.c.l.b16 %v737
        %v1107 = vunpack.c.h.b16 %v737
        %v1108 = vunpack.c.l.b16 %v738
        %v1109 = vunpack.c.h.b16 %v738
        %v1110 = vunpack.c.l.b16 %v739
        %v1111 = vunpack.c.h.b16 %v739
        %v1112 = vunpack.c.l.b16 %v740
        %v1113 = vunpack.c.h.b16 %v740
        %v1114 = vunpack.c.l.b16 %v741
        %v1115 = vunpack.c.h.b16 %v741
        %v1116 = vunpack.c.l.b16 %v742
        %v1117 = vunpack.c.h.b16 %v742
        %v1118 = vunpack.c.l.b16 %v743
        %v1119 = vunpack.c.h.b16 %v743
        %v1120 = vunpack.c.l.b16 %v744
        %v1121 = vunpack.c.h.b16 %v744
        %v1122 = vunpack.c.l.b16 %v745
        %v1123 = vunpack.c.h.b16 %v745
        %v1124 = vunpack.c.l.b16 %v746
        %v1125 = vunpack.c.h.b16 %v746
        %v1126 = vunpack.c.l.b16 %v747
        %v1127 = vunpack.c.h.b16 %v747
        %v1128 = vunpack.c.l.b16 %v748
        %v1129 = vunpack.c.h.b16 %v748
        %v1130 = vunpack.c.l.b16 %v749
        %v1131 = vunpack.c.h.b16 %v749
        %v1132 = vunpack.c.l.b16 %v750
        %v1133 = vunpack.c.h.b16 %v750
        %v1134 = vunpack.c.l.b16 %v751
        %v1135 = vunpack.c.h.b16 %v751
        %v1136 = vpack.c.b16 %v884, %v880
        %v1137 = vpack.c.b16 %v885, %v881
        %v1138 = vpack.c.b16 %v886, %v882
        %v1139 = vpack.c.b16 %v887, %v883
        %v1140 = vpack.c.b16 %v892, %v888
        %v1141 = vpack.c.b16 %v893, %v889
        %v1142 = vpack.c.b16 %v894, %v890
        %v1143 = vpack.c.b16 %v895, %v891
        %v1144 = vpack.c.b16 %v900, %v896
        %v1145 = vpack.c.b16 %v901, %v897
        %v1146 = vpack.c.b16 %v902, %v898
        %v1147 = vpack.c.b16 %v903, %v899
        %v1148 = vpack.c.b16 %v908, %v904
        %v1149 = vpack.c.b16 %v909, %v905
        %v1150 = vpack.c.b16 %v910, %v906
        %v1151 = vpack.c.b16 %v911, %v907
        %v1152 = vpack.c.b16 %v916, %v912
        %v1153 = vpack.c.b16 %v917, %v913
        %v1154 = vpack.c.b16 %v918, %v914
        %v1155 = vpack.c.b16 %v919, %v915
        %v1156 = vpack.c.b16 %v924, %v920
        %v1157 = vpack.c.b16 %v925, %v921
        %v1158 = vpack.c.b16 %v926, %v922
        %v1159 = vpack.c.b16 %v927, %v923
        %v1160 = vpack.c.b16 %v932, %v928
        %v1161 = vpack.c.b16 %v933, %v929
        %v1162 = vpack.c.b16 %v934, %v930
        %v1163 = vpack.c.b16 %v935, %v931
        %v1164 = vpack.c.b16 %v940, %v936
        %v1165 = vpack.c.b16 %v941, %v937
        %v1166 = vpack.c.b16 %v942, %v938
        %v1167 = vpack.c.b16 %v943, %v939
        %v1168 = vpack.c.b16 %v948, %v944
        %v1169 = vpack.c.b16 %v949, %v945
        %v1170 = vpack.c.b16 %v950, %v946
        %v1171 = vpack.c.b16 %v951, %v947
        %v1172 = vpack.c.b16 %v956, %v952
        %v1173 = vpack.c.b16 %v957, %v953
        %v1174 = vpack.c.b16 %v958, %v954
        %v1175 = vpack.c.b16 %v959, %v955
        %v1176 = vpack.c.b16 %v964, %v960
        %v1177 = vpack.c.b16 %v965, %v961
        %v1178 = vpack.c.b16 %v966, %v962
        %v1179 = vpack.c.b16 %v967, %v963
        %v1180 = vpack.c.b16 %v972, %v968
        %v1181 = vpack.c.b16 %v973, %v969
        %v1182 = vpack.c.b16 %v974, %v970
        %v1183 = vpack.c.b16 %v975, %v971
        %v1184 = vpack.c.b16 %v980, %v976
        %v1185 = vpack.c.b16 %v981, %v977
        %v1186 = vpack.c.b16 %v982, %v978
        %v1187 = vpack.c.b16 %v983, %v979
        %v1188 = vpack.c.b16 %v988, %v984
        %v1189 = vpack.c.b16 %v989, %v985
        %v1190 = vpack.c.b16 %v990, %v986
        %v1191 = vpack.c.b16 %v991, %v987
        %v1192 = vpack.c.b16 %v996, %v992
        %v1193 = vpack.c.b16 %v997, %v993
        %v1194 = vpack.c.b16 %v998, %v994
        %v1195 = vpack.c.b16 %v999, %v995
        %v1196 = vpack.c.b16 %v1004, %v1000
        %v1197 = vpack.c.b16 %v1005, %v1001
        %v1198 = vpack.c.b16 %v1006, %v1002
        %v1199 = vpack.c.b16 %v1007, %v1003
        %v1200 = vpack.c.b16 %v1012, %v1008
        %v1201 = vpack.c.b16 %v1013, %v1009
        %v1202 = vpack.c.b16 %v1014, %v1010
        %v1203 = vpack.c.b16 %v1015, %v1011
        %v1204 = vpack.c.b16 %v1020, %v1016
        %v1205 = vpack.c.b16 %v1021, %v1017
        %v1206 = vpack.c.b16 %v1022, %v1018
        %v1207 = vpack.c.b16 %v1023, %v1019
        %v1208 = vpack.c.b16 %v1028, %v1024
        %v1209 = vpack.c.b16 %v1029, %v1025
        %v1210 = vpack.c.b16 %v1030, %v1026
        %v1211 = vpack.c.b16 %v1031, %v1027
        %v1212 = vpack.c.b16 %v1036, %v1032
        %v1213 = vpack.c.b16 %v1037, %v1033
        %v1214 = vpack.c.b16 %v1038, %v1034
        %v1215 = vpack.c.b16 %v1039, %v1035
        %v1216 = vpack.c.b16 %v1044, %v1040
        %v1217 = vpack.c.b16 %v1045, %v1041
        %v1218 = vpack.c.b16 %v1046, %v1042
        %v1219 = vpack.c.b16 %v1047, %v1043
        %v1220 = vpack.c.b16 %v1052, %v1048
        %v1221 = vpack.c.b16 %v1053, %v1049
        %v1222 = vpack.c.b16 %v1054, %v1050
        %v1223 = vpack.c.b16 %v1055, %v1051
        %v1224 = vpack.c.b16 %v1060, %v1056
        %v1225 = vpack.c.b16 %v1061, %v1057
        %v1226 = vpack.c.b16 %v1062, %v1058
        %v1227 = vpack.c.b16 %v1063, %v1059
        %v1228 = vpack.c.b16 %v1068, %v1064
        %v1229 = vpack.c.b16 %v1069, %v1065
        %v1230 = vpack.c.b16 %v1070, %v1066
        %v1231 = vpack.c.b16 %v1071, %v1067
        %v1232 = vpack.c.b16 %v1076, %v1072
        %v1233 = vpack.c.b16 %v1077, %v1073
        %v1234 = vpack.c.b16 %v1078, %v1074
        %v1235 = vpack.c.b16 %v1079, %v1075
        %v1236 = vpack.c.b16 %v1084, %v1080
        %v1237 = vpack.c.b16 %v1085, %v1081
        %v1238 = vpack.c.b16 %v1086, %v1082
        %v1239 = vpack.c.b16 %v1087, %v1083
        %v1240 = vpack.c.b16 %v1092, %v1088
        %v1241 = vpack.c.b16 %v1093, %v1089
        %v1242 = vpack.c.b16 %v1094, %v1090
        %v1243 = vpack.c.b16 %v1095, %v1091
        %v1244 = vpack.c.b16 %v1100, %v1096
        %v1245 = vpack.c.b16 %v1101, %v1097
        %v1246 = vpack.c.b16 %v1102, %v1098
        %v1247 = vpack.c.b16 %v1103, %v1099
        %v1248 = vpack.c.b16 %v1108, %v1104
        %v1249 = vpack.c.b16 %v1109, %v1105
        %v1250 = vpack.c.b16 %v1110, %v1106
        %v1251 = vpack.c.b16 %v1111, %v1107
        %v1252 = vpack.c.b16 %v1116, %v1112
        %v1253 = vpack.c.b16 %v1117, %v1113
        %v1254 = vpack.c.b16 %v1118, %v1114
        %v1255 = vpack.c.b16 %v1119, %v1115
        %v1256 = vpack.c.b16 %v1124, %v1120
        %v1257 = vpack.c.b16 %v1125, %v1121
        %v1258 = vpack.c.b16 %v1126, %v1122
        %v1259 = vpack.c.b16 %v1127, %v1123
        %v1260 = vpack.c.b16 %v1132, %v1128
        %v1261 = vpack.c.b16 %v1133, %v1129
        %v1262 = vpack.c.b16 %v1134, %v1130
        %v1263 = vpack.c.b16 %v1135, %v1131
        %1392 = vmatprep.subr.bf16.mxu0 %v1165
        %1393 = vmatpush1.bf16.msra.mxu0 %v1164
        %1394 = vmatprep.subr.bf16.mxu0 %v1161
        %1395 = vmatpush1.bf16.msra.mxu0 %v1160
        %1396 = vmatprep.subr.bf16.mxu0 %v1157
        %1397 = vmatpush1.bf16.msra.mxu0 %v1156
        %1398 = vmatprep.subr.bf16.mxu0 %v1153
        %1399 = vmatpush1.bf16.msra.mxu0 %v1152
        %1400 = vmatprep.subr.bf16.mxu0 %v1149
        %1401 = vmatpush1.bf16.msra.mxu0 %v1148
        %1402 = vmatprep.subr.bf16.mxu0 %v1145
        %1403 = vmatpush1.bf16.msra.mxu0 %v1144
        %1404 = vmatprep.subr.bf16.mxu0 %v1141
        %1405 = vmatpush1.bf16.msra.mxu0 %v1140
        %1406 = vmatprep.subr.bf16.mxu0 %v1137
        %1407 = vmatpush1.bf16.msra.mxu0 %v1136
        %1408 = vmatprep.subr.bf16.mxu0 %v1197
        %1409 = vmatpush2.bf16.msra.mxu0 %v1196
        %1410 = vmatprep.subr.bf16.mxu0 %v1193
        %1411 = vmatpush2.bf16.msra.mxu0 %v1192
        %1412 = vmatprep.subr.bf16.mxu0 %v1189
        %1413 = vmatpush2.bf16.msra.mxu0 %v1188
        %1414 = vmatprep.subr.bf16.mxu0 %v1185
        %1415 = vmatpush2.bf16.msra.mxu0 %v1184
        %1416 = vmatprep.subr.bf16.mxu0 %v1181
        %1417 = vmatpush2.bf16.msra.mxu0 %v1180
        %1418 = vmatprep.subr.bf16.mxu0 %v1177
        %1419 = vmatpush2.bf16.msra.mxu0 %v1176
        %1420 = vmatprep.subr.bf16.mxu0 %v1173
        %1421 = vmatpush2.bf16.msra.mxu0 %v1172
        %1422 = vmatprep.subr.bf16.mxu0 %v1169
        %1423 = vmatpush2.bf16.msra.mxu0 %v1168
        %1424 = vmatprep.mubr.bf16.mxu0 %v617
        %1425 = vmatmul.mubr.bf16.gmra.mxu0 %v616
        %v1426 = vpop.f32.mrf.mxu0
        %v1427 = vadd.f32 0.0, %v1426
        %v1428 = vpop.f32.mrf.mxu0
        %v1429 = vadd.f32 0.0, %v1428
        %v1430 = vpop.f32.mrf.mxu0
        %v1431 = vadd.f32 0.0, %v1430
        %v1432 = vpop.f32.mrf.mxu0
        %v1433 = vadd.f32 0.0, %v1432
        %1434 = vmatprep.mubr.bf16.mxu0 %v621
        %1435 = vmatmul.mubr.bf16.gmra.mxu0 %v620
        %v1436 = vpop.f32.mrf.mxu0
        %v1437 = vadd.f32 0.0, %v1436
        %v1438 = vpop.f32.mrf.mxu0
        %v1439 = vadd.f32 0.0, %v1438
        %v1440 = vpop.f32.mrf.mxu0
        %v1441 = vadd.f32 0.0, %v1440
        %v1442 = vpop.f32.mrf.mxu0
        %v1443 = vadd.f32 0.0, %v1442
        %1444 = vdwg.mxu0
        %1445 = vmatprep.subr.bf16.mxu0 %v1229
        %1446 = vmatpush1.bf16.msra.mxu0 %v1228
        %1447 = vmatprep.subr.bf16.mxu0 %v1225
        %1448 = vmatpush1.bf16.msra.mxu0 %v1224
        %1449 = vmatprep.subr.bf16.mxu0 %v1221
        %1450 = vmatpush1.bf16.msra.mxu0 %v1220
        %1451 = vmatprep.subr.bf16.mxu0 %v1217
        %1452 = vmatpush1.bf16.msra.mxu0 %v1216
        %1453 = vmatprep.subr.bf16.mxu0 %v1213
        %1454 = vmatpush1.bf16.msra.mxu0 %v1212
        %1455 = vmatprep.subr.bf16.mxu0 %v1209
        %1456 = vmatpush1.bf16.msra.mxu0 %v1208
        %1457 = vmatprep.subr.bf16.mxu0 %v1205
        %1458 = vmatpush1.bf16.msra.mxu0 %v1204
        %1459 = vmatprep.subr.bf16.mxu0 %v1201
        %1460 = vmatpush1.bf16.msra.mxu0 %v1200
        %1461 = vmatprep.subr.bf16.mxu0 %v1261
        %1462 = vmatpush2.bf16.msra.mxu0 %v1260
        %1463 = vmatprep.subr.bf16.mxu0 %v1257
        %1464 = vmatpush2.bf16.msra.mxu0 %v1256
        %1465 = vmatprep.subr.bf16.mxu0 %v1253
        %1466 = vmatpush2.bf16.msra.mxu0 %v1252
        %1467 = vmatprep.subr.bf16.mxu0 %v1249
        %1468 = vmatpush2.bf16.msra.mxu0 %v1248
        %1469 = vmatprep.subr.bf16.mxu0 %v1245
        %1470 = vmatpush2.bf16.msra.mxu0 %v1244
        %1471 = vmatprep.subr.bf16.mxu0 %v1241
        %1472 = vmatpush2.bf16.msra.mxu0 %v1240
        %1473 = vmatprep.subr.bf16.mxu0 %v1237
        %1474 = vmatpush2.bf16.msra.mxu0 %v1236
        %1475 = vmatprep.subr.bf16.mxu0 %v1233
        %1476 = vmatpush2.bf16.msra.mxu0 %v1232
        %1477 = vmatprep.mubr.bf16.mxu0 %v619
        %1478 = vmatmul.mubr.bf16.gmra.mxu0 %v618
        %v1479 = vpop.f32.mrf.mxu0
        %v1480 = vadd.f32 %v1427, %v1479
        %v1481 = vpop.f32.mrf.mxu0
        %v1482 = vadd.f32 %v1429, %v1481
        %v1483 = vpop.f32.mrf.mxu0
        %v1484 = vadd.f32 %v1431, %v1483
        %v1485 = vpop.f32.mrf.mxu0
        %v1486 = vadd.f32 %v1433, %v1485
        %1487 = vmatprep.mubr.bf16.mxu0 %v623
        %1488 = vmatmul.mubr.bf16.gmra.mxu0 %v622
        %v1489 = vpop.f32.mrf.mxu0
        %v1490 = vadd.f32 %v1437, %v1489
        %v1491 = vpop.f32.mrf.mxu0
        %v1492 = vadd.f32 %v1439, %v1491
        %v1493 = vpop.f32.mrf.mxu0
        %v1494 = vadd.f32 %v1441, %v1493
        %v1495 = vpop.f32.mrf.mxu0
        %v1496 = vadd.f32 %v1443, %v1495
        %1497 = vdwg.mxu0
        %1498 = vmatprep.subr.bf16.mxu0 %v1167
        %1499 = vmatpush1.bf16.msra.mxu0 %v1166
        %1500 = vmatprep.subr.bf16.mxu0 %v1163
        %1501 = vmatpush1.bf16.msra.mxu0 %v1162
        %1502 = vmatprep.subr.bf16.mxu0 %v1159
        %1503 = vmatpush1.bf16.msra.mxu0 %v1158
        %1504 = vmatprep.subr.bf16.mxu0 %v1155
        %1505 = vmatpush1.bf16.msra.mxu0 %v1154
        %1506 = vmatprep.subr.bf16.mxu0 %v1151
        %1507 = vmatpush1.bf16.msra.mxu0 %v1150
        %1508 = vmatprep.subr.bf16.mxu0 %v1147
        %1509 = vmatpush1.bf16.msra.mxu0 %v1146
        %1510 = vmatprep.subr.bf16.mxu0 %v1143
        %1511 = vmatpush1.bf16.msra.mxu0 %v1142
        %1512 = vmatprep.subr.bf16.mxu0 %v1139
        %1513 = vmatpush1.bf16.msra.mxu0 %v1138
        %1514 = vmatprep.subr.bf16.mxu0 %v1199
        %1515 = vmatpush2.bf16.msra.mxu0 %v1198
        %1516 = vmatprep.subr.bf16.mxu0 %v1195
        %1517 = vmatpush2.bf16.msra.mxu0 %v1194
        %1518 = vmatprep.subr.bf16.mxu0 %v1191
        %1519 = vmatpush2.bf16.msra.mxu0 %v1190
        %1520 = vmatprep.subr.bf16.mxu0 %v1187
        %1521 = vmatpush2.bf16.msra.mxu0 %v1186
        %1522 = vmatprep.subr.bf16.mxu0 %v1183
        %1523 = vmatpush2.bf16.msra.mxu0 %v1182
        %1524 = vmatprep.subr.bf16.mxu0 %v1179
        %1525 = vmatpush2.bf16.msra.mxu0 %v1178
        %1526 = vmatprep.subr.bf16.mxu0 %v1175
        %1527 = vmatpush2.bf16.msra.mxu0 %v1174
        %1528 = vmatprep.subr.bf16.mxu0 %v1171
        %1529 = vmatpush2.bf16.msra.mxu0 %v1170
        %1530 = vmatprep.mubr.bf16.mxu0 %v617
        %1531 = vmatmul.mubr.bf16.gmra.mxu0 %v616
        %v1532 = vpop.f32.mrf.mxu0
        %v1533 = vadd.f32 0.0, %v1532
        %v1534 = vpop.f32.mrf.mxu0
        %v1535 = vadd.f32 0.0, %v1534
        %v1536 = vpop.f32.mrf.mxu0
        %v1537 = vadd.f32 0.0, %v1536
        %v1538 = vpop.f32.mrf.mxu0
        %v1539 = vadd.f32 0.0, %v1538
        %1540 = vmatprep.mubr.bf16.mxu0 %v621
        %1541 = vmatmul.mubr.bf16.gmra.mxu0 %v620
        %v1542 = vpop.f32.mrf.mxu0
        %v1543 = vadd.f32 0.0, %v1542
        %v1544 = vpop.f32.mrf.mxu0
        %v1545 = vadd.f32 0.0, %v1544
        %v1546 = vpop.f32.mrf.mxu0
        %v1547 = vadd.f32 0.0, %v1546
        %v1548 = vpop.f32.mrf.mxu0
        %v1549 = vadd.f32 0.0, %v1548
        %1550 = vdwg.mxu0
        %1551 = vmatprep.subr.bf16.mxu0 %v1231
        %1552 = vmatpush1.bf16.msra.mxu0 %v1230
        %1553 = vmatprep.subr.bf16.mxu0 %v1227
        %1554 = vmatpush1.bf16.msra.mxu0 %v1226
        %1555 = vmatprep.subr.bf16.mxu0 %v1223
        %1556 = vmatpush1.bf16.msra.mxu0 %v1222
        %1557 = vmatprep.subr.bf16.mxu0 %v1219
        %1558 = vmatpush1.bf16.msra.mxu0 %v1218
        %1559 = vmatprep.subr.bf16.mxu0 %v1215
        %1560 = vmatpush1.bf16.msra.mxu0 %v1214
        %1561 = vmatprep.subr.bf16.mxu0 %v1211
        %1562 = vmatpush1.bf16.msra.mxu0 %v1210
        %1563 = vmatprep.subr.bf16.mxu0 %v1207
        %1564 = vmatpush1.bf16.msra.mxu0 %v1206
        %1565 = vmatprep.subr.bf16.mxu0 %v1203
        %1566 = vmatpush1.bf16.msra.mxu0 %v1202
        %1567 = vmatprep.subr.bf16.mxu0 %v1263
        %1568 = vmatpush2.bf16.msra.mxu0 %v1262
        %1569 = vmatprep.subr.bf16.mxu0 %v1259
        %1570 = vmatpush2.bf16.msra.mxu0 %v1258
        %1571 = vmatprep.subr.bf16.mxu0 %v1255
        %1572 = vmatpush2.bf16.msra.mxu0 %v1254
        %1573 = vmatprep.subr.bf16.mxu0 %v1251
        %1574 = vmatpush2.bf16.msra.mxu0 %v1250
        %1575 = vmatprep.subr.bf16.mxu0 %v1247
        %1576 = vmatpush2.bf16.msra.mxu0 %v1246
        %1577 = vmatprep.subr.bf16.mxu0 %v1243
        %1578 = vmatpush2.bf16.msra.mxu0 %v1242
        %1579 = vmatprep.subr.bf16.mxu0 %v1239
        %1580 = vmatpush2.bf16.msra.mxu0 %v1238
        %1581 = vmatprep.subr.bf16.mxu0 %v1235
        %1582 = vmatpush2.bf16.msra.mxu0 %v1234
        %1583 = vmatprep.mubr.bf16.mxu0 %v619
        %1584 = vmatmul.mubr.bf16.gmra.mxu0 %v618
        %v1585 = vpop.f32.mrf.mxu0
        %v1586 = vadd.f32 %v1533, %v1585
        %v1587 = vpop.f32.mrf.mxu0
        %v1588 = vadd.f32 %v1535, %v1587
        %v1589 = vpop.f32.mrf.mxu0
        %v1590 = vadd.f32 %v1537, %v1589
        %v1591 = vpop.f32.mrf.mxu0
        %v1592 = vadd.f32 %v1539, %v1591
        %1593 = vmatprep.mubr.bf16.mxu0 %v623
        %1594 = vmatmul.mubr.bf16.gmra.mxu0 %v622
        %v1595 = vpop.f32.mrf.mxu0
        %v1596 = vadd.f32 %v1543, %v1595
        %v1597 = vpop.f32.mrf.mxu0
        %v1598 = vadd.f32 %v1545, %v1597
        %v1599 = vpop.f32.mrf.mxu0
        %v1600 = vadd.f32 %v1547, %v1599
        %v1601 = vpop.f32.mrf.mxu0
        %v1602 = vadd.f32 %v1549, %v1601
        %1603 = vdwg.mxu0
        %1604 = vst [vmem:[%s497] sm:$0xff] %v1480
        %1605 = vst [vmem:[%s497 + $0x8] sm:$0xff] %v1482
        %1606 = vst [vmem:[%s497 + $0x10] sm:$0xff] %v1586
        %1607 = vst [vmem:[%s497 + $0x18] sm:$0xff] %v1588
        %1608 = vst [vmem:[%s497 + $0x20] sm:$0xff] %v1484
        %1609 = vst [vmem:[%s497 + $0x28] sm:$0xff] %v1486
        %1610 = vst [vmem:[%s497 + $0x30] sm:$0xff] %v1590
        %1611 = vst [vmem:[%s497 + $0x38] sm:$0xff] %v1592
        %1612 = vst [vmem:[%s497 + $0x40] sm:$0xff] %v1490
        %1613 = vst [vmem:[%s497 + $0x48] sm:$0xff] %v1492
        %1614 = vst [vmem:[%s497 + $0x50] sm:$0xff] %v1596
        %1615 = vst [vmem:[%s497 + $0x58] sm:$0xff] %v1598
        %1616 = vst [vmem:[%s497 + $0x60] sm:$0xff] %v1494
        %1617 = vst [vmem:[%s497 + $0x68] sm:$0xff] %v1496
        %1618 = vst [vmem:[%s497 + $0x70] sm:$0xff] %v1600
        %1619 = vst [vmem:[%s497 + $0x78] sm:$0xff] %v1602
        %s1620 = sand.u32 %s131, 1
        %s1621 = sand.u32 %s131, 1
        %s1622 = smul.addr %s1621, 128
        %s1623 = scalar_lea.vmem [#allocation3], %s1622
        // Predicated region
        $region60: #{generator_forward.12} parent=54 // pred_check
          %p1624 = pneg %p141
        $region61: #{generator_forward.12} parent=54 // pred_check_branch
          %1626 = sbr.rel (%p1624) target = $region63
        $region62: #{generator_forward.12} parent=54 // pred_region
          %s1627 = smul.u32 4, %s19
          %s1628 = smul.u32 4, %s20
          %s1629 = smul.addr %s1627, 32
          %s1630 = sadd.s32 %s1628, %s1629
          %s1631 = smul.addr %s1630, 8
          %s1632 = scalar_lea.vmem %s4, %s1631
          // Predicated region
          $region64: #{generator_forward.12} parent=62 // pred_check
            _
          $region65: #{generator_forward.12} parent=62 // pred_check_branch
            %1634 = sbr.rel (0) target = $region67
          $region66: #{generator_forward.12} parent=62 // pred_region
            // Predicated region
            $region68: #{generator_forward.12} parent=66 // pred_check
              _
            $region69: #{generator_forward.12} parent=66 // pred_check_branch
              %1636 = sbr.rel (0) target = $region71
            $region70: #{generator_forward.12} parent=66 // pred_region
              loop: start=0, step=1, limit=1
              $region72: #{generator_forward.12} parent=70 // loop_pre_header
                _
              $region73: #{generator_forward.12} parent=70 // loop_header
                %s1638 = sphi 0, %s1642
                %p1639 = scmp.ge.s32.totalorder %s1638, 1
                %s1643 = sphi %s1623, %s1623
                %s1644 = sphi %s1632, %s1632
              $region74: #{generator_forward.12} parent=70 // loop_header_branch
                %1641 = sbr.rel (%p1639) target = $region78
              $region75: #{generator_forward.12} parent=70 // loop_body
                %v1645 = vld [vmem:[%s1643] sm:$0xff]
                %1646 = vst [vmem:[%s1644] sm:$0xff] %v1645
                %v1647 = vld [vmem:[%s1643 + $0x8] sm:$0xff]
                %1648 = vst [vmem:[%s1644 + $0x8] sm:$0xff] %v1647
                %v1649 = vld [vmem:[%s1643 + $0x10] sm:$0xff]
                %1650 = vst [vmem:[%s1644 + $0x10] sm:$0xff] %v1649
                %v1651 = vld [vmem:[%s1643 + $0x18] sm:$0xff]
                %1652 = vst [vmem:[%s1644 + $0x18] sm:$0xff] %v1651
                %v1653 = vld [vmem:[%s1643 + $0x20] sm:$0xff]
                %1654 = vst [vmem:[%s1644 + $0x100] sm:$0xff] %v1653
                %v1655 = vld [vmem:[%s1643 + $0x28] sm:$0xff]
                %1656 = vst [vmem:[%s1644 + $0x108] sm:$0xff] %v1655
                %v1657 = vld [vmem:[%s1643 + $0x30] sm:$0xff]
                %1658 = vst [vmem:[%s1644 + $0x110] sm:$0xff] %v1657
                %v1659 = vld [vmem:[%s1643 + $0x38] sm:$0xff]
                %1660 = vst [vmem:[%s1644 + $0x118] sm:$0xff] %v1659
                %v1661 = vld [vmem:[%s1643 + $0x40] sm:$0xff]
                %1662 = vst [vmem:[%s1644 + $0x200] sm:$0xff] %v1661
                %v1663 = vld [vmem:[%s1643 + $0x48] sm:$0xff]
                %1664 = vst [vmem:[%s1644 + $0x208] sm:$0xff] %v1663
                %v1665 = vld [vmem:[%s1643 + $0x50] sm:$0xff]
                %1666 = vst [vmem:[%s1644 + $0x210] sm:$0xff] %v1665
                %v1667 = vld [vmem:[%s1643 + $0x58] sm:$0xff]
                %1668 = vst [vmem:[%s1644 + $0x218] sm:$0xff] %v1667
                %v1669 = vld [vmem:[%s1643 + $0x60] sm:$0xff]
                %1670 = vst [vmem:[%s1644 + $0x300] sm:$0xff] %v1669
                %v1671 = vld [vmem:[%s1643 + $0x68] sm:$0xff]
                %1672 = vst [vmem:[%s1644 + $0x308] sm:$0xff] %v1671
                %v1673 = vld [vmem:[%s1643 + $0x70] sm:$0xff]
                %1674 = vst [vmem:[%s1644 + $0x310] sm:$0xff] %v1673
                %v1675 = vld [vmem:[%s1643 + $0x78] sm:$0xff]
                %1676 = vst [vmem:[%s1644 + $0x318] sm:$0xff] %v1675
              $region76: #{generator_forward.12} parent=70 // loop_footer
                %s1642 = sadd.s32 1, %s1638
              $region77: #{generator_forward.12} parent=70 // loop_footer_branch
                %1637 = sbr.rel target = $region73
              $region78: #{generator_forward.12} parent=70 // loop_exit
                _
            $region71: #{generator_forward.12} parent=66 // pred_fallthru
              _
            // Predicated region
            $region79: #{generator_forward.12} parent=66 // pred_check
              _
            $region80: #{generator_forward.12} parent=66 // pred_check_branch
              %1678 = sbr.rel target = $region82
            $region81: #{generator_forward.12} parent=66 // pred_region
              _
            $region82: #{generator_forward.12} parent=66 // pred_fallthru
              _
          $region67: #{generator_forward.12} parent=62 // pred_fallthru
            _
          %1679 = vnop
        $region63: #{generator_forward.12} parent=54 // pred_fallthru
          _
      $region55: #{generator_forward.12} parent=5 // pred_fallthru
        _
      %p1680 = scmp.le.s32.totalorder 2, %s10
      // Predicated region
      $region83: #{generator_forward.12} parent=5 // pred_check
        %p1681 = pneg %p1680
      $region84: #{generator_forward.12} parent=5 // pred_check_branch
        %1683 = sbr.rel (%p1681) target = $region86
      $region85: #{generator_forward.12} parent=5 // pred_region
        %s1684 = ssub.s32 %s10, 2
        // Predicated region
        $region87: #{generator_forward.12} parent=85 // pred_check
          %p1685 = pneg %p147
        $region88: #{generator_forward.12} parent=85 // pred_check_branch
          %1687 = sbr.rel (%p1685) target = $region90
        $region89: #{generator_forward.12} parent=85 // pred_region
          %s1688 = sand.u32 %s132, 1
          %s1689 = sand.u32 %s132, 1
          %s1690 = smul.addr %s1689, 128
          %s1691 = scalar_lea.vmem [#allocation3], %s1690
        $region90: #{generator_forward.12} parent=85 // pred_fallthru
          _
      $region86: #{generator_forward.12} parent=5 // pred_fallthru
        _
    $region6: #{generator_forward.12} parent=1 // loop_footer
      %s14 = sadd.s32 1, %s10
    $region7: #{generator_forward.12} parent=1 // loop_footer_branch
      %9 = sbr.rel target = $region3
    $region8: #{generator_forward.12} parent=1 // loop_exit
      _

// kernel: generator_forward.13
$region0: #{generator_forward.13}
  #allocation0 [shape = 'u32[]', space=smem, size = 0x4, offset = 0x4, fixed_abs, tag = 'smem constant byte address 0x4 - core index']
  #allocation1 [shape = 'u32[144,128]{1,0:T(1,128)}', space=vmem, size = 0x12000, scoped, tag = 'internal scratch']
  %s0 = inlined_call_operand.vmem [shape: f32[128,256], index: 0, kind: input, shape index: {}]
  %s1 = inlined_call_operand.vmem [shape: f32[1,256], index: 1, kind: output, shape index: {0}]
  %s2 = inlined_call_operand.vmem [shape: f32[1,256], index: 2, kind: output, shape index: {1}]
  %3 = xla_tuple %s1, %s2
  %s4 = sld [smem:[#allocation0]]
  $region26: #{generator_forward.13} parent=0
    _
  %s6 = ssub.s32 1, %s4
  %s7 = scalar_select 0, %s6, %s4
  // Predicated region
  $region2: #{generator_forward.13} parent=0 // pred_check
    _
  $region3: #{generator_forward.13} parent=0 // pred_check_branch
    %9 = sbr.rel (0) target = $region5
  $region4: #{generator_forward.13} parent=0 // pred_region
    _
  $region5: #{generator_forward.13} parent=0 // pred_fallthru
    _
  %p10 = scmp.eq.s32.totalorder 0, 0
  // Predicated region
  $region6: #{generator_forward.13} parent=0 // pred_check
    %p11 = pneg %p10
  $region7: #{generator_forward.13} parent=0 // pred_check_branch
    %13 = sbr.rel (%p11) target = $region9
  $region8: #{generator_forward.13} parent=0 // pred_region
    %v14 = vlaneseq
    %vm15 = vcmp.ge.s32.totalorder %v14, 0
    %vm16 = vcmp.lt.s32.totalorder %v14, 256
    %vm17 = vmand %vm15, %vm16
    %18 = vst.msk [vmem:[%s1] sm:$0x3] %vm17, 0.0
    %19 = vst.msk [vmem:[%s2] sm:$0x3] %vm17, 0.0
  $region9: #{generator_forward.13} parent=0 // pred_fallthru
    _
  %v20 = vld [vmem:[%s0] sm:$0xff]
  %v21 = vld [vmem:[%s0 + $0x8] sm:$0xff]
  %v22 = vld [vmem:[%s0 + $0x10] sm:$0xff]
  %v23 = vld [vmem:[%s0 + $0x18] sm:$0xff]
  %v24 = vld [vmem:[%s0 + $0x20] sm:$0xff]
  %v25 = vld [vmem:[%s0 + $0x28] sm:$0xff]
  %v26 = vld [vmem:[%s0 + $0x30] sm:$0xff]
  %v27 = vld [vmem:[%s0 + $0x38] sm:$0xff]
  %v28 = vld [vmem:[%s0 + $0x40] sm:$0xff]
  %v29 = vld [vmem:[%s0 + $0x48] sm:$0xff]
  %v30 = vld [vmem:[%s0 + $0x50] sm:$0xff]
  %v31 = vld [vmem:[%s0 + $0x58] sm:$0xff]
  %v32 = vld [vmem:[%s0 + $0x60] sm:$0xff]
  %v33 = vld [vmem:[%s0 + $0x68] sm:$0xff]
  %v34 = vld [vmem:[%s0 + $0x70] sm:$0xff]
  %v35 = vld [vmem:[%s0 + $0x78] sm:$0xff]
  %v36 = vld [vmem:[%s0 + $0x80] sm:$0xff]
  %v37 = vld [vmem:[%s0 + $0x88] sm:$0xff]
  %v38 = vld [vmem:[%s0 + $0x90] sm:$0xff]
  %v39 = vld [vmem:[%s0 + $0x98] sm:$0xff]
  %v40 = vld [vmem:[%s0 + $0xa0] sm:$0xff]
  %v41 = vld [vmem:[%s0 + $0xa8] sm:$0xff]
  %v42 = vld [vmem:[%s0 + $0xb0] sm:$0xff]
  %v43 = vld [vmem:[%s0 + $0xb8] sm:$0xff]
  %v44 = vld [vmem:[%s0 + $0xc0] sm:$0xff]
  %v45 = vld [vmem:[%s0 + $0xc8] sm:$0xff]
  %v46 = vld [vmem:[%s0 + $0xd0] sm:$0xff]
  %v47 = vld [vmem:[%s0 + $0xd8] sm:$0xff]
  %v48 = vld [vmem:[%s0 + $0xe0] sm:$0xff]
  %v49 = vld [vmem:[%s0 + $0xe8] sm:$0xff]
  %v50 = vld [vmem:[%s0 + $0xf0] sm:$0xff]
  %v51 = vld [vmem:[%s0 + $0xf8] sm:$0xff]
  %v52 = vld [vmem:[%s1] sm:$0x3]
  %v53 = vadd.f32 %v20, %v22
  %v54 = vadd.f32 %v53, %v24
  %v55 = vadd.f32 %v54, %v26
  %v56 = vadd.f32 %v55, %v28
  %v57 = vadd.f32 %v56, %v30
  %v58 = vadd.f32 %v57, %v32
  %v59 = vadd.f32 %v58, %v34
  %v60 = vadd.f32 %v59, %v36
  %v61 = vadd.f32 %v60, %v38
  %v62 = vadd.f32 %v61, %v40
  %v63 = vadd.f32 %v62, %v42
  %v64 = vadd.f32 %v63, %v44
  %v65 = vadd.f32 %v64, %v46
  %v66 = vadd.f32 %v65, %v48
  %v67 = vadd.f32 %v66, %v50
  %v68 = vrot.slane %v67, 4
  %v69 = vadd.f32 %v67, %v68
  %v70 = vrot.slane %v69, 2
  %v71 = vadd.f32 %v69, %v70
  %v72 = vrot.slane %v71, 1
  %v73 = vadd.f32 %v71, %v72
  %v74 = vadd.f32 %v21, %v23
  %v75 = vadd.f32 %v74, %v25
  %v76 = vadd.f32 %v75, %v27
  %v77 = vadd.f32 %v76, %v29
  %v78 = vadd.f32 %v77, %v31
  %v79 = vadd.f32 %v78, %v33
  %v80 = vadd.f32 %v79, %v35
  %v81 = vadd.f32 %v80, %v37
  %v82 = vadd.f32 %v81, %v39
  %v83 = vadd.f32 %v82, %v41
  %v84 = vadd.f32 %v83, %v43
  %v85 = vadd.f32 %v84, %v45
  %v86 = vadd.f32 %v85, %v47
  %v87 = vadd.f32 %v86, %v49
  %v88 = vadd.f32 %v87, %v51
  %v89 = vrot.slane %v88, 4
  %v90 = vadd.f32 %v88, %v89
  %v91 = vrot.slane %v90, 2
  %v92 = vadd.f32 %v90, %v91
  %v93 = vrot.slane %v92, 1
  %v94 = vadd.f32 %v92, %v93
  %v97 = vcombine.low %v73, %v94
  %v99 = vunpack.c.l.s4 1966171168
  %v100 = vunpack.c.0.s8 %v99
  %v101 = vlaneseq
  %v102 = vshrl.u32 %v101, 7
  %v103 = vsub.s32 %v100, %v102
  %v104 = vrot.slane %v97, %v103
  %v106 = vunpack.c.l.s4 1966171168
  %v107 = vunpack.c.0.s8 %v106
  %v108 = vlaneseq
  %v109 = vshrl.u32 %v108, 7
  %v110 = vsub.s32 %v107, %v109
  %v111 = vrot.slane %v104, %v110
  %v113 = vadd.f32 %v52, %v111
  %v114 = vlaneseq
  %vm115 = vcmp.ge.s32.totalorder %v114, 0
  %vm116 = vcmp.lt.s32.totalorder %v114, 256
  %vm117 = vmand %vm115, %vm116
  %118 = vst.msk [vmem:[%s1] sm:$0x3] %vm117, %v113
  %v119 = vld [vmem:[%s2] sm:$0x3]
  %v120 = vmul.f32 %v20, %v20
  %v121 = vmul.f32 %v21, %v21
  %v122 = vmul.f32 %v22, %v22
  %v123 = vmul.f32 %v23, %v23
  %v124 = vmul.f32 %v24, %v24
  %v125 = vmul.f32 %v25, %v25
  %v126 = vmul.f32 %v26, %v26
  %v127 = vmul.f32 %v27, %v27
  %v128 = vmul.f32 %v28, %v28
  %v129 = vmul.f32 %v29, %v29
  %v130 = vmul.f32 %v30, %v30
  %v131 = vmul.f32 %v31, %v31
  %v132 = vmul.f32 %v32, %v32
  %v133 = vmul.f32 %v33, %v33
  %v134 = vmul.f32 %v34, %v34
  %v135 = vmul.f32 %v35, %v35
  %v136 = vmul.f32 %v36, %v36
  %v137 = vmul.f32 %v37, %v37
  %v138 = vmul.f32 %v38, %v38
  %v139 = vmul.f32 %v39, %v39
  %v140 = vmul.f32 %v40, %v40
  %v141 = vmul.f32 %v41, %v41
  %v142 = vmul.f32 %v42, %v42
  %v143 = vmul.f32 %v43, %v43
  %v144 = vmul.f32 %v44, %v44
  %v145 = vmul.f32 %v45, %v45
  %v146 = vmul.f32 %v46, %v46
  %v147 = vmul.f32 %v47, %v47
  %v148 = vmul.f32 %v48, %v48
  %v149 = vmul.f32 %v49, %v49
  %v150 = vmul.f32 %v50, %v50
  %v151 = vmul.f32 %v51, %v51
  %v152 = vadd.f32 %v120, %v122
  %v153 = vadd.f32 %v152, %v124
  %v154 = vadd.f32 %v153, %v126
  %v155 = vadd.f32 %v154, %v128
  %v156 = vadd.f32 %v155, %v130
  %v157 = vadd.f32 %v156, %v132
  %v158 = vadd.f32 %v157, %v134
  %v159 = vadd.f32 %v158, %v136
  %v160 = vadd.f32 %v159, %v138
  %v161 = vadd.f32 %v160, %v140
  %v162 = vadd.f32 %v161, %v142
  %v163 = vadd.f32 %v162, %v144
  %v164 = vadd.f32 %v163, %v146
  %v165 = vadd.f32 %v164, %v148
  %v166 = vadd.f32 %v165, %v150
  %v167 = vrot.slane %v166, 4
  %v168 = vadd.f32 %v166, %v167
  %v169 = vrot.slane %v168, 2
  %v170 = vadd.f32 %v168, %v169
  %v171 = vrot.slane %v170, 1
  %v172 = vadd.f32 %v170, %v171
  %v173 = vadd.f32 %v121, %v123
  %v174 = vadd.f32 %v173, %v125
  %v175 = vadd.f32 %v174, %v127
  %v176 = vadd.f32 %v175, %v129
  %v177 = vadd.f32 %v176, %v131
  %v178 = vadd.f32 %v177, %v133
  %v179 = vadd.f32 %v178, %v135
  %v180 = vadd.f32 %v179, %v137
  %v181 = vadd.f32 %v180, %v139
  %v182 = vadd.f32 %v181, %v141
  %v183 = vadd.f32 %v182, %v143
  %v184 = vadd.f32 %v183, %v145
  %v185 = vadd.f32 %v184, %v147
  %v186 = vadd.f32 %v185, %v149
  %v187 = vadd.f32 %v186, %v151
  %v188 = vrot.slane %v187, 4
  %v189 = vadd.f32 %v187, %v188
  %v190 = vrot.slane %v189, 2
  %v191 = vadd.f32 %v189, %v190
  %v192 = vrot.slane %v191, 1
  %v193 = vadd.f32 %v191, %v192
  %v196 = vcombine.low %v172, %v193
  %v198 = vunpack.c.l.s4 1966171168
  %v199 = vunpack.c.0.s8 %v198
  %v200 = vlaneseq
  %v201 = vshrl.u32 %v200, 7
  %v202 = vsub.s32 %v199, %v201
  %v203 = vrot.slane %v196, %v202
  %v205 = vunpack.c.l.s4 1966171168
  %v206 = vunpack.c.0.s8 %v205
  %v207 = vlaneseq
  %v208 = vshrl.u32 %v207, 7
  %v209 = vsub.s32 %v206, %v208
  %v210 = vrot.slane %v203, %v209
  %v212 = vadd.f32 %v119, %v210
  %213 = vst.msk [vmem:[%s2] sm:$0x3] %vm117, %v212
  // Predicated region
  $region10: #{generator_forward.13} parent=0 // pred_check
    _
  $region11: #{generator_forward.13} parent=0 // pred_check_branch
    %215 = sbr.rel (0) target = $region13
  $region12: #{generator_forward.13} parent=0 // pred_region
    _
  $region13: #{generator_forward.13} parent=0 // pred_fallthru
    _
  // Predicated region
  $region14: #{generator_forward.13} parent=0 // pred_check
    _
  $region15: #{generator_forward.13} parent=0 // pred_check_branch
    %217 = sbr.rel (0) target = $region17
  $region16: #{generator_forward.13} parent=0 // pred_region
    _
  $region17: #{generator_forward.13} parent=0 // pred_fallthru
    _
  // Predicated region
  $region18: #{generator_forward.13} parent=0 // pred_check
    _
  $region19: #{generator_forward.13} parent=0 // pred_check_branch
    %219 = sbr.rel (0) target = $region21
  $region20: #{generator_forward.13} parent=0 // pred_region
    _
  $region21: #{generator_forward.13} parent=0 // pred_fallthru
    _
  // Predicated region
  $region22: #{generator_forward.13} parent=0 // pred_check
    _
  $region23: #{generator_forward.13} parent=0 // pred_check_branch
    %221 = sbr.rel (0) target = $region25
  $region24: #{generator_forward.13} parent=0 // pred_region
    _
  $region25: #{generator_forward.13} parent=0 // pred_fallthru
    _

// kernel: generator_forward.14
$region0: #{generator_forward.14}
  #allocation0 [shape = 'u32[]', space=smem, size = 0x4, offset = 0x4, fixed_abs, tag = 'smem constant byte address 0x4 - core index']
  #allocation1 [shape = 'u32[144,128]{1,0:T(1,128)}', space=vmem, size = 0x12000, scoped, tag = 'internal scratch']
  %s0 = inlined_call_operand.vmem [shape: f32[128,256], index: 0, kind: input, shape index: {}]
  %s1 = inlined_call_operand.vmem [shape: f32[1,256], index: 1, kind: input, shape index: {}]
  %s2 = inlined_call_operand.vmem [shape: f32[1,256], index: 2, kind: input, shape index: {}]
  %s3 = inlined_call_operand.vmem [shape: bf16[256,2048], index: 3, kind: input, shape index: {}]
  %s4 = inlined_call_operand.vmem [shape: f32[128,2048], index: 4, kind: output, shape index: {}]
  %s5 = sld [smem:[#allocation0]]
  $region91: #{generator_forward.14} parent=0
    _
  %s7 = ssub.s32 1, %s5
  %s8 = scalar_select 0, %s7, %s5
  $region1: #{generator_forward.14} parent=0
    #allocation2 [shape = 'u8[524288]{0}', space=vmem, size = 0x80000, scoped, tag = 'input window, operand 3']
    #allocation3 [shape = 'u8[524288]{0}', space=vmem, size = 0x80000, scoped, tag = 'output window, operand 0']
    loop: start=0, step=1, limit=6
    $region2: #{generator_forward.14} parent=1 // loop_pre_header
      _
    $region3: #{generator_forward.14} parent=1 // loop_header
      %s10 = sphi 0, %s14
      %p11 = scmp.ge.s32.totalorder %s10, 6
      %s17 = sphi 0, %s29
      %s18 = sphi 0, %s25
      %s19 = sphi 0, %s17
      %s20 = sphi 0, %s18
      %s21 = sphi 0, %s19
      %s22 = sphi 0, %s20
      %s32 = sphi 0, %s34
      %s35 = sphi 0, %s32
      %s36 = sphi 0, %s35
      %s52 = sphi 0, %s36
      %s56 = sphi 0, %s56
      %s58 = sphi 0, %s56
      %s59 = sphi 0, %s58
      %s73 = sphi 0, %s59
      %s77 = sphi 0, %s77
      %s79 = sphi 0, %s77
      %s80 = sphi 0, %s79
      %s94 = sphi 0, %s80
      %s100 = sphi 0, %s102
      %s103 = sphi 0, %s100
      %s104 = sphi 0, %s103
      %s120 = sphi 0, %s104
      %s128 = sphi 0, %s130
      %s131 = sphi 0, %s128
      %s132 = sphi 0, %s131
      %s148 = sphi 0, %s132
    $region4: #{generator_forward.14} parent=1 // loop_header_branch
      %13 = sbr.rel (%p11) target = $region8
    $region5: #{generator_forward.14} parent=1 // loop_body
      %s15 = ssub.s32 %s10, 1
      %s16 = ssub.s32 %s10, 2
      %s23 = sadd.s32 1, %s18
      %p24 = scmp.ge.s32.totalorder %s23, 4
      %s25 = scalar_select %p24, 0, %s23
      %s26 = sadd.s32 1, %s17
      %s27 = scalar_select %p24, %s26, %s17
      %p28 = scmp.ge.s32.totalorder %s27, 1
      %s29 = scalar_select %p28, 0, %s27
      %s30 = ssub.s32 %s17, %s29
      %p31 = scmp.eq.s32.totalorder %s30, 0
      %s33 = sadd.s32 %s32, 1
      %s34 = scalar_select %p31, %s32, %s33
      %p37 = pneg %p31
      %p38 = scmp.eq.s32.totalorder %s10, 3
      %p39 = por %p37, %p38
      %p40 = scmp.ne.s32.totalorder %s32, %s35
      %p41 = scmp.eq.s32.totalorder %s10, 0
      %p42 = por %p40, %p41
      %p43 = scmp.ne.s32.totalorder %s32, %s35
      %p44 = scmp.eq.s32.totalorder %s15, 3
      %p45 = por %p43, %p44
      %p46 = scmp.ne.s32.totalorder %s35, %s36
      %p47 = scmp.eq.s32.totalorder %s15, 0
      %p48 = por %p46, %p47
      %p49 = scmp.ne.s32.totalorder %s35, %s36
      %p50 = scmp.eq.s32.totalorder %s16, 3
      %p51 = por %p49, %p50
      %p53 = scmp.ne.s32.totalorder %s36, %s52
      %p54 = scmp.eq.s32.totalorder %s16, 0
      %p55 = por %p53, %p54
      %s57 = sadd.s32 %s56, 1
      %p60 = scmp.eq.s32.totalorder %s10, 3
      %p61 = scmp.ne.s32.totalorder %s56, %s58
      %p62 = scmp.eq.s32.totalorder %s10, 0
      %p63 = por %p61, %p62
      %p64 = scmp.ne.s32.totalorder %s56, %s58
      %p65 = scmp.eq.s32.totalorder %s15, 3
      %p66 = por %p64, %p65
      %p67 = scmp.ne.s32.totalorder %s58, %s59
      %p68 = scmp.eq.s32.totalorder %s15, 0
      %p69 = por %p67, %p68
      %p70 = scmp.ne.s32.totalorder %s58, %s59
      %p71 = scmp.eq.s32.totalorder %s16, 3
      %p72 = por %p70, %p71
      %p74 = scmp.ne.s32.totalorder %s59, %s73
      %p75 = scmp.eq.s32.totalorder %s16, 0
      %p76 = por %p74, %p75
      %s78 = sadd.s32 %s77, 1
      %p81 = scmp.eq.s32.totalorder %s10, 3
      %p82 = scmp.ne.s32.totalorder %s77, %s79
      %p83 = scmp.eq.s32.totalorder %s10, 0
      %p84 = por %p82, %p83
      %p85 = scmp.ne.s32.totalorder %s77, %s79
      %p86 = scmp.eq.s32.totalorder %s15, 3
      %p87 = por %p85, %p86
      %p88 = scmp.ne.s32.totalorder %s79, %s80
      %p89 = scmp.eq.s32.totalorder %s15, 0
      %p90 = por %p88, %p89
      %p91 = scmp.ne.s32.totalorder %s79, %s80
      %p92 = scmp.eq.s32.totalorder %s16, 3
      %p93 = por %p91, %p92
      %p95 = scmp.ne.s32.totalorder %s80, %s94
      %p96 = scmp.eq.s32.totalorder %s16, 0
      %p97 = por %p95, %p96
      %s98 = ssub.s32 %s18, %s25
      %p99 = scmp.eq.s32.totalorder %s98, 0
      %s101 = sadd.s32 %s100, 1
      %s102 = scalar_select %p99, %s100, %s101
      %p105 = pneg %p99
      %p106 = scmp.eq.s32.totalorder %s10, 3
      %p107 = por %p105, %p106
      %p108 = scmp.ne.s32.totalorder %s100, %s103
      %p109 = scmp.eq.s32.totalorder %s10, 0
      %p110 = por %p108, %p109
      %p111 = scmp.ne.s32.totalorder %s100, %s103
      %p112 = scmp.eq.s32.totalorder %s15, 3
      %p113 = por %p111, %p112
      %p114 = scmp.ne.s32.totalorder %s103, %s104
      %p115 = scmp.eq.s32.totalorder %s15, 0
      %p116 = por %p114, %p115
      %p117 = scmp.ne.s32.totalorder %s103, %s104
      %p118 = scmp.eq.s32.totalorder %s16, 3
      %p119 = por %p117, %p118
      %p121 = scmp.ne.s32.totalorder %s104, %s120
      %p122 = scmp.eq.s32.totalorder %s16, 0
      %p123 = por %p121, %p122
      %s124 = ssub.s32 %s17, %s29
      %s125 = ssub.s32 %s18, %s25
      %s126 = sor.u32 %s124, %s125
      %p127 = scmp.eq.s32.totalorder %s126, 0
      %s129 = sadd.s32 %s128, 1
      %s130 = scalar_select %p127, %s128, %s129
      %p133 = pneg %p127
      %p134 = scmp.eq.s32.totalorder %s10, 3
      %p135 = por %p133, %p134
      %p136 = scmp.ne.s32.totalorder %s128, %s131
      %p137 = scmp.eq.s32.totalorder %s10, 0
      %p138 = por %p136, %p137
      %p139 = scmp.ne.s32.totalorder %s128, %s131
      %p140 = scmp.eq.s32.totalorder %s15, 3
      %p141 = por %p139, %p140
      %p142 = scmp.ne.s32.totalorder %s131, %s132
      %p143 = scmp.eq.s32.totalorder %s15, 0
      %p144 = por %p142, %p143
      %p145 = scmp.ne.s32.totalorder %s131, %s132
      %p146 = scmp.eq.s32.totalorder %s16, 3
      %p147 = por %p145, %p146
      %p149 = scmp.ne.s32.totalorder %s132, %s148
      %p150 = scmp.eq.s32.totalorder %s16, 0
      %p151 = por %p149, %p150
      %p152 = scmp.le.s32.totalorder 1, %s10
      %p153 = scmp.lt.s32.totalorder %s10, 5
      %p154 = pnand %p152, %p153
      %p155 = pneg %p154
      // Predicated region
      $region9: #{generator_forward.14} parent=5 // pred_check
        _
      $region10: #{generator_forward.14} parent=5 // pred_check_branch
        %157 = sbr.rel (%p154) target = $region12
      $region11: #{generator_forward.14} parent=5 // pred_region
        %s158 = ssub.s32 %s10, 1
        // Predicated region
        $region13: #{generator_forward.14} parent=11 // pred_check
          %p159 = pneg %p48
        $region14: #{generator_forward.14} parent=11 // pred_check_branch
          %161 = sbr.rel (%p159) target = $region16
        $region15: #{generator_forward.14} parent=11 // pred_region
          %s162 = smul.u32 16, %s19
          %p163 = scmp.lt.s32.totalorder %s162, 15
          %s164 = scalar_select %p163, %s162, 15
          %s165 = smul.addr %s164, 2
          %s166 = smul.addr %s165, 8
          %s167 = scalar_lea.vmem %s0, %s166
          %s168 = smul.u32 16, %s19
        $region16: #{generator_forward.14} parent=11 // pred_fallthru
          _
        // Predicated region
        $region17: #{generator_forward.14} parent=11 // pred_check
          %p169 = pneg %p69
        $region18: #{generator_forward.14} parent=11 // pred_check_branch
          %171 = sbr.rel (%p169) target = $region20
        $region19: #{generator_forward.14} parent=11 // pred_region
          _
        $region20: #{generator_forward.14} parent=11 // pred_fallthru
          _
        // Predicated region
        $region21: #{generator_forward.14} parent=11 // pred_check
          %p172 = pneg %p90
        $region22: #{generator_forward.14} parent=11 // pred_check_branch
          %174 = sbr.rel (%p172) target = $region24
        $region23: #{generator_forward.14} parent=11 // pred_region
          _
        $region24: #{generator_forward.14} parent=11 // pred_fallthru
          _
      $region12: #{generator_forward.14} parent=5 // pred_fallthru
        _
      %p175 = scmp.lt.s32.totalorder %s10, 4
      // Predicated region
      $region25: #{generator_forward.14} parent=5 // pred_check
        %p176 = pneg %p175
      $region26: #{generator_forward.14} parent=5 // pred_check_branch
        %178 = sbr.rel (%p176) target = $region28
      $region27: #{generator_forward.14} parent=5 // pred_region
        // Predicated region
        $region29: #{generator_forward.14} parent=27 // pred_check
          %p179 = pneg %p110
        $region30: #{generator_forward.14} parent=27 // pred_check_branch
          %181 = sbr.rel (%p179) target = $region32
        $region31: #{generator_forward.14} parent=27 // pred_region
          %s182 = sand.u32 %s100, 1
          %s183 = sand.u32 %s100, 1
          %s184 = smul.addr %s183, 512
          %s185 = scalar_lea.vmem [#allocation2], %s184
          %s186 = smul.u32 4, %s18
          %s187 = smul.addr %s186, 4
          %s188 = scalar_lea.vmem %s3, %s187
          // Predicated region
          $region33: #{generator_forward.14} parent=31 // pred_check
            _
          $region34: #{generator_forward.14} parent=31 // pred_check_branch
            %190 = sbr.rel (0) target = $region36
          $region35: #{generator_forward.14} parent=31 // pred_region
            // Predicated region
            $region37: #{generator_forward.14} parent=35 // pred_check
              _
            $region38: #{generator_forward.14} parent=35 // pred_check_branch
              %192 = sbr.rel (0) target = $region40
            $region39: #{generator_forward.14} parent=35 // pred_region
              loop: start=0, step=1, limit=1
              $region41: #{generator_forward.14} parent=39 // loop_pre_header
                _
              $region42: #{generator_forward.14} parent=39 // loop_header
                %s194 = sphi 0, %s198
                %p195 = scmp.ge.s32.totalorder %s194, 1
                %s199 = sphi %s188, %s188
                %s200 = sphi %s185, %s185
              $region43: #{generator_forward.14} parent=39 // loop_header_branch
                %197 = sbr.rel (%p195) target = $region47
              $region44: #{generator_forward.14} parent=39 // loop_body
                %v201 = vld [vmem:[%s199] sm:$0xff]
                %202 = vst [vmem:[%s200] sm:$0xff] %v201
                %v203 = vld [vmem:[%s199 + $0x8] sm:$0xff]
                %204 = vst [vmem:[%s200 + $0x8] sm:$0xff] %v203
                %v205 = vld [vmem:[%s199 + $0x40] sm:$0xff]
                %206 = vst [vmem:[%s200 + $0x10] sm:$0xff] %v205
                %v207 = vld [vmem:[%s199 + $0x48] sm:$0xff]
                %208 = vst [vmem:[%s200 + $0x18] sm:$0xff] %v207
                %v209 = vld [vmem:[%s199 + $0x80] sm:$0xff]
                %210 = vst [vmem:[%s200 + $0x20] sm:$0xff] %v209
                %v211 = vld [vmem:[%s199 + $0x88] sm:$0xff]
                %212 = vst [vmem:[%s200 + $0x28] sm:$0xff] %v211
                %v213 = vld [vmem:[%s199 + $0xc0] sm:$0xff]
                %214 = vst [vmem:[%s200 + $0x30] sm:$0xff] %v213
                %v215 = vld [vmem:[%s199 + $0xc8] sm:$0xff]
                %216 = vst [vmem:[%s200 + $0x38] sm:$0xff] %v215
                %v217 = vld [vmem:[%s199 + $0x100] sm:$0xff]
                %218 = vst [vmem:[%s200 + $0x40] sm:$0xff] %v217
                %v219 = vld [vmem:[%s199 + $0x108] sm:$0xff]
                %220 = vst [vmem:[%s200 + $0x48] sm:$0xff] %v219
                %v221 = vld [vmem:[%s199 + $0x140] sm:$0xff]
                %222 = vst [vmem:[%s200 + $0x50] sm:$0xff] %v221
                %v223 = vld [vmem:[%s199 + $0x148] sm:$0xff]
                %224 = vst [vmem:[%s200 + $0x58] sm:$0xff] %v223
                %v225 = vld [vmem:[%s199 + $0x180] sm:$0xff]
                %226 = vst [vmem:[%s200 + $0x60] sm:$0xff] %v225
                %v227 = vld [vmem:[%s199 + $0x188] sm:$0xff]
                %228 = vst [vmem:[%s200 + $0x68] sm:$0xff] %v227
                %v229 = vld [vmem:[%s199 + $0x1c0] sm:$0xff]
                %230 = vst [vmem:[%s200 + $0x70] sm:$0xff] %v229
                %v231 = vld [vmem:[%s199 + $0x1c8] sm:$0xff]
                %232 = vst [vmem:[%s200 + $0x78] sm:$0xff] %v231
                %v233 = vld [vmem:[%s199 + $0x200] sm:$0xff]
                %234 = vst [vmem:[%s200 + $0x80] sm:$0xff] %v233
                %v235 = vld [vmem:[%s199 + $0x208] sm:$0xff]
                %236 = vst [vmem:[%s200 + $0x88] sm:$0xff] %v235
                %v237 = vld [vmem:[%s199 + $0x240] sm:$0xff]
                %238 = vst [vmem:[%s200 + $0x90] sm:$0xff] %v237
                %v239 = vld [vmem:[%s199 + $0x248] sm:$0xff]
                %240 = vst [vmem:[%s200 + $0x98] sm:$0xff] %v239
                %v241 = vld [vmem:[%s199 + $0x280] sm:$0xff]
                %242 = vst [vmem:[%s200 + $0xa0] sm:$0xff] %v241
                %v243 = vld [vmem:[%s199 + $0x288] sm:$0xff]
                %244 = vst [vmem:[%s200 + $0xa8] sm:$0xff] %v243
                %v245 = vld [vmem:[%s199 + $0x2c0] sm:$0xff]
                %246 = vst [vmem:[%s200 + $0xb0] sm:$0xff] %v245
                %v247 = vld [vmem:[%s199 + $0x2c8] sm:$0xff]
                %248 = vst [vmem:[%s200 + $0xb8] sm:$0xff] %v247
                %v249 = vld [vmem:[%s199 + $0x300] sm:$0xff]
                %250 = vst [vmem:[%s200 + $0xc0] sm:$0xff] %v249
                %v251 = vld [vmem:[%s199 + $0x308] sm:$0xff]
                %252 = vst [vmem:[%s200 + $0xc8] sm:$0xff] %v251
                %v253 = vld [vmem:[%s199 + $0x340] sm:$0xff]
                %254 = vst [vmem:[%s200 + $0xd0] sm:$0xff] %v253
                %v255 = vld [vmem:[%s199 + $0x348] sm:$0xff]
                %256 = vst [vmem:[%s200 + $0xd8] sm:$0xff] %v255
                %v257 = vld [vmem:[%s199 + $0x380] sm:$0xff]
                %258 = vst [vmem:[%s200 + $0xe0] sm:$0xff] %v257
                %v259 = vld [vmem:[%s199 + $0x388] sm:$0xff]
                %260 = vst [vmem:[%s200 + $0xe8] sm:$0xff] %v259
                %v261 = vld [vmem:[%s199 + $0x3c0] sm:$0xff]
                %262 = vst [vmem:[%s200 + $0xf0] sm:$0xff] %v261
                %v263 = vld [vmem:[%s199 + $0x3c8] sm:$0xff]
                %264 = vst [vmem:[%s200 + $0xf8] sm:$0xff] %v263
                %v265 = vld [vmem:[%s199 + $0x400] sm:$0xff]
                %266 = vst [vmem:[%s200 + $0x100] sm:$0xff] %v265
                %v267 = vld [vmem:[%s199 + $0x408] sm:$0xff]
                %268 = vst [vmem:[%s200 + $0x108] sm:$0xff] %v267
                %v269 = vld [vmem:[%s199 + $0x440] sm:$0xff]
                %270 = vst [vmem:[%s200 + $0x110] sm:$0xff] %v269
                %v271 = vld [vmem:[%s199 + $0x448] sm:$0xff]
                %272 = vst [vmem:[%s200 + $0x118] sm:$0xff] %v271
                %v273 = vld [vmem:[%s199 + $0x480] sm:$0xff]
                %274 = vst [vmem:[%s200 + $0x120] sm:$0xff] %v273
                %v275 = vld [vmem:[%s199 + $0x488] sm:$0xff]
                %276 = vst [vmem:[%s200 + $0x128] sm:$0xff] %v275
                %v277 = vld [vmem:[%s199 + $0x4c0] sm:$0xff]
                %278 = vst [vmem:[%s200 + $0x130] sm:$0xff] %v277
                %v279 = vld [vmem:[%s199 + $0x4c8] sm:$0xff]
                %280 = vst [vmem:[%s200 + $0x138] sm:$0xff] %v279
                %v281 = vld [vmem:[%s199 + $0x500] sm:$0xff]
                %282 = vst [vmem:[%s200 + $0x140] sm:$0xff] %v281
                %v283 = vld [vmem:[%s199 + $0x508] sm:$0xff]
                %284 = vst [vmem:[%s200 + $0x148] sm:$0xff] %v283
                %v285 = vld [vmem:[%s199 + $0x540] sm:$0xff]
                %286 = vst [vmem:[%s200 + $0x150] sm:$0xff] %v285
                %v287 = vld [vmem:[%s199 + $0x548] sm:$0xff]
                %288 = vst [vmem:[%s200 + $0x158] sm:$0xff] %v287
                %v289 = vld [vmem:[%s199 + $0x580] sm:$0xff]
                %290 = vst [vmem:[%s200 + $0x160] sm:$0xff] %v289
                %v291 = vld [vmem:[%s199 + $0x588] sm:$0xff]
                %292 = vst [vmem:[%s200 + $0x168] sm:$0xff] %v291
                %v293 = vld [vmem:[%s199 + $0x5c0] sm:$0xff]
                %294 = vst [vmem:[%s200 + $0x170] sm:$0xff] %v293
                %v295 = vld [vmem:[%s199 + $0x5c8] sm:$0xff]
                %296 = vst [vmem:[%s200 + $0x178] sm:$0xff] %v295
                %v297 = vld [vmem:[%s199 + $0x600] sm:$0xff]
                %298 = vst [vmem:[%s200 + $0x180] sm:$0xff] %v297
                %v299 = vld [vmem:[%s199 + $0x608] sm:$0xff]
                %300 = vst [vmem:[%s200 + $0x188] sm:$0xff] %v299
                %v301 = vld [vmem:[%s199 + $0x640] sm:$0xff]
                %302 = vst [vmem:[%s200 + $0x190] sm:$0xff] %v301
                %v303 = vld [vmem:[%s199 + $0x648] sm:$0xff]
                %304 = vst [vmem:[%s200 + $0x198] sm:$0xff] %v303
                %v305 = vld [vmem:[%s199 + $0x680] sm:$0xff]
                %306 = vst [vmem:[%s200 + $0x1a0] sm:$0xff] %v305
                %v307 = vld [vmem:[%s199 + $0x688] sm:$0xff]
                %308 = vst [vmem:[%s200 + $0x1a8] sm:$0xff] %v307
                %v309 = vld [vmem:[%s199 + $0x6c0] sm:$0xff]
                %310 = vst [vmem:[%s200 + $0x1b0] sm:$0xff] %v309
                %v311 = vld [vmem:[%s199 + $0x6c8] sm:$0xff]
                %312 = vst [vmem:[%s200 + $0x1b8] sm:$0xff] %v311
                %v313 = vld [vmem:[%s199 + $0x700] sm:$0xff]
                %314 = vst [vmem:[%s200 + $0x1c0] sm:$0xff] %v313
                %v315 = vld [vmem:[%s199 + $0x708] sm:$0xff]
                %316 = vst [vmem:[%s200 + $0x1c8] sm:$0xff] %v315
                %v317 = vld [vmem:[%s199 + $0x740] sm:$0xff]
                %318 = vst [vmem:[%s200 + $0x1d0] sm:$0xff] %v317
                %v319 = vld [vmem:[%s199 + $0x748] sm:$0xff]
                %320 = vst [vmem:[%s200 + $0x1d8] sm:$0xff] %v319
                %v321 = vld [vmem:[%s199 + $0x780] sm:$0xff]
                %322 = vst [vmem:[%s200 + $0x1e0] sm:$0xff] %v321
                %v323 = vld [vmem:[%s199 + $0x788] sm:$0xff]
                %324 = vst [vmem:[%s200 + $0x1e8] sm:$0xff] %v323
                %v325 = vld [vmem:[%s199 + $0x7c0] sm:$0xff]
                %326 = vst [vmem:[%s200 + $0x1f0] sm:$0xff] %v325
                %v327 = vld [vmem:[%s199 + $0x7c8] sm:$0xff]
                %328 = vst [vmem:[%s200 + $0x1f8] sm:$0xff] %v327
              $region45: #{generator_forward.14} parent=39 // loop_footer
                %s198 = sadd.s32 1, %s194
              $region46: #{generator_forward.14} parent=39 // loop_footer_branch
                %193 = sbr.rel target = $region42
              $region47: #{generator_forward.14} parent=39 // loop_exit
                _
            $region40: #{generator_forward.14} parent=35 // pred_fallthru
              _
            // Predicated region
            $region48: #{generator_forward.14} parent=35 // pred_check
              _
            $region49: #{generator_forward.14} parent=35 // pred_check_branch
              %330 = sbr.rel target = $region51
            $region50: #{generator_forward.14} parent=35 // pred_region
              _
            $region51: #{generator_forward.14} parent=35 // pred_fallthru
              _
          $region36: #{generator_forward.14} parent=31 // pred_fallthru
            _
          %331 = vnop
        $region32: #{generator_forward.14} parent=27 // pred_fallthru
          _
      $region28: #{generator_forward.14} parent=5 // pred_fallthru
        _
      %p332 = scmp.le.s32.totalorder 1, %s10
      %p333 = scmp.lt.s32.totalorder %s10, 5
      %p334 = pnand %p332, %p333
      %p335 = pneg %p334
      // Predicated region
      $region52: #{generator_forward.14} parent=5 // pred_check
        _
      $region53: #{generator_forward.14} parent=5 // pred_check_branch
        %337 = sbr.rel (%p334) target = $region55
      $region54: #{generator_forward.14} parent=5 // pred_region
        %s338 = ssub.s32 %s10, 1
        %s339 = sand.u32 %s103, 1
        %s340 = sand.u32 %s103, 1
        %s341 = smul.addr %s340, 512
        %s342 = scalar_lea.vmem [#allocation2], %s341
        // Predicated region
        $region56: #{generator_forward.14} parent=54 // pred_check
          %p343 = pneg %p116
        $region57: #{generator_forward.14} parent=54 // pred_check_branch
          %345 = sbr.rel (%p343) target = $region59
        $region58: #{generator_forward.14} parent=54 // pred_region
          _
        $region59: #{generator_forward.14} parent=54 // pred_fallthru
          _
        %s346 = smul.u32 16, %s19
        %p347 = scmp.lt.s32.totalorder %s346, 15
        %s348 = scalar_select %p347, %s346, 15
        %s349 = smul.addr %s348, 2
        %s350 = smul.addr %s349, 8
        %s351 = scalar_lea.vmem %s0, %s350
        %p352 = pneg %p48
        %p353 = pneg %p45
        %p354 = pneg %p69
        %p355 = pneg %p66
        %p356 = pneg %p90
        %p357 = pneg %p87
        %s358 = sand.u32 %s103, 1
        %s359 = sand.u32 %s103, 1
        %s360 = smul.addr %s359, 512
        %s361 = scalar_lea.vmem [#allocation2], %s360
        %p362 = pneg %p116
        %p363 = pneg %p113
        %p364 = pneg %p144
        %p365 = pneg %p141
        %s366 = sand.u32 %s131, 1
        %s367 = sand.u32 %s131, 1
        %s368 = smul.addr %s367, 512
        %s369 = scalar_lea.vmem [#allocation3], %s368
        %s370 = smul.u32 16, %s19
        %p371 = scmp.lt.s32.totalorder %s370, 15
        %s372 = scalar_select %p371, %s370, 15
        %s373 = smul.addr %s372, 2
        %s374 = smul.addr %s373, 8
        %s375 = scalar_lea.vmem %s0, %s374
        %s376 = smul.u32 16, %s19
        %s377 = smul.u32 4, %s20
        %s378 = smul.u32 16, %s19
        %s379 = smul.u32 4, %s20
        %v380 = vld [vmem:[%s375] sm:$0xff]
        %v381 = vld [vmem:[%s375 + $0x8] sm:$0xff]
        %v382 = vld [vmem:[%s375 + $0x10] sm:$0xff]
        %v383 = vld [vmem:[%s375 + $0x18] sm:$0xff]
        %v384 = vld [vmem:[%s375 + $0x20] sm:$0xff]
        %v385 = vld [vmem:[%s375 + $0x28] sm:$0xff]
        %v386 = vld [vmem:[%s375 + $0x30] sm:$0xff]
        %v387 = vld [vmem:[%s375 + $0x38] sm:$0xff]
        %v388 = vld [vmem:[%s375 + $0x40] sm:$0xff]
        %v389 = vld [vmem:[%s375 + $0x48] sm:$0xff]
        %v390 = vld [vmem:[%s375 + $0x50] sm:$0xff]
        %v391 = vld [vmem:[%s375 + $0x58] sm:$0xff]
        %v392 = vld [vmem:[%s375 + $0x60] sm:$0xff]
        %v393 = vld [vmem:[%s375 + $0x68] sm:$0xff]
        %v394 = vld [vmem:[%s375 + $0x70] sm:$0xff]
        %v395 = vld [vmem:[%s375 + $0x78] sm:$0xff]
        %v396 = vld [vmem:[%s375 + $0x80] sm:$0xff]
        %v397 = vld [vmem:[%s375 + $0x88] sm:$0xff]
        %v398 = vld [vmem:[%s375 + $0x90] sm:$0xff]
        %v399 = vld [vmem:[%s375 + $0x98] sm:$0xff]
        %v400 = vld [vmem:[%s375 + $0xa0] sm:$0xff]
        %v401 = vld [vmem:[%s375 + $0xa8] sm:$0xff]
        %v402 = vld [vmem:[%s375 + $0xb0] sm:$0xff]
        %v403 = vld [vmem:[%s375 + $0xb8] sm:$0xff]
        %v404 = vld [vmem:[%s375 + $0xc0] sm:$0xff]
        %v405 = vld [vmem:[%s375 + $0xc8] sm:$0xff]
        %v406 = vld [vmem:[%s375 + $0xd0] sm:$0xff]
        %v407 = vld [vmem:[%s375 + $0xd8] sm:$0xff]
        %v408 = vld [vmem:[%s375 + $0xe0] sm:$0xff]
        %v409 = vld [vmem:[%s375 + $0xe8] sm:$0xff]
        %v410 = vld [vmem:[%s375 + $0xf0] sm:$0xff]
        %v411 = vld [vmem:[%s375 + $0xf8] sm:$0xff]
        %v412 = vld [vmem:[%s1] sm:$0x3]
        %v414 = vlaneseq
        %v415 = vshrl.u32 %v414, 7
        %v416 = vsub.s32 0, %v415
        %v417 = vrot.slane %v412, %v416
        %v418 = vlaneseq
        %v419 = vshrl.u32 %v418, 7
        %v420 = vsub.s32 1, %v419
        %v421 = vrot.slane %v412, %v420
        %v424 = vmul.f32 %v380, %v417
        %v425 = vmul.f32 %v381, %v421
        %v426 = vmul.f32 %v382, %v417
        %v427 = vmul.f32 %v383, %v421
        %v428 = vmul.f32 %v384, %v417
        %v429 = vmul.f32 %v385, %v421
        %v430 = vmul.f32 %v386, %v417
        %v431 = vmul.f32 %v387, %v421
        %v432 = vmul.f32 %v388, %v417
        %v433 = vmul.f32 %v389, %v421
        %v434 = vmul.f32 %v390, %v417
        %v435 = vmul.f32 %v391, %v421
        %v436 = vmul.f32 %v392, %v417
        %v437 = vmul.f32 %v393, %v421
        %v438 = vmul.f32 %v394, %v417
        %v439 = vmul.f32 %v395, %v421
        %v440 = vmul.f32 %v396, %v417
        %v441 = vmul.f32 %v397, %v421
        %v442 = vmul.f32 %v398, %v417
        %v443 = vmul.f32 %v399, %v421
        %v444 = vmul.f32 %v400, %v417
        %v445 = vmul.f32 %v401, %v421
        %v446 = vmul.f32 %v402, %v417
        %v447 = vmul.f32 %v403, %v421
        %v448 = vmul.f32 %v404, %v417
        %v449 = vmul.f32 %v405, %v421
        %v450 = vmul.f32 %v406, %v417
        %v451 = vmul.f32 %v407, %v421
        %v452 = vmul.f32 %v408, %v417
        %v453 = vmul.f32 %v409, %v421
        %v454 = vmul.f32 %v410, %v417
        %v455 = vmul.f32 %v411, %v421
        %v456 = vld [vmem:[%s2] sm:$0x3]
        %v458 = vlaneseq
        %v459 = vshrl.u32 %v458, 7
        %v460 = vsub.s32 0, %v459
        %v461 = vrot.slane %v456, %v460
        %v462 = vlaneseq
        %v463 = vshrl.u32 %v462, 7
        %v464 = vsub.s32 1, %v463
        %v465 = vrot.slane %v456, %v464
        %v468 = vadd.f32 %v424, %v461
        %v469 = vadd.f32 %v425, %v465
        %v470 = vadd.f32 %v426, %v461
        %v471 = vadd.f32 %v427, %v465
        %v472 = vadd.f32 %v428, %v461
        %v473 = vadd.f32 %v429, %v465
        %v474 = vadd.f32 %v430, %v461
        %v475 = vadd.f32 %v431, %v465
        %v476 = vadd.f32 %v432, %v461
        %v477 = vadd.f32 %v433, %v465
        %v478 = vadd.f32 %v434, %v461
        %v479 = vadd.f32 %v435, %v465
        %v480 = vadd.f32 %v436, %v461
        %v481 = vadd.f32 %v437, %v465
        %v482 = vadd.f32 %v438, %v461
        %v483 = vadd.f32 %v439, %v465
        %v484 = vadd.f32 %v440, %v461
        %v485 = vadd.f32 %v441, %v465
        %v486 = vadd.f32 %v442, %v461
        %v487 = vadd.f32 %v443, %v465
        %v488 = vadd.f32 %v444, %v461
        %v489 = vadd.f32 %v445, %v465
        %v490 = vadd.f32 %v446, %v461
        %v491 = vadd.f32 %v447, %v465
        %v492 = vadd.f32 %v448, %v461
        %v493 = vadd.f32 %v449, %v465
        %v494 = vadd.f32 %v450, %v461
        %v495 = vadd.f32 %v451, %v465
        %v496 = vadd.f32 %v452, %v461
        %v497 = vadd.f32 %v453, %v465
        %v498 = vadd.f32 %v454, %v461
        %v499 = vadd.f32 %v455, %v465
        %v500 = vmax.f32 %v468, 0.0
        %v501 = vmax.f32 %v469, 0.0
        %v502 = vmax.f32 %v470, 0.0
        %v503 = vmax.f32 %v471, 0.0
        %v504 = vmax.f32 %v472, 0.0
        %v505 = vmax.f32 %v473, 0.0
        %v506 = vmax.f32 %v474, 0.0
        %v507 = vmax.f32 %v475, 0.0
        %v508 = vmax.f32 %v476, 0.0
        %v509 = vmax.f32 %v477, 0.0
        %v510 = vmax.f32 %v478, 0.0
        %v511 = vmax.f32 %v479, 0.0
        %v512 = vmax.f32 %v480, 0.0
        %v513 = vmax.f32 %v481, 0.0
        %v514 = vmax.f32 %v482, 0.0
        %v515 = vmax.f32 %v483, 0.0
        %v516 = vmax.f32 %v484, 0.0
        %v517 = vmax.f32 %v485, 0.0
        %v518 = vmax.f32 %v486, 0.0
        %v519 = vmax.f32 %v487, 0.0
        %v520 = vmax.f32 %v488, 0.0
        %v521 = vmax.f32 %v489, 0.0
        %v522 = vmax.f32 %v490, 0.0
        %v523 = vmax.f32 %v491, 0.0
        %v524 = vmax.f32 %v492, 0.0
        %v525 = vmax.f32 %v493, 0.0
        %v526 = vmax.f32 %v494, 0.0
        %v527 = vmax.f32 %v495, 0.0
        %v528 = vmax.f32 %v496, 0.0
        %v529 = vmax.f32 %v497, 0.0
        %v530 = vmax.f32 %v498, 0.0
        %v531 = vmax.f32 %v499, 0.0
        %v532 = vpack.c.bf16 %v502, %v500
        %v533 = vpack.c.bf16 %v503, %v501
        %v534 = vpack.c.bf16 %v506, %v504
        %v535 = vpack.c.bf16 %v507, %v505
        %v536 = vpack.c.bf16 %v510, %v508
        %v537 = vpack.c.bf16 %v511, %v509
        %v538 = vpack.c.bf16 %v514, %v512
        %v539 = vpack.c.bf16 %v515, %v513
        %v540 = vpack.c.bf16 %v518, %v516
        %v541 = vpack.c.bf16 %v519, %v517
        %v542 = vpack.c.bf16 %v522, %v520
        %v543 = vpack.c.bf16 %v523, %v521
        %v544 = vpack.c.bf16 %v526, %v524
        %v545 = vpack.c.bf16 %v527, %v525
        %v546 = vpack.c.bf16 %v530, %v528
        %v547 = vpack.c.bf16 %v531, %v529
        %v548 = vld [vmem:[%s342] sm:$0xff]
        %v549 = vld [vmem:[%s342 + $0x8] sm:$0xff]
        %v550 = vld [vmem:[%s342 + $0x10] sm:$0xff]
        %v551 = vld [vmem:[%s342 + $0x18] sm:$0xff]
        %v552 = vld [vmem:[%s342 + $0x20] sm:$0xff]
        %v553 = vld [vmem:[%s342 + $0x28] sm:$0xff]
        %v554 = vld [vmem:[%s342 + $0x30] sm:$0xff]
        %v555 = vld [vmem:[%s342 + $0x38] sm:$0xff]
        %v556 = vld [vmem:[%s342 + $0x40] sm:$0xff]
        %v557 = vld [vmem:[%s342 + $0x48] sm:$0xff]
        %v558 = vld [vmem:[%s342 + $0x50] sm:$0xff]
        %v559 = vld [vmem:[%s342 + $0x58] sm:$0xff]
        %v560 = vld [vmem:[%s342 + $0x60] sm:$0xff]
        %v561 = vld [vmem:[%s342 + $0x68] sm:$0xff]
        %v562 = vld [vmem:[%s342 + $0x70] sm:$0xff]
        %v563 = vld [vmem:[%s342 + $0x78] sm:$0xff]
        %v564 = vld [vmem:[%s342 + $0x80] sm:$0xff]
        %v565 = vld [vmem:[%s342 + $0x88] sm:$0xff]
        %v566 = vld [vmem:[%s342 + $0x90] sm:$0xff]
        %v567 = vld [vmem:[%s342 + $0x98] sm:$0xff]
        %v568 = vld [vmem:[%s342 + $0xa0] sm:$0xff]
        %v569 = vld [vmem:[%s342 + $0xa8] sm:$0xff]
        %v570 = vld [vmem:[%s342 + $0xb0] sm:$0xff]
        %v571 = vld [vmem:[%s342 + $0xb8] sm:$0xff]
        %v572 = vld [vmem:[%s342 + $0xc0] sm:$0xff]
        %v573 = vld [vmem:[%s342 + $0xc8] sm:$0xff]
        %v574 = vld [vmem:[%s342 + $0xd0] sm:$0xff]
        %v575 = vld [vmem:[%s342 + $0xd8] sm:$0xff]
        %v576 = vld [vmem:[%s342 + $0xe0] sm:$0xff]
        %v577 = vld [vmem:[%s342 + $0xe8] sm:$0xff]
        %v578 = vld [vmem:[%s342 + $0xf0] sm:$0xff]
        %v579 = vld [vmem:[%s342 + $0xf8] sm:$0xff]
        %v580 = vld [vmem:[%s342 + $0x100] sm:$0xff]
        %v581 = vld [vmem:[%s342 + $0x108] sm:$0xff]
        %v582 = vld [vmem:[%s342 + $0x110] sm:$0xff]
        %v583 = vld [vmem:[%s342 + $0x118] sm:$0xff]
        %v584 = vld [vmem:[%s342 + $0x120] sm:$0xff]
        %v585 = vld [vmem:[%s342 + $0x128] sm:$0xff]
        %v586 = vld [vmem:[%s342 + $0x130] sm:$0xff]
        %v587 = vld [vmem:[%s342 + $0x138] sm:$0xff]
        %v588 = vld [vmem:[%s342 + $0x140] sm:$0xff]
        %v589 = vld [vmem:[%s342 + $0x148] sm:$0xff]
        %v590 = vld [vmem:[%s342 + $0x150] sm:$0xff]
        %v591 = vld [vmem:[%s342 + $0x158] sm:$0xff]
        %v592 = vld [vmem:[%s342 + $0x160] sm:$0xff]
        %v593 = vld [vmem:[%s342 + $0x168] sm:$0xff]
        %v594 = vld [vmem:[%s342 + $0x170] sm:$0xff]
        %v595 = vld [vmem:[%s342 + $0x178] sm:$0xff]
        %v596 = vld [vmem:[%s342 + $0x180] sm:$0xff]
        %v597 = vld [vmem:[%s342 + $0x188] sm:$0xff]
        %v598 = vld [vmem:[%s342 + $0x190] sm:$0xff]
        %v599 = vld [vmem:[%s342 + $0x198] sm:$0xff]
        %v600 = vld [vmem:[%s342 + $0x1a0] sm:$0xff]
        %v601 = vld [vmem:[%s342 + $0x1a8] sm:$0xff]
        %v602 = vld [vmem:[%s342 + $0x1b0] sm:$0xff]
        %v603 = vld [vmem:[%s342 + $0x1b8] sm:$0xff]
        %v604 = vld [vmem:[%s342 + $0x1c0] sm:$0xff]
        %v605 = vld [vmem:[%s342 + $0x1c8] sm:$0xff]
        %v606 = vld [vmem:[%s342 + $0x1d0] sm:$0xff]
        %v607 = vld [vmem:[%s342 + $0x1d8] sm:$0xff]
        %v608 = vld [vmem:[%s342 + $0x1e0] sm:$0xff]
        %v609 = vld [vmem:[%s342 + $0x1e8] sm:$0xff]
        %v610 = vld [vmem:[%s342 + $0x1f0] sm:$0xff]
        %v611 = vld [vmem:[%s342 + $0x1f8] sm:$0xff]
        %v676 = vunpack.c.l.b16 %v548
        %v677 = vunpack.c.h.b16 %v548
        %v678 = vunpack.c.l.b16 %v549
        %v679 = vunpack.c.h.b16 %v549
        %v680 = vunpack.c.l.b16 %v550
        %v681 = vunpack.c.h.b16 %v550
        %v682 = vunpack.c.l.b16 %v551
        %v683 = vunpack.c.h.b16 %v551
        %v684 = vunpack.c.l.b16 %v552
        %v685 = vunpack.c.h.b16 %v552
        %v686 = vunpack.c.l.b16 %v553
        %v687 = vunpack.c.h.b16 %v553
        %v688 = vunpack.c.l.b16 %v554
        %v689 = vunpack.c.h.b16 %v554
        %v690 = vunpack.c.l.b16 %v555
        %v691 = vunpack.c.h.b16 %v555
        %v692 = vunpack.c.l.b16 %v556
        %v693 = vunpack.c.h.b16 %v556
        %v694 = vunpack.c.l.b16 %v557
        %v695 = vunpack.c.h.b16 %v557
        %v696 = vunpack.c.l.b16 %v558
        %v697 = vunpack.c.h.b16 %v558
        %v698 = vunpack.c.l.b16 %v559
        %v699 = vunpack.c.h.b16 %v559
        %v700 = vunpack.c.l.b16 %v560
        %v701 = vunpack.c.h.b16 %v560
        %v702 = vunpack.c.l.b16 %v561
        %v703 = vunpack.c.h.b16 %v561
        %v704 = vunpack.c.l.b16 %v562
        %v705 = vunpack.c.h.b16 %v562
        %v706 = vunpack.c.l.b16 %v563
        %v707 = vunpack.c.h.b16 %v563
        %v708 = vunpack.c.l.b16 %v564
        %v709 = vunpack.c.h.b16 %v564
        %v710 = vunpack.c.l.b16 %v565
        %v711 = vunpack.c.h.b16 %v565
        %v712 = vunpack.c.l.b16 %v566
        %v713 = vunpack.c.h.b16 %v566
        %v714 = vunpack.c.l.b16 %v567
        %v715 = vunpack.c.h.b16 %v567
        %v716 = vunpack.c.l.b16 %v568
        %v717 = vunpack.c.h.b16 %v568
        %v718 = vunpack.c.l.b16 %v569
        %v719 = vunpack.c.h.b16 %v569
        %v720 = vunpack.c.l.b16 %v570
        %v721 = vunpack.c.h.b16 %v570
        %v722 = vunpack.c.l.b16 %v571
        %v723 = vunpack.c.h.b16 %v571
        %v724 = vunpack.c.l.b16 %v572
        %v725 = vunpack.c.h.b16 %v572
        %v726 = vunpack.c.l.b16 %v573
        %v727 = vunpack.c.h.b16 %v573
        %v728 = vunpack.c.l.b16 %v574
        %v729 = vunpack.c.h.b16 %v574
        %v730 = vunpack.c.l.b16 %v575
        %v731 = vunpack.c.h.b16 %v575
        %v732 = vunpack.c.l.b16 %v576
        %v733 = vunpack.c.h.b16 %v576
        %v734 = vunpack.c.l.b16 %v577
        %v735 = vunpack.c.h.b16 %v577
        %v736 = vunpack.c.l.b16 %v578
        %v737 = vunpack.c.h.b16 %v578
        %v738 = vunpack.c.l.b16 %v579
        %v739 = vunpack.c.h.b16 %v579
        %v740 = vunpack.c.l.b16 %v580
        %v741 = vunpack.c.h.b16 %v580
        %v742 = vunpack.c.l.b16 %v581
        %v743 = vunpack.c.h.b16 %v581
        %v744 = vunpack.c.l.b16 %v582
        %v745 = vunpack.c.h.b16 %v582
        %v746 = vunpack.c.l.b16 %v583
        %v747 = vunpack.c.h.b16 %v583
        %v748 = vunpack.c.l.b16 %v584
        %v749 = vunpack.c.h.b16 %v584
        %v750 = vunpack.c.l.b16 %v585
        %v751 = vunpack.c.h.b16 %v585
        %v752 = vunpack.c.l.b16 %v586
        %v753 = vunpack.c.h.b16 %v586
        %v754 = vunpack.c.l.b16 %v587
        %v755 = vunpack.c.h.b16 %v587
        %v756 = vunpack.c.l.b16 %v588
        %v757 = vunpack.c.h.b16 %v588
        %v758 = vunpack.c.l.b16 %v589
        %v759 = vunpack.c.h.b16 %v589
        %v760 = vunpack.c.l.b16 %v590
        %v761 = vunpack.c.h.b16 %v590
        %v762 = vunpack.c.l.b16 %v591
        %v763 = vunpack.c.h.b16 %v591
        %v764 = vunpack.c.l.b16 %v592
        %v765 = vunpack.c.h.b16 %v592
        %v766 = vunpack.c.l.b16 %v593
        %v767 = vunpack.c.h.b16 %v593
        %v768 = vunpack.c.l.b16 %v594
        %v769 = vunpack.c.h.b16 %v594
        %v770 = vunpack.c.l.b16 %v595
        %v771 = vunpack.c.h.b16 %v595
        %v772 = vunpack.c.l.b16 %v596
        %v773 = vunpack.c.h.b16 %v596
        %v774 = vunpack.c.l.b16 %v597
        %v775 = vunpack.c.h.b16 %v597
        %v776 = vunpack.c.l.b16 %v598
        %v777 = vunpack.c.h.b16 %v598
        %v778 = vunpack.c.l.b16 %v599
        %v779 = vunpack.c.h.b16 %v599
        %v780 = vunpack.c.l.b16 %v600
        %v781 = vunpack.c.h.b16 %v600
        %v782 = vunpack.c.l.b16 %v601
        %v783 = vunpack.c.h.b16 %v601
        %v784 = vunpack.c.l.b16 %v602
        %v785 = vunpack.c.h.b16 %v602
        %v786 = vunpack.c.l.b16 %v603
        %v787 = vunpack.c.h.b16 %v603
        %v788 = vunpack.c.l.b16 %v604
        %v789 = vunpack.c.h.b16 %v604
        %v790 = vunpack.c.l.b16 %v605
        %v791 = vunpack.c.h.b16 %v605
        %v792 = vunpack.c.l.b16 %v606
        %v793 = vunpack.c.h.b16 %v606
        %v794 = vunpack.c.l.b16 %v607
        %v795 = vunpack.c.h.b16 %v607
        %v796 = vunpack.c.l.b16 %v608
        %v797 = vunpack.c.h.b16 %v608
        %v798 = vunpack.c.l.b16 %v609
        %v799 = vunpack.c.h.b16 %v609
        %v800 = vunpack.c.l.b16 %v610
        %v801 = vunpack.c.h.b16 %v610
        %v802 = vunpack.c.l.b16 %v611
        %v803 = vunpack.c.h.b16 %v611
        %v804 = vpack.c.b16 %v680, %v676
        %v805 = vpack.c.b16 %v681, %v677
        %v806 = vpack.c.b16 %v682, %v678
        %v807 = vpack.c.b16 %v683, %v679
        %v808 = vpack.c.b16 %v688, %v684
        %v809 = vpack.c.b16 %v689, %v685
        %v810 = vpack.c.b16 %v690, %v686
        %v811 = vpack.c.b16 %v691, %v687
        %v812 = vpack.c.b16 %v696, %v692
        %v813 = vpack.c.b16 %v697, %v693
        %v814 = vpack.c.b16 %v698, %v694
        %v815 = vpack.c.b16 %v699, %v695
        %v816 = vpack.c.b16 %v704, %v700
        %v817 = vpack.c.b16 %v705, %v701
        %v818 = vpack.c.b16 %v706, %v702
        %v819 = vpack.c.b16 %v707, %v703
        %v820 = vpack.c.b16 %v712, %v708
        %v821 = vpack.c.b16 %v713, %v709
        %v822 = vpack.c.b16 %v714, %v710
        %v823 = vpack.c.b16 %v715, %v711
        %v824 = vpack.c.b16 %v720, %v716
        %v825 = vpack.c.b16 %v721, %v717
        %v826 = vpack.c.b16 %v722, %v718
        %v827 = vpack.c.b16 %v723, %v719
        %v828 = vpack.c.b16 %v728, %v724
        %v829 = vpack.c.b16 %v729, %v725
        %v830 = vpack.c.b16 %v730, %v726
        %v831 = vpack.c.b16 %v731, %v727
        %v832 = vpack.c.b16 %v736, %v732
        %v833 = vpack.c.b16 %v737, %v733
        %v834 = vpack.c.b16 %v738, %v734
        %v835 = vpack.c.b16 %v739, %v735
        %v836 = vpack.c.b16 %v744, %v740
        %v837 = vpack.c.b16 %v745, %v741
        %v838 = vpack.c.b16 %v746, %v742
        %v839 = vpack.c.b16 %v747, %v743
        %v840 = vpack.c.b16 %v752, %v748
        %v841 = vpack.c.b16 %v753, %v749
        %v842 = vpack.c.b16 %v754, %v750
        %v843 = vpack.c.b16 %v755, %v751
        %v844 = vpack.c.b16 %v760, %v756
        %v845 = vpack.c.b16 %v761, %v757
        %v846 = vpack.c.b16 %v762, %v758
        %v847 = vpack.c.b16 %v763, %v759
        %v848 = vpack.c.b16 %v768, %v764
        %v849 = vpack.c.b16 %v769, %v765
        %v850 = vpack.c.b16 %v770, %v766
        %v851 = vpack.c.b16 %v771, %v767
        %v852 = vpack.c.b16 %v776, %v772
        %v853 = vpack.c.b16 %v777, %v773
        %v854 = vpack.c.b16 %v778, %v774
        %v855 = vpack.c.b16 %v779, %v775
        %v856 = vpack.c.b16 %v784, %v780
        %v857 = vpack.c.b16 %v785, %v781
        %v858 = vpack.c.b16 %v786, %v782
        %v859 = vpack.c.b16 %v787, %v783
        %v860 = vpack.c.b16 %v792, %v788
        %v861 = vpack.c.b16 %v793, %v789
        %v862 = vpack.c.b16 %v794, %v790
        %v863 = vpack.c.b16 %v795, %v791
        %v864 = vpack.c.b16 %v800, %v796
        %v865 = vpack.c.b16 %v801, %v797
        %v866 = vpack.c.b16 %v802, %v798
        %v867 = vpack.c.b16 %v803, %v799
        %932 = vmatprep.subr.bf16.mxu0 %v833
        %933 = vmatpush1.bf16.msra.mxu0 %v832
        %934 = vmatprep.subr.bf16.mxu0 %v829
        %935 = vmatpush1.bf16.msra.mxu0 %v828
        %936 = vmatprep.subr.bf16.mxu0 %v825
        %937 = vmatpush1.bf16.msra.mxu0 %v824
        %938 = vmatprep.subr.bf16.mxu0 %v821
        %939 = vmatpush1.bf16.msra.mxu0 %v820
        %940 = vmatprep.subr.bf16.mxu0 %v817
        %941 = vmatpush1.bf16.msra.mxu0 %v816
        %942 = vmatprep.subr.bf16.mxu0 %v813
        %943 = vmatpush1.bf16.msra.mxu0 %v812
        %944 = vmatprep.subr.bf16.mxu0 %v809
        %945 = vmatpush1.bf16.msra.mxu0 %v808
        %946 = vmatprep.subr.bf16.mxu0 %v805
        %947 = vmatpush1.bf16.msra.mxu0 %v804
        %948 = vmatprep.subr.bf16.mxu0 %v865
        %949 = vmatpush2.bf16.msra.mxu0 %v864
        %950 = vmatprep.subr.bf16.mxu0 %v861
        %951 = vmatpush2.bf16.msra.mxu0 %v860
        %952 = vmatprep.subr.bf16.mxu0 %v857
        %953 = vmatpush2.bf16.msra.mxu0 %v856
        %954 = vmatprep.subr.bf16.mxu0 %v853
        %955 = vmatpush2.bf16.msra.mxu0 %v852
        %956 = vmatprep.subr.bf16.mxu0 %v849
        %957 = vmatpush2.bf16.msra.mxu0 %v848
        %958 = vmatprep.subr.bf16.mxu0 %v845
        %959 = vmatpush2.bf16.msra.mxu0 %v844
        %960 = vmatprep.subr.bf16.mxu0 %v841
        %961 = vmatpush2.bf16.msra.mxu0 %v840
        %962 = vmatprep.subr.bf16.mxu0 %v837
        %963 = vmatpush2.bf16.msra.mxu0 %v836
        %964 = vmatprep.mubr.bf16.mxu0 %v533
        %965 = vmatmul.mubr.bf16.gmra.mxu0 %v532
        %v966 = vpop.f32.mrf.mxu0
        %v967 = vadd.f32 0.0, %v966
        %v968 = vpop.f32.mrf.mxu0
        %v969 = vadd.f32 0.0, %v968
        %v970 = vpop.f32.mrf.mxu0
        %v971 = vadd.f32 0.0, %v970
        %v972 = vpop.f32.mrf.mxu0
        %v973 = vadd.f32 0.0, %v972
        %974 = vmatprep.mubr.bf16.mxu0 %v535
        %975 = vmatmul.mubr.bf16.gmra.mxu0 %v534
        %v976 = vpop.f32.mrf.mxu0
        %v977 = vadd.f32 0.0, %v976
        %v978 = vpop.f32.mrf.mxu0
        %v979 = vadd.f32 0.0, %v978
        %v980 = vpop.f32.mrf.mxu0
        %v981 = vadd.f32 0.0, %v980
        %v982 = vpop.f32.mrf.mxu0
        %v983 = vadd.f32 0.0, %v982
        %984 = vmatprep.mubr.bf16.mxu0 %v537
        %985 = vmatmul.mubr.bf16.gmra.mxu0 %v536
        %v986 = vpop.f32.mrf.mxu0
        %v987 = vadd.f32 0.0, %v986
        %v988 = vpop.f32.mrf.mxu0
        %v989 = vadd.f32 0.0, %v988
        %v990 = vpop.f32.mrf.mxu0
        %v991 = vadd.f32 0.0, %v990
        %v992 = vpop.f32.mrf.mxu0
        %v993 = vadd.f32 0.0, %v992
        %994 = vmatprep.mubr.bf16.mxu0 %v539
        %995 = vmatmul.mubr.bf16.gmra.mxu0 %v538
        %v996 = vpop.f32.mrf.mxu0
        %v997 = vadd.f32 0.0, %v996
        %v998 = vpop.f32.mrf.mxu0
        %v999 = vadd.f32 0.0, %v998
        %v1000 = vpop.f32.mrf.mxu0
        %v1001 = vadd.f32 0.0, %v1000
        %v1002 = vpop.f32.mrf.mxu0
        %v1003 = vadd.f32 0.0, %v1002
        %1004 = vmatprep.mubr.bf16.mxu0 %v541
        %1005 = vmatmul.mubr.bf16.gmra.mxu0 %v540
        %v1006 = vpop.f32.mrf.mxu0
        %v1007 = vadd.f32 0.0, %v1006
        %v1008 = vpop.f32.mrf.mxu0
        %v1009 = vadd.f32 0.0, %v1008
        %v1010 = vpop.f32.mrf.mxu0
        %v1011 = vadd.f32 0.0, %v1010
        %v1012 = vpop.f32.mrf.mxu0
        %v1013 = vadd.f32 0.0, %v1012
        %1014 = vmatprep.mubr.bf16.mxu0 %v543
        %1015 = vmatmul.mubr.bf16.gmra.mxu0 %v542
        %v1016 = vpop.f32.mrf.mxu0
        %v1017 = vadd.f32 0.0, %v1016
        %v1018 = vpop.f32.mrf.mxu0
        %v1019 = vadd.f32 0.0, %v1018
        %v1020 = vpop.f32.mrf.mxu0
        %v1021 = vadd.f32 0.0, %v1020
        %v1022 = vpop.f32.mrf.mxu0
        %v1023 = vadd.f32 0.0, %v1022
        %1024 = vmatprep.mubr.bf16.mxu0 %v545
        %1025 = vmatmul.mubr.bf16.gmra.mxu0 %v544
        %v1026 = vpop.f32.mrf.mxu0
        %v1027 = vadd.f32 0.0, %v1026
        %v1028 = vpop.f32.mrf.mxu0
        %v1029 = vadd.f32 0.0, %v1028
        %v1030 = vpop.f32.mrf.mxu0
        %v1031 = vadd.f32 0.0, %v1030
        %v1032 = vpop.f32.mrf.mxu0
        %v1033 = vadd.f32 0.0, %v1032
        %1034 = vmatprep.mubr.bf16.mxu0 %v547
        %1035 = vmatmul.mubr.bf16.gmra.mxu0 %v546
        %v1036 = vpop.f32.mrf.mxu0
        %v1037 = vadd.f32 0.0, %v1036
        %v1038 = vpop.f32.mrf.mxu0
        %v1039 = vadd.f32 0.0, %v1038
        %v1040 = vpop.f32.mrf.mxu0
        %v1041 = vadd.f32 0.0, %v1040
        %v1042 = vpop.f32.mrf.mxu0
        %v1043 = vadd.f32 0.0, %v1042
        %1044 = vdwg.mxu0
        %1045 = vmatprep.subr.bf16.mxu0 %v835
        %1046 = vmatpush1.bf16.msra.mxu0 %v834
        %1047 = vmatprep.subr.bf16.mxu0 %v831
        %1048 = vmatpush1.bf16.msra.mxu0 %v830
        %1049 = vmatprep.subr.bf16.mxu0 %v827
        %1050 = vmatpush1.bf16.msra.mxu0 %v826
        %1051 = vmatprep.subr.bf16.mxu0 %v823
        %1052 = vmatpush1.bf16.msra.mxu0 %v822
        %1053 = vmatprep.subr.bf16.mxu0 %v819
        %1054 = vmatpush1.bf16.msra.mxu0 %v818
        %1055 = vmatprep.subr.bf16.mxu0 %v815
        %1056 = vmatpush1.bf16.msra.mxu0 %v814
        %1057 = vmatprep.subr.bf16.mxu0 %v811
        %1058 = vmatpush1.bf16.msra.mxu0 %v810
        %1059 = vmatprep.subr.bf16.mxu0 %v807
        %1060 = vmatpush1.bf16.msra.mxu0 %v806
        %1061 = vmatprep.subr.bf16.mxu0 %v867
        %1062 = vmatpush2.bf16.msra.mxu0 %v866
        %1063 = vmatprep.subr.bf16.mxu0 %v863
        %1064 = vmatpush2.bf16.msra.mxu0 %v862
        %1065 = vmatprep.subr.bf16.mxu0 %v859
        %1066 = vmatpush2.bf16.msra.mxu0 %v858
        %1067 = vmatprep.subr.bf16.mxu0 %v855
        %1068 = vmatpush2.bf16.msra.mxu0 %v854
        %1069 = vmatprep.subr.bf16.mxu0 %v851
        %1070 = vmatpush2.bf16.msra.mxu0 %v850
        %1071 = vmatprep.subr.bf16.mxu0 %v847
        %1072 = vmatpush2.bf16.msra.mxu0 %v846
        %1073 = vmatprep.subr.bf16.mxu0 %v843
        %1074 = vmatpush2.bf16.msra.mxu0 %v842
        %1075 = vmatprep.subr.bf16.mxu0 %v839
        %1076 = vmatpush2.bf16.msra.mxu0 %v838
        %1077 = vmatprep.mubr.bf16.mxu0 %v533
        %1078 = vmatmul.mubr.bf16.gmra.mxu0 %v532
        %v1079 = vpop.f32.mrf.mxu0
        %v1080 = vadd.f32 0.0, %v1079
        %v1081 = vpop.f32.mrf.mxu0
        %v1082 = vadd.f32 0.0, %v1081
        %v1083 = vpop.f32.mrf.mxu0
        %v1084 = vadd.f32 0.0, %v1083
        %v1085 = vpop.f32.mrf.mxu0
        %v1086 = vadd.f32 0.0, %v1085
        %1087 = vmatprep.mubr.bf16.mxu0 %v535
        %1088 = vmatmul.mubr.bf16.gmra.mxu0 %v534
        %v1089 = vpop.f32.mrf.mxu0
        %v1090 = vadd.f32 0.0, %v1089
        %v1091 = vpop.f32.mrf.mxu0
        %v1092 = vadd.f32 0.0, %v1091
        %v1093 = vpop.f32.mrf.mxu0
        %v1094 = vadd.f32 0.0, %v1093
        %v1095 = vpop.f32.mrf.mxu0
        %v1096 = vadd.f32 0.0, %v1095
        %1097 = vmatprep.mubr.bf16.mxu0 %v537
        %1098 = vmatmul.mubr.bf16.gmra.mxu0 %v536
        %v1099 = vpop.f32.mrf.mxu0
        %v1100 = vadd.f32 0.0, %v1099
        %v1101 = vpop.f32.mrf.mxu0
        %v1102 = vadd.f32 0.0, %v1101
        %v1103 = vpop.f32.mrf.mxu0
        %v1104 = vadd.f32 0.0, %v1103
        %v1105 = vpop.f32.mrf.mxu0
        %v1106 = vadd.f32 0.0, %v1105
        %1107 = vmatprep.mubr.bf16.mxu0 %v539
        %1108 = vmatmul.mubr.bf16.gmra.mxu0 %v538
        %v1109 = vpop.f32.mrf.mxu0
        %v1110 = vadd.f32 0.0, %v1109
        %v1111 = vpop.f32.mrf.mxu0
        %v1112 = vadd.f32 0.0, %v1111
        %v1113 = vpop.f32.mrf.mxu0
        %v1114 = vadd.f32 0.0, %v1113
        %v1115 = vpop.f32.mrf.mxu0
        %v1116 = vadd.f32 0.0, %v1115
        %1117 = vmatprep.mubr.bf16.mxu0 %v541
        %1118 = vmatmul.mubr.bf16.gmra.mxu0 %v540
        %v1119 = vpop.f32.mrf.mxu0
        %v1120 = vadd.f32 0.0, %v1119
        %v1121 = vpop.f32.mrf.mxu0
        %v1122 = vadd.f32 0.0, %v1121
        %v1123 = vpop.f32.mrf.mxu0
        %v1124 = vadd.f32 0.0, %v1123
        %v1125 = vpop.f32.mrf.mxu0
        %v1126 = vadd.f32 0.0, %v1125
        %1127 = vmatprep.mubr.bf16.mxu0 %v543
        %1128 = vmatmul.mubr.bf16.gmra.mxu0 %v542
        %v1129 = vpop.f32.mrf.mxu0
        %v1130 = vadd.f32 0.0, %v1129
        %v1131 = vpop.f32.mrf.mxu0
        %v1132 = vadd.f32 0.0, %v1131
        %v1133 = vpop.f32.mrf.mxu0
        %v1134 = vadd.f32 0.0, %v1133
        %v1135 = vpop.f32.mrf.mxu0
        %v1136 = vadd.f32 0.0, %v1135
        %1137 = vmatprep.mubr.bf16.mxu0 %v545
        %1138 = vmatmul.mubr.bf16.gmra.mxu0 %v544
        %v1139 = vpop.f32.mrf.mxu0
        %v1140 = vadd.f32 0.0, %v1139
        %v1141 = vpop.f32.mrf.mxu0
        %v1142 = vadd.f32 0.0, %v1141
        %v1143 = vpop.f32.mrf.mxu0
        %v1144 = vadd.f32 0.0, %v1143
        %v1145 = vpop.f32.mrf.mxu0
        %v1146 = vadd.f32 0.0, %v1145
        %1147 = vmatprep.mubr.bf16.mxu0 %v547
        %1148 = vmatmul.mubr.bf16.gmra.mxu0 %v546
        %v1149 = vpop.f32.mrf.mxu0
        %v1150 = vadd.f32 0.0, %v1149
        %v1151 = vpop.f32.mrf.mxu0
        %v1152 = vadd.f32 0.0, %v1151
        %v1153 = vpop.f32.mrf.mxu0
        %v1154 = vadd.f32 0.0, %v1153
        %v1155 = vpop.f32.mrf.mxu0
        %v1156 = vadd.f32 0.0, %v1155
        %1157 = vdwg.mxu0
        %1158 = vst [vmem:[%s369] sm:$0xff] %v967
        %1159 = vst [vmem:[%s369 + $0x8] sm:$0xff] %v969
        %1160 = vst [vmem:[%s369 + $0x10] sm:$0xff] %v1080
        %1161 = vst [vmem:[%s369 + $0x18] sm:$0xff] %v1082
        %1162 = vst [vmem:[%s369 + $0x20] sm:$0xff] %v971
        %1163 = vst [vmem:[%s369 + $0x28] sm:$0xff] %v973
        %1164 = vst [vmem:[%s369 + $0x30] sm:$0xff] %v1084
        %1165 = vst [vmem:[%s369 + $0x38] sm:$0xff] %v1086
        %1166 = vst [vmem:[%s369 + $0x40] sm:$0xff] %v977
        %1167 = vst [vmem:[%s369 + $0x48] sm:$0xff] %v979
        %1168 = vst [vmem:[%s369 + $0x50] sm:$0xff] %v1090
        %1169 = vst [vmem:[%s369 + $0x58] sm:$0xff] %v1092
        %1170 = vst [vmem:[%s369 + $0x60] sm:$0xff] %v981
        %1171 = vst [vmem:[%s369 + $0x68] sm:$0xff] %v983
        %1172 = vst [vmem:[%s369 + $0x70] sm:$0xff] %v1094
        %1173 = vst [vmem:[%s369 + $0x78] sm:$0xff] %v1096
        %1174 = vst [vmem:[%s369 + $0x80] sm:$0xff] %v987
        %1175 = vst [vmem:[%s369 + $0x88] sm:$0xff] %v989
        %1176 = vst [vmem:[%s369 + $0x90] sm:$0xff] %v1100
        %1177 = vst [vmem:[%s369 + $0x98] sm:$0xff] %v1102
        %1178 = vst [vmem:[%s369 + $0xa0] sm:$0xff] %v991
        %1179 = vst [vmem:[%s369 + $0xa8] sm:$0xff] %v993
        %1180 = vst [vmem:[%s369 + $0xb0] sm:$0xff] %v1104
        %1181 = vst [vmem:[%s369 + $0xb8] sm:$0xff] %v1106
        %1182 = vst [vmem:[%s369 + $0xc0] sm:$0xff] %v997
        %1183 = vst [vmem:[%s369 + $0xc8] sm:$0xff] %v999
        %1184 = vst [vmem:[%s369 + $0xd0] sm:$0xff] %v1110
        %1185 = vst [vmem:[%s369 + $0xd8] sm:$0xff] %v1112
        %1186 = vst [vmem:[%s369 + $0xe0] sm:$0xff] %v1001
        %1187 = vst [vmem:[%s369 + $0xe8] sm:$0xff] %v1003
        %1188 = vst [vmem:[%s369 + $0xf0] sm:$0xff] %v1114
        %1189 = vst [vmem:[%s369 + $0xf8] sm:$0xff] %v1116
        %1190 = vst [vmem:[%s369 + $0x100] sm:$0xff] %v1007
        %1191 = vst [vmem:[%s369 + $0x108] sm:$0xff] %v1009
        %1192 = vst [vmem:[%s369 + $0x110] sm:$0xff] %v1120
        %1193 = vst [vmem:[%s369 + $0x118] sm:$0xff] %v1122
        %1194 = vst [vmem:[%s369 + $0x120] sm:$0xff] %v1011
        %1195 = vst [vmem:[%s369 + $0x128] sm:$0xff] %v1013
        %1196 = vst [vmem:[%s369 + $0x130] sm:$0xff] %v1124
        %1197 = vst [vmem:[%s369 + $0x138] sm:$0xff] %v1126
        %1198 = vst [vmem:[%s369 + $0x140] sm:$0xff] %v1017
        %1199 = vst [vmem:[%s369 + $0x148] sm:$0xff] %v1019
        %1200 = vst [vmem:[%s369 + $0x150] sm:$0xff] %v1130
        %1201 = vst [vmem:[%s369 + $0x158] sm:$0xff] %v1132
        %1202 = vst [vmem:[%s369 + $0x160] sm:$0xff] %v1021
        %1203 = vst [vmem:[%s369 + $0x168] sm:$0xff] %v1023
        %1204 = vst [vmem:[%s369 + $0x170] sm:$0xff] %v1134
        %1205 = vst [vmem:[%s369 + $0x178] sm:$0xff] %v1136
        %1206 = vst [vmem:[%s369 + $0x180] sm:$0xff] %v1027
        %1207 = vst [vmem:[%s369 + $0x188] sm:$0xff] %v1029
        %1208 = vst [vmem:[%s369 + $0x190] sm:$0xff] %v1140
        %1209 = vst [vmem:[%s369 + $0x198] sm:$0xff] %v1142
        %1210 = vst [vmem:[%s369 + $0x1a0] sm:$0xff] %v1031
        %1211 = vst [vmem:[%s369 + $0x1a8] sm:$0xff] %v1033
        %1212 = vst [vmem:[%s369 + $0x1b0] sm:$0xff] %v1144
        %1213 = vst [vmem:[%s369 + $0x1b8] sm:$0xff] %v1146
        %1214 = vst [vmem:[%s369 + $0x1c0] sm:$0xff] %v1037
        %1215 = vst [vmem:[%s369 + $0x1c8] sm:$0xff] %v1039
        %1216 = vst [vmem:[%s369 + $0x1d0] sm:$0xff] %v1150
        %1217 = vst [vmem:[%s369 + $0x1d8] sm:$0xff] %v1152
        %1218 = vst [vmem:[%s369 + $0x1e0] sm:$0xff] %v1041
        %1219 = vst [vmem:[%s369 + $0x1e8] sm:$0xff] %v1043
        %1220 = vst [vmem:[%s369 + $0x1f0] sm:$0xff] %v1154
        %1221 = vst [vmem:[%s369 + $0x1f8] sm:$0xff] %v1156
        %s1222 = sand.u32 %s131, 1
        %s1223 = sand.u32 %s131, 1
        %s1224 = smul.addr %s1223, 512
        %s1225 = scalar_lea.vmem [#allocation3], %s1224
        // Predicated region
        $region60: #{generator_forward.14} parent=54 // pred_check
          %p1226 = pneg %p141
        $region61: #{generator_forward.14} parent=54 // pred_check_branch
          %1228 = sbr.rel (%p1226) target = $region63
        $region62: #{generator_forward.14} parent=54 // pred_region
          %s1229 = smul.u32 16, %s19
          %s1230 = smul.u32 4, %s20
          %s1231 = smul.addr %s1229, 16
          %s1232 = sadd.s32 %s1230, %s1231
          %s1233 = smul.addr %s1232, 8
          %s1234 = scalar_lea.vmem %s4, %s1233
          // Predicated region
          $region64: #{generator_forward.14} parent=62 // pred_check
            _
          $region65: #{generator_forward.14} parent=62 // pred_check_branch
            %1236 = sbr.rel (0) target = $region67
          $region66: #{generator_forward.14} parent=62 // pred_region
            // Predicated region
            $region68: #{generator_forward.14} parent=66 // pred_check
              _
            $region69: #{generator_forward.14} parent=66 // pred_check_branch
              %1238 = sbr.rel (0) target = $region71
            $region70: #{generator_forward.14} parent=66 // pred_region
              loop: start=0, step=1, limit=1
              $region72: #{generator_forward.14} parent=70 // loop_pre_header
                _
              $region73: #{generator_forward.14} parent=70 // loop_header
                %s1240 = sphi 0, %s1244
                %p1241 = scmp.ge.s32.totalorder %s1240, 1
                %s1245 = sphi %s1225, %s1225
                %s1246 = sphi %s1234, %s1234
              $region74: #{generator_forward.14} parent=70 // loop_header_branch
                %1243 = sbr.rel (%p1241) target = $region78
              $region75: #{generator_forward.14} parent=70 // loop_body
                %v1247 = vld [vmem:[%s1245] sm:$0xff]
                %1248 = vst [vmem:[%s1246] sm:$0xff] %v1247
                %v1249 = vld [vmem:[%s1245 + $0x8] sm:$0xff]
                %1250 = vst [vmem:[%s1246 + $0x8] sm:$0xff] %v1249
                %v1251 = vld [vmem:[%s1245 + $0x10] sm:$0xff]
                %1252 = vst [vmem:[%s1246 + $0x10] sm:$0xff] %v1251
                %v1253 = vld [vmem:[%s1245 + $0x18] sm:$0xff]
                %1254 = vst [vmem:[%s1246 + $0x18] sm:$0xff] %v1253
                %v1255 = vld [vmem:[%s1245 + $0x20] sm:$0xff]
                %1256 = vst [vmem:[%s1246 + $0x80] sm:$0xff] %v1255
                %v1257 = vld [vmem:[%s1245 + $0x28] sm:$0xff]
                %1258 = vst [vmem:[%s1246 + $0x88] sm:$0xff] %v1257
                %v1259 = vld [vmem:[%s1245 + $0x30] sm:$0xff]
                %1260 = vst [vmem:[%s1246 + $0x90] sm:$0xff] %v1259
                %v1261 = vld [vmem:[%s1245 + $0x38] sm:$0xff]
                %1262 = vst [vmem:[%s1246 + $0x98] sm:$0xff] %v1261
                %v1263 = vld [vmem:[%s1245 + $0x40] sm:$0xff]
                %1264 = vst [vmem:[%s1246 + $0x100] sm:$0xff] %v1263
                %v1265 = vld [vmem:[%s1245 + $0x48] sm:$0xff]
                %1266 = vst [vmem:[%s1246 + $0x108] sm:$0xff] %v1265
                %v1267 = vld [vmem:[%s1245 + $0x50] sm:$0xff]
                %1268 = vst [vmem:[%s1246 + $0x110] sm:$0xff] %v1267
                %v1269 = vld [vmem:[%s1245 + $0x58] sm:$0xff]
                %1270 = vst [vmem:[%s1246 + $0x118] sm:$0xff] %v1269
                %v1271 = vld [vmem:[%s1245 + $0x60] sm:$0xff]
                %1272 = vst [vmem:[%s1246 + $0x180] sm:$0xff] %v1271
                %v1273 = vld [vmem:[%s1245 + $0x68] sm:$0xff]
                %1274 = vst [vmem:[%s1246 + $0x188] sm:$0xff] %v1273
                %v1275 = vld [vmem:[%s1245 + $0x70] sm:$0xff]
                %1276 = vst [vmem:[%s1246 + $0x190] sm:$0xff] %v1275
                %v1277 = vld [vmem:[%s1245 + $0x78] sm:$0xff]
                %1278 = vst [vmem:[%s1246 + $0x198] sm:$0xff] %v1277
                %v1279 = vld [vmem:[%s1245 + $0x80] sm:$0xff]
                %1280 = vst [vmem:[%s1246 + $0x200] sm:$0xff] %v1279
                %v1281 = vld [vmem:[%s1245 + $0x88] sm:$0xff]
                %1282 = vst [vmem:[%s1246 + $0x208] sm:$0xff] %v1281
                %v1283 = vld [vmem:[%s1245 + $0x90] sm:$0xff]
                %1284 = vst [vmem:[%s1246 + $0x210] sm:$0xff] %v1283
                %v1285 = vld [vmem:[%s1245 + $0x98] sm:$0xff]
                %1286 = vst [vmem:[%s1246 + $0x218] sm:$0xff] %v1285
                %v1287 = vld [vmem:[%s1245 + $0xa0] sm:$0xff]
                %1288 = vst [vmem:[%s1246 + $0x280] sm:$0xff] %v1287
                %v1289 = vld [vmem:[%s1245 + $0xa8] sm:$0xff]
                %1290 = vst [vmem:[%s1246 + $0x288] sm:$0xff] %v1289
                %v1291 = vld [vmem:[%s1245 + $0xb0] sm:$0xff]
                %1292 = vst [vmem:[%s1246 + $0x290] sm:$0xff] %v1291
                %v1293 = vld [vmem:[%s1245 + $0xb8] sm:$0xff]
                %1294 = vst [vmem:[%s1246 + $0x298] sm:$0xff] %v1293
                %v1295 = vld [vmem:[%s1245 + $0xc0] sm:$0xff]
                %1296 = vst [vmem:[%s1246 + $0x300] sm:$0xff] %v1295
                %v1297 = vld [vmem:[%s1245 + $0xc8] sm:$0xff]
                %1298 = vst [vmem:[%s1246 + $0x308] sm:$0xff] %v1297
                %v1299 = vld [vmem:[%s1245 + $0xd0] sm:$0xff]
                %1300 = vst [vmem:[%s1246 + $0x310] sm:$0xff] %v1299
                %v1301 = vld [vmem:[%s1245 + $0xd8] sm:$0xff]
                %1302 = vst [vmem:[%s1246 + $0x318] sm:$0xff] %v1301
                %v1303 = vld [vmem:[%s1245 + $0xe0] sm:$0xff]
                %1304 = vst [vmem:[%s1246 + $0x380] sm:$0xff] %v1303
                %v1305 = vld [vmem:[%s1245 + $0xe8] sm:$0xff]
                %1306 = vst [vmem:[%s1246 + $0x388] sm:$0xff] %v1305
                %v1307 = vld [vmem:[%s1245 + $0xf0] sm:$0xff]
                %1308 = vst [vmem:[%s1246 + $0x390] sm:$0xff] %v1307
                %v1309 = vld [vmem:[%s1245 + $0xf8] sm:$0xff]
                %1310 = vst [vmem:[%s1246 + $0x398] sm:$0xff] %v1309
                %v1311 = vld [vmem:[%s1245 + $0x100] sm:$0xff]
                %1312 = vst [vmem:[%s1246 + $0x400] sm:$0xff] %v1311
                %v1313 = vld [vmem:[%s1245 + $0x108] sm:$0xff]
                %1314 = vst [vmem:[%s1246 + $0x408] sm:$0xff] %v1313
                %v1315 = vld [vmem:[%s1245 + $0x110] sm:$0xff]
                %1316 = vst [vmem:[%s1246 + $0x410] sm:$0xff] %v1315
                %v1317 = vld [vmem:[%s1245 + $0x118] sm:$0xff]
                %1318 = vst [vmem:[%s1246 + $0x418] sm:$0xff] %v1317
                %v1319 = vld [vmem:[%s1245 + $0x120] sm:$0xff]
                %1320 = vst [vmem:[%s1246 + $0x480] sm:$0xff] %v1319
                %v1321 = vld [vmem:[%s1245 + $0x128] sm:$0xff]
                %1322 = vst [vmem:[%s1246 + $0x488] sm:$0xff] %v1321
                %v1323 = vld [vmem:[%s1245 + $0x130] sm:$0xff]
                %1324 = vst [vmem:[%s1246 + $0x490] sm:$0xff] %v1323
                %v1325 = vld [vmem:[%s1245 + $0x138] sm:$0xff]
                %1326 = vst [vmem:[%s1246 + $0x498] sm:$0xff] %v1325
                %v1327 = vld [vmem:[%s1245 + $0x140] sm:$0xff]
                %1328 = vst [vmem:[%s1246 + $0x500] sm:$0xff] %v1327
                %v1329 = vld [vmem:[%s1245 + $0x148] sm:$0xff]
                %1330 = vst [vmem:[%s1246 + $0x508] sm:$0xff] %v1329
                %v1331 = vld [vmem:[%s1245 + $0x150] sm:$0xff]
                %1332 = vst [vmem:[%s1246 + $0x510] sm:$0xff] %v1331
                %v1333 = vld [vmem:[%s1245 + $0x158] sm:$0xff]
                %1334 = vst [vmem:[%s1246 + $0x518] sm:$0xff] %v1333
                %v1335 = vld [vmem:[%s1245 + $0x160] sm:$0xff]
                %1336 = vst [vmem:[%s1246 + $0x580] sm:$0xff] %v1335
                %v1337 = vld [vmem:[%s1245 + $0x168] sm:$0xff]
                %1338 = vst [vmem:[%s1246 + $0x588] sm:$0xff] %v1337
                %v1339 = vld [vmem:[%s1245 + $0x170] sm:$0xff]
                %1340 = vst [vmem:[%s1246 + $0x590] sm:$0xff] %v1339
                %v1341 = vld [vmem:[%s1245 + $0x178] sm:$0xff]
                %1342 = vst [vmem:[%s1246 + $0x598] sm:$0xff] %v1341
                %v1343 = vld [vmem:[%s1245 + $0x180] sm:$0xff]
                %1344 = vst [vmem:[%s1246 + $0x600] sm:$0xff] %v1343
                %v1345 = vld [vmem:[%s1245 + $0x188] sm:$0xff]
                %1346 = vst [vmem:[%s1246 + $0x608] sm:$0xff] %v1345
                %v1347 = vld [vmem:[%s1245 + $0x190] sm:$0xff]
                %1348 = vst [vmem:[%s1246 + $0x610] sm:$0xff] %v1347
                %v1349 = vld [vmem:[%s1245 + $0x198] sm:$0xff]
                %1350 = vst [vmem:[%s1246 + $0x618] sm:$0xff] %v1349
                %v1351 = vld [vmem:[%s1245 + $0x1a0] sm:$0xff]
                %1352 = vst [vmem:[%s1246 + $0x680] sm:$0xff] %v1351
                %v1353 = vld [vmem:[%s1245 + $0x1a8] sm:$0xff]
                %1354 = vst [vmem:[%s1246 + $0x688] sm:$0xff] %v1353
                %v1355 = vld [vmem:[%s1245 + $0x1b0] sm:$0xff]
                %1356 = vst [vmem:[%s1246 + $0x690] sm:$0xff] %v1355
                %v1357 = vld [vmem:[%s1245 + $0x1b8] sm:$0xff]
                %1358 = vst [vmem:[%s1246 + $0x698] sm:$0xff] %v1357
                %v1359 = vld [vmem:[%s1245 + $0x1c0] sm:$0xff]
                %1360 = vst [vmem:[%s1246 + $0x700] sm:$0xff] %v1359
                %v1361 = vld [vmem:[%s1245 + $0x1c8] sm:$0xff]
                %1362 = vst [vmem:[%s1246 + $0x708] sm:$0xff] %v1361
                %v1363 = vld [vmem:[%s1245 + $0x1d0] sm:$0xff]
                %1364 = vst [vmem:[%s1246 + $0x710] sm:$0xff] %v1363
                %v1365 = vld [vmem:[%s1245 + $0x1d8] sm:$0xff]
                %1366 = vst [vmem:[%s1246 + $0x718] sm:$0xff] %v1365
                %v1367 = vld [vmem:[%s1245 + $0x1e0] sm:$0xff]
                %1368 = vst [vmem:[%s1246 + $0x780] sm:$0xff] %v1367
                %v1369 = vld [vmem:[%s1245 + $0x1e8] sm:$0xff]
                %1370 = vst [vmem:[%s1246 + $0x788] sm:$0xff] %v1369
                %v1371 = vld [vmem:[%s1245 + $0x1f0] sm:$0xff]
                %1372 = vst [vmem:[%s1246 + $0x790] sm:$0xff] %v1371
                %v1373 = vld [vmem:[%s1245 + $0x1f8] sm:$0xff]
                %1374 = vst [vmem:[%s1246 + $0x798] sm:$0xff] %v1373
              $region76: #{generator_forward.14} parent=70 // loop_footer
                %s1244 = sadd.s32 1, %s1240
              $region77: #{generator_forward.14} parent=70 // loop_footer_branch
                %1239 = sbr.rel target = $region73
              $region78: #{generator_forward.14} parent=70 // loop_exit
                _
            $region71: #{generator_forward.14} parent=66 // pred_fallthru
              _
            // Predicated region
            $region79: #{generator_forward.14} parent=66 // pred_check
              _
            $region80: #{generator_forward.14} parent=66 // pred_check_branch
              %1376 = sbr.rel target = $region82
            $region81: #{generator_forward.14} parent=66 // pred_region
              _
            $region82: #{generator_forward.14} parent=66 // pred_fallthru
              _
          $region67: #{generator_forward.14} parent=62 // pred_fallthru
            _
          %1377 = vnop
        $region63: #{generator_forward.14} parent=54 // pred_fallthru
          _
      $region55: #{generator_forward.14} parent=5 // pred_fallthru
        _
      %p1378 = scmp.le.s32.totalorder 2, %s10
      // Predicated region
      $region83: #{generator_forward.14} parent=5 // pred_check
        %p1379 = pneg %p1378
      $region84: #{generator_forward.14} parent=5 // pred_check_branch
        %1381 = sbr.rel (%p1379) target = $region86
      $region85: #{generator_forward.14} parent=5 // pred_region
        %s1382 = ssub.s32 %s10, 2
        // Predicated region
        $region87: #{generator_forward.14} parent=85 // pred_check
          %p1383 = pneg %p147
        $region88: #{generator_forward.14} parent=85 // pred_check_branch
          %1385 = sbr.rel (%p1383) target = $region90
        $region89: #{generator_forward.14} parent=85 // pred_region
          %s1386 = sand.u32 %s132, 1
          %s1387 = sand.u32 %s132, 1
          %s1388 = smul.addr %s1387, 512
          %s1389 = scalar_lea.vmem [#allocation3], %s1388
        $region90: #{generator_forward.14} parent=85 // pred_fallthru
          _
      $region86: #{generator_forward.14} parent=5 // pred_fallthru
        _
    $region6: #{generator_forward.14} parent=1 // loop_footer
      %s14 = sadd.s32 1, %s10
    $region7: #{generator_forward.14} parent=1 // loop_footer_branch
      %9 = sbr.rel target = $region3
    $region8: #{generator_forward.14} parent=1 // loop_exit
      _

// kernel: generator_forward.15
$region0: #{generator_forward.15}
  #allocation0 [shape = 'u32[]', space=smem, size = 0x4, offset = 0x4, fixed_abs, tag = 'smem constant byte address 0x4 - core index']
  #allocation1 [shape = 'u32[144,128]{1,0:T(1,128)}', space=vmem, size = 0x12000, scoped, tag = 'internal scratch']
  %s0 = inlined_call_operand.vmem [shape: f32[512,128], index: 0, kind: input, shape index: {}]
  %s1 = inlined_call_operand.vmem [shape: f32[1,128], index: 1, kind: output, shape index: {0}]
  %s2 = inlined_call_operand.vmem [shape: f32[1,128], index: 2, kind: output, shape index: {1}]
  %3 = xla_tuple %s1, %s2
  %s4 = sld [smem:[#allocation0]]
  $region26: #{generator_forward.15} parent=0
    _
  %s6 = ssub.s32 1, %s4
  %s7 = scalar_select 0, %s6, %s4
  // Predicated region
  $region2: #{generator_forward.15} parent=0 // pred_check
    _
  $region3: #{generator_forward.15} parent=0 // pred_check_branch
    %9 = sbr.rel (0) target = $region5
  $region4: #{generator_forward.15} parent=0 // pred_region
    _
  $region5: #{generator_forward.15} parent=0 // pred_fallthru
    _
  %p10 = scmp.eq.s32.totalorder 0, 0
  // Predicated region
  $region6: #{generator_forward.15} parent=0 // pred_check
    %p11 = pneg %p10
  $region7: #{generator_forward.15} parent=0 // pred_check_branch
    %13 = sbr.rel (%p11) target = $region9
  $region8: #{generator_forward.15} parent=0 // pred_region
    %14 = vst [vmem:[%s1] sm:$0x1] 0.0
    %15 = vst [vmem:[%s2] sm:$0x1] 0.0
  $region9: #{generator_forward.15} parent=0 // pred_fallthru
    _
  %v16 = vld [vmem:[%s0] sm:$0xff]
  %v17 = vld [vmem:[%s0 + $0x8] sm:$0xff]
  %v18 = vld [vmem:[%s0 + $0x10] sm:$0xff]
  %v19 = vld [vmem:[%s0 + $0x18] sm:$0xff]
  %v20 = vld [vmem:[%s0 + $0x20] sm:$0xff]
  %v21 = vld [vmem:[%s0 + $0x28] sm:$0xff]
  %v22 = vld [vmem:[%s0 + $0x30] sm:$0xff]
  %v23 = vld [vmem:[%s0 + $0x38] sm:$0xff]
  %v24 = vld [vmem:[%s0 + $0x40] sm:$0xff]
  %v25 = vld [vmem:[%s0 + $0x48] sm:$0xff]
  %v26 = vld [vmem:[%s0 + $0x50] sm:$0xff]
  %v27 = vld [vmem:[%s0 + $0x58] sm:$0xff]
  %v28 = vld [vmem:[%s0 + $0x60] sm:$0xff]
  %v29 = vld [vmem:[%s0 + $0x68] sm:$0xff]
  %v30 = vld [vmem:[%s0 + $0x70] sm:$0xff]
  %v31 = vld [vmem:[%s0 + $0x78] sm:$0xff]
  %v32 = vld [vmem:[%s0 + $0x80] sm:$0xff]
  %v33 = vld [vmem:[%s0 + $0x88] sm:$0xff]
  %v34 = vld [vmem:[%s0 + $0x90] sm:$0xff]
  %v35 = vld [vmem:[%s0 + $0x98] sm:$0xff]
  %v36 = vld [vmem:[%s0 + $0xa0] sm:$0xff]
  %v37 = vld [vmem:[%s0 + $0xa8] sm:$0xff]
  %v38 = vld [vmem:[%s0 + $0xb0] sm:$0xff]
  %v39 = vld [vmem:[%s0 + $0xb8] sm:$0xff]
  %v40 = vld [vmem:[%s0 + $0xc0] sm:$0xff]
  %v41 = vld [vmem:[%s0 + $0xc8] sm:$0xff]
  %v42 = vld [vmem:[%s0 + $0xd0] sm:$0xff]
  %v43 = vld [vmem:[%s0 + $0xd8] sm:$0xff]
  %v44 = vld [vmem:[%s0 + $0xe0] sm:$0xff]
  %v45 = vld [vmem:[%s0 + $0xe8] sm:$0xff]
  %v46 = vld [vmem:[%s0 + $0xf0] sm:$0xff]
  %v47 = vld [vmem:[%s0 + $0xf8] sm:$0xff]
  %v48 = vld [vmem:[%s0 + $0x100] sm:$0xff]
  %v49 = vld [vmem:[%s0 + $0x108] sm:$0xff]
  %v50 = vld [vmem:[%s0 + $0x110] sm:$0xff]
  %v51 = vld [vmem:[%s0 + $0x118] sm:$0xff]
  %v52 = vld [vmem:[%s0 + $0x120] sm:$0xff]
  %v53 = vld [vmem:[%s0 + $0x128] sm:$0xff]
  %v54 = vld [vmem:[%s0 + $0x130] sm:$0xff]
  %v55 = vld [vmem:[%s0 + $0x138] sm:$0xff]
  %v56 = vld [vmem:[%s0 + $0x140] sm:$0xff]
  %v57 = vld [vmem:[%s0 + $0x148] sm:$0xff]
  %v58 = vld [vmem:[%s0 + $0x150] sm:$0xff]
  %v59 = vld [vmem:[%s0 + $0x158] sm:$0xff]
  %v60 = vld [vmem:[%s0 + $0x160] sm:$0xff]
  %v61 = vld [vmem:[%s0 + $0x168] sm:$0xff]
  %v62 = vld [vmem:[%s0 + $0x170] sm:$0xff]
  %v63 = vld [vmem:[%s0 + $0x178] sm:$0xff]
  %v64 = vld [vmem:[%s0 + $0x180] sm:$0xff]
  %v65 = vld [vmem:[%s0 + $0x188] sm:$0xff]
  %v66 = vld [vmem:[%s0 + $0x190] sm:$0xff]
  %v67 = vld [vmem:[%s0 + $0x198] sm:$0xff]
  %v68 = vld [vmem:[%s0 + $0x1a0] sm:$0xff]
  %v69 = vld [vmem:[%s0 + $0x1a8] sm:$0xff]
  %v70 = vld [vmem:[%s0 + $0x1b0] sm:$0xff]
  %v71 = vld [vmem:[%s0 + $0x1b8] sm:$0xff]
  %v72 = vld [vmem:[%s0 + $0x1c0] sm:$0xff]
  %v73 = vld [vmem:[%s0 + $0x1c8] sm:$0xff]
  %v74 = vld [vmem:[%s0 + $0x1d0] sm:$0xff]
  %v75 = vld [vmem:[%s0 + $0x1d8] sm:$0xff]
  %v76 = vld [vmem:[%s0 + $0x1e0] sm:$0xff]
  %v77 = vld [vmem:[%s0 + $0x1e8] sm:$0xff]
  %v78 = vld [vmem:[%s0 + $0x1f0] sm:$0xff]
  %v79 = vld [vmem:[%s0 + $0x1f8] sm:$0xff]
  %v80 = vld [vmem:[%s1] sm:$0x1]
  %v81 = vadd.f32 %v16, %v17
  %v82 = vadd.f32 %v81, %v18
  %v83 = vadd.f32 %v82, %v19
  %v84 = vadd.f32 %v83, %v20
  %v85 = vadd.f32 %v84, %v21
  %v86 = vadd.f32 %v85, %v22
  %v87 = vadd.f32 %v86, %v23
  %v88 = vadd.f32 %v87, %v24
  %v89 = vadd.f32 %v88, %v25
  %v90 = vadd.f32 %v89, %v26
  %v91 = vadd.f32 %v90, %v27
  %v92 = vadd.f32 %v91, %v28
  %v93 = vadd.f32 %v92, %v29
  %v94 = vadd.f32 %v93, %v30
  %v95 = vadd.f32 %v94, %v31
  %v96 = vadd.f32 %v95, %v32
  %v97 = vadd.f32 %v96, %v33
  %v98 = vadd.f32 %v97, %v34
  %v99 = vadd.f32 %v98, %v35
  %v100 = vadd.f32 %v99, %v36
  %v101 = vadd.f32 %v100, %v37
  %v102 = vadd.f32 %v101, %v38
  %v103 = vadd.f32 %v102, %v39
  %v104 = vadd.f32 %v103, %v40
  %v105 = vadd.f32 %v104, %v41
  %v106 = vadd.f32 %v105, %v42
  %v107 = vadd.f32 %v106, %v43
  %v108 = vadd.f32 %v107, %v44
  %v109 = vadd.f32 %v108, %v45
  %v110 = vadd.f32 %v109, %v46
  %v111 = vadd.f32 %v110, %v47
  %v112 = vadd.f32 %v111, %v48
  %v113 = vadd.f32 %v112, %v49
  %v114 = vadd.f32 %v113, %v50
  %v115 = vadd.f32 %v114, %v51
  %v116 = vadd.f32 %v115, %v52
  %v117 = vadd.f32 %v116, %v53
  %v118 = vadd.f32 %v117, %v54
  %v119 = vadd.f32 %v118, %v55
  %v120 = vadd.f32 %v119, %v56
  %v121 = vadd.f32 %v120, %v57
  %v122 = vadd.f32 %v121, %v58
  %v123 = vadd.f32 %v122, %v59
  %v124 = vadd.f32 %v123, %v60
  %v125 = vadd.f32 %v124, %v61
  %v126 = vadd.f32 %v125, %v62
  %v127 = vadd.f32 %v126, %v63
  %v128 = vadd.f32 %v127, %v64
  %v129 = vadd.f32 %v128, %v65
  %v130 = vadd.f32 %v129, %v66
  %v131 = vadd.f32 %v130, %v67
  %v132 = vadd.f32 %v131, %v68
  %v133 = vadd.f32 %v132, %v69
  %v134 = vadd.f32 %v133, %v70
  %v135 = vadd.f32 %v134, %v71
  %v136 = vadd.f32 %v135, %v72
  %v137 = vadd.f32 %v136, %v73
  %v138 = vadd.f32 %v137, %v74
  %v139 = vadd.f32 %v138, %v75
  %v140 = vadd.f32 %v139, %v76
  %v141 = vadd.f32 %v140, %v77
  %v142 = vadd.f32 %v141, %v78
  %v143 = vadd.f32 %v142, %v79
  %v144 = vrot.slane %v143, 4
  %v145 = vadd.f32 %v143, %v144
  %v146 = vrot.slane %v145, 2
  %v147 = vadd.f32 %v145, %v146
  %v148 = vrot.slane %v147, 1
  %v149 = vadd.f32 %v147, %v148
  %v150 = vadd.f32 %v80, %v149
  %151 = vst [vmem:[%s1] sm:$0x1] %v150
  %v152 = vld [vmem:[%s2] sm:$0x1]
  %v153 = vmul.f32 %v16, %v16
  %v154 = vmul.f32 %v17, %v17
  %v155 = vmul.f32 %v18, %v18
  %v156 = vmul.f32 %v19, %v19
  %v157 = vmul.f32 %v20, %v20
  %v158 = vmul.f32 %v21, %v21
  %v159 = vmul.f32 %v22, %v22
  %v160 = vmul.f32 %v23, %v23
  %v161 = vmul.f32 %v24, %v24
  %v162 = vmul.f32 %v25, %v25
  %v163 = vmul.f32 %v26, %v26
  %v164 = vmul.f32 %v27, %v27
  %v165 = vmul.f32 %v28, %v28
  %v166 = vmul.f32 %v29, %v29
  %v167 = vmul.f32 %v30, %v30
  %v168 = vmul.f32 %v31, %v31
  %v169 = vmul.f32 %v32, %v32
  %v170 = vmul.f32 %v33, %v33
  %v171 = vmul.f32 %v34, %v34
  %v172 = vmul.f32 %v35, %v35
  %v173 = vmul.f32 %v36, %v36
  %v174 = vmul.f32 %v37, %v37
  %v175 = vmul.f32 %v38, %v38
  %v176 = vmul.f32 %v39, %v39
  %v177 = vmul.f32 %v40, %v40
  %v178 = vmul.f32 %v41, %v41
  %v179 = vmul.f32 %v42, %v42
  %v180 = vmul.f32 %v43, %v43
  %v181 = vmul.f32 %v44, %v44
  %v182 = vmul.f32 %v45, %v45
  %v183 = vmul.f32 %v46, %v46
  %v184 = vmul.f32 %v47, %v47
  %v185 = vmul.f32 %v48, %v48
  %v186 = vmul.f32 %v49, %v49
  %v187 = vmul.f32 %v50, %v50
  %v188 = vmul.f32 %v51, %v51
  %v189 = vmul.f32 %v52, %v52
  %v190 = vmul.f32 %v53, %v53
  %v191 = vmul.f32 %v54, %v54
  %v192 = vmul.f32 %v55, %v55
  %v193 = vmul.f32 %v56, %v56
  %v194 = vmul.f32 %v57, %v57
  %v195 = vmul.f32 %v58, %v58
  %v196 = vmul.f32 %v59, %v59
  %v197 = vmul.f32 %v60, %v60
  %v198 = vmul.f32 %v61, %v61
  %v199 = vmul.f32 %v62, %v62
  %v200 = vmul.f32 %v63, %v63
  %v201 = vmul.f32 %v64, %v64
  %v202 = vmul.f32 %v65, %v65
  %v203 = vmul.f32 %v66, %v66
  %v204 = vmul.f32 %v67, %v67
  %v205 = vmul.f32 %v68, %v68
  %v206 = vmul.f32 %v69, %v69
  %v207 = vmul.f32 %v70, %v70
  %v208 = vmul.f32 %v71, %v71
  %v209 = vmul.f32 %v72, %v72
  %v210 = vmul.f32 %v73, %v73
  %v211 = vmul.f32 %v74, %v74
  %v212 = vmul.f32 %v75, %v75
  %v213 = vmul.f32 %v76, %v76
  %v214 = vmul.f32 %v77, %v77
  %v215 = vmul.f32 %v78, %v78
  %v216 = vmul.f32 %v79, %v79
  %v217 = vadd.f32 %v153, %v154
  %v218 = vadd.f32 %v217, %v155
  %v219 = vadd.f32 %v218, %v156
  %v220 = vadd.f32 %v219, %v157
  %v221 = vadd.f32 %v220, %v158
  %v222 = vadd.f32 %v221, %v159
  %v223 = vadd.f32 %v222, %v160
  %v224 = vadd.f32 %v223, %v161
  %v225 = vadd.f32 %v224, %v162
  %v226 = vadd.f32 %v225, %v163
  %v227 = vadd.f32 %v226, %v164
  %v228 = vadd.f32 %v227, %v165
  %v229 = vadd.f32 %v228, %v166
  %v230 = vadd.f32 %v229, %v167
  %v231 = vadd.f32 %v230, %v168
  %v232 = vadd.f32 %v231, %v169
  %v233 = vadd.f32 %v232, %v170
  %v234 = vadd.f32 %v233, %v171
  %v235 = vadd.f32 %v234, %v172
  %v236 = vadd.f32 %v235, %v173
  %v237 = vadd.f32 %v236, %v174
  %v238 = vadd.f32 %v237, %v175
  %v239 = vadd.f32 %v238, %v176
  %v240 = vadd.f32 %v239, %v177
  %v241 = vadd.f32 %v240, %v178
  %v242 = vadd.f32 %v241, %v179
  %v243 = vadd.f32 %v242, %v180
  %v244 = vadd.f32 %v243, %v181
  %v245 = vadd.f32 %v244, %v182
  %v246 = vadd.f32 %v245, %v183
  %v247 = vadd.f32 %v246, %v184
  %v248 = vadd.f32 %v247, %v185
  %v249 = vadd.f32 %v248, %v186
  %v250 = vadd.f32 %v249, %v187
  %v251 = vadd.f32 %v250, %v188
  %v252 = vadd.f32 %v251, %v189
  %v253 = vadd.f32 %v252, %v190
  %v254 = vadd.f32 %v253, %v191
  %v255 = vadd.f32 %v254, %v192
  %v256 = vadd.f32 %v255, %v193
  %v257 = vadd.f32 %v256, %v194
  %v258 = vadd.f32 %v257, %v195
  %v259 = vadd.f32 %v258, %v196
  %v260 = vadd.f32 %v259, %v197
  %v261 = vadd.f32 %v260, %v198
  %v262 = vadd.f32 %v261, %v199
  %v263 = vadd.f32 %v262, %v200
  %v264 = vadd.f32 %v263, %v201
  %v265 = vadd.f32 %v264, %v202
  %v266 = vadd.f32 %v265, %v203
  %v267 = vadd.f32 %v266, %v204
  %v268 = vadd.f32 %v267, %v205
  %v269 = vadd.f32 %v268, %v206
  %v270 = vadd.f32 %v269, %v207
  %v271 = vadd.f32 %v270, %v208
  %v272 = vadd.f32 %v271, %v209
  %v273 = vadd.f32 %v272, %v210
  %v274 = vadd.f32 %v273, %v211
  %v275 = vadd.f32 %v274, %v212
  %v276 = vadd.f32 %v275, %v213
  %v277 = vadd.f32 %v276, %v214
  %v278 = vadd.f32 %v277, %v215
  %v279 = vadd.f32 %v278, %v216
  %v280 = vrot.slane %v279, 4
  %v281 = vadd.f32 %v279, %v280
  %v282 = vrot.slane %v281, 2
  %v283 = vadd.f32 %v281, %v282
  %v284 = vrot.slane %v283, 1
  %v285 = vadd.f32 %v283, %v284
  %v286 = vadd.f32 %v152, %v285
  %287 = vst [vmem:[%s2] sm:$0x1] %v286
  // Predicated region
  $region10: #{generator_forward.15} parent=0 // pred_check
    _
  $region11: #{generator_forward.15} parent=0 // pred_check_branch
    %289 = sbr.rel (0) target = $region13
  $region12: #{generator_forward.15} parent=0 // pred_region
    _
  $region13: #{generator_forward.15} parent=0 // pred_fallthru
    _
  // Predicated region
  $region14: #{generator_forward.15} parent=0 // pred_check
    _
  $region15: #{generator_forward.15} parent=0 // pred_check_branch
    %291 = sbr.rel (0) target = $region17
  $region16: #{generator_forward.15} parent=0 // pred_region
    _
  $region17: #{generator_forward.15} parent=0 // pred_fallthru
    _
  // Predicated region
  $region18: #{generator_forward.15} parent=0 // pred_check
    _
  $region19: #{generator_forward.15} parent=0 // pred_check_branch
    %293 = sbr.rel (0) target = $region21
  $region20: #{generator_forward.15} parent=0 // pred_region
    _
  $region21: #{generator_forward.15} parent=0 // pred_fallthru
    _
  // Predicated region
  $region22: #{generator_forward.15} parent=0 // pred_check
    _
  $region23: #{generator_forward.15} parent=0 // pred_check_branch
    %295 = sbr.rel (0) target = $region25
  $region24: #{generator_forward.15} parent=0 // pred_region
    _
  $region25: #{generator_forward.15} parent=0 // pred_fallthru
    _

// kernel: generator_forward.16
$region0: #{generator_forward.16}
  #allocation0 [shape = 'u32[]', space=smem, size = 0x4, offset = 0x4, fixed_abs, tag = 'smem constant byte address 0x4 - core index']
  #allocation1 [shape = 'u32[144,128]{1,0:T(1,128)}', space=vmem, size = 0x12000, scoped, tag = 'internal scratch']
  %s0 = inlined_call_operand.vmem [shape: f32[512,128], index: 0, kind: input, shape index: {}]
  %s1 = inlined_call_operand.vmem [shape: f32[1,128], index: 1, kind: input, shape index: {}]
  %s2 = inlined_call_operand.vmem [shape: f32[1,128], index: 2, kind: input, shape index: {}]
  %s3 = inlined_call_operand.vmem [shape: bf16[128,1024], index: 3, kind: input, shape index: {}]
  %s4 = inlined_call_operand.vmem [shape: f32[512,1024], index: 4, kind: output, shape index: {}]
  %s5 = sld [smem:[#allocation0]]
  $region91: #{generator_forward.16} parent=0
    _
  %s7 = ssub.s32 1, %s5
  %s8 = scalar_select 0, %s7, %s5
  $region1: #{generator_forward.16} parent=0
    #allocation2 [shape = 'u8[262144]{0}', space=vmem, size = 0x40000, scoped, tag = 'input window, operand 3']
    #allocation3 [shape = 'u8[2097152]{0}', space=vmem, size = 0x200000, scoped, tag = 'output window, operand 0']
    loop: start=0, step=1, limit=4
    $region2: #{generator_forward.16} parent=1 // loop_pre_header
      _
    $region3: #{generator_forward.16} parent=1 // loop_header
      %s10 = sphi 0, %s14
      %p11 = scmp.ge.s32.totalorder %s10, 4
      %s17 = sphi 0, %s29
      %s18 = sphi 0, %s25
      %s19 = sphi 0, %s17
      %s20 = sphi 0, %s18
      %s21 = sphi 0, %s19
      %s22 = sphi 0, %s20
      %s32 = sphi 0, %s34
      %s35 = sphi 0, %s32
      %s36 = sphi 0, %s35
      %s52 = sphi 0, %s36
      %s56 = sphi 0, %s56
      %s58 = sphi 0, %s56
      %s59 = sphi 0, %s58
      %s73 = sphi 0, %s59
      %s77 = sphi 0, %s77
      %s79 = sphi 0, %s77
      %s80 = sphi 0, %s79
      %s94 = sphi 0, %s80
      %s100 = sphi 0, %s102
      %s103 = sphi 0, %s100
      %s104 = sphi 0, %s103
      %s120 = sphi 0, %s104
      %s128 = sphi 0, %s130
      %s131 = sphi 0, %s128
      %s132 = sphi 0, %s131
      %s148 = sphi 0, %s132
    $region4: #{generator_forward.16} parent=1 // loop_header_branch
      %13 = sbr.rel (%p11) target = $region8
    $region5: #{generator_forward.16} parent=1 // loop_body
      %s15 = ssub.s32 %s10, 1
      %s16 = ssub.s32 %s10, 2
      %s23 = sadd.s32 1, %s18
      %p24 = scmp.ge.s32.totalorder %s23, 2
      %s25 = scalar_select %p24, 0, %s23
      %s26 = sadd.s32 1, %s17
      %s27 = scalar_select %p24, %s26, %s17
      %p28 = scmp.ge.s32.totalorder %s27, 1
      %s29 = scalar_select %p28, 0, %s27
      %s30 = ssub.s32 %s17, %s29
      %p31 = scmp.eq.s32.totalorder %s30, 0
      %s33 = sadd.s32 %s32, 1
      %s34 = scalar_select %p31, %s32, %s33
      %p37 = pneg %p31
      %p38 = scmp.eq.s32.totalorder %s10, 1
      %p39 = por %p37, %p38
      %p40 = scmp.ne.s32.totalorder %s32, %s35
      %p41 = scmp.eq.s32.totalorder %s10, 0
      %p42 = por %p40, %p41
      %p43 = scmp.ne.s32.totalorder %s32, %s35
      %p44 = scmp.eq.s32.totalorder %s15, 1
      %p45 = por %p43, %p44
      %p46 = scmp.ne.s32.totalorder %s35, %s36
      %p47 = scmp.eq.s32.totalorder %s15, 0
      %p48 = por %p46, %p47
      %p49 = scmp.ne.s32.totalorder %s35, %s36
      %p50 = scmp.eq.s32.totalorder %s16, 1
      %p51 = por %p49, %p50
      %p53 = scmp.ne.s32.totalorder %s36, %s52
      %p54 = scmp.eq.s32.totalorder %s16, 0
      %p55 = por %p53, %p54
      %s57 = sadd.s32 %s56, 1
      %p60 = scmp.eq.s32.totalorder %s10, 1
      %p61 = scmp.ne.s32.totalorder %s56, %s58
      %p62 = scmp.eq.s32.totalorder %s10, 0
      %p63 = por %p61, %p62
      %p64 = scmp.ne.s32.totalorder %s56, %s58
      %p65 = scmp.eq.s32.totalorder %s15, 1
      %p66 = por %p64, %p65
      %p67 = scmp.ne.s32.totalorder %s58, %s59
      %p68 = scmp.eq.s32.totalorder %s15, 0
      %p69 = por %p67, %p68
      %p70 = scmp.ne.s32.totalorder %s58, %s59
      %p71 = scmp.eq.s32.totalorder %s16, 1
      %p72 = por %p70, %p71
      %p74 = scmp.ne.s32.totalorder %s59, %s73
      %p75 = scmp.eq.s32.totalorder %s16, 0
      %p76 = por %p74, %p75
      %s78 = sadd.s32 %s77, 1
      %p81 = scmp.eq.s32.totalorder %s10, 1
      %p82 = scmp.ne.s32.totalorder %s77, %s79
      %p83 = scmp.eq.s32.totalorder %s10, 0
      %p84 = por %p82, %p83
      %p85 = scmp.ne.s32.totalorder %s77, %s79
      %p86 = scmp.eq.s32.totalorder %s15, 1
      %p87 = por %p85, %p86
      %p88 = scmp.ne.s32.totalorder %s79, %s80
      %p89 = scmp.eq.s32.totalorder %s15, 0
      %p90 = por %p88, %p89
      %p91 = scmp.ne.s32.totalorder %s79, %s80
      %p92 = scmp.eq.s32.totalorder %s16, 1
      %p93 = por %p91, %p92
      %p95 = scmp.ne.s32.totalorder %s80, %s94
      %p96 = scmp.eq.s32.totalorder %s16, 0
      %p97 = por %p95, %p96
      %s98 = ssub.s32 %s18, %s25
      %p99 = scmp.eq.s32.totalorder %s98, 0
      %s101 = sadd.s32 %s100, 1
      %s102 = scalar_select %p99, %s100, %s101
      %p105 = pneg %p99
      %p106 = scmp.eq.s32.totalorder %s10, 1
      %p107 = por %p105, %p106
      %p108 = scmp.ne.s32.totalorder %s100, %s103
      %p109 = scmp.eq.s32.totalorder %s10, 0
      %p110 = por %p108, %p109
      %p111 = scmp.ne.s32.totalorder %s100, %s103
      %p112 = scmp.eq.s32.totalorder %s15, 1
      %p113 = por %p111, %p112
      %p114 = scmp.ne.s32.totalorder %s103, %s104
      %p115 = scmp.eq.s32.totalorder %s15, 0
      %p116 = por %p114, %p115
      %p117 = scmp.ne.s32.totalorder %s103, %s104
      %p118 = scmp.eq.s32.totalorder %s16, 1
      %p119 = por %p117, %p118
      %p121 = scmp.ne.s32.totalorder %s104, %s120
      %p122 = scmp.eq.s32.totalorder %s16, 0
      %p123 = por %p121, %p122
      %s124 = ssub.s32 %s17, %s29
      %s125 = ssub.s32 %s18, %s25
      %s126 = sor.u32 %s124, %s125
      %p127 = scmp.eq.s32.totalorder %s126, 0
      %s129 = sadd.s32 %s128, 1
      %s130 = scalar_select %p127, %s128, %s129
      %p133 = pneg %p127
      %p134 = scmp.eq.s32.totalorder %s10, 1
      %p135 = por %p133, %p134
      %p136 = scmp.ne.s32.totalorder %s128, %s131
      %p137 = scmp.eq.s32.totalorder %s10, 0
      %p138 = por %p136, %p137
      %p139 = scmp.ne.s32.totalorder %s128, %s131
      %p140 = scmp.eq.s32.totalorder %s15, 1
      %p141 = por %p139, %p140
      %p142 = scmp.ne.s32.totalorder %s131, %s132
      %p143 = scmp.eq.s32.totalorder %s15, 0
      %p144 = por %p142, %p143
      %p145 = scmp.ne.s32.totalorder %s131, %s132
      %p146 = scmp.eq.s32.totalorder %s16, 1
      %p147 = por %p145, %p146
      %p149 = scmp.ne.s32.totalorder %s132, %s148
      %p150 = scmp.eq.s32.totalorder %s16, 0
      %p151 = por %p149, %p150
      %p152 = scmp.le.s32.totalorder 1, %s10
      %p153 = scmp.lt.s32.totalorder %s10, 3
      %p154 = pnand %p152, %p153
      %p155 = pneg %p154
      // Predicated region
      $region9: #{generator_forward.16} parent=5 // pred_check
        _
      $region10: #{generator_forward.16} parent=5 // pred_check_branch
        %157 = sbr.rel (%p154) target = $region12
      $region11: #{generator_forward.16} parent=5 // pred_region
        %s158 = ssub.s32 %s10, 1
        // Predicated region
        $region13: #{generator_forward.16} parent=11 // pred_check
          %p159 = pneg %p48
        $region14: #{generator_forward.16} parent=11 // pred_check_branch
          %161 = sbr.rel (%p159) target = $region16
        $region15: #{generator_forward.16} parent=11 // pred_region
          %s162 = smul.u32 64, %s19
          %p163 = scmp.lt.s32.totalorder %s162, 63
          %s164 = scalar_select %p163, %s162, 63
          %s165 = smul.addr %s164, 8
          %s166 = scalar_lea.vmem %s0, %s165
          %s167 = smul.u32 64, %s19
        $region16: #{generator_forward.16} parent=11 // pred_fallthru
          _
        // Predicated region
        $region17: #{generator_forward.16} parent=11 // pred_check
          %p168 = pneg %p69
        $region18: #{generator_forward.16} parent=11 // pred_check_branch
          %170 = sbr.rel (%p168) target = $region20
        $region19: #{generator_forward.16} parent=11 // pred_region
          _
        $region20: #{generator_forward.16} parent=11 // pred_fallthru
          _
        // Predicated region
        $region21: #{generator_forward.16} parent=11 // pred_check
          %p171 = pneg %p90
        $region22: #{generator_forward.16} parent=11 // pred_check_branch
          %173 = sbr.rel (%p171) target = $region24
        $region23: #{generator_forward.16} parent=11 // pred_region
          _
        $region24: #{generator_forward.16} parent=11 // pred_fallthru
          _
      $region12: #{generator_forward.16} parent=5 // pred_fallthru
        _
      %p174 = scmp.lt.s32.totalorder %s10, 2
      // Predicated region
      $region25: #{generator_forward.16} parent=5 // pred_check
        %p175 = pneg %p174
      $region26: #{generator_forward.16} parent=5 // pred_check_branch
        %177 = sbr.rel (%p175) target = $region28
      $region27: #{generator_forward.16} parent=5 // pred_region
        // Predicated region
        $region29: #{generator_forward.16} parent=27 // pred_check
          %p178 = pneg %p110
        $region30: #{generator_forward.16} parent=27 // pred_check_branch
          %180 = sbr.rel (%p178) target = $region32
        $region31: #{generator_forward.16} parent=27 // pred_region
          %s181 = sand.u32 %s100, 1
          %s182 = sand.u32 %s100, 1
          %s183 = smul.addr %s182, 256
          %s184 = scalar_lea.vmem [#allocation2], %s183
          %s185 = smul.u32 4, %s18
          %s186 = smul.addr %s185, 4
          %s187 = scalar_lea.vmem %s3, %s186
          // Predicated region
          $region33: #{generator_forward.16} parent=31 // pred_check
            _
          $region34: #{generator_forward.16} parent=31 // pred_check_branch
            %189 = sbr.rel (0) target = $region36
          $region35: #{generator_forward.16} parent=31 // pred_region
            // Predicated region
            $region37: #{generator_forward.16} parent=35 // pred_check
              _
            $region38: #{generator_forward.16} parent=35 // pred_check_branch
              %191 = sbr.rel (0) target = $region40
            $region39: #{generator_forward.16} parent=35 // pred_region
              loop: start=0, step=1, limit=1
              $region41: #{generator_forward.16} parent=39 // loop_pre_header
                _
              $region42: #{generator_forward.16} parent=39 // loop_header
                %s193 = sphi 0, %s197
                %p194 = scmp.ge.s32.totalorder %s193, 1
                %s198 = sphi %s187, %s187
                %s199 = sphi %s184, %s184
              $region43: #{generator_forward.16} parent=39 // loop_header_branch
                %196 = sbr.rel (%p194) target = $region47
              $region44: #{generator_forward.16} parent=39 // loop_body
                %v200 = vld [vmem:[%s198] sm:$0xff]
                %201 = vst [vmem:[%s199] sm:$0xff] %v200
                %v202 = vld [vmem:[%s198 + $0x8] sm:$0xff]
                %203 = vst [vmem:[%s199 + $0x8] sm:$0xff] %v202
                %v204 = vld [vmem:[%s198 + $0x20] sm:$0xff]
                %205 = vst [vmem:[%s199 + $0x10] sm:$0xff] %v204
                %v206 = vld [vmem:[%s198 + $0x28] sm:$0xff]
                %207 = vst [vmem:[%s199 + $0x18] sm:$0xff] %v206
                %v208 = vld [vmem:[%s198 + $0x40] sm:$0xff]
                %209 = vst [vmem:[%s199 + $0x20] sm:$0xff] %v208
                %v210 = vld [vmem:[%s198 + $0x48] sm:$0xff]
                %211 = vst [vmem:[%s199 + $0x28] sm:$0xff] %v210
                %v212 = vld [vmem:[%s198 + $0x60] sm:$0xff]
                %213 = vst [vmem:[%s199 + $0x30] sm:$0xff] %v212
                %v214 = vld [vmem:[%s198 + $0x68] sm:$0xff]
                %215 = vst [vmem:[%s199 + $0x38] sm:$0xff] %v214
                %v216 = vld [vmem:[%s198 + $0x80] sm:$0xff]
                %217 = vst [vmem:[%s199 + $0x40] sm:$0xff] %v216
                %v218 = vld [vmem:[%s198 + $0x88] sm:$0xff]
                %219 = vst [vmem:[%s199 + $0x48] sm:$0xff] %v218
                %v220 = vld [vmem:[%s198 + $0xa0] sm:$0xff]
                %221 = vst [vmem:[%s199 + $0x50] sm:$0xff] %v220
                %v222 = vld [vmem:[%s198 + $0xa8] sm:$0xff]
                %223 = vst [vmem:[%s199 + $0x58] sm:$0xff] %v222
                %v224 = vld [vmem:[%s198 + $0xc0] sm:$0xff]
                %225 = vst [vmem:[%s199 + $0x60] sm:$0xff] %v224
                %v226 = vld [vmem:[%s198 + $0xc8] sm:$0xff]
                %227 = vst [vmem:[%s199 + $0x68] sm:$0xff] %v226
                %v228 = vld [vmem:[%s198 + $0xe0] sm:$0xff]
                %229 = vst [vmem:[%s199 + $0x70] sm:$0xff] %v228
                %v230 = vld [vmem:[%s198 + $0xe8] sm:$0xff]
                %231 = vst [vmem:[%s199 + $0x78] sm:$0xff] %v230
                %v232 = vld [vmem:[%s198 + $0x100] sm:$0xff]
                %233 = vst [vmem:[%s199 + $0x80] sm:$0xff] %v232
                %v234 = vld [vmem:[%s198 + $0x108] sm:$0xff]
                %235 = vst [vmem:[%s199 + $0x88] sm:$0xff] %v234
                %v236 = vld [vmem:[%s198 + $0x120] sm:$0xff]
                %237 = vst [vmem:[%s199 + $0x90] sm:$0xff] %v236
                %v238 = vld [vmem:[%s198 + $0x128] sm:$0xff]
                %239 = vst [vmem:[%s199 + $0x98] sm:$0xff] %v238
                %v240 = vld [vmem:[%s198 + $0x140] sm:$0xff]
                %241 = vst [vmem:[%s199 + $0xa0] sm:$0xff] %v240
                %v242 = vld [vmem:[%s198 + $0x148] sm:$0xff]
                %243 = vst [vmem:[%s199 + $0xa8] sm:$0xff] %v242
                %v244 = vld [vmem:[%s198 + $0x160] sm:$0xff]
                %245 = vst [vmem:[%s199 + $0xb0] sm:$0xff] %v244
                %v246 = vld [vmem:[%s198 + $0x168] sm:$0xff]
                %247 = vst [vmem:[%s199 + $0xb8] sm:$0xff] %v246
                %v248 = vld [vmem:[%s198 + $0x180] sm:$0xff]
                %249 = vst [vmem:[%s199 + $0xc0] sm:$0xff] %v248
                %v250 = vld [vmem:[%s198 + $0x188] sm:$0xff]
                %251 = vst [vmem:[%s199 + $0xc8] sm:$0xff] %v250
                %v252 = vld [vmem:[%s198 + $0x1a0] sm:$0xff]
                %253 = vst [vmem:[%s199 + $0xd0] sm:$0xff] %v252
                %v254 = vld [vmem:[%s198 + $0x1a8] sm:$0xff]
                %255 = vst [vmem:[%s199 + $0xd8] sm:$0xff] %v254
                %v256 = vld [vmem:[%s198 + $0x1c0] sm:$0xff]
                %257 = vst [vmem:[%s199 + $0xe0] sm:$0xff] %v256
                %v258 = vld [vmem:[%s198 + $0x1c8] sm:$0xff]
                %259 = vst [vmem:[%s199 + $0xe8] sm:$0xff] %v258
                %v260 = vld [vmem:[%s198 + $0x1e0] sm:$0xff]
                %261 = vst [vmem:[%s199 + $0xf0] sm:$0xff] %v260
                %v262 = vld [vmem:[%s198 + $0x1e8] sm:$0xff]
                %263 = vst [vmem:[%s199 + $0xf8] sm:$0xff] %v262
              $region45: #{generator_forward.16} parent=39 // loop_footer
                %s197 = sadd.s32 1, %s193
              $region46: #{generator_forward.16} parent=39 // loop_footer_branch
                %192 = sbr.rel target = $region42
              $region47: #{generator_forward.16} parent=39 // loop_exit
                _
            $region40: #{generator_forward.16} parent=35 // pred_fallthru
              _
            // Predicated region
            $region48: #{generator_forward.16} parent=35 // pred_check
              _
            $region49: #{generator_forward.16} parent=35 // pred_check_branch
              %265 = sbr.rel target = $region51
            $region50: #{generator_forward.16} parent=35 // pred_region
              _
            $region51: #{generator_forward.16} parent=35 // pred_fallthru
              _
          $region36: #{generator_forward.16} parent=31 // pred_fallthru
            _
          %266 = vnop
        $region32: #{generator_forward.16} parent=27 // pred_fallthru
          _
      $region28: #{generator_forward.16} parent=5 // pred_fallthru
        _
      %p267 = scmp.le.s32.totalorder 1, %s10
      %p268 = scmp.lt.s32.totalorder %s10, 3
      %p269 = pnand %p267, %p268
      %p270 = pneg %p269
      // Predicated region
      $region52: #{generator_forward.16} parent=5 // pred_check
        _
      $region53: #{generator_forward.16} parent=5 // pred_check_branch
        %272 = sbr.rel (%p269) target = $region55
      $region54: #{generator_forward.16} parent=5 // pred_region
        %s273 = ssub.s32 %s10, 1
        %s274 = sand.u32 %s103, 1
        %s275 = sand.u32 %s103, 1
        %s276 = smul.addr %s275, 256
        %s277 = scalar_lea.vmem [#allocation2], %s276
        // Predicated region
        $region56: #{generator_forward.16} parent=54 // pred_check
          %p278 = pneg %p116
        $region57: #{generator_forward.16} parent=54 // pred_check_branch
          %280 = sbr.rel (%p278) target = $region59
        $region58: #{generator_forward.16} parent=54 // pred_region
          _
        $region59: #{generator_forward.16} parent=54 // pred_fallthru
          _
        %s281 = smul.u32 64, %s19
        %p282 = scmp.lt.s32.totalorder %s281, 63
        %s283 = scalar_select %p282, %s281, 63
        %s284 = smul.addr %s283, 8
        %s285 = scalar_lea.vmem %s0, %s284
        %p286 = pneg %p48
        %p287 = pneg %p45
        %p288 = pneg %p69
        %p289 = pneg %p66
        %p290 = pneg %p90
        %p291 = pneg %p87
        %s292 = sand.u32 %s103, 1
        %s293 = sand.u32 %s103, 1
        %s294 = smul.addr %s293, 256
        %s295 = scalar_lea.vmem [#allocation2], %s294
        %p296 = pneg %p116
        %p297 = pneg %p113
        %p298 = pneg %p144
        %p299 = pneg %p141
        %s300 = sand.u32 %s131, 1
        %s301 = sand.u32 %s131, 1
        %s302 = smul.addr %s301, 2048
        %s303 = scalar_lea.vmem [#allocation3], %s302
        %s304 = smul.u32 64, %s19
        %p305 = scmp.lt.s32.totalorder %s304, 63
        %s306 = scalar_select %p305, %s304, 63
        %s307 = smul.addr %s306, 8
        %s308 = scalar_lea.vmem %s0, %s307
        %s309 = smul.u32 64, %s19
        %s310 = smul.u32 4, %s20
        %s311 = smul.u32 64, %s19
        %s312 = smul.u32 4, %s20
        %v314 = vld [vmem:[%s308] sm:$0xff]
        %v315 = vld [vmem:[%s308 + $0x8] sm:$0xff]
        %v316 = vld [vmem:[%s308 + $0x10] sm:$0xff]
        %v317 = vld [vmem:[%s308 + $0x18] sm:$0xff]
        %v318 = vld [vmem:[%s308 + $0x20] sm:$0xff]
        %v319 = vld [vmem:[%s308 + $0x28] sm:$0xff]
        %v320 = vld [vmem:[%s308 + $0x30] sm:$0xff]
        %v321 = vld [vmem:[%s308 + $0x38] sm:$0xff]
        %v322 = vld [vmem:[%s308 + $0x40] sm:$0xff]
        %v323 = vld [vmem:[%s308 + $0x48] sm:$0xff]
        %v324 = vld [vmem:[%s308 + $0x50] sm:$0xff]
        %v325 = vld [vmem:[%s308 + $0x58] sm:$0xff]
        %v326 = vld [vmem:[%s308 + $0x60] sm:$0xff]
        %v327 = vld [vmem:[%s308 + $0x68] sm:$0xff]
        %v328 = vld [vmem:[%s308 + $0x70] sm:$0xff]
        %v329 = vld [vmem:[%s308 + $0x78] sm:$0xff]
        %v330 = vld [vmem:[%s308 + $0x80] sm:$0xff]
        %v331 = vld [vmem:[%s308 + $0x88] sm:$0xff]
        %v332 = vld [vmem:[%s308 + $0x90] sm:$0xff]
        %v333 = vld [vmem:[%s308 + $0x98] sm:$0xff]
        %v334 = vld [vmem:[%s308 + $0xa0] sm:$0xff]
        %v335 = vld [vmem:[%s308 + $0xa8] sm:$0xff]
        %v336 = vld [vmem:[%s308 + $0xb0] sm:$0xff]
        %v337 = vld [vmem:[%s308 + $0xb8] sm:$0xff]
        %v338 = vld [vmem:[%s308 + $0xc0] sm:$0xff]
        %v339 = vld [vmem:[%s308 + $0xc8] sm:$0xff]
        %v340 = vld [vmem:[%s308 + $0xd0] sm:$0xff]
        %v341 = vld [vmem:[%s308 + $0xd8] sm:$0xff]
        %v342 = vld [vmem:[%s308 + $0xe0] sm:$0xff]
        %v343 = vld [vmem:[%s308 + $0xe8] sm:$0xff]
        %v344 = vld [vmem:[%s308 + $0xf0] sm:$0xff]
        %v345 = vld [vmem:[%s308 + $0xf8] sm:$0xff]
        %v346 = vld [vmem:[%s308 + $0x100] sm:$0xff]
        %v347 = vld [vmem:[%s308 + $0x108] sm:$0xff]
        %v348 = vld [vmem:[%s308 + $0x110] sm:$0xff]
        %v349 = vld [vmem:[%s308 + $0x118] sm:$0xff]
        %v350 = vld [vmem:[%s308 + $0x120] sm:$0xff]
        %v351 = vld [vmem:[%s308 + $0x128] sm:$0xff]
        %v352 = vld [vmem:[%s308 + $0x130] sm:$0xff]
        %v353 = vld [vmem:[%s308 + $0x138] sm:$0xff]
        %v354 = vld [vmem:[%s308 + $0x140] sm:$0xff]
        %v355 = vld [vmem:[%s308 + $0x148] sm:$0xff]
        %v356 = vld [vmem:[%s308 + $0x150] sm:$0xff]
        %v357 = vld [vmem:[%s308 + $0x158] sm:$0xff]
        %v358 = vld [vmem:[%s308 + $0x160] sm:$0xff]
        %v359 = vld [vmem:[%s308 + $0x168] sm:$0xff]
        %v360 = vld [vmem:[%s308 + $0x170] sm:$0xff]
        %v361 = vld [vmem:[%s308 + $0x178] sm:$0xff]
        %v362 = vld [vmem:[%s308 + $0x180] sm:$0xff]
        %v363 = vld [vmem:[%s308 + $0x188] sm:$0xff]
        %v364 = vld [vmem:[%s308 + $0x190] sm:$0xff]
        %v365 = vld [vmem:[%s308 + $0x198] sm:$0xff]
        %v366 = vld [vmem:[%s308 + $0x1a0] sm:$0xff]
        %v367 = vld [vmem:[%s308 + $0x1a8] sm:$0xff]
        %v368 = vld [vmem:[%s308 + $0x1b0] sm:$0xff]
        %v369 = vld [vmem:[%s308 + $0x1b8] sm:$0xff]
        %v370 = vld [vmem:[%s308 + $0x1c0] sm:$0xff]
        %v371 = vld [vmem:[%s308 + $0x1c8] sm:$0xff]
        %v372 = vld [vmem:[%s308 + $0x1d0] sm:$0xff]
        %v373 = vld [vmem:[%s308 + $0x1d8] sm:$0xff]
        %v374 = vld [vmem:[%s308 + $0x1e0] sm:$0xff]
        %v375 = vld [vmem:[%s308 + $0x1e8] sm:$0xff]
        %v376 = vld [vmem:[%s308 + $0x1f0] sm:$0xff]
        %v377 = vld [vmem:[%s308 + $0x1f8] sm:$0xff]
        %v378 = vld [vmem:[%s1] sm:$0x1]
        %v380 = vlaneseq
        %v381 = vshrl.u32 %v380, 7
        %v382 = vsub.s32 0, %v381
        %v383 = vrot.slane %v378, %v382
        %v385 = vmul.f32 %v314, %v383
        %v386 = vmul.f32 %v315, %v383
        %v387 = vmul.f32 %v316, %v383
        %v388 = vmul.f32 %v317, %v383
        %v389 = vmul.f32 %v318, %v383
        %v390 = vmul.f32 %v319, %v383
        %v391 = vmul.f32 %v320, %v383
        %v392 = vmul.f32 %v321, %v383
        %v393 = vmul.f32 %v322, %v383
        %v394 = vmul.f32 %v323, %v383
        %v395 = vmul.f32 %v324, %v383
        %v396 = vmul.f32 %v325, %v383
        %v397 = vmul.f32 %v326, %v383
        %v398 = vmul.f32 %v327, %v383
        %v399 = vmul.f32 %v328, %v383
        %v400 = vmul.f32 %v329, %v383
        %v401 = vmul.f32 %v330, %v383
        %v402 = vmul.f32 %v331, %v383
        %v403 = vmul.f32 %v332, %v383
        %v404 = vmul.f32 %v333, %v383
        %v405 = vmul.f32 %v334, %v383
        %v406 = vmul.f32 %v335, %v383
        %v407 = vmul.f32 %v336, %v383
        %v408 = vmul.f32 %v337, %v383
        %v409 = vmul.f32 %v338, %v383
        %v410 = vmul.f32 %v339, %v383
        %v411 = vmul.f32 %v340, %v383
        %v412 = vmul.f32 %v341, %v383
        %v413 = vmul.f32 %v342, %v383
        %v414 = vmul.f32 %v343, %v383
        %v415 = vmul.f32 %v344, %v383
        %v416 = vmul.f32 %v345, %v383
        %v417 = vmul.f32 %v346, %v383
        %v418 = vmul.f32 %v347, %v383
        %v419 = vmul.f32 %v348, %v383
        %v420 = vmul.f32 %v349, %v383
        %v421 = vmul.f32 %v350, %v383
        %v422 = vmul.f32 %v351, %v383
        %v423 = vmul.f32 %v352, %v383
        %v424 = vmul.f32 %v353, %v383
        %v425 = vmul.f32 %v354, %v383
        %v426 = vmul.f32 %v355, %v383
        %v427 = vmul.f32 %v356, %v383
        %v428 = vmul.f32 %v357, %v383
        %v429 = vmul.f32 %v358, %v383
        %v430 = vmul.f32 %v359, %v383
        %v431 = vmul.f32 %v360, %v383
        %v432 = vmul.f32 %v361, %v383
        %v433 = vmul.f32 %v362, %v383
        %v434 = vmul.f32 %v363, %v383
        %v435 = vmul.f32 %v364, %v383
        %v436 = vmul.f32 %v365, %v383
        %v437 = vmul.f32 %v366, %v383
        %v438 = vmul.f32 %v367, %v383
        %v439 = vmul.f32 %v368, %v383
        %v440 = vmul.f32 %v369, %v383
        %v441 = vmul.f32 %v370, %v383
        %v442 = vmul.f32 %v371, %v383
        %v443 = vmul.f32 %v372, %v383
        %v444 = vmul.f32 %v373, %v383
        %v445 = vmul.f32 %v374, %v383
        %v446 = vmul.f32 %v375, %v383
        %v447 = vmul.f32 %v376, %v383
        %v448 = vmul.f32 %v377, %v383
        %v449 = vld [vmem:[%s2] sm:$0x1]
        %v451 = vlaneseq
        %v452 = vshrl.u32 %v451, 7
        %v453 = vsub.s32 0, %v452
        %v454 = vrot.slane %v449, %v453
        %v456 = vadd.f32 %v385, %v454
        %v457 = vadd.f32 %v386, %v454
        %v458 = vadd.f32 %v387, %v454
        %v459 = vadd.f32 %v388, %v454
        %v460 = vadd.f32 %v389, %v454
        %v461 = vadd.f32 %v390, %v454
        %v462 = vadd.f32 %v391, %v454
        %v463 = vadd.f32 %v392, %v454
        %v464 = vadd.f32 %v393, %v454
        %v465 = vadd.f32 %v394, %v454
        %v466 = vadd.f32 %v395, %v454
        %v467 = vadd.f32 %v396, %v454
        %v468 = vadd.f32 %v397, %v454
        %v469 = vadd.f32 %v398, %v454
        %v470 = vadd.f32 %v399, %v454
        %v471 = vadd.f32 %v400, %v454
        %v472 = vadd.f32 %v401, %v454
        %v473 = vadd.f32 %v402, %v454
        %v474 = vadd.f32 %v403, %v454
        %v475 = vadd.f32 %v404, %v454
        %v476 = vadd.f32 %v405, %v454
        %v477 = vadd.f32 %v406, %v454
        %v478 = vadd.f32 %v407, %v454
        %v479 = vadd.f32 %v408, %v454
        %v480 = vadd.f32 %v409, %v454
        %v481 = vadd.f32 %v410, %v454
        %v482 = vadd.f32 %v411, %v454
        %v483 = vadd.f32 %v412, %v454
        %v484 = vadd.f32 %v413, %v454
        %v485 = vadd.f32 %v414, %v454
        %v486 = vadd.f32 %v415, %v454
        %v487 = vadd.f32 %v416, %v454
        %v488 = vadd.f32 %v417, %v454
        %v489 = vadd.f32 %v418, %v454
        %v490 = vadd.f32 %v419, %v454
        %v491 = vadd.f32 %v420, %v454
        %v492 = vadd.f32 %v421, %v454
        %v493 = vadd.f32 %v422, %v454
        %v494 = vadd.f32 %v423, %v454
        %v495 = vadd.f32 %v424, %v454
        %v496 = vadd.f32 %v425, %v454
        %v497 = vadd.f32 %v426, %v454
        %v498 = vadd.f32 %v427, %v454
        %v499 = vadd.f32 %v428, %v454
        %v500 = vadd.f32 %v429, %v454
        %v501 = vadd.f32 %v430, %v454
        %v502 = vadd.f32 %v431, %v454
        %v503 = vadd.f32 %v432, %v454
        %v504 = vadd.f32 %v433, %v454
        %v505 = vadd.f32 %v434, %v454
        %v506 = vadd.f32 %v435, %v454
        %v507 = vadd.f32 %v436, %v454
        %v508 = vadd.f32 %v437, %v454
        %v509 = vadd.f32 %v438, %v454
        %v510 = vadd.f32 %v439, %v454
        %v511 = vadd.f32 %v440, %v454
        %v512 = vadd.f32 %v441, %v454
        %v513 = vadd.f32 %v442, %v454
        %v514 = vadd.f32 %v443, %v454
        %v515 = vadd.f32 %v444, %v454
        %v516 = vadd.f32 %v445, %v454
        %v517 = vadd.f32 %v446, %v454
        %v518 = vadd.f32 %v447, %v454
        %v519 = vadd.f32 %v448, %v454
        %v520 = vmax.f32 %v456, 0.0
        %v521 = vmax.f32 %v457, 0.0
        %v522 = vmax.f32 %v458, 0.0
        %v523 = vmax.f32 %v459, 0.0
        %v524 = vmax.f32 %v460, 0.0
        %v525 = vmax.f32 %v461, 0.0
        %v526 = vmax.f32 %v462, 0.0
        %v527 = vmax.f32 %v463, 0.0
        %v528 = vmax.f32 %v464, 0.0
        %v529 = vmax.f32 %v465, 0.0
        %v530 = vmax.f32 %v466, 0.0
        %v531 = vmax.f32 %v467, 0.0
        %v532 = vmax.f32 %v468, 0.0
        %v533 = vmax.f32 %v469, 0.0
        %v534 = vmax.f32 %v470, 0.0
        %v535 = vmax.f32 %v471, 0.0
        %v536 = vmax.f32 %v472, 0.0
        %v537 = vmax.f32 %v473, 0.0
        %v538 = vmax.f32 %v474, 0.0
        %v539 = vmax.f32 %v475, 0.0
        %v540 = vmax.f32 %v476, 0.0
        %v541 = vmax.f32 %v477, 0.0
        %v542 = vmax.f32 %v478, 0.0
        %v543 = vmax.f32 %v479, 0.0
        %v544 = vmax.f32 %v480, 0.0
        %v545 = vmax.f32 %v481, 0.0
        %v546 = vmax.f32 %v482, 0.0
        %v547 = vmax.f32 %v483, 0.0
        %v548 = vmax.f32 %v484, 0.0
        %v549 = vmax.f32 %v485, 0.0
        %v550 = vmax.f32 %v486, 0.0
        %v551 = vmax.f32 %v487, 0.0
        %v552 = vmax.f32 %v488, 0.0
        %v553 = vmax.f32 %v489, 0.0
        %v554 = vmax.f32 %v490, 0.0
        %v555 = vmax.f32 %v491, 0.0
        %v556 = vmax.f32 %v492, 0.0
        %v557 = vmax.f32 %v493, 0.0
        %v558 = vmax.f32 %v494, 0.0
        %v559 = vmax.f32 %v495, 0.0
        %v560 = vmax.f32 %v496, 0.0
        %v561 = vmax.f32 %v497, 0.0
        %v562 = vmax.f32 %v498, 0.0
        %v563 = vmax.f32 %v499, 0.0
        %v564 = vmax.f32 %v500, 0.0
        %v565 = vmax.f32 %v501, 0.0
        %v566 = vmax.f32 %v502, 0.0
        %v567 = vmax.f32 %v503, 0.0
        %v568 = vmax.f32 %v504, 0.0
        %v569 = vmax.f32 %v505, 0.0
        %v570 = vmax.f32 %v506, 0.0
        %v571 = vmax.f32 %v507, 0.0
        %v572 = vmax.f32 %v508, 0.0
        %v573 = vmax.f32 %v509, 0.0
        %v574 = vmax.f32 %v510, 0.0
        %v575 = vmax.f32 %v511, 0.0
        %v576 = vmax.f32 %v512, 0.0
        %v577 = vmax.f32 %v513, 0.0
        %v578 = vmax.f32 %v514, 0.0
        %v579 = vmax.f32 %v515, 0.0
        %v580 = vmax.f32 %v516, 0.0
        %v581 = vmax.f32 %v517, 0.0
        %v582 = vmax.f32 %v518, 0.0
        %v583 = vmax.f32 %v519, 0.0
        %v584 = vpack.c.bf16 %v521, %v520
        %v585 = vpack.c.bf16 %v523, %v522
        %v586 = vpack.c.bf16 %v525, %v524
        %v587 = vpack.c.bf16 %v527, %v526
        %v588 = vpack.c.bf16 %v529, %v528
        %v589 = vpack.c.bf16 %v531, %v530
        %v590 = vpack.c.bf16 %v533, %v532
        %v591 = vpack.c.bf16 %v535, %v534
        %v592 = vpack.c.bf16 %v537, %v536
        %v593 = vpack.c.bf16 %v539, %v538
        %v594 = vpack.c.bf16 %v541, %v540
        %v595 = vpack.c.bf16 %v543, %v542
        %v596 = vpack.c.bf16 %v545, %v544
        %v597 = vpack.c.bf16 %v547, %v546
        %v598 = vpack.c.bf16 %v549, %v548
        %v599 = vpack.c.bf16 %v551, %v550
        %v600 = vpack.c.bf16 %v553, %v552
        %v601 = vpack.c.bf16 %v555, %v554
        %v602 = vpack.c.bf16 %v557, %v556
        %v603 = vpack.c.bf16 %v559, %v558
        %v604 = vpack.c.bf16 %v561, %v560
        %v605 = vpack.c.bf16 %v563, %v562
        %v606 = vpack.c.bf16 %v565, %v564
        %v607 = vpack.c.bf16 %v567, %v566
        %v608 = vpack.c.bf16 %v569, %v568
        %v609 = vpack.c.bf16 %v571, %v570
        %v610 = vpack.c.bf16 %v573, %v572
        %v611 = vpack.c.bf16 %v575, %v574
        %v612 = vpack.c.bf16 %v577, %v576
        %v613 = vpack.c.bf16 %v579, %v578
        %v614 = vpack.c.bf16 %v581, %v580
        %v615 = vpack.c.bf16 %v583, %v582
        %v616 = vld [vmem:[%s277] sm:$0xff]
        %v617 = vld [vmem:[%s277 + $0x8] sm:$0xff]
        %v618 = vld [vmem:[%s277 + $0x10] sm:$0xff]
        %v619 = vld [vmem:[%s277 + $0x18] sm:$0xff]
        %v620 = vld [vmem:[%s277 + $0x20] sm:$0xff]
        %v621 = vld [vmem:[%s277 + $0x28] sm:$0xff]
        %v622 = vld [vmem:[%s277 + $0x30] sm:$0xff]
        %v623 = vld [vmem:[%s277 + $0x38] sm:$0xff]
        %v624 = vld [vmem:[%s277 + $0x40] sm:$0xff]
        %v625 = vld [vmem:[%s277 + $0x48] sm:$0xff]
        %v626 = vld [vmem:[%s277 + $0x50] sm:$0xff]
        %v627 = vld [vmem:[%s277 + $0x58] sm:$0xff]
        %v628 = vld [vmem:[%s277 + $0x60] sm:$0xff]
        %v629 = vld [vmem:[%s277 + $0x68] sm:$0xff]
        %v630 = vld [vmem:[%s277 + $0x70] sm:$0xff]
        %v631 = vld [vmem:[%s277 + $0x78] sm:$0xff]
        %v632 = vld [vmem:[%s277 + $0x80] sm:$0xff]
        %v633 = vld [vmem:[%s277 + $0x88] sm:$0xff]
        %v634 = vld [vmem:[%s277 + $0x90] sm:$0xff]
        %v635 = vld [vmem:[%s277 + $0x98] sm:$0xff]
        %v636 = vld [vmem:[%s277 + $0xa0] sm:$0xff]
        %v637 = vld [vmem:[%s277 + $0xa8] sm:$0xff]
        %v638 = vld [vmem:[%s277 + $0xb0] sm:$0xff]
        %v639 = vld [vmem:[%s277 + $0xb8] sm:$0xff]
        %v640 = vld [vmem:[%s277 + $0xc0] sm:$0xff]
        %v641 = vld [vmem:[%s277 + $0xc8] sm:$0xff]
        %v642 = vld [vmem:[%s277 + $0xd0] sm:$0xff]
        %v643 = vld [vmem:[%s277 + $0xd8] sm:$0xff]
        %v644 = vld [vmem:[%s277 + $0xe0] sm:$0xff]
        %v645 = vld [vmem:[%s277 + $0xe8] sm:$0xff]
        %v646 = vld [vmem:[%s277 + $0xf0] sm:$0xff]
        %v647 = vld [vmem:[%s277 + $0xf8] sm:$0xff]
        %v680 = vunpack.c.l.b16 %v616
        %v681 = vunpack.c.h.b16 %v616
        %v682 = vunpack.c.l.b16 %v617
        %v683 = vunpack.c.h.b16 %v617
        %v684 = vunpack.c.l.b16 %v618
        %v685 = vunpack.c.h.b16 %v618
        %v686 = vunpack.c.l.b16 %v619
        %v687 = vunpack.c.h.b16 %v619
        %v688 = vunpack.c.l.b16 %v620
        %v689 = vunpack.c.h.b16 %v620
        %v690 = vunpack.c.l.b16 %v621
        %v691 = vunpack.c.h.b16 %v621
        %v692 = vunpack.c.l.b16 %v622
        %v693 = vunpack.c.h.b16 %v622
        %v694 = vunpack.c.l.b16 %v623
        %v695 = vunpack.c.h.b16 %v623
        %v696 = vunpack.c.l.b16 %v624
        %v697 = vunpack.c.h.b16 %v624
        %v698 = vunpack.c.l.b16 %v625
        %v699 = vunpack.c.h.b16 %v625
        %v700 = vunpack.c.l.b16 %v626
        %v701 = vunpack.c.h.b16 %v626
        %v702 = vunpack.c.l.b16 %v627
        %v703 = vunpack.c.h.b16 %v627
        %v704 = vunpack.c.l.b16 %v628
        %v705 = vunpack.c.h.b16 %v628
        %v706 = vunpack.c.l.b16 %v629
        %v707 = vunpack.c.h.b16 %v629
        %v708 = vunpack.c.l.b16 %v630
        %v709 = vunpack.c.h.b16 %v630
        %v710 = vunpack.c.l.b16 %v631
        %v711 = vunpack.c.h.b16 %v631
        %v712 = vunpack.c.l.b16 %v632
        %v713 = vunpack.c.h.b16 %v632
        %v714 = vunpack.c.l.b16 %v633
        %v715 = vunpack.c.h.b16 %v633
        %v716 = vunpack.c.l.b16 %v634
        %v717 = vunpack.c.h.b16 %v634
        %v718 = vunpack.c.l.b16 %v635
        %v719 = vunpack.c.h.b16 %v635
        %v720 = vunpack.c.l.b16 %v636
        %v721 = vunpack.c.h.b16 %v636
        %v722 = vunpack.c.l.b16 %v637
        %v723 = vunpack.c.h.b16 %v637
        %v724 = vunpack.c.l.b16 %v638
        %v725 = vunpack.c.h.b16 %v638
        %v726 = vunpack.c.l.b16 %v639
        %v727 = vunpack.c.h.b16 %v639
        %v728 = vunpack.c.l.b16 %v640
        %v729 = vunpack.c.h.b16 %v640
        %v730 = vunpack.c.l.b16 %v641
        %v731 = vunpack.c.h.b16 %v641
        %v732 = vunpack.c.l.b16 %v642
        %v733 = vunpack.c.h.b16 %v642
        %v734 = vunpack.c.l.b16 %v643
        %v735 = vunpack.c.h.b16 %v643
        %v736 = vunpack.c.l.b16 %v644
        %v737 = vunpack.c.h.b16 %v644
        %v738 = vunpack.c.l.b16 %v645
        %v739 = vunpack.c.h.b16 %v645
        %v740 = vunpack.c.l.b16 %v646
        %v741 = vunpack.c.h.b16 %v646
        %v742 = vunpack.c.l.b16 %v647
        %v743 = vunpack.c.h.b16 %v647
        %v744 = vpack.c.b16 %v684, %v680
        %v745 = vpack.c.b16 %v685, %v681
        %v746 = vpack.c.b16 %v686, %v682
        %v747 = vpack.c.b16 %v687, %v683
        %v748 = vpack.c.b16 %v692, %v688
        %v749 = vpack.c.b16 %v693, %v689
        %v750 = vpack.c.b16 %v694, %v690
        %v751 = vpack.c.b16 %v695, %v691
        %v752 = vpack.c.b16 %v700, %v696
        %v753 = vpack.c.b16 %v701, %v697
        %v754 = vpack.c.b16 %v702, %v698
        %v755 = vpack.c.b16 %v703, %v699
        %v756 = vpack.c.b16 %v708, %v704
        %v757 = vpack.c.b16 %v709, %v705
        %v758 = vpack.c.b16 %v710, %v706
        %v759 = vpack.c.b16 %v711, %v707
        %v760 = vpack.c.b16 %v716, %v712
        %v761 = vpack.c.b16 %v717, %v713
        %v762 = vpack.c.b16 %v718, %v714
        %v763 = vpack.c.b16 %v719, %v715
        %v764 = vpack.c.b16 %v724, %v720
        %v765 = vpack.c.b16 %v725, %v721
        %v766 = vpack.c.b16 %v726, %v722
        %v767 = vpack.c.b16 %v727, %v723
        %v768 = vpack.c.b16 %v732, %v728
        %v769 = vpack.c.b16 %v733, %v729
        %v770 = vpack.c.b16 %v734, %v730
        %v771 = vpack.c.b16 %v735, %v731
        %v772 = vpack.c.b16 %v740, %v736
        %v773 = vpack.c.b16 %v741, %v737
        %v774 = vpack.c.b16 %v742, %v738
        %v775 = vpack.c.b16 %v743, %v739
        %808 = vmatprep.subr.bf16.mxu0 %v773
        %809 = vmatpush1.bf16.msra.mxu0 %v772
        %810 = vmatprep.subr.bf16.mxu0 %v769
        %811 = vmatpush1.bf16.msra.mxu0 %v768
        %812 = vmatprep.subr.bf16.mxu0 %v765
        %813 = vmatpush1.bf16.msra.mxu0 %v764
        %814 = vmatprep.subr.bf16.mxu0 %v761
        %815 = vmatpush1.bf16.msra.mxu0 %v760
        %816 = vmatprep.subr.bf16.mxu0 %v757
        %817 = vmatpush1.bf16.msra.mxu0 %v756
        %818 = vmatprep.subr.bf16.mxu0 %v753
        %819 = vmatpush1.bf16.msra.mxu0 %v752
        %820 = vmatprep.subr.bf16.mxu0 %v749
        %821 = vmatpush1.bf16.msra.mxu0 %v748
        %822 = vmatprep.subr.bf16.mxu0 %v745
        %823 = vmatpush1.bf16.msra.mxu0 %v744
        %824 = vmatprep.subr.bf16.mxu0 0
        %825 = vmatpush2.bf16.msra.mxu0 0
        %826 = vmatprep.subr.bf16.mxu0 0
        %827 = vmatpush2.bf16.msra.mxu0 0
        %828 = vmatprep.subr.bf16.mxu0 0
        %829 = vmatpush2.bf16.msra.mxu0 0
        %830 = vmatprep.subr.bf16.mxu0 0
        %831 = vmatpush2.bf16.msra.mxu0 0
        %832 = vmatprep.subr.bf16.mxu0 0
        %833 = vmatpush2.bf16.msra.mxu0 0
        %834 = vmatprep.subr.bf16.mxu0 0
        %835 = vmatpush2.bf16.msra.mxu0 0
        %836 = vmatprep.subr.bf16.mxu0 0
        %837 = vmatpush2.bf16.msra.mxu0 0
        %838 = vmatprep.subr.bf16.mxu0 0
        %839 = vmatpush2.bf16.msra.mxu0 0
        %840 = vmatprep.mubr.bf16.mxu0 0
        %841 = vmatmul.mubr.bf16.gmra.mxu0 %v584
        %v842 = vpop.f32.mrf.mxu0
        %v843 = vadd.f32 0.0, %v842
        %v844 = vpop.f32.mrf.mxu0
        %v845 = vadd.f32 0.0, %v844
        %v846 = vpop.f32.mrf.mxu0
        %v847 = vadd.f32 0.0, %v846
        %v848 = vpop.f32.mrf.mxu0
        %v849 = vadd.f32 0.0, %v848
        %850 = vmatprep.mubr.bf16.mxu0 0
        %851 = vmatmul.mubr.bf16.gmra.mxu0 %v585
        %v852 = vpop.f32.mrf.mxu0
        %v853 = vadd.f32 0.0, %v852
        %v854 = vpop.f32.mrf.mxu0
        %v855 = vadd.f32 0.0, %v854
        %v856 = vpop.f32.mrf.mxu0
        %v857 = vadd.f32 0.0, %v856
        %v858 = vpop.f32.mrf.mxu0
        %v859 = vadd.f32 0.0, %v858
        %860 = vmatprep.mubr.bf16.mxu0 0
        %861 = vmatmul.mubr.bf16.gmra.mxu0 %v586
        %v862 = vpop.f32.mrf.mxu0
        %v863 = vadd.f32 0.0, %v862
        %v864 = vpop.f32.mrf.mxu0
        %v865 = vadd.f32 0.0, %v864
        %v866 = vpop.f32.mrf.mxu0
        %v867 = vadd.f32 0.0, %v866
        %v868 = vpop.f32.mrf.mxu0
        %v869 = vadd.f32 0.0, %v868
        %870 = vmatprep.mubr.bf16.mxu0 0
        %871 = vmatmul.mubr.bf16.gmra.mxu0 %v587
        %v872 = vpop.f32.mrf.mxu0
        %v873 = vadd.f32 0.0, %v872
        %v874 = vpop.f32.mrf.mxu0
        %v875 = vadd.f32 0.0, %v874
        %v876 = vpop.f32.mrf.mxu0
        %v877 = vadd.f32 0.0, %v876
        %v878 = vpop.f32.mrf.mxu0
        %v879 = vadd.f32 0.0, %v878
        %880 = vmatprep.mubr.bf16.mxu0 0
        %881 = vmatmul.mubr.bf16.gmra.mxu0 %v588
        %v882 = vpop.f32.mrf.mxu0
        %v883 = vadd.f32 0.0, %v882
        %v884 = vpop.f32.mrf.mxu0
        %v885 = vadd.f32 0.0, %v884
        %v886 = vpop.f32.mrf.mxu0
        %v887 = vadd.f32 0.0, %v886
        %v888 = vpop.f32.mrf.mxu0
        %v889 = vadd.f32 0.0, %v888
        %890 = vmatprep.mubr.bf16.mxu0 0
        %891 = vmatmul.mubr.bf16.gmra.mxu0 %v589
        %v892 = vpop.f32.mrf.mxu0
        %v893 = vadd.f32 0.0, %v892
        %v894 = vpop.f32.mrf.mxu0
        %v895 = vadd.f32 0.0, %v894
        %v896 = vpop.f32.mrf.mxu0
        %v897 = vadd.f32 0.0, %v896
        %v898 = vpop.f32.mrf.mxu0
        %v899 = vadd.f32 0.0, %v898
        %900 = vmatprep.mubr.bf16.mxu0 0
        %901 = vmatmul.mubr.bf16.gmra.mxu0 %v590
        %v902 = vpop.f32.mrf.mxu0
        %v903 = vadd.f32 0.0, %v902
        %v904 = vpop.f32.mrf.mxu0
        %v905 = vadd.f32 0.0, %v904
        %v906 = vpop.f32.mrf.mxu0
        %v907 = vadd.f32 0.0, %v906
        %v908 = vpop.f32.mrf.mxu0
        %v909 = vadd.f32 0.0, %v908
        %910 = vmatprep.mubr.bf16.mxu0 0
        %911 = vmatmul.mubr.bf16.gmra.mxu0 %v591
        %v912 = vpop.f32.mrf.mxu0
        %v913 = vadd.f32 0.0, %v912
        %v914 = vpop.f32.mrf.mxu0
        %v915 = vadd.f32 0.0, %v914
        %v916 = vpop.f32.mrf.mxu0
        %v917 = vadd.f32 0.0, %v916
        %v918 = vpop.f32.mrf.mxu0
        %v919 = vadd.f32 0.0, %v918
        %920 = vmatprep.mubr.bf16.mxu0 0
        %921 = vmatmul.mubr.bf16.gmra.mxu0 %v592
        %v922 = vpop.f32.mrf.mxu0
        %v923 = vadd.f32 0.0, %v922
        %v924 = vpop.f32.mrf.mxu0
        %v925 = vadd.f32 0.0, %v924
        %v926 = vpop.f32.mrf.mxu0
        %v927 = vadd.f32 0.0, %v926
        %v928 = vpop.f32.mrf.mxu0
        %v929 = vadd.f32 0.0, %v928
        %930 = vmatprep.mubr.bf16.mxu0 0
        %931 = vmatmul.mubr.bf16.gmra.mxu0 %v593
        %v932 = vpop.f32.mrf.mxu0
        %v933 = vadd.f32 0.0, %v932
        %v934 = vpop.f32.mrf.mxu0
        %v935 = vadd.f32 0.0, %v934
        %v936 = vpop.f32.mrf.mxu0
        %v937 = vadd.f32 0.0, %v936
        %v938 = vpop.f32.mrf.mxu0
        %v939 = vadd.f32 0.0, %v938
        %940 = vmatprep.mubr.bf16.mxu0 0
        %941 = vmatmul.mubr.bf16.gmra.mxu0 %v594
        %v942 = vpop.f32.mrf.mxu0
        %v943 = vadd.f32 0.0, %v942
        %v944 = vpop.f32.mrf.mxu0
        %v945 = vadd.f32 0.0, %v944
        %v946 = vpop.f32.mrf.mxu0
        %v947 = vadd.f32 0.0, %v946
        %v948 = vpop.f32.mrf.mxu0
        %v949 = vadd.f32 0.0, %v948
        %950 = vmatprep.mubr.bf16.mxu0 0
        %951 = vmatmul.mubr.bf16.gmra.mxu0 %v595
        %v952 = vpop.f32.mrf.mxu0
        %v953 = vadd.f32 0.0, %v952
        %v954 = vpop.f32.mrf.mxu0
        %v955 = vadd.f32 0.0, %v954
        %v956 = vpop.f32.mrf.mxu0
        %v957 = vadd.f32 0.0, %v956
        %v958 = vpop.f32.mrf.mxu0
        %v959 = vadd.f32 0.0, %v958
        %960 = vmatprep.mubr.bf16.mxu0 0
        %961 = vmatmul.mubr.bf16.gmra.mxu0 %v596
        %v962 = vpop.f32.mrf.mxu0
        %v963 = vadd.f32 0.0, %v962
        %v964 = vpop.f32.mrf.mxu0
        %v965 = vadd.f32 0.0, %v964
        %v966 = vpop.f32.mrf.mxu0
        %v967 = vadd.f32 0.0, %v966
        %v968 = vpop.f32.mrf.mxu0
        %v969 = vadd.f32 0.0, %v968
        %970 = vmatprep.mubr.bf16.mxu0 0
        %971 = vmatmul.mubr.bf16.gmra.mxu0 %v597
        %v972 = vpop.f32.mrf.mxu0
        %v973 = vadd.f32 0.0, %v972
        %v974 = vpop.f32.mrf.mxu0
        %v975 = vadd.f32 0.0, %v974
        %v976 = vpop.f32.mrf.mxu0
        %v977 = vadd.f32 0.0, %v976
        %v978 = vpop.f32.mrf.mxu0
        %v979 = vadd.f32 0.0, %v978
        %980 = vmatprep.mubr.bf16.mxu0 0
        %981 = vmatmul.mubr.bf16.gmra.mxu0 %v598
        %v982 = vpop.f32.mrf.mxu0
        %v983 = vadd.f32 0.0, %v982
        %v984 = vpop.f32.mrf.mxu0
        %v985 = vadd.f32 0.0, %v984
        %v986 = vpop.f32.mrf.mxu0
        %v987 = vadd.f32 0.0, %v986
        %v988 = vpop.f32.mrf.mxu0
        %v989 = vadd.f32 0.0, %v988
        %990 = vmatprep.mubr.bf16.mxu0 0
        %991 = vmatmul.mubr.bf16.gmra.mxu0 %v599
        %v992 = vpop.f32.mrf.mxu0
        %v993 = vadd.f32 0.0, %v992
        %v994 = vpop.f32.mrf.mxu0
        %v995 = vadd.f32 0.0, %v994
        %v996 = vpop.f32.mrf.mxu0
        %v997 = vadd.f32 0.0, %v996
        %v998 = vpop.f32.mrf.mxu0
        %v999 = vadd.f32 0.0, %v998
        %1000 = vmatprep.mubr.bf16.mxu0 0
        %1001 = vmatmul.mubr.bf16.gmra.mxu0 %v600
        %v1002 = vpop.f32.mrf.mxu0
        %v1003 = vadd.f32 0.0, %v1002
        %v1004 = vpop.f32.mrf.mxu0
        %v1005 = vadd.f32 0.0, %v1004
        %v1006 = vpop.f32.mrf.mxu0
        %v1007 = vadd.f32 0.0, %v1006
        %v1008 = vpop.f32.mrf.mxu0
        %v1009 = vadd.f32 0.0, %v1008
        %1010 = vmatprep.mubr.bf16.mxu0 0
        %1011 = vmatmul.mubr.bf16.gmra.mxu0 %v601
        %v1012 = vpop.f32.mrf.mxu0
        %v1013 = vadd.f32 0.0, %v1012
        %v1014 = vpop.f32.mrf.mxu0
        %v1015 = vadd.f32 0.0, %v1014
        %v1016 = vpop.f32.mrf.mxu0
        %v1017 = vadd.f32 0.0, %v1016
        %v1018 = vpop.f32.mrf.mxu0
        %v1019 = vadd.f32 0.0, %v1018
        %1020 = vmatprep.mubr.bf16.mxu0 0
        %1021 = vmatmul.mubr.bf16.gmra.mxu0 %v602
        %v1022 = vpop.f32.mrf.mxu0
        %v1023 = vadd.f32 0.0, %v1022
        %v1024 = vpop.f32.mrf.mxu0
        %v1025 = vadd.f32 0.0, %v1024
        %v1026 = vpop.f32.mrf.mxu0
        %v1027 = vadd.f32 0.0, %v1026
        %v1028 = vpop.f32.mrf.mxu0
        %v1029 = vadd.f32 0.0, %v1028
        %1030 = vmatprep.mubr.bf16.mxu0 0
        %1031 = vmatmul.mubr.bf16.gmra.mxu0 %v603
        %v1032 = vpop.f32.mrf.mxu0
        %v1033 = vadd.f32 0.0, %v1032
        %v1034 = vpop.f32.mrf.mxu0
        %v1035 = vadd.f32 0.0, %v1034
        %v1036 = vpop.f32.mrf.mxu0
        %v1037 = vadd.f32 0.0, %v1036
        %v1038 = vpop.f32.mrf.mxu0
        %v1039 = vadd.f32 0.0, %v1038
        %1040 = vmatprep.mubr.bf16.mxu0 0
        %1041 = vmatmul.mubr.bf16.gmra.mxu0 %v604
        %v1042 = vpop.f32.mrf.mxu0
        %v1043 = vadd.f32 0.0, %v1042
        %v1044 = vpop.f32.mrf.mxu0
        %v1045 = vadd.f32 0.0, %v1044
        %v1046 = vpop.f32.mrf.mxu0
        %v1047 = vadd.f32 0.0, %v1046
        %v1048 = vpop.f32.mrf.mxu0
        %v1049 = vadd.f32 0.0, %v1048
        %1050 = vmatprep.mubr.bf16.mxu0 0
        %1051 = vmatmul.mubr.bf16.gmra.mxu0 %v605
        %v1052 = vpop.f32.mrf.mxu0
        %v1053 = vadd.f32 0.0, %v1052
        %v1054 = vpop.f32.mrf.mxu0
        %v1055 = vadd.f32 0.0, %v1054
        %v1056 = vpop.f32.mrf.mxu0
        %v1057 = vadd.f32 0.0, %v1056
        %v1058 = vpop.f32.mrf.mxu0
        %v1059 = vadd.f32 0.0, %v1058
        %1060 = vmatprep.mubr.bf16.mxu0 0
        %1061 = vmatmul.mubr.bf16.gmra.mxu0 %v606
        %v1062 = vpop.f32.mrf.mxu0
        %v1063 = vadd.f32 0.0, %v1062
        %v1064 = vpop.f32.mrf.mxu0
        %v1065 = vadd.f32 0.0, %v1064
        %v1066 = vpop.f32.mrf.mxu0
        %v1067 = vadd.f32 0.0, %v1066
        %v1068 = vpop.f32.mrf.mxu0
        %v1069 = vadd.f32 0.0, %v1068
        %1070 = vmatprep.mubr.bf16.mxu0 0
        %1071 = vmatmul.mubr.bf16.gmra.mxu0 %v607
        %v1072 = vpop.f32.mrf.mxu0
        %v1073 = vadd.f32 0.0, %v1072
        %v1074 = vpop.f32.mrf.mxu0
        %v1075 = vadd.f32 0.0, %v1074
        %v1076 = vpop.f32.mrf.mxu0
        %v1077 = vadd.f32 0.0, %v1076
        %v1078 = vpop.f32.mrf.mxu0
        %v1079 = vadd.f32 0.0, %v1078
        %1080 = vmatprep.mubr.bf16.mxu0 0
        %1081 = vmatmul.mubr.bf16.gmra.mxu0 %v608
        %v1082 = vpop.f32.mrf.mxu0
        %v1083 = vadd.f32 0.0, %v1082
        %v1084 = vpop.f32.mrf.mxu0
        %v1085 = vadd.f32 0.0, %v1084
        %v1086 = vpop.f32.mrf.mxu0
        %v1087 = vadd.f32 0.0, %v1086
        %v1088 = vpop.f32.mrf.mxu0
        %v1089 = vadd.f32 0.0, %v1088
        %1090 = vmatprep.mubr.bf16.mxu0 0
        %1091 = vmatmul.mubr.bf16.gmra.mxu0 %v609
        %v1092 = vpop.f32.mrf.mxu0
        %v1093 = vadd.f32 0.0, %v1092
        %v1094 = vpop.f32.mrf.mxu0
        %v1095 = vadd.f32 0.0, %v1094
        %v1096 = vpop.f32.mrf.mxu0
        %v1097 = vadd.f32 0.0, %v1096
        %v1098 = vpop.f32.mrf.mxu0
        %v1099 = vadd.f32 0.0, %v1098
        %1100 = vmatprep.mubr.bf16.mxu0 0
        %1101 = vmatmul.mubr.bf16.gmra.mxu0 %v610
        %v1102 = vpop.f32.mrf.mxu0
        %v1103 = vadd.f32 0.0, %v1102
        %v1104 = vpop.f32.mrf.mxu0
        %v1105 = vadd.f32 0.0, %v1104
        %v1106 = vpop.f32.mrf.mxu0
        %v1107 = vadd.f32 0.0, %v1106
        %v1108 = vpop.f32.mrf.mxu0
        %v1109 = vadd.f32 0.0, %v1108
        %1110 = vmatprep.mubr.bf16.mxu0 0
        %1111 = vmatmul.mubr.bf16.gmra.mxu0 %v611
        %v1112 = vpop.f32.mrf.mxu0
        %v1113 = vadd.f32 0.0, %v1112
        %v1114 = vpop.f32.mrf.mxu0
        %v1115 = vadd.f32 0.0, %v1114
        %v1116 = vpop.f32.mrf.mxu0
        %v1117 = vadd.f32 0.0, %v1116
        %v1118 = vpop.f32.mrf.mxu0
        %v1119 = vadd.f32 0.0, %v1118
        %1120 = vmatprep.mubr.bf16.mxu0 0
        %1121 = vmatmul.mubr.bf16.gmra.mxu0 %v612
        %v1122 = vpop.f32.mrf.mxu0
        %v1123 = vadd.f32 0.0, %v1122
        %v1124 = vpop.f32.mrf.mxu0
        %v1125 = vadd.f32 0.0, %v1124
        %v1126 = vpop.f32.mrf.mxu0
        %v1127 = vadd.f32 0.0, %v1126
        %v1128 = vpop.f32.mrf.mxu0
        %v1129 = vadd.f32 0.0, %v1128
        %1130 = vmatprep.mubr.bf16.mxu0 0
        %1131 = vmatmul.mubr.bf16.gmra.mxu0 %v613
        %v1132 = vpop.f32.mrf.mxu0
        %v1133 = vadd.f32 0.0, %v1132
        %v1134 = vpop.f32.mrf.mxu0
        %v1135 = vadd.f32 0.0, %v1134
        %v1136 = vpop.f32.mrf.mxu0
        %v1137 = vadd.f32 0.0, %v1136
        %v1138 = vpop.f32.mrf.mxu0
        %v1139 = vadd.f32 0.0, %v1138
        %1140 = vmatprep.mubr.bf16.mxu0 0
        %1141 = vmatmul.mubr.bf16.gmra.mxu0 %v614
        %v1142 = vpop.f32.mrf.mxu0
        %v1143 = vadd.f32 0.0, %v1142
        %v1144 = vpop.f32.mrf.mxu0
        %v1145 = vadd.f32 0.0, %v1144
        %v1146 = vpop.f32.mrf.mxu0
        %v1147 = vadd.f32 0.0, %v1146
        %v1148 = vpop.f32.mrf.mxu0
        %v1149 = vadd.f32 0.0, %v1148
        %1150 = vmatprep.mubr.bf16.mxu0 0
        %1151 = vmatmul.mubr.bf16.gmra.mxu0 %v615
        %v1152 = vpop.f32.mrf.mxu0
        %v1153 = vadd.f32 0.0, %v1152
        %v1154 = vpop.f32.mrf.mxu0
        %v1155 = vadd.f32 0.0, %v1154
        %v1156 = vpop.f32.mrf.mxu0
        %v1157 = vadd.f32 0.0, %v1156
        %v1158 = vpop.f32.mrf.mxu0
        %v1159 = vadd.f32 0.0, %v1158
        %1160 = vdwg.mxu0
        %1161 = vmatprep.subr.bf16.mxu0 %v775
        %1162 = vmatpush1.bf16.msra.mxu0 %v774
        %1163 = vmatprep.subr.bf16.mxu0 %v771
        %1164 = vmatpush1.bf16.msra.mxu0 %v770
        %1165 = vmatprep.subr.bf16.mxu0 %v767
        %1166 = vmatpush1.bf16.msra.mxu0 %v766
        %1167 = vmatprep.subr.bf16.mxu0 %v763
        %1168 = vmatpush1.bf16.msra.mxu0 %v762
        %1169 = vmatprep.subr.bf16.mxu0 %v759
        %1170 = vmatpush1.bf16.msra.mxu0 %v758
        %1171 = vmatprep.subr.bf16.mxu0 %v755
        %1172 = vmatpush1.bf16.msra.mxu0 %v754
        %1173 = vmatprep.subr.bf16.mxu0 %v751
        %1174 = vmatpush1.bf16.msra.mxu0 %v750
        %1175 = vmatprep.subr.bf16.mxu0 %v747
        %1176 = vmatpush1.bf16.msra.mxu0 %v746
        %1177 = vmatprep.subr.bf16.mxu0 0
        %1178 = vmatpush2.bf16.msra.mxu0 0
        %1179 = vmatprep.subr.bf16.mxu0 0
        %1180 = vmatpush2.bf16.msra.mxu0 0
        %1181 = vmatprep.subr.bf16.mxu0 0
        %1182 = vmatpush2.bf16.msra.mxu0 0
        %1183 = vmatprep.subr.bf16.mxu0 0
        %1184 = vmatpush2.bf16.msra.mxu0 0
        %1185 = vmatprep.subr.bf16.mxu0 0
        %1186 = vmatpush2.bf16.msra.mxu0 0
        %1187 = vmatprep.subr.bf16.mxu0 0
        %1188 = vmatpush2.bf16.msra.mxu0 0
        %1189 = vmatprep.subr.bf16.mxu0 0
        %1190 = vmatpush2.bf16.msra.mxu0 0
        %1191 = vmatprep.subr.bf16.mxu0 0
        %1192 = vmatpush2.bf16.msra.mxu0 0
        %1193 = vmatprep.mubr.bf16.mxu0 0
        %1194 = vmatmul.mubr.bf16.gmra.mxu0 %v584
        %v1195 = vpop.f32.mrf.mxu0
        %v1196 = vadd.f32 0.0, %v1195
        %v1197 = vpop.f32.mrf.mxu0
        %v1198 = vadd.f32 0.0, %v1197
        %v1199 = vpop.f32.mrf.mxu0
        %v1200 = vadd.f32 0.0, %v1199
        %v1201 = vpop.f32.mrf.mxu0
        %v1202 = vadd.f32 0.0, %v1201
        %1203 = vmatprep.mubr.bf16.mxu0 0
        %1204 = vmatmul.mubr.bf16.gmra.mxu0 %v585
        %v1205 = vpop.f32.mrf.mxu0
        %v1206 = vadd.f32 0.0, %v1205
        %v1207 = vpop.f32.mrf.mxu0
        %v1208 = vadd.f32 0.0, %v1207
        %v1209 = vpop.f32.mrf.mxu0
        %v1210 = vadd.f32 0.0, %v1209
        %v1211 = vpop.f32.mrf.mxu0
        %v1212 = vadd.f32 0.0, %v1211
        %1213 = vmatprep.mubr.bf16.mxu0 0
        %1214 = vmatmul.mubr.bf16.gmra.mxu0 %v586
        %v1215 = vpop.f32.mrf.mxu0
        %v1216 = vadd.f32 0.0, %v1215
        %v1217 = vpop.f32.mrf.mxu0
        %v1218 = vadd.f32 0.0, %v1217
        %v1219 = vpop.f32.mrf.mxu0
        %v1220 = vadd.f32 0.0, %v1219
        %v1221 = vpop.f32.mrf.mxu0
        %v1222 = vadd.f32 0.0, %v1221
        %1223 = vmatprep.mubr.bf16.mxu0 0
        %1224 = vmatmul.mubr.bf16.gmra.mxu0 %v587
        %v1225 = vpop.f32.mrf.mxu0
        %v1226 = vadd.f32 0.0, %v1225
        %v1227 = vpop.f32.mrf.mxu0
        %v1228 = vadd.f32 0.0, %v1227
        %v1229 = vpop.f32.mrf.mxu0
        %v1230 = vadd.f32 0.0, %v1229
        %v1231 = vpop.f32.mrf.mxu0
        %v1232 = vadd.f32 0.0, %v1231
        %1233 = vmatprep.mubr.bf16.mxu0 0
        %1234 = vmatmul.mubr.bf16.gmra.mxu0 %v588
        %v1235 = vpop.f32.mrf.mxu0
        %v1236 = vadd.f32 0.0, %v1235
        %v1237 = vpop.f32.mrf.mxu0
        %v1238 = vadd.f32 0.0, %v1237
        %v1239 = vpop.f32.mrf.mxu0
        %v1240 = vadd.f32 0.0, %v1239
        %v1241 = vpop.f32.mrf.mxu0
        %v1242 = vadd.f32 0.0, %v1241
        %1243 = vmatprep.mubr.bf16.mxu0 0
        %1244 = vmatmul.mubr.bf16.gmra.mxu0 %v589
        %v1245 = vpop.f32.mrf.mxu0
        %v1246 = vadd.f32 0.0, %v1245
        %v1247 = vpop.f32.mrf.mxu0
        %v1248 = vadd.f32 0.0, %v1247
        %v1249 = vpop.f32.mrf.mxu0
        %v1250 = vadd.f32 0.0, %v1249
        %v1251 = vpop.f32.mrf.mxu0
        %v1252 = vadd.f32 0.0, %v1251
        %1253 = vmatprep.mubr.bf16.mxu0 0
        %1254 = vmatmul.mubr.bf16.gmra.mxu0 %v590
        %v1255 = vpop.f32.mrf.mxu0
        %v1256 = vadd.f32 0.0, %v1255
        %v1257 = vpop.f32.mrf.mxu0
        %v1258 = vadd.f32 0.0, %v1257
        %v1259 = vpop.f32.mrf.mxu0
        %v1260 = vadd.f32 0.0, %v1259
        %v1261 = vpop.f32.mrf.mxu0
        %v1262 = vadd.f32 0.0, %v1261
        %1263 = vmatprep.mubr.bf16.mxu0 0
        %1264 = vmatmul.mubr.bf16.gmra.mxu0 %v591
        %v1265 = vpop.f32.mrf.mxu0
        %v1266 = vadd.f32 0.0, %v1265
        %v1267 = vpop.f32.mrf.mxu0
        %v1268 = vadd.f32 0.0, %v1267
        %v1269 = vpop.f32.mrf.mxu0
        %v1270 = vadd.f32 0.0, %v1269
        %v1271 = vpop.f32.mrf.mxu0
        %v1272 = vadd.f32 0.0, %v1271
        %1273 = vmatprep.mubr.bf16.mxu0 0
        %1274 = vmatmul.mubr.bf16.gmra.mxu0 %v592
        %v1275 = vpop.f32.mrf.mxu0
        %v1276 = vadd.f32 0.0, %v1275
        %v1277 = vpop.f32.mrf.mxu0
        %v1278 = vadd.f32 0.0, %v1277
        %v1279 = vpop.f32.mrf.mxu0
        %v1280 = vadd.f32 0.0, %v1279
        %v1281 = vpop.f32.mrf.mxu0
        %v1282 = vadd.f32 0.0, %v1281
        %1283 = vmatprep.mubr.bf16.mxu0 0
        %1284 = vmatmul.mubr.bf16.gmra.mxu0 %v593
        %v1285 = vpop.f32.mrf.mxu0
        %v1286 = vadd.f32 0.0, %v1285
        %v1287 = vpop.f32.mrf.mxu0
        %v1288 = vadd.f32 0.0, %v1287
        %v1289 = vpop.f32.mrf.mxu0
        %v1290 = vadd.f32 0.0, %v1289
        %v1291 = vpop.f32.mrf.mxu0
        %v1292 = vadd.f32 0.0, %v1291
        %1293 = vmatprep.mubr.bf16.mxu0 0
        %1294 = vmatmul.mubr.bf16.gmra.mxu0 %v594
        %v1295 = vpop.f32.mrf.mxu0
        %v1296 = vadd.f32 0.0, %v1295
        %v1297 = vpop.f32.mrf.mxu0
        %v1298 = vadd.f32 0.0, %v1297
        %v1299 = vpop.f32.mrf.mxu0
        %v1300 = vadd.f32 0.0, %v1299
        %v1301 = vpop.f32.mrf.mxu0
        %v1302 = vadd.f32 0.0, %v1301
        %1303 = vmatprep.mubr.bf16.mxu0 0
        %1304 = vmatmul.mubr.bf16.gmra.mxu0 %v595
        %v1305 = vpop.f32.mrf.mxu0
        %v1306 = vadd.f32 0.0, %v1305
        %v1307 = vpop.f32.mrf.mxu0
        %v1308 = vadd.f32 0.0, %v1307
        %v1309 = vpop.f32.mrf.mxu0
        %v1310 = vadd.f32 0.0, %v1309
        %v1311 = vpop.f32.mrf.mxu0
        %v1312 = vadd.f32 0.0, %v1311
        %1313 = vmatprep.mubr.bf16.mxu0 0
        %1314 = vmatmul.mubr.bf16.gmra.mxu0 %v596
        %v1315 = vpop.f32.mrf.mxu0
        %v1316 = vadd.f32 0.0, %v1315
        %v1317 = vpop.f32.mrf.mxu0
        %v1318 = vadd.f32 0.0, %v1317
        %v1319 = vpop.f32.mrf.mxu0
        %v1320 = vadd.f32 0.0, %v1319
        %v1321 = vpop.f32.mrf.mxu0
        %v1322 = vadd.f32 0.0, %v1321
        %1323 = vmatprep.mubr.bf16.mxu0 0
        %1324 = vmatmul.mubr.bf16.gmra.mxu0 %v597
        %v1325 = vpop.f32.mrf.mxu0
        %v1326 = vadd.f32 0.0, %v1325
        %v1327 = vpop.f32.mrf.mxu0
        %v1328 = vadd.f32 0.0, %v1327
        %v1329 = vpop.f32.mrf.mxu0
        %v1330 = vadd.f32 0.0, %v1329
        %v1331 = vpop.f32.mrf.mxu0
        %v1332 = vadd.f32 0.0, %v1331
        %1333 = vmatprep.mubr.bf16.mxu0 0
        %1334 = vmatmul.mubr.bf16.gmra.mxu0 %v598
        %v1335 = vpop.f32.mrf.mxu0
        %v1336 = vadd.f32 0.0, %v1335
        %v1337 = vpop.f32.mrf.mxu0
        %v1338 = vadd.f32 0.0, %v1337
        %v1339 = vpop.f32.mrf.mxu0
        %v1340 = vadd.f32 0.0, %v1339
        %v1341 = vpop.f32.mrf.mxu0
        %v1342 = vadd.f32 0.0, %v1341
        %1343 = vmatprep.mubr.bf16.mxu0 0
        %1344 = vmatmul.mubr.bf16.gmra.mxu0 %v599
        %v1345 = vpop.f32.mrf.mxu0
        %v1346 = vadd.f32 0.0, %v1345
        %v1347 = vpop.f32.mrf.mxu0
        %v1348 = vadd.f32 0.0, %v1347
        %v1349 = vpop.f32.mrf.mxu0
        %v1350 = vadd.f32 0.0, %v1349
        %v1351 = vpop.f32.mrf.mxu0
        %v1352 = vadd.f32 0.0, %v1351
        %1353 = vmatprep.mubr.bf16.mxu0 0
        %1354 = vmatmul.mubr.bf16.gmra.mxu0 %v600
        %v1355 = vpop.f32.mrf.mxu0
        %v1356 = vadd.f32 0.0, %v1355
        %v1357 = vpop.f32.mrf.mxu0
        %v1358 = vadd.f32 0.0, %v1357
        %v1359 = vpop.f32.mrf.mxu0
        %v1360 = vadd.f32 0.0, %v1359
        %v1361 = vpop.f32.mrf.mxu0
        %v1362 = vadd.f32 0.0, %v1361
        %1363 = vmatprep.mubr.bf16.mxu0 0
        %1364 = vmatmul.mubr.bf16.gmra.mxu0 %v601
        %v1365 = vpop.f32.mrf.mxu0
        %v1366 = vadd.f32 0.0, %v1365
        %v1367 = vpop.f32.mrf.mxu0
        %v1368 = vadd.f32 0.0, %v1367
        %v1369 = vpop.f32.mrf.mxu0
        %v1370 = vadd.f32 0.0, %v1369
        %v1371 = vpop.f32.mrf.mxu0
        %v1372 = vadd.f32 0.0, %v1371
        %1373 = vmatprep.mubr.bf16.mxu0 0
        %1374 = vmatmul.mubr.bf16.gmra.mxu0 %v602
        %v1375 = vpop.f32.mrf.mxu0
        %v1376 = vadd.f32 0.0, %v1375
        %v1377 = vpop.f32.mrf.mxu0
        %v1378 = vadd.f32 0.0, %v1377
        %v1379 = vpop.f32.mrf.mxu0
        %v1380 = vadd.f32 0.0, %v1379
        %v1381 = vpop.f32.mrf.mxu0
        %v1382 = vadd.f32 0.0, %v1381
        %1383 = vmatprep.mubr.bf16.mxu0 0
        %1384 = vmatmul.mubr.bf16.gmra.mxu0 %v603
        %v1385 = vpop.f32.mrf.mxu0
        %v1386 = vadd.f32 0.0, %v1385
        %v1387 = vpop.f32.mrf.mxu0
        %v1388 = vadd.f32 0.0, %v1387
        %v1389 = vpop.f32.mrf.mxu0
        %v1390 = vadd.f32 0.0, %v1389
        %v1391 = vpop.f32.mrf.mxu0
        %v1392 = vadd.f32 0.0, %v1391
        %1393 = vmatprep.mubr.bf16.mxu0 0
        %1394 = vmatmul.mubr.bf16.gmra.mxu0 %v604
        %v1395 = vpop.f32.mrf.mxu0
        %v1396 = vadd.f32 0.0, %v1395
        %v1397 = vpop.f32.mrf.mxu0
        %v1398 = vadd.f32 0.0, %v1397
        %v1399 = vpop.f32.mrf.mxu0
        %v1400 = vadd.f32 0.0, %v1399
        %v1401 = vpop.f32.mrf.mxu0
        %v1402 = vadd.f32 0.0, %v1401
        %1403 = vmatprep.mubr.bf16.mxu0 0
        %1404 = vmatmul.mubr.bf16.gmra.mxu0 %v605
        %v1405 = vpop.f32.mrf.mxu0
        %v1406 = vadd.f32 0.0, %v1405
        %v1407 = vpop.f32.mrf.mxu0
        %v1408 = vadd.f32 0.0, %v1407
        %v1409 = vpop.f32.mrf.mxu0
        %v1410 = vadd.f32 0.0, %v1409
        %v1411 = vpop.f32.mrf.mxu0
        %v1412 = vadd.f32 0.0, %v1411
        %1413 = vmatprep.mubr.bf16.mxu0 0
        %1414 = vmatmul.mubr.bf16.gmra.mxu0 %v606
        %v1415 = vpop.f32.mrf.mxu0
        %v1416 = vadd.f32 0.0, %v1415
        %v1417 = vpop.f32.mrf.mxu0
        %v1418 = vadd.f32 0.0, %v1417
        %v1419 = vpop.f32.mrf.mxu0
        %v1420 = vadd.f32 0.0, %v1419
        %v1421 = vpop.f32.mrf.mxu0
        %v1422 = vadd.f32 0.0, %v1421
        %1423 = vmatprep.mubr.bf16.mxu0 0
        %1424 = vmatmul.mubr.bf16.gmra.mxu0 %v607
        %v1425 = vpop.f32.mrf.mxu0
        %v1426 = vadd.f32 0.0, %v1425
        %v1427 = vpop.f32.mrf.mxu0
        %v1428 = vadd.f32 0.0, %v1427
        %v1429 = vpop.f32.mrf.mxu0
        %v1430 = vadd.f32 0.0, %v1429
        %v1431 = vpop.f32.mrf.mxu0
        %v1432 = vadd.f32 0.0, %v1431
        %1433 = vmatprep.mubr.bf16.mxu0 0
        %1434 = vmatmul.mubr.bf16.gmra.mxu0 %v608
        %v1435 = vpop.f32.mrf.mxu0
        %v1436 = vadd.f32 0.0, %v1435
        %v1437 = vpop.f32.mrf.mxu0
        %v1438 = vadd.f32 0.0, %v1437
        %v1439 = vpop.f32.mrf.mxu0
        %v1440 = vadd.f32 0.0, %v1439
        %v1441 = vpop.f32.mrf.mxu0
        %v1442 = vadd.f32 0.0, %v1441
        %1443 = vmatprep.mubr.bf16.mxu0 0
        %1444 = vmatmul.mubr.bf16.gmra.mxu0 %v609
        %v1445 = vpop.f32.mrf.mxu0
        %v1446 = vadd.f32 0.0, %v1445
        %v1447 = vpop.f32.mrf.mxu0
        %v1448 = vadd.f32 0.0, %v1447
        %v1449 = vpop.f32.mrf.mxu0
        %v1450 = vadd.f32 0.0, %v1449
        %v1451 = vpop.f32.mrf.mxu0
        %v1452 = vadd.f32 0.0, %v1451
        %1453 = vmatprep.mubr.bf16.mxu0 0
        %1454 = vmatmul.mubr.bf16.gmra.mxu0 %v610
        %v1455 = vpop.f32.mrf.mxu0
        %v1456 = vadd.f32 0.0, %v1455
        %v1457 = vpop.f32.mrf.mxu0
        %v1458 = vadd.f32 0.0, %v1457
        %v1459 = vpop.f32.mrf.mxu0
        %v1460 = vadd.f32 0.0, %v1459
        %v1461 = vpop.f32.mrf.mxu0
        %v1462 = vadd.f32 0.0, %v1461
        %1463 = vmatprep.mubr.bf16.mxu0 0
        %1464 = vmatmul.mubr.bf16.gmra.mxu0 %v611
        %v1465 = vpop.f32.mrf.mxu0
        %v1466 = vadd.f32 0.0, %v1465
        %v1467 = vpop.f32.mrf.mxu0
        %v1468 = vadd.f32 0.0, %v1467
        %v1469 = vpop.f32.mrf.mxu0
        %v1470 = vadd.f32 0.0, %v1469
        %v1471 = vpop.f32.mrf.mxu0
        %v1472 = vadd.f32 0.0, %v1471
        %1473 = vmatprep.mubr.bf16.mxu0 0
        %1474 = vmatmul.mubr.bf16.gmra.mxu0 %v612
        %v1475 = vpop.f32.mrf.mxu0
        %v1476 = vadd.f32 0.0, %v1475
        %v1477 = vpop.f32.mrf.mxu0
        %v1478 = vadd.f32 0.0, %v1477
        %v1479 = vpop.f32.mrf.mxu0
        %v1480 = vadd.f32 0.0, %v1479
        %v1481 = vpop.f32.mrf.mxu0
        %v1482 = vadd.f32 0.0, %v1481
        %1483 = vmatprep.mubr.bf16.mxu0 0
        %1484 = vmatmul.mubr.bf16.gmra.mxu0 %v613
        %v1485 = vpop.f32.mrf.mxu0
        %v1486 = vadd.f32 0.0, %v1485
        %v1487 = vpop.f32.mrf.mxu0
        %v1488 = vadd.f32 0.0, %v1487
        %v1489 = vpop.f32.mrf.mxu0
        %v1490 = vadd.f32 0.0, %v1489
        %v1491 = vpop.f32.mrf.mxu0
        %v1492 = vadd.f32 0.0, %v1491
        %1493 = vmatprep.mubr.bf16.mxu0 0
        %1494 = vmatmul.mubr.bf16.gmra.mxu0 %v614
        %v1495 = vpop.f32.mrf.mxu0
        %v1496 = vadd.f32 0.0, %v1495
        %v1497 = vpop.f32.mrf.mxu0
        %v1498 = vadd.f32 0.0, %v1497
        %v1499 = vpop.f32.mrf.mxu0
        %v1500 = vadd.f32 0.0, %v1499
        %v1501 = vpop.f32.mrf.mxu0
        %v1502 = vadd.f32 0.0, %v1501
        %1503 = vmatprep.mubr.bf16.mxu0 0
        %1504 = vmatmul.mubr.bf16.gmra.mxu0 %v615
        %v1505 = vpop.f32.mrf.mxu0
        %v1506 = vadd.f32 0.0, %v1505
        %v1507 = vpop.f32.mrf.mxu0
        %v1508 = vadd.f32 0.0, %v1507
        %v1509 = vpop.f32.mrf.mxu0
        %v1510 = vadd.f32 0.0, %v1509
        %v1511 = vpop.f32.mrf.mxu0
        %v1512 = vadd.f32 0.0, %v1511
        %1513 = vdwg.mxu0
        %1514 = vst [vmem:[%s303] sm:$0xff] %v843
        %1515 = vst [vmem:[%s303 + $0x8] sm:$0xff] %v845
        %1516 = vst [vmem:[%s303 + $0x10] sm:$0xff] %v1196
        %1517 = vst [vmem:[%s303 + $0x18] sm:$0xff] %v1198
        %1518 = vst [vmem:[%s303 + $0x20] sm:$0xff] %v847
        %1519 = vst [vmem:[%s303 + $0x28] sm:$0xff] %v849
        %1520 = vst [vmem:[%s303 + $0x30] sm:$0xff] %v1200
        %1521 = vst [vmem:[%s303 + $0x38] sm:$0xff] %v1202
        %1522 = vst [vmem:[%s303 + $0x40] sm:$0xff] %v853
        %1523 = vst [vmem:[%s303 + $0x48] sm:$0xff] %v855
        %1524 = vst [vmem:[%s303 + $0x50] sm:$0xff] %v1206
        %1525 = vst [vmem:[%s303 + $0x58] sm:$0xff] %v1208
        %1526 = vst [vmem:[%s303 + $0x60] sm:$0xff] %v857
        %1527 = vst [vmem:[%s303 + $0x68] sm:$0xff] %v859
        %1528 = vst [vmem:[%s303 + $0x70] sm:$0xff] %v1210
        %1529 = vst [vmem:[%s303 + $0x78] sm:$0xff] %v1212
        %1530 = vst [vmem:[%s303 + $0x80] sm:$0xff] %v863
        %1531 = vst [vmem:[%s303 + $0x88] sm:$0xff] %v865
        %1532 = vst [vmem:[%s303 + $0x90] sm:$0xff] %v1216
        %1533 = vst [vmem:[%s303 + $0x98] sm:$0xff] %v1218
        %1534 = vst [vmem:[%s303 + $0xa0] sm:$0xff] %v867
        %1535 = vst [vmem:[%s303 + $0xa8] sm:$0xff] %v869
        %1536 = vst [vmem:[%s303 + $0xb0] sm:$0xff] %v1220
        %1537 = vst [vmem:[%s303 + $0xb8] sm:$0xff] %v1222
        %1538 = vst [vmem:[%s303 + $0xc0] sm:$0xff] %v873
        %1539 = vst [vmem:[%s303 + $0xc8] sm:$0xff] %v875
        %1540 = vst [vmem:[%s303 + $0xd0] sm:$0xff] %v1226
        %1541 = vst [vmem:[%s303 + $0xd8] sm:$0xff] %v1228
        %1542 = vst [vmem:[%s303 + $0xe0] sm:$0xff] %v877
        %1543 = vst [vmem:[%s303 + $0xe8] sm:$0xff] %v879
        %1544 = vst [vmem:[%s303 + $0xf0] sm:$0xff] %v1230
        %1545 = vst [vmem:[%s303 + $0xf8] sm:$0xff] %v1232
        %1546 = vst [vmem:[%s303 + $0x100] sm:$0xff] %v883
        %1547 = vst [vmem:[%s303 + $0x108] sm:$0xff] %v885
        %1548 = vst [vmem:[%s303 + $0x110] sm:$0xff] %v1236
        %1549 = vst [vmem:[%s303 + $0x118] sm:$0xff] %v1238
        %1550 = vst [vmem:[%s303 + $0x120] sm:$0xff] %v887
        %1551 = vst [vmem:[%s303 + $0x128] sm:$0xff] %v889
        %1552 = vst [vmem:[%s303 + $0x130] sm:$0xff] %v1240
        %1553 = vst [vmem:[%s303 + $0x138] sm:$0xff] %v1242
        %1554 = vst [vmem:[%s303 + $0x140] sm:$0xff] %v893
        %1555 = vst [vmem:[%s303 + $0x148] sm:$0xff] %v895
        %1556 = vst [vmem:[%s303 + $0x150] sm:$0xff] %v1246
        %1557 = vst [vmem:[%s303 + $0x158] sm:$0xff] %v1248
        %1558 = vst [vmem:[%s303 + $0x160] sm:$0xff] %v897
        %1559 = vst [vmem:[%s303 + $0x168] sm:$0xff] %v899
        %1560 = vst [vmem:[%s303 + $0x170] sm:$0xff] %v1250
        %1561 = vst [vmem:[%s303 + $0x178] sm:$0xff] %v1252
        %1562 = vst [vmem:[%s303 + $0x180] sm:$0xff] %v903
        %1563 = vst [vmem:[%s303 + $0x188] sm:$0xff] %v905
        %1564 = vst [vmem:[%s303 + $0x190] sm:$0xff] %v1256
        %1565 = vst [vmem:[%s303 + $0x198] sm:$0xff] %v1258
        %1566 = vst [vmem:[%s303 + $0x1a0] sm:$0xff] %v907
        %1567 = vst [vmem:[%s303 + $0x1a8] sm:$0xff] %v909
        %1568 = vst [vmem:[%s303 + $0x1b0] sm:$0xff] %v1260
        %1569 = vst [vmem:[%s303 + $0x1b8] sm:$0xff] %v1262
        %1570 = vst [vmem:[%s303 + $0x1c0] sm:$0xff] %v913
        %1571 = vst [vmem:[%s303 + $0x1c8] sm:$0xff] %v915
        %1572 = vst [vmem:[%s303 + $0x1d0] sm:$0xff] %v1266
        %1573 = vst [vmem:[%s303 + $0x1d8] sm:$0xff] %v1268
        %1574 = vst [vmem:[%s303 + $0x1e0] sm:$0xff] %v917
        %1575 = vst [vmem:[%s303 + $0x1e8] sm:$0xff] %v919
        %1576 = vst [vmem:[%s303 + $0x1f0] sm:$0xff] %v1270
        %1577 = vst [vmem:[%s303 + $0x1f8] sm:$0xff] %v1272
        %1578 = vst [vmem:[%s303 + $0x200] sm:$0xff] %v923
        %1579 = vst [vmem:[%s303 + $0x208] sm:$0xff] %v925
        %1580 = vst [vmem:[%s303 + $0x210] sm:$0xff] %v1276
        %1581 = vst [vmem:[%s303 + $0x218] sm:$0xff] %v1278
        %1582 = vst [vmem:[%s303 + $0x220] sm:$0xff] %v927
        %1583 = vst [vmem:[%s303 + $0x228] sm:$0xff] %v929
        %1584 = vst [vmem:[%s303 + $0x230] sm:$0xff] %v1280
        %1585 = vst [vmem:[%s303 + $0x238] sm:$0xff] %v1282
        %1586 = vst [vmem:[%s303 + $0x240] sm:$0xff] %v933
        %1587 = vst [vmem:[%s303 + $0x248] sm:$0xff] %v935
        %1588 = vst [vmem:[%s303 + $0x250] sm:$0xff] %v1286
        %1589 = vst [vmem:[%s303 + $0x258] sm:$0xff] %v1288
        %1590 = vst [vmem:[%s303 + $0x260] sm:$0xff] %v937
        %1591 = vst [vmem:[%s303 + $0x268] sm:$0xff] %v939
        %1592 = vst [vmem:[%s303 + $0x270] sm:$0xff] %v1290
        %1593 = vst [vmem:[%s303 + $0x278] sm:$0xff] %v1292
        %1594 = vst [vmem:[%s303 + $0x280] sm:$0xff] %v943
        %1595 = vst [vmem:[%s303 + $0x288] sm:$0xff] %v945
        %1596 = vst [vmem:[%s303 + $0x290] sm:$0xff] %v1296
        %1597 = vst [vmem:[%s303 + $0x298] sm:$0xff] %v1298
        %1598 = vst [vmem:[%s303 + $0x2a0] sm:$0xff] %v947
        %1599 = vst [vmem:[%s303 + $0x2a8] sm:$0xff] %v949
        %1600 = vst [vmem:[%s303 + $0x2b0] sm:$0xff] %v1300
        %1601 = vst [vmem:[%s303 + $0x2b8] sm:$0xff] %v1302
        %1602 = vst [vmem:[%s303 + $0x2c0] sm:$0xff] %v953
        %1603 = vst [vmem:[%s303 + $0x2c8] sm:$0xff] %v955
        %1604 = vst [vmem:[%s303 + $0x2d0] sm:$0xff] %v1306
        %1605 = vst [vmem:[%s303 + $0x2d8] sm:$0xff] %v1308
        %1606 = vst [vmem:[%s303 + $0x2e0] sm:$0xff] %v957
        %1607 = vst [vmem:[%s303 + $0x2e8] sm:$0xff] %v959
        %1608 = vst [vmem:[%s303 + $0x2f0] sm:$0xff] %v1310
        %1609 = vst [vmem:[%s303 + $0x2f8] sm:$0xff] %v1312
        %1610 = vst [vmem:[%s303 + $0x300] sm:$0xff] %v963
        %1611 = vst [vmem:[%s303 + $0x308] sm:$0xff] %v965
        %1612 = vst [vmem:[%s303 + $0x310] sm:$0xff] %v1316
        %1613 = vst [vmem:[%s303 + $0x318] sm:$0xff] %v1318
        %1614 = vst [vmem:[%s303 + $0x320] sm:$0xff] %v967
        %1615 = vst [vmem:[%s303 + $0x328] sm:$0xff] %v969
        %1616 = vst [vmem:[%s303 + $0x330] sm:$0xff] %v1320
        %1617 = vst [vmem:[%s303 + $0x338] sm:$0xff] %v1322
        %1618 = vst [vmem:[%s303 + $0x340] sm:$0xff] %v973
        %1619 = vst [vmem:[%s303 + $0x348] sm:$0xff] %v975
        %1620 = vst [vmem:[%s303 + $0x350] sm:$0xff] %v1326
        %1621 = vst [vmem:[%s303 + $0x358] sm:$0xff] %v1328
        %1622 = vst [vmem:[%s303 + $0x360] sm:$0xff] %v977
        %1623 = vst [vmem:[%s303 + $0x368] sm:$0xff] %v979
        %1624 = vst [vmem:[%s303 + $0x370] sm:$0xff] %v1330
        %1625 = vst [vmem:[%s303 + $0x378] sm:$0xff] %v1332
        %1626 = vst [vmem:[%s303 + $0x380] sm:$0xff] %v983
        %1627 = vst [vmem:[%s303 + $0x388] sm:$0xff] %v985
        %1628 = vst [vmem:[%s303 + $0x390] sm:$0xff] %v1336
        %1629 = vst [vmem:[%s303 + $0x398] sm:$0xff] %v1338
        %1630 = vst [vmem:[%s303 + $0x3a0] sm:$0xff] %v987
        %1631 = vst [vmem:[%s303 + $0x3a8] sm:$0xff] %v989
        %1632 = vst [vmem:[%s303 + $0x3b0] sm:$0xff] %v1340
        %1633 = vst [vmem:[%s303 + $0x3b8] sm:$0xff] %v1342
        %1634 = vst [vmem:[%s303 + $0x3c0] sm:$0xff] %v993
        %1635 = vst [vmem:[%s303 + $0x3c8] sm:$0xff] %v995
        %1636 = vst [vmem:[%s303 + $0x3d0] sm:$0xff] %v1346
        %1637 = vst [vmem:[%s303 + $0x3d8] sm:$0xff] %v1348
        %1638 = vst [vmem:[%s303 + $0x3e0] sm:$0xff] %v997
        %1639 = vst [vmem:[%s303 + $0x3e8] sm:$0xff] %v999
        %1640 = vst [vmem:[%s303 + $0x3f0] sm:$0xff] %v1350
        %1641 = vst [vmem:[%s303 + $0x3f8] sm:$0xff] %v1352
        %1642 = vst [vmem:[%s303 + $0x400] sm:$0xff] %v1003
        %1643 = vst [vmem:[%s303 + $0x408] sm:$0xff] %v1005
        %1644 = vst [vmem:[%s303 + $0x410] sm:$0xff] %v1356
        %1645 = vst [vmem:[%s303 + $0x418] sm:$0xff] %v1358
        %1646 = vst [vmem:[%s303 + $0x420] sm:$0xff] %v1007
        %1647 = vst [vmem:[%s303 + $0x428] sm:$0xff] %v1009
        %1648 = vst [vmem:[%s303 + $0x430] sm:$0xff] %v1360
        %1649 = vst [vmem:[%s303 + $0x438] sm:$0xff] %v1362
        %1650 = vst [vmem:[%s303 + $0x440] sm:$0xff] %v1013
        %1651 = vst [vmem:[%s303 + $0x448] sm:$0xff] %v1015
        %1652 = vst [vmem:[%s303 + $0x450] sm:$0xff] %v1366
        %1653 = vst [vmem:[%s303 + $0x458] sm:$0xff] %v1368
        %1654 = vst [vmem:[%s303 + $0x460] sm:$0xff] %v1017
        %1655 = vst [vmem:[%s303 + $0x468] sm:$0xff] %v1019
        %1656 = vst [vmem:[%s303 + $0x470] sm:$0xff] %v1370
        %1657 = vst [vmem:[%s303 + $0x478] sm:$0xff] %v1372
        %1658 = vst [vmem:[%s303 + $0x480] sm:$0xff] %v1023
        %1659 = vst [vmem:[%s303 + $0x488] sm:$0xff] %v1025
        %1660 = vst [vmem:[%s303 + $0x490] sm:$0xff] %v1376
        %1661 = vst [vmem:[%s303 + $0x498] sm:$0xff] %v1378
        %1662 = vst [vmem:[%s303 + $0x4a0] sm:$0xff] %v1027
        %1663 = vst [vmem:[%s303 + $0x4a8] sm:$0xff] %v1029
        %1664 = vst [vmem:[%s303 + $0x4b0] sm:$0xff] %v1380
        %1665 = vst [vmem:[%s303 + $0x4b8] sm:$0xff] %v1382
        %1666 = vst [vmem:[%s303 + $0x4c0] sm:$0xff] %v1033
        %1667 = vst [vmem:[%s303 + $0x4c8] sm:$0xff] %v1035
        %1668 = vst [vmem:[%s303 + $0x4d0] sm:$0xff] %v1386
        %1669 = vst [vmem:[%s303 + $0x4d8] sm:$0xff] %v1388
        %1670 = vst [vmem:[%s303 + $0x4e0] sm:$0xff] %v1037
        %1671 = vst [vmem:[%s303 + $0x4e8] sm:$0xff] %v1039
        %1672 = vst [vmem:[%s303 + $0x4f0] sm:$0xff] %v1390
        %1673 = vst [vmem:[%s303 + $0x4f8] sm:$0xff] %v1392
        %1674 = vst [vmem:[%s303 + $0x500] sm:$0xff] %v1043
        %1675 = vst [vmem:[%s303 + $0x508] sm:$0xff] %v1045
        %1676 = vst [vmem:[%s303 + $0x510] sm:$0xff] %v1396
        %1677 = vst [vmem:[%s303 + $0x518] sm:$0xff] %v1398
        %1678 = vst [vmem:[%s303 + $0x520] sm:$0xff] %v1047
        %1679 = vst [vmem:[%s303 + $0x528] sm:$0xff] %v1049
        %1680 = vst [vmem:[%s303 + $0x530] sm:$0xff] %v1400
        %1681 = vst [vmem:[%s303 + $0x538] sm:$0xff] %v1402
        %1682 = vst [vmem:[%s303 + $0x540] sm:$0xff] %v1053
        %1683 = vst [vmem:[%s303 + $0x548] sm:$0xff] %v1055
        %1684 = vst [vmem:[%s303 + $0x550] sm:$0xff] %v1406
        %1685 = vst [vmem:[%s303 + $0x558] sm:$0xff] %v1408
        %1686 = vst [vmem:[%s303 + $0x560] sm:$0xff] %v1057
        %1687 = vst [vmem:[%s303 + $0x568] sm:$0xff] %v1059
        %1688 = vst [vmem:[%s303 + $0x570] sm:$0xff] %v1410
        %1689 = vst [vmem:[%s303 + $0x578] sm:$0xff] %v1412
        %1690 = vst [vmem:[%s303 + $0x580] sm:$0xff] %v1063
        %1691 = vst [vmem:[%s303 + $0x588] sm:$0xff] %v1065
        %1692 = vst [vmem:[%s303 + $0x590] sm:$0xff] %v1416
        %1693 = vst [vmem:[%s303 + $0x598] sm:$0xff] %v1418
        %1694 = vst [vmem:[%s303 + $0x5a0] sm:$0xff] %v1067
        %1695 = vst [vmem:[%s303 + $0x5a8] sm:$0xff] %v1069
        %1696 = vst [vmem:[%s303 + $0x5b0] sm:$0xff] %v1420
        %1697 = vst [vmem:[%s303 + $0x5b8] sm:$0xff] %v1422
        %1698 = vst [vmem:[%s303 + $0x5c0] sm:$0xff] %v1073
        %1699 = vst [vmem:[%s303 + $0x5c8] sm:$0xff] %v1075
        %1700 = vst [vmem:[%s303 + $0x5d0] sm:$0xff] %v1426
        %1701 = vst [vmem:[%s303 + $0x5d8] sm:$0xff] %v1428
        %1702 = vst [vmem:[%s303 + $0x5e0] sm:$0xff] %v1077
        %1703 = vst [vmem:[%s303 + $0x5e8] sm:$0xff] %v1079
        %1704 = vst [vmem:[%s303 + $0x5f0] sm:$0xff] %v1430
        %1705 = vst [vmem:[%s303 + $0x5f8] sm:$0xff] %v1432
        %1706 = vst [vmem:[%s303 + $0x600] sm:$0xff] %v1083
        %1707 = vst [vmem:[%s303 + $0x608] sm:$0xff] %v1085
        %1708 = vst [vmem:[%s303 + $0x610] sm:$0xff] %v1436
        %1709 = vst [vmem:[%s303 + $0x618] sm:$0xff] %v1438
        %1710 = vst [vmem:[%s303 + $0x620] sm:$0xff] %v1087
        %1711 = vst [vmem:[%s303 + $0x628] sm:$0xff] %v1089
        %1712 = vst [vmem:[%s303 + $0x630] sm:$0xff] %v1440
        %1713 = vst [vmem:[%s303 + $0x638] sm:$0xff] %v1442
        %1714 = vst [vmem:[%s303 + $0x640] sm:$0xff] %v1093
        %1715 = vst [vmem:[%s303 + $0x648] sm:$0xff] %v1095
        %1716 = vst [vmem:[%s303 + $0x650] sm:$0xff] %v1446
        %1717 = vst [vmem:[%s303 + $0x658] sm:$0xff] %v1448
        %1718 = vst [vmem:[%s303 + $0x660] sm:$0xff] %v1097
        %1719 = vst [vmem:[%s303 + $0x668] sm:$0xff] %v1099
        %1720 = vst [vmem:[%s303 + $0x670] sm:$0xff] %v1450
        %1721 = vst [vmem:[%s303 + $0x678] sm:$0xff] %v1452
        %1722 = vst [vmem:[%s303 + $0x680] sm:$0xff] %v1103
        %1723 = vst [vmem:[%s303 + $0x688] sm:$0xff] %v1105
        %1724 = vst [vmem:[%s303 + $0x690] sm:$0xff] %v1456
        %1725 = vst [vmem:[%s303 + $0x698] sm:$0xff] %v1458
        %1726 = vst [vmem:[%s303 + $0x6a0] sm:$0xff] %v1107
        %1727 = vst [vmem:[%s303 + $0x6a8] sm:$0xff] %v1109
        %1728 = vst [vmem:[%s303 + $0x6b0] sm:$0xff] %v1460
        %1729 = vst [vmem:[%s303 + $0x6b8] sm:$0xff] %v1462
        %1730 = vst [vmem:[%s303 + $0x6c0] sm:$0xff] %v1113
        %1731 = vst [vmem:[%s303 + $0x6c8] sm:$0xff] %v1115
        %1732 = vst [vmem:[%s303 + $0x6d0] sm:$0xff] %v1466
        %1733 = vst [vmem:[%s303 + $0x6d8] sm:$0xff] %v1468
        %1734 = vst [vmem:[%s303 + $0x6e0] sm:$0xff] %v1117
        %1735 = vst [vmem:[%s303 + $0x6e8] sm:$0xff] %v1119
        %1736 = vst [vmem:[%s303 + $0x6f0] sm:$0xff] %v1470
        %1737 = vst [vmem:[%s303 + $0x6f8] sm:$0xff] %v1472
        %1738 = vst [vmem:[%s303 + $0x700] sm:$0xff] %v1123
        %1739 = vst [vmem:[%s303 + $0x708] sm:$0xff] %v1125
        %1740 = vst [vmem:[%s303 + $0x710] sm:$0xff] %v1476
        %1741 = vst [vmem:[%s303 + $0x718] sm:$0xff] %v1478
        %1742 = vst [vmem:[%s303 + $0x720] sm:$0xff] %v1127
        %1743 = vst [vmem:[%s303 + $0x728] sm:$0xff] %v1129
        %1744 = vst [vmem:[%s303 + $0x730] sm:$0xff] %v1480
        %1745 = vst [vmem:[%s303 + $0x738] sm:$0xff] %v1482
        %1746 = vst [vmem:[%s303 + $0x740] sm:$0xff] %v1133
        %1747 = vst [vmem:[%s303 + $0x748] sm:$0xff] %v1135
        %1748 = vst [vmem:[%s303 + $0x750] sm:$0xff] %v1486
        %1749 = vst [vmem:[%s303 + $0x758] sm:$0xff] %v1488
        %1750 = vst [vmem:[%s303 + $0x760] sm:$0xff] %v1137
        %1751 = vst [vmem:[%s303 + $0x768] sm:$0xff] %v1139
        %1752 = vst [vmem:[%s303 + $0x770] sm:$0xff] %v1490
        %1753 = vst [vmem:[%s303 + $0x778] sm:$0xff] %v1492
        %1754 = vst [vmem:[%s303 + $0x780] sm:$0xff] %v1143
        %1755 = vst [vmem:[%s303 + $0x788] sm:$0xff] %v1145
        %1756 = vst [vmem:[%s303 + $0x790] sm:$0xff] %v1496
        %1757 = vst [vmem:[%s303 + $0x798] sm:$0xff] %v1498
        %1758 = vst [vmem:[%s303 + $0x7a0] sm:$0xff] %v1147
        %1759 = vst [vmem:[%s303 + $0x7a8] sm:$0xff] %v1149
        %1760 = vst [vmem:[%s303 + $0x7b0] sm:$0xff] %v1500
        %1761 = vst [vmem:[%s303 + $0x7b8] sm:$0xff] %v1502
        %1762 = vst [vmem:[%s303 + $0x7c0] sm:$0xff] %v1153
        %1763 = vst [vmem:[%s303 + $0x7c8] sm:$0xff] %v1155
        %1764 = vst [vmem:[%s303 + $0x7d0] sm:$0xff] %v1506
        %1765 = vst [vmem:[%s303 + $0x7d8] sm:$0xff] %v1508
        %1766 = vst [vmem:[%s303 + $0x7e0] sm:$0xff] %v1157
        %1767 = vst [vmem:[%s303 + $0x7e8] sm:$0xff] %v1159
        %1768 = vst [vmem:[%s303 + $0x7f0] sm:$0xff] %v1510
        %1769 = vst [vmem:[%s303 + $0x7f8] sm:$0xff] %v1512
        %s1770 = sand.u32 %s131, 1
        %s1771 = sand.u32 %s131, 1
        %s1772 = smul.addr %s1771, 2048
        %s1773 = scalar_lea.vmem [#allocation3], %s1772
        // Predicated region
        $region60: #{generator_forward.16} parent=54 // pred_check
          %p1774 = pneg %p141
        $region61: #{generator_forward.16} parent=54 // pred_check_branch
          %1776 = sbr.rel (%p1774) target = $region63
        $region62: #{generator_forward.16} parent=54 // pred_region
          %s1777 = smul.u32 64, %s19
          %s1778 = smul.u32 4, %s20
          %s1779 = smul.addr %s1777, 8
          %s1780 = sadd.s32 %s1778, %s1779
          %s1781 = smul.addr %s1780, 8
          %s1782 = scalar_lea.vmem %s4, %s1781
          // Predicated region
          $region64: #{generator_forward.16} parent=62 // pred_check
            _
          $region65: #{generator_forward.16} parent=62 // pred_check_branch
            %1784 = sbr.rel (0) target = $region67
          $region66: #{generator_forward.16} parent=62 // pred_region
            // Predicated region
            $region68: #{generator_forward.16} parent=66 // pred_check
              _
            $region69: #{generator_forward.16} parent=66 // pred_check_branch
              %1786 = sbr.rel (0) target = $region71
            $region70: #{generator_forward.16} parent=66 // pred_region
              loop: start=0, step=1, limit=1
              $region72: #{generator_forward.16} parent=70 // loop_pre_header
                _
              $region73: #{generator_forward.16} parent=70 // loop_header
                %s1788 = sphi 0, %s1792
                %p1789 = scmp.ge.s32.totalorder %s1788, 1
                %s1793 = sphi %s1773, %s1773
                %s1794 = sphi %s1782, %s1782
              $region74: #{generator_forward.16} parent=70 // loop_header_branch
                %1791 = sbr.rel (%p1789) target = $region78
              $region75: #{generator_forward.16} parent=70 // loop_body
                %v1795 = vld [vmem:[%s1793] sm:$0xff]
                %1796 = vst [vmem:[%s1794] sm:$0xff] %v1795
                %v1797 = vld [vmem:[%s1793 + $0x8] sm:$0xff]
                %1798 = vst [vmem:[%s1794 + $0x8] sm:$0xff] %v1797
                %v1799 = vld [vmem:[%s1793 + $0x10] sm:$0xff]
                %1800 = vst [vmem:[%s1794 + $0x10] sm:$0xff] %v1799
                %v1801 = vld [vmem:[%s1793 + $0x18] sm:$0xff]
                %1802 = vst [vmem:[%s1794 + $0x18] sm:$0xff] %v1801
                %v1803 = vld [vmem:[%s1793 + $0x20] sm:$0xff]
                %1804 = vst [vmem:[%s1794 + $0x40] sm:$0xff] %v1803
                %v1805 = vld [vmem:[%s1793 + $0x28] sm:$0xff]
                %1806 = vst [vmem:[%s1794 + $0x48] sm:$0xff] %v1805
                %v1807 = vld [vmem:[%s1793 + $0x30] sm:$0xff]
                %1808 = vst [vmem:[%s1794 + $0x50] sm:$0xff] %v1807
                %v1809 = vld [vmem:[%s1793 + $0x38] sm:$0xff]
                %1810 = vst [vmem:[%s1794 + $0x58] sm:$0xff] %v1809
                %v1811 = vld [vmem:[%s1793 + $0x40] sm:$0xff]
                %1812 = vst [vmem:[%s1794 + $0x80] sm:$0xff] %v1811
                %v1813 = vld [vmem:[%s1793 + $0x48] sm:$0xff]
                %1814 = vst [vmem:[%s1794 + $0x88] sm:$0xff] %v1813
                %v1815 = vld [vmem:[%s1793 + $0x50] sm:$0xff]
                %1816 = vst [vmem:[%s1794 + $0x90] sm:$0xff] %v1815
                %v1817 = vld [vmem:[%s1793 + $0x58] sm:$0xff]
                %1818 = vst [vmem:[%s1794 + $0x98] sm:$0xff] %v1817
                %v1819 = vld [vmem:[%s1793 + $0x60] sm:$0xff]
                %1820 = vst [vmem:[%s1794 + $0xc0] sm:$0xff] %v1819
                %v1821 = vld [vmem:[%s1793 + $0x68] sm:$0xff]
                %1822 = vst [vmem:[%s1794 + $0xc8] sm:$0xff] %v1821
                %v1823 = vld [vmem:[%s1793 + $0x70] sm:$0xff]
                %1824 = vst [vmem:[%s1794 + $0xd0] sm:$0xff] %v1823
                %v1825 = vld [vmem:[%s1793 + $0x78] sm:$0xff]
                %1826 = vst [vmem:[%s1794 + $0xd8] sm:$0xff] %v1825
                %v1827 = vld [vmem:[%s1793 + $0x80] sm:$0xff]
                %1828 = vst [vmem:[%s1794 + $0x100] sm:$0xff] %v1827
                %v1829 = vld [vmem:[%s1793 + $0x88] sm:$0xff]
                %1830 = vst [vmem:[%s1794 + $0x108] sm:$0xff] %v1829
                %v1831 = vld [vmem:[%s1793 + $0x90] sm:$0xff]
                %1832 = vst [vmem:[%s1794 + $0x110] sm:$0xff] %v1831
                %v1833 = vld [vmem:[%s1793 + $0x98] sm:$0xff]
                %1834 = vst [vmem:[%s1794 + $0x118] sm:$0xff] %v1833
                %v1835 = vld [vmem:[%s1793 + $0xa0] sm:$0xff]
                %1836 = vst [vmem:[%s1794 + $0x140] sm:$0xff] %v1835
                %v1837 = vld [vmem:[%s1793 + $0xa8] sm:$0xff]
                %1838 = vst [vmem:[%s1794 + $0x148] sm:$0xff] %v1837
                %v1839 = vld [vmem:[%s1793 + $0xb0] sm:$0xff]
                %1840 = vst [vmem:[%s1794 + $0x150] sm:$0xff] %v1839
                %v1841 = vld [vmem:[%s1793 + $0xb8] sm:$0xff]
                %1842 = vst [vmem:[%s1794 + $0x158] sm:$0xff] %v1841
                %v1843 = vld [vmem:[%s1793 + $0xc0] sm:$0xff]
                %1844 = vst [vmem:[%s1794 + $0x180] sm:$0xff] %v1843
                %v1845 = vld [vmem:[%s1793 + $0xc8] sm:$0xff]
                %1846 = vst [vmem:[%s1794 + $0x188] sm:$0xff] %v1845
                %v1847 = vld [vmem:[%s1793 + $0xd0] sm:$0xff]
                %1848 = vst [vmem:[%s1794 + $0x190] sm:$0xff] %v1847
                %v1849 = vld [vmem:[%s1793 + $0xd8] sm:$0xff]
                %1850 = vst [vmem:[%s1794 + $0x198] sm:$0xff] %v1849
                %v1851 = vld [vmem:[%s1793 + $0xe0] sm:$0xff]
                %1852 = vst [vmem:[%s1794 + $0x1c0] sm:$0xff] %v1851
                %v1853 = vld [vmem:[%s1793 + $0xe8] sm:$0xff]
                %1854 = vst [vmem:[%s1794 + $0x1c8] sm:$0xff] %v1853
                %v1855 = vld [vmem:[%s1793 + $0xf0] sm:$0xff]
                %1856 = vst [vmem:[%s1794 + $0x1d0] sm:$0xff] %v1855
                %v1857 = vld [vmem:[%s1793 + $0xf8] sm:$0xff]
                %1858 = vst [vmem:[%s1794 + $0x1d8] sm:$0xff] %v1857
                %v1859 = vld [vmem:[%s1793 + $0x100] sm:$0xff]
                %1860 = vst [vmem:[%s1794 + $0x200] sm:$0xff] %v1859
                %v1861 = vld [vmem:[%s1793 + $0x108] sm:$0xff]
                %1862 = vst [vmem:[%s1794 + $0x208] sm:$0xff] %v1861
                %v1863 = vld [vmem:[%s1793 + $0x110] sm:$0xff]
                %1864 = vst [vmem:[%s1794 + $0x210] sm:$0xff] %v1863
                %v1865 = vld [vmem:[%s1793 + $0x118] sm:$0xff]
                %1866 = vst [vmem:[%s1794 + $0x218] sm:$0xff] %v1865
                %v1867 = vld [vmem:[%s1793 + $0x120] sm:$0xff]
                %1868 = vst [vmem:[%s1794 + $0x240] sm:$0xff] %v1867
                %v1869 = vld [vmem:[%s1793 + $0x128] sm:$0xff]
                %1870 = vst [vmem:[%s1794 + $0x248] sm:$0xff] %v1869
                %v1871 = vld [vmem:[%s1793 + $0x130] sm:$0xff]
                %1872 = vst [vmem:[%s1794 + $0x250] sm:$0xff] %v1871
                %v1873 = vld [vmem:[%s1793 + $0x138] sm:$0xff]
                %1874 = vst [vmem:[%s1794 + $0x258] sm:$0xff] %v1873
                %v1875 = vld [vmem:[%s1793 + $0x140] sm:$0xff]
                %1876 = vst [vmem:[%s1794 + $0x280] sm:$0xff] %v1875
                %v1877 = vld [vmem:[%s1793 + $0x148] sm:$0xff]
                %1878 = vst [vmem:[%s1794 + $0x288] sm:$0xff] %v1877
                %v1879 = vld [vmem:[%s1793 + $0x150] sm:$0xff]
                %1880 = vst [vmem:[%s1794 + $0x290] sm:$0xff] %v1879
                %v1881 = vld [vmem:[%s1793 + $0x158] sm:$0xff]
                %1882 = vst [vmem:[%s1794 + $0x298] sm:$0xff] %v1881
                %v1883 = vld [vmem:[%s1793 + $0x160] sm:$0xff]
                %1884 = vst [vmem:[%s1794 + $0x2c0] sm:$0xff] %v1883
                %v1885 = vld [vmem:[%s1793 + $0x168] sm:$0xff]
                %1886 = vst [vmem:[%s1794 + $0x2c8] sm:$0xff] %v1885
                %v1887 = vld [vmem:[%s1793 + $0x170] sm:$0xff]
                %1888 = vst [vmem:[%s1794 + $0x2d0] sm:$0xff] %v1887
                %v1889 = vld [vmem:[%s1793 + $0x178] sm:$0xff]
                %1890 = vst [vmem:[%s1794 + $0x2d8] sm:$0xff] %v1889
                %v1891 = vld [vmem:[%s1793 + $0x180] sm:$0xff]
                %1892 = vst [vmem:[%s1794 + $0x300] sm:$0xff] %v1891
                %v1893 = vld [vmem:[%s1793 + $0x188] sm:$0xff]
                %1894 = vst [vmem:[%s1794 + $0x308] sm:$0xff] %v1893
                %v1895 = vld [vmem:[%s1793 + $0x190] sm:$0xff]
                %1896 = vst [vmem:[%s1794 + $0x310] sm:$0xff] %v1895
                %v1897 = vld [vmem:[%s1793 + $0x198] sm:$0xff]
                %1898 = vst [vmem:[%s1794 + $0x318] sm:$0xff] %v1897
                %v1899 = vld [vmem:[%s1793 + $0x1a0] sm:$0xff]
                %1900 = vst [vmem:[%s1794 + $0x340] sm:$0xff] %v1899
                %v1901 = vld [vmem:[%s1793 + $0x1a8] sm:$0xff]
                %1902 = vst [vmem:[%s1794 + $0x348] sm:$0xff] %v1901
                %v1903 = vld [vmem:[%s1793 + $0x1b0] sm:$0xff]
                %1904 = vst [vmem:[%s1794 + $0x350] sm:$0xff] %v1903
                %v1905 = vld [vmem:[%s1793 + $0x1b8] sm:$0xff]
                %1906 = vst [vmem:[%s1794 + $0x358] sm:$0xff] %v1905
                %v1907 = vld [vmem:[%s1793 + $0x1c0] sm:$0xff]
                %1908 = vst [vmem:[%s1794 + $0x380] sm:$0xff] %v1907
                %v1909 = vld [vmem:[%s1793 + $0x1c8] sm:$0xff]
                %1910 = vst [vmem:[%s1794 + $0x388] sm:$0xff] %v1909
                %v1911 = vld [vmem:[%s1793 + $0x1d0] sm:$0xff]
                %1912 = vst [vmem:[%s1794 + $0x390] sm:$0xff] %v1911
                %v1913 = vld [vmem:[%s1793 + $0x1d8] sm:$0xff]
                %1914 = vst [vmem:[%s1794 + $0x398] sm:$0xff] %v1913
                %v1915 = vld [vmem:[%s1793 + $0x1e0] sm:$0xff]
                %1916 = vst [vmem:[%s1794 + $0x3c0] sm:$0xff] %v1915
                %v1917 = vld [vmem:[%s1793 + $0x1e8] sm:$0xff]
                %1918 = vst [vmem:[%s1794 + $0x3c8] sm:$0xff] %v1917
                %v1919 = vld [vmem:[%s1793 + $0x1f0] sm:$0xff]
                %1920 = vst [vmem:[%s1794 + $0x3d0] sm:$0xff] %v1919
                %v1921 = vld [vmem:[%s1793 + $0x1f8] sm:$0xff]
                %1922 = vst [vmem:[%s1794 + $0x3d8] sm:$0xff] %v1921
                %v1923 = vld [vmem:[%s1793 + $0x200] sm:$0xff]
                %1924 = vst [vmem:[%s1794 + $0x400] sm:$0xff] %v1923
                %v1925 = vld [vmem:[%s1793 + $0x208] sm:$0xff]
                %1926 = vst [vmem:[%s1794 + $0x408] sm:$0xff] %v1925
                %v1927 = vld [vmem:[%s1793 + $0x210] sm:$0xff]
                %1928 = vst [vmem:[%s1794 + $0x410] sm:$0xff] %v1927
                %v1929 = vld [vmem:[%s1793 + $0x218] sm:$0xff]
                %1930 = vst [vmem:[%s1794 + $0x418] sm:$0xff] %v1929
                %v1931 = vld [vmem:[%s1793 + $0x220] sm:$0xff]
                %1932 = vst [vmem:[%s1794 + $0x440] sm:$0xff] %v1931
                %v1933 = vld [vmem:[%s1793 + $0x228] sm:$0xff]
                %1934 = vst [vmem:[%s1794 + $0x448] sm:$0xff] %v1933
                %v1935 = vld [vmem:[%s1793 + $0x230] sm:$0xff]
                %1936 = vst [vmem:[%s1794 + $0x450] sm:$0xff] %v1935
                %v1937 = vld [vmem:[%s1793 + $0x238] sm:$0xff]
                %1938 = vst [vmem:[%s1794 + $0x458] sm:$0xff] %v1937
                %v1939 = vld [vmem:[%s1793 + $0x240] sm:$0xff]
                %1940 = vst [vmem:[%s1794 + $0x480] sm:$0xff] %v1939
                %v1941 = vld [vmem:[%s1793 + $0x248] sm:$0xff]
                %1942 = vst [vmem:[%s1794 + $0x488] sm:$0xff] %v1941
                %v1943 = vld [vmem:[%s1793 + $0x250] sm:$0xff]
                %1944 = vst [vmem:[%s1794 + $0x490] sm:$0xff] %v1943
                %v1945 = vld [vmem:[%s1793 + $0x258] sm:$0xff]
                %1946 = vst [vmem:[%s1794 + $0x498] sm:$0xff] %v1945
                %v1947 = vld [vmem:[%s1793 + $0x260] sm:$0xff]
                %1948 = vst [vmem:[%s1794 + $0x4c0] sm:$0xff] %v1947
                %v1949 = vld [vmem:[%s1793 + $0x268] sm:$0xff]
                %1950 = vst [vmem:[%s1794 + $0x4c8] sm:$0xff] %v1949
                %v1951 = vld [vmem:[%s1793 + $0x270] sm:$0xff]
                %1952 = vst [vmem:[%s1794 + $0x4d0] sm:$0xff] %v1951
                %v1953 = vld [vmem:[%s1793 + $0x278] sm:$0xff]
                %1954 = vst [vmem:[%s1794 + $0x4d8] sm:$0xff] %v1953
                %v1955 = vld [vmem:[%s1793 + $0x280] sm:$0xff]
                %1956 = vst [vmem:[%s1794 + $0x500] sm:$0xff] %v1955
                %v1957 = vld [vmem:[%s1793 + $0x288] sm:$0xff]
                %1958 = vst [vmem:[%s1794 + $0x508] sm:$0xff] %v1957
                %v1959 = vld [vmem:[%s1793 + $0x290] sm:$0xff]
                %1960 = vst [vmem:[%s1794 + $0x510] sm:$0xff] %v1959
                %v1961 = vld [vmem:[%s1793 + $0x298] sm:$0xff]
                %1962 = vst [vmem:[%s1794 + $0x518] sm:$0xff] %v1961
                %v1963 = vld [vmem:[%s1793 + $0x2a0] sm:$0xff]
                %1964 = vst [vmem:[%s1794 + $0x540] sm:$0xff] %v1963
                %v1965 = vld [vmem:[%s1793 + $0x2a8] sm:$0xff]
                %1966 = vst [vmem:[%s1794 + $0x548] sm:$0xff] %v1965
                %v1967 = vld [vmem:[%s1793 + $0x2b0] sm:$0xff]
                %1968 = vst [vmem:[%s1794 + $0x550] sm:$0xff] %v1967
                %v1969 = vld [vmem:[%s1793 + $0x2b8] sm:$0xff]
                %1970 = vst [vmem:[%s1794 + $0x558] sm:$0xff] %v1969
                %v1971 = vld [vmem:[%s1793 + $0x2c0] sm:$0xff]
                %1972 = vst [vmem:[%s1794 + $0x580] sm:$0xff] %v1971
                %v1973 = vld [vmem:[%s1793 + $0x2c8] sm:$0xff]
                %1974 = vst [vmem:[%s1794 + $0x588] sm:$0xff] %v1973
                %v1975 = vld [vmem:[%s1793 + $0x2d0] sm:$0xff]
                %1976 = vst [vmem:[%s1794 + $0x590] sm:$0xff] %v1975
                %v1977 = vld [vmem:[%s1793 + $0x2d8] sm:$0xff]
                %1978 = vst [vmem:[%s1794 + $0x598] sm:$0xff] %v1977
                %v1979 = vld [vmem:[%s1793 + $0x2e0] sm:$0xff]
                %1980 = vst [vmem:[%s1794 + $0x5c0] sm:$0xff] %v1979
                %v1981 = vld [vmem:[%s1793 + $0x2e8] sm:$0xff]
                %1982 = vst [vmem:[%s1794 + $0x5c8] sm:$0xff] %v1981
                %v1983 = vld [vmem:[%s1793 + $0x2f0] sm:$0xff]
                %1984 = vst [vmem:[%s1794 + $0x5d0] sm:$0xff] %v1983
                %v1985 = vld [vmem:[%s1793 + $0x2f8] sm:$0xff]
                %1986 = vst [vmem:[%s1794 + $0x5d8] sm:$0xff] %v1985
                %v1987 = vld [vmem:[%s1793 + $0x300] sm:$0xff]
                %1988 = vst [vmem:[%s1794 + $0x600] sm:$0xff] %v1987
                %v1989 = vld [vmem:[%s1793 + $0x308] sm:$0xff]
                %1990 = vst [vmem:[%s1794 + $0x608] sm:$0xff] %v1989
                %v1991 = vld [vmem:[%s1793 + $0x310] sm:$0xff]
                %1992 = vst [vmem:[%s1794 + $0x610] sm:$0xff] %v1991
                %v1993 = vld [vmem:[%s1793 + $0x318] sm:$0xff]
                %1994 = vst [vmem:[%s1794 + $0x618] sm:$0xff] %v1993
                %v1995 = vld [vmem:[%s1793 + $0x320] sm:$0xff]
                %1996 = vst [vmem:[%s1794 + $0x640] sm:$0xff] %v1995
                %v1997 = vld [vmem:[%s1793 + $0x328] sm:$0xff]
                %1998 = vst [vmem:[%s1794 + $0x648] sm:$0xff] %v1997
                %v1999 = vld [vmem:[%s1793 + $0x330] sm:$0xff]
                %2000 = vst [vmem:[%s1794 + $0x650] sm:$0xff] %v1999
                %v2001 = vld [vmem:[%s1793 + $0x338] sm:$0xff]
                %2002 = vst [vmem:[%s1794 + $0x658] sm:$0xff] %v2001
                %v2003 = vld [vmem:[%s1793 + $0x340] sm:$0xff]
                %2004 = vst [vmem:[%s1794 + $0x680] sm:$0xff] %v2003
                %v2005 = vld [vmem:[%s1793 + $0x348] sm:$0xff]
                %2006 = vst [vmem:[%s1794 + $0x688] sm:$0xff] %v2005
                %v2007 = vld [vmem:[%s1793 + $0x350] sm:$0xff]
                %2008 = vst [vmem:[%s1794 + $0x690] sm:$0xff] %v2007
                %v2009 = vld [vmem:[%s1793 + $0x358] sm:$0xff]
                %2010 = vst [vmem:[%s1794 + $0x698] sm:$0xff] %v2009
                %v2011 = vld [vmem:[%s1793 + $0x360] sm:$0xff]
                %2012 = vst [vmem:[%s1794 + $0x6c0] sm:$0xff] %v2011
                %v2013 = vld [vmem:[%s1793 + $0x368] sm:$0xff]
                %2014 = vst [vmem:[%s1794 + $0x6c8] sm:$0xff] %v2013
                %v2015 = vld [vmem:[%s1793 + $0x370] sm:$0xff]
                %2016 = vst [vmem:[%s1794 + $0x6d0] sm:$0xff] %v2015
                %v2017 = vld [vmem:[%s1793 + $0x378] sm:$0xff]
                %2018 = vst [vmem:[%s1794 + $0x6d8] sm:$0xff] %v2017
                %v2019 = vld [vmem:[%s1793 + $0x380] sm:$0xff]
                %2020 = vst [vmem:[%s1794 + $0x700] sm:$0xff] %v2019
                %v2021 = vld [vmem:[%s1793 + $0x388] sm:$0xff]
                %2022 = vst [vmem:[%s1794 + $0x708] sm:$0xff] %v2021
                %v2023 = vld [vmem:[%s1793 + $0x390] sm:$0xff]
                %2024 = vst [vmem:[%s1794 + $0x710] sm:$0xff] %v2023
                %v2025 = vld [vmem:[%s1793 + $0x398] sm:$0xff]
                %2026 = vst [vmem:[%s1794 + $0x718] sm:$0xff] %v2025
                %v2027 = vld [vmem:[%s1793 + $0x3a0] sm:$0xff]
                %2028 = vst [vmem:[%s1794 + $0x740] sm:$0xff] %v2027
                %v2029 = vld [vmem:[%s1793 + $0x3a8] sm:$0xff]
                %2030 = vst [vmem:[%s1794 + $0x748] sm:$0xff] %v2029
                %v2031 = vld [vmem:[%s1793 + $0x3b0] sm:$0xff]
                %2032 = vst [vmem:[%s1794 + $0x750] sm:$0xff] %v2031
                %v2033 = vld [vmem:[%s1793 + $0x3b8] sm:$0xff]
                %2034 = vst [vmem:[%s1794 + $0x758] sm:$0xff] %v2033
                %v2035 = vld [vmem:[%s1793 + $0x3c0] sm:$0xff]
                %2036 = vst [vmem:[%s1794 + $0x780] sm:$0xff] %v2035
                %v2037 = vld [vmem:[%s1793 + $0x3c8] sm:$0xff]
                %2038 = vst [vmem:[%s1794 + $0x788] sm:$0xff] %v2037
                %v2039 = vld [vmem:[%s1793 + $0x3d0] sm:$0xff]
                %2040 = vst [vmem:[%s1794 + $0x790] sm:$0xff] %v2039
                %v2041 = vld [vmem:[%s1793 + $0x3d8] sm:$0xff]
                %2042 = vst [vmem:[%s1794 + $0x798] sm:$0xff] %v2041
                %v2043 = vld [vmem:[%s1793 + $0x3e0] sm:$0xff]
                %2044 = vst [vmem:[%s1794 + $0x7c0] sm:$0xff] %v2043
                %v2045 = vld [vmem:[%s1793 + $0x3e8] sm:$0xff]
                %2046 = vst [vmem:[%s1794 + $0x7c8] sm:$0xff] %v2045
                %v2047 = vld [vmem:[%s1793 + $0x3f0] sm:$0xff]
                %2048 = vst [vmem:[%s1794 + $0x7d0] sm:$0xff] %v2047
                %v2049 = vld [vmem:[%s1793 + $0x3f8] sm:$0xff]
                %2050 = vst [vmem:[%s1794 + $0x7d8] sm:$0xff] %v2049
                %v2051 = vld [vmem:[%s1793 + $0x400] sm:$0xff]
                %2052 = vst [vmem:[%s1794 + $0x800] sm:$0xff] %v2051
                %v2053 = vld [vmem:[%s1793 + $0x408] sm:$0xff]
                %2054 = vst [vmem:[%s1794 + $0x808] sm:$0xff] %v2053
                %v2055 = vld [vmem:[%s1793 + $0x410] sm:$0xff]
                %2056 = vst [vmem:[%s1794 + $0x810] sm:$0xff] %v2055
                %v2057 = vld [vmem:[%s1793 + $0x418] sm:$0xff]
                %2058 = vst [vmem:[%s1794 + $0x818] sm:$0xff] %v2057
                %v2059 = vld [vmem:[%s1793 + $0x420] sm:$0xff]
                %2060 = vst [vmem:[%s1794 + $0x840] sm:$0xff] %v2059
                %v2061 = vld [vmem:[%s1793 + $0x428] sm:$0xff]
                %2062 = vst [vmem:[%s1794 + $0x848] sm:$0xff] %v2061
                %v2063 = vld [vmem:[%s1793 + $0x430] sm:$0xff]
                %2064 = vst [vmem:[%s1794 + $0x850] sm:$0xff] %v2063
                %v2065 = vld [vmem:[%s1793 + $0x438] sm:$0xff]
                %2066 = vst [vmem:[%s1794 + $0x858] sm:$0xff] %v2065
                %v2067 = vld [vmem:[%s1793 + $0x440] sm:$0xff]
                %2068 = vst [vmem:[%s1794 + $0x880] sm:$0xff] %v2067
                %v2069 = vld [vmem:[%s1793 + $0x448] sm:$0xff]
                %2070 = vst [vmem:[%s1794 + $0x888] sm:$0xff] %v2069
                %v2071 = vld [vmem:[%s1793 + $0x450] sm:$0xff]
                %2072 = vst [vmem:[%s1794 + $0x890] sm:$0xff] %v2071
                %v2073 = vld [vmem:[%s1793 + $0x458] sm:$0xff]
                %2074 = vst [vmem:[%s1794 + $0x898] sm:$0xff] %v2073
                %v2075 = vld [vmem:[%s1793 + $0x460] sm:$0xff]
                %2076 = vst [vmem:[%s1794 + $0x8c0] sm:$0xff] %v2075
                %v2077 = vld [vmem:[%s1793 + $0x468] sm:$0xff]
                %2078 = vst [vmem:[%s1794 + $0x8c8] sm:$0xff] %v2077
                %v2079 = vld [vmem:[%s1793 + $0x470] sm:$0xff]
                %2080 = vst [vmem:[%s1794 + $0x8d0] sm:$0xff] %v2079
                %v2081 = vld [vmem:[%s1793 + $0x478] sm:$0xff]
                %2082 = vst [vmem:[%s1794 + $0x8d8] sm:$0xff] %v2081
                %v2083 = vld [vmem:[%s1793 + $0x480] sm:$0xff]
                %2084 = vst [vmem:[%s1794 + $0x900] sm:$0xff] %v2083
                %v2085 = vld [vmem:[%s1793 + $0x488] sm:$0xff]
                %2086 = vst [vmem:[%s1794 + $0x908] sm:$0xff] %v2085
                %v2087 = vld [vmem:[%s1793 + $0x490] sm:$0xff]
                %2088 = vst [vmem:[%s1794 + $0x910] sm:$0xff] %v2087
                %v2089 = vld [vmem:[%s1793 + $0x498] sm:$0xff]
                %2090 = vst [vmem:[%s1794 + $0x918] sm:$0xff] %v2089
                %v2091 = vld [vmem:[%s1793 + $0x4a0] sm:$0xff]
                %2092 = vst [vmem:[%s1794 + $0x940] sm:$0xff] %v2091
                %v2093 = vld [vmem:[%s1793 + $0x4a8] sm:$0xff]
                %2094 = vst [vmem:[%s1794 + $0x948] sm:$0xff] %v2093
                %v2095 = vld [vmem:[%s1793 + $0x4b0] sm:$0xff]
                %2096 = vst [vmem:[%s1794 + $0x950] sm:$0xff] %v2095
                %v2097 = vld [vmem:[%s1793 + $0x4b8] sm:$0xff]
                %2098 = vst [vmem:[%s1794 + $0x958] sm:$0xff] %v2097
                %v2099 = vld [vmem:[%s1793 + $0x4c0] sm:$0xff]
                %2100 = vst [vmem:[%s1794 + $0x980] sm:$0xff] %v2099
                %v2101 = vld [vmem:[%s1793 + $0x4c8] sm:$0xff]
                %2102 = vst [vmem:[%s1794 + $0x988] sm:$0xff] %v2101
                %v2103 = vld [vmem:[%s1793 + $0x4d0] sm:$0xff]
                %2104 = vst [vmem:[%s1794 + $0x990] sm:$0xff] %v2103
                %v2105 = vld [vmem:[%s1793 + $0x4d8] sm:$0xff]
                %2106 = vst [vmem:[%s1794 + $0x998] sm:$0xff] %v2105
                %v2107 = vld [vmem:[%s1793 + $0x4e0] sm:$0xff]
                %2108 = vst [vmem:[%s1794 + $0x9c0] sm:$0xff] %v2107
                %v2109 = vld [vmem:[%s1793 + $0x4e8] sm:$0xff]
                %2110 = vst [vmem:[%s1794 + $0x9c8] sm:$0xff] %v2109
                %v2111 = vld [vmem:[%s1793 + $0x4f0] sm:$0xff]
                %2112 = vst [vmem:[%s1794 + $0x9d0] sm:$0xff] %v2111
                %v2113 = vld [vmem:[%s1793 + $0x4f8] sm:$0xff]
                %2114 = vst [vmem:[%s1794 + $0x9d8] sm:$0xff] %v2113
                %v2115 = vld [vmem:[%s1793 + $0x500] sm:$0xff]
                %2116 = vst [vmem:[%s1794 + $0xa00] sm:$0xff] %v2115
                %v2117 = vld [vmem:[%s1793 + $0x508] sm:$0xff]
                %2118 = vst [vmem:[%s1794 + $0xa08] sm:$0xff] %v2117
                %v2119 = vld [vmem:[%s1793 + $0x510] sm:$0xff]
                %2120 = vst [vmem:[%s1794 + $0xa10] sm:$0xff] %v2119
                %v2121 = vld [vmem:[%s1793 + $0x518] sm:$0xff]
                %2122 = vst [vmem:[%s1794 + $0xa18] sm:$0xff] %v2121
                %v2123 = vld [vmem:[%s1793 + $0x520] sm:$0xff]
                %2124 = vst [vmem:[%s1794 + $0xa40] sm:$0xff] %v2123
                %v2125 = vld [vmem:[%s1793 + $0x528] sm:$0xff]
                %2126 = vst [vmem:[%s1794 + $0xa48] sm:$0xff] %v2125
                %v2127 = vld [vmem:[%s1793 + $0x530] sm:$0xff]
                %2128 = vst [vmem:[%s1794 + $0xa50] sm:$0xff] %v2127
                %v2129 = vld [vmem:[%s1793 + $0x538] sm:$0xff]
                %2130 = vst [vmem:[%s1794 + $0xa58] sm:$0xff] %v2129
                %v2131 = vld [vmem:[%s1793 + $0x540] sm:$0xff]
                %2132 = vst [vmem:[%s1794 + $0xa80] sm:$0xff] %v2131
                %v2133 = vld [vmem:[%s1793 + $0x548] sm:$0xff]
                %2134 = vst [vmem:[%s1794 + $0xa88] sm:$0xff] %v2133
                %v2135 = vld [vmem:[%s1793 + $0x550] sm:$0xff]
                %2136 = vst [vmem:[%s1794 + $0xa90] sm:$0xff] %v2135
                %v2137 = vld [vmem:[%s1793 + $0x558] sm:$0xff]
                %2138 = vst [vmem:[%s1794 + $0xa98] sm:$0xff] %v2137
                %v2139 = vld [vmem:[%s1793 + $0x560] sm:$0xff]
                %2140 = vst [vmem:[%s1794 + $0xac0] sm:$0xff] %v2139
                %v2141 = vld [vmem:[%s1793 + $0x568] sm:$0xff]
                %2142 = vst [vmem:[%s1794 + $0xac8] sm:$0xff] %v2141
                %v2143 = vld [vmem:[%s1793 + $0x570] sm:$0xff]
                %2144 = vst [vmem:[%s1794 + $0xad0] sm:$0xff] %v2143
                %v2145 = vld [vmem:[%s1793 + $0x578] sm:$0xff]
                %2146 = vst [vmem:[%s1794 + $0xad8] sm:$0xff] %v2145
                %v2147 = vld [vmem:[%s1793 + $0x580] sm:$0xff]
                %2148 = vst [vmem:[%s1794 + $0xb00] sm:$0xff] %v2147
                %v2149 = vld [vmem:[%s1793 + $0x588] sm:$0xff]
                %2150 = vst [vmem:[%s1794 + $0xb08] sm:$0xff] %v2149
                %v2151 = vld [vmem:[%s1793 + $0x590] sm:$0xff]
                %2152 = vst [vmem:[%s1794 + $0xb10] sm:$0xff] %v2151
                %v2153 = vld [vmem:[%s1793 + $0x598] sm:$0xff]
                %2154 = vst [vmem:[%s1794 + $0xb18] sm:$0xff] %v2153
                %v2155 = vld [vmem:[%s1793 + $0x5a0] sm:$0xff]
                %2156 = vst [vmem:[%s1794 + $0xb40] sm:$0xff] %v2155
                %v2157 = vld [vmem:[%s1793 + $0x5a8] sm:$0xff]
                %2158 = vst [vmem:[%s1794 + $0xb48] sm:$0xff] %v2157
                %v2159 = vld [vmem:[%s1793 + $0x5b0] sm:$0xff]
                %2160 = vst [vmem:[%s1794 + $0xb50] sm:$0xff] %v2159
                %v2161 = vld [vmem:[%s1793 + $0x5b8] sm:$0xff]
                %2162 = vst [vmem:[%s1794 + $0xb58] sm:$0xff] %v2161
                %v2163 = vld [vmem:[%s1793 + $0x5c0] sm:$0xff]
                %2164 = vst [vmem:[%s1794 + $0xb80] sm:$0xff] %v2163
                %v2165 = vld [vmem:[%s1793 + $0x5c8] sm:$0xff]
                %2166 = vst [vmem:[%s1794 + $0xb88] sm:$0xff] %v2165
                %v2167 = vld [vmem:[%s1793 + $0x5d0] sm:$0xff]
                %2168 = vst [vmem:[%s1794 + $0xb90] sm:$0xff] %v2167
                %v2169 = vld [vmem:[%s1793 + $0x5d8] sm:$0xff]
                %2170 = vst [vmem:[%s1794 + $0xb98] sm:$0xff] %v2169
                %v2171 = vld [vmem:[%s1793 + $0x5e0] sm:$0xff]
                %2172 = vst [vmem:[%s1794 + $0xbc0] sm:$0xff] %v2171
                %v2173 = vld [vmem:[%s1793 + $0x5e8] sm:$0xff]
                %2174 = vst [vmem:[%s1794 + $0xbc8] sm:$0xff] %v2173
                %v2175 = vld [vmem:[%s1793 + $0x5f0] sm:$0xff]
                %2176 = vst [vmem:[%s1794 + $0xbd0] sm:$0xff] %v2175
                %v2177 = vld [vmem:[%s1793 + $0x5f8] sm:$0xff]
                %2178 = vst [vmem:[%s1794 + $0xbd8] sm:$0xff] %v2177
                %v2179 = vld [vmem:[%s1793 + $0x600] sm:$0xff]
                %2180 = vst [vmem:[%s1794 + $0xc00] sm:$0xff] %v2179
                %v2181 = vld [vmem:[%s1793 + $0x608] sm:$0xff]
                %2182 = vst [vmem:[%s1794 + $0xc08] sm:$0xff] %v2181
                %v2183 = vld [vmem:[%s1793 + $0x610] sm:$0xff]
                %2184 = vst [vmem:[%s1794 + $0xc10] sm:$0xff] %v2183
                %v2185 = vld [vmem:[%s1793 + $0x618] sm:$0xff]
                %2186 = vst [vmem:[%s1794 + $0xc18] sm:$0xff] %v2185
                %v2187 = vld [vmem:[%s1793 + $0x620] sm:$0xff]
                %2188 = vst [vmem:[%s1794 + $0xc40] sm:$0xff] %v2187
                %v2189 = vld [vmem:[%s1793 + $0x628] sm:$0xff]
                %2190 = vst [vmem:[%s1794 + $0xc48] sm:$0xff] %v2189
                %v2191 = vld [vmem:[%s1793 + $0x630] sm:$0xff]
                %2192 = vst [vmem:[%s1794 + $0xc50] sm:$0xff] %v2191
                %v2193 = vld [vmem:[%s1793 + $0x638] sm:$0xff]
                %2194 = vst [vmem:[%s1794 + $0xc58] sm:$0xff] %v2193
                %v2195 = vld [vmem:[%s1793 + $0x640] sm:$0xff]
                %2196 = vst [vmem:[%s1794 + $0xc80] sm:$0xff] %v2195
                %v2197 = vld [vmem:[%s1793 + $0x648] sm:$0xff]
                %2198 = vst [vmem:[%s1794 + $0xc88] sm:$0xff] %v2197
                %v2199 = vld [vmem:[%s1793 + $0x650] sm:$0xff]
                %2200 = vst [vmem:[%s1794 + $0xc90] sm:$0xff] %v2199
                %v2201 = vld [vmem:[%s1793 + $0x658] sm:$0xff]
                %2202 = vst [vmem:[%s1794 + $0xc98] sm:$0xff] %v2201
                %v2203 = vld [vmem:[%s1793 + $0x660] sm:$0xff]
                %2204 = vst [vmem:[%s1794 + $0xcc0] sm:$0xff] %v2203
                %v2205 = vld [vmem:[%s1793 + $0x668] sm:$0xff]
                %2206 = vst [vmem:[%s1794 + $0xcc8] sm:$0xff] %v2205
                %v2207 = vld [vmem:[%s1793 + $0x670] sm:$0xff]
                %2208 = vst [vmem:[%s1794 + $0xcd0] sm:$0xff] %v2207
                %v2209 = vld [vmem:[%s1793 + $0x678] sm:$0xff]
                %2210 = vst [vmem:[%s1794 + $0xcd8] sm:$0xff] %v2209
                %v2211 = vld [vmem:[%s1793 + $0x680] sm:$0xff]
                %2212 = vst [vmem:[%s1794 + $0xd00] sm:$0xff] %v2211
                %v2213 = vld [vmem:[%s1793 + $0x688] sm:$0xff]
                %2214 = vst [vmem:[%s1794 + $0xd08] sm:$0xff] %v2213
                %v2215 = vld [vmem:[%s1793 + $0x690] sm:$0xff]
                %2216 = vst [vmem:[%s1794 + $0xd10] sm:$0xff] %v2215
                %v2217 = vld [vmem:[%s1793 + $0x698] sm:$0xff]
                %2218 = vst [vmem:[%s1794 + $0xd18] sm:$0xff] %v2217
                %v2219 = vld [vmem:[%s1793 + $0x6a0] sm:$0xff]
                %2220 = vst [vmem:[%s1794 + $0xd40] sm:$0xff] %v2219
                %v2221 = vld [vmem:[%s1793 + $0x6a8] sm:$0xff]
                %2222 = vst [vmem:[%s1794 + $0xd48] sm:$0xff] %v2221
                %v2223 = vld [vmem:[%s1793 + $0x6b0] sm:$0xff]
                %2224 = vst [vmem:[%s1794 + $0xd50] sm:$0xff] %v2223
                %v2225 = vld [vmem:[%s1793 + $0x6b8] sm:$0xff]
                %2226 = vst [vmem:[%s1794 + $0xd58] sm:$0xff] %v2225
                %v2227 = vld [vmem:[%s1793 + $0x6c0] sm:$0xff]
                %2228 = vst [vmem:[%s1794 + $0xd80] sm:$0xff] %v2227
                %v2229 = vld [vmem:[%s1793 + $0x6c8] sm:$0xff]
                %2230 = vst [vmem:[%s1794 + $0xd88] sm:$0xff] %v2229
                %v2231 = vld [vmem:[%s1793 + $0x6d0] sm:$0xff]
                %2232 = vst [vmem:[%s1794 + $0xd90] sm:$0xff] %v2231
                %v2233 = vld [vmem:[%s1793 + $0x6d8] sm:$0xff]
                %2234 = vst [vmem:[%s1794 + $0xd98] sm:$0xff] %v2233
                %v2235 = vld [vmem:[%s1793 + $0x6e0] sm:$0xff]
                %2236 = vst [vmem:[%s1794 + $0xdc0] sm:$0xff] %v2235
                %v2237 = vld [vmem:[%s1793 + $0x6e8] sm:$0xff]
                %2238 = vst [vmem:[%s1794 + $0xdc8] sm:$0xff] %v2237
                %v2239 = vld [vmem:[%s1793 + $0x6f0] sm:$0xff]
                %2240 = vst [vmem:[%s1794 + $0xdd0] sm:$0xff] %v2239
                %v2241 = vld [vmem:[%s1793 + $0x6f8] sm:$0xff]
                %2242 = vst [vmem:[%s1794 + $0xdd8] sm:$0xff] %v2241
                %v2243 = vld [vmem:[%s1793 + $0x700] sm:$0xff]
                %2244 = vst [vmem:[%s1794 + $0xe00] sm:$0xff] %v2243
                %v2245 = vld [vmem:[%s1793 + $0x708] sm:$0xff]
                %2246 = vst [vmem:[%s1794 + $0xe08] sm:$0xff] %v2245
                %v2247 = vld [vmem:[%s1793 + $0x710] sm:$0xff]
                %2248 = vst [vmem:[%s1794 + $0xe10] sm:$0xff] %v2247
                %v2249 = vld [vmem:[%s1793 + $0x718] sm:$0xff]
                %2250 = vst [vmem:[%s1794 + $0xe18] sm:$0xff] %v2249
                %v2251 = vld [vmem:[%s1793 + $0x720] sm:$0xff]
                %2252 = vst [vmem:[%s1794 + $0xe40] sm:$0xff] %v2251
                %v2253 = vld [vmem:[%s1793 + $0x728] sm:$0xff]
                %2254 = vst [vmem:[%s1794 + $0xe48] sm:$0xff] %v2253
                %v2255 = vld [vmem:[%s1793 + $0x730] sm:$0xff]
                %2256 = vst [vmem:[%s1794 + $0xe50] sm:$0xff] %v2255
                %v2257 = vld [vmem:[%s1793 + $0x738] sm:$0xff]
                %2258 = vst [vmem:[%s1794 + $0xe58] sm:$0xff] %v2257
                %v2259 = vld [vmem:[%s1793 + $0x740] sm:$0xff]
                %2260 = vst [vmem:[%s1794 + $0xe80] sm:$0xff] %v2259
                %v2261 = vld [vmem:[%s1793 + $0x748] sm:$0xff]
                %2262 = vst [vmem:[%s1794 + $0xe88] sm:$0xff] %v2261
                %v2263 = vld [vmem:[%s1793 + $0x750] sm:$0xff]
                %2264 = vst [vmem:[%s1794 + $0xe90] sm:$0xff] %v2263
                %v2265 = vld [vmem:[%s1793 + $0x758] sm:$0xff]
                %2266 = vst [vmem:[%s1794 + $0xe98] sm:$0xff] %v2265
                %v2267 = vld [vmem:[%s1793 + $0x760] sm:$0xff]
                %2268 = vst [vmem:[%s1794 + $0xec0] sm:$0xff] %v2267
                %v2269 = vld [vmem:[%s1793 + $0x768] sm:$0xff]
                %2270 = vst [vmem:[%s1794 + $0xec8] sm:$0xff] %v2269
                %v2271 = vld [vmem:[%s1793 + $0x770] sm:$0xff]
                %2272 = vst [vmem:[%s1794 + $0xed0] sm:$0xff] %v2271
                %v2273 = vld [vmem:[%s1793 + $0x778] sm:$0xff]
                %2274 = vst [vmem:[%s1794 + $0xed8] sm:$0xff] %v2273
                %v2275 = vld [vmem:[%s1793 + $0x780] sm:$0xff]
                %2276 = vst [vmem:[%s1794 + $0xf00] sm:$0xff] %v2275
                %v2277 = vld [vmem:[%s1793 + $0x788] sm:$0xff]
                %2278 = vst [vmem:[%s1794 + $0xf08] sm:$0xff] %v2277
                %v2279 = vld [vmem:[%s1793 + $0x790] sm:$0xff]
                %2280 = vst [vmem:[%s1794 + $0xf10] sm:$0xff] %v2279
                %v2281 = vld [vmem:[%s1793 + $0x798] sm:$0xff]
                %2282 = vst [vmem:[%s1794 + $0xf18] sm:$0xff] %v2281
                %v2283 = vld [vmem:[%s1793 + $0x7a0] sm:$0xff]
                %2284 = vst [vmem:[%s1794 + $0xf40] sm:$0xff] %v2283
                %v2285 = vld [vmem:[%s1793 + $0x7a8] sm:$0xff]
                %2286 = vst [vmem:[%s1794 + $0xf48] sm:$0xff] %v2285
                %v2287 = vld [vmem:[%s1793 + $0x7b0] sm:$0xff]
                %2288 = vst [vmem:[%s1794 + $0xf50] sm:$0xff] %v2287
                %v2289 = vld [vmem:[%s1793 + $0x7b8] sm:$0xff]
                %2290 = vst [vmem:[%s1794 + $0xf58] sm:$0xff] %v2289
                %v2291 = vld [vmem:[%s1793 + $0x7c0] sm:$0xff]
                %2292 = vst [vmem:[%s1794 + $0xf80] sm:$0xff] %v2291
                %v2293 = vld [vmem:[%s1793 + $0x7c8] sm:$0xff]
                %2294 = vst [vmem:[%s1794 + $0xf88] sm:$0xff] %v2293
                %v2295 = vld [vmem:[%s1793 + $0x7d0] sm:$0xff]
                %2296 = vst [vmem:[%s1794 + $0xf90] sm:$0xff] %v2295
                %v2297 = vld [vmem:[%s1793 + $0x7d8] sm:$0xff]
                %2298 = vst [vmem:[%s1794 + $0xf98] sm:$0xff] %v2297
                %v2299 = vld [vmem:[%s1793 + $0x7e0] sm:$0xff]
                %2300 = vst [vmem:[%s1794 + $0xfc0] sm:$0xff] %v2299
                %v2301 = vld [vmem:[%s1793 + $0x7e8] sm:$0xff]
                %2302 = vst [vmem:[%s1794 + $0xfc8] sm:$0xff] %v2301
                %v2303 = vld [vmem:[%s1793 + $0x7f0] sm:$0xff]
                %2304 = vst [vmem:[%s1794 + $0xfd0] sm:$0xff] %v2303
                %v2305 = vld [vmem:[%s1793 + $0x7f8] sm:$0xff]
                %2306 = vst [vmem:[%s1794 + $0xfd8] sm:$0xff] %v2305
              $region76: #{generator_forward.16} parent=70 // loop_footer
                %s1792 = sadd.s32 1, %s1788
              $region77: #{generator_forward.16} parent=70 // loop_footer_branch
                %1787 = sbr.rel target = $region73
              $region78: #{generator_forward.16} parent=70 // loop_exit
                _
            $region71: #{generator_forward.16} parent=66 // pred_fallthru
              _
            // Predicated region
            $region79: #{generator_forward.16} parent=66 // pred_check
              _
            $region80: #{generator_forward.16} parent=66 // pred_check_branch
              %2308 = sbr.rel target = $region82
            $region81: #{generator_forward.16} parent=66 // pred_region
              _
            $region82: #{generator_forward.16} parent=66 // pred_fallthru
              _
          $region67: #{generator_forward.16} parent=62 // pred_fallthru
            _
          %2309 = vnop
        $region63: #{generator_forward.16} parent=54 // pred_fallthru
          _
      $region55: #{generator_forward.16} parent=5 // pred_fallthru
        _
      %p2310 = scmp.le.s32.totalorder 2, %s10
      // Predicated region
      $region83: #{generator_forward.16} parent=5 // pred_check
        %p2311 = pneg %p2310
      $region84: #{generator_forward.16} parent=5 // pred_check_branch
        %2313 = sbr.rel (%p2311) target = $region86
      $region85: #{generator_forward.16} parent=5 // pred_region
        %s2314 = ssub.s32 %s10, 2
        // Predicated region
        $region87: #{generator_forward.16} parent=85 // pred_check
          %p2315 = pneg %p147
        $region88: #{generator_forward.16} parent=85 // pred_check_branch
          %2317 = sbr.rel (%p2315) target = $region90
        $region89: #{generator_forward.16} parent=85 // pred_region
          %s2318 = sand.u32 %s132, 1
          %s2319 = sand.u32 %s132, 1
          %s2320 = smul.addr %s2319, 2048
          %s2321 = scalar_lea.vmem [#allocation3], %s2320
        $region90: #{generator_forward.16} parent=85 // pred_fallthru
          _
      $region86: #{generator_forward.16} parent=5 // pred_fallthru
        _
    $region6: #{generator_forward.16} parent=1 // loop_footer
      %s14 = sadd.s32 1, %s10
    $region7: #{generator_forward.16} parent=1 // loop_footer_branch
      %9 = sbr.rel target = $region3
    $region8: #{generator_forward.16} parent=1 // loop_exit
      _

// kernel: generator_forward.17
$region0: #{generator_forward.17}
  #allocation0 [shape = 'u32[]', space=smem, size = 0x4, offset = 0x4, fixed_abs, tag = 'smem constant byte address 0x4 - core index']
  #allocation1 [shape = 'u32[144,128]{1,0:T(1,128)}', space=vmem, size = 0x12000, scoped, tag = 'internal scratch']
  %s0 = inlined_call_operand.vmem [shape: f32[2048,64], index: 0, kind: input, shape index: {}]
  %s1 = inlined_call_operand.vmem [shape: f32[1,64], index: 1, kind: output, shape index: {0}]
  %s2 = inlined_call_operand.vmem [shape: f32[1,64], index: 2, kind: output, shape index: {1}]
  %3 = xla_tuple %s1, %s2
  %s4 = sld [smem:[#allocation0]]
  $region49: #{generator_forward.17} parent=0
    _
  %s6 = ssub.s32 1, %s4
  %s7 = scalar_select 0, %s6, %s4
  loop: start=0, step=1, limit=4
  $region2: #{generator_forward.17} parent=0 // loop_pre_header
    _
  $region3: #{generator_forward.17} parent=0 // loop_header
    %s9 = sphi 0, %s13
    %p10 = scmp.ge.s32.totalorder %s9, 4
    %s19 = sphi 0, %s21
    %s22 = sphi 0, %s19
    %s23 = sphi 0, %s22
    %s39 = sphi 0, %s23
    %s43 = sphi 0, %s43
    %s45 = sphi 0, %s43
    %s46 = sphi 0, %s45
    %s60 = sphi 0, %s46
    %s64 = sphi 0, %s64
    %s66 = sphi 0, %s64
    %s67 = sphi 0, %s66
    %s81 = sphi 0, %s67
  $region4: #{generator_forward.17} parent=0 // loop_header_branch
    %12 = sbr.rel (%p10) target = $region8
  $region5: #{generator_forward.17} parent=0 // loop_body
    %s14 = ssub.s32 %s9, 1
    %s15 = ssub.s32 %s9, 2
    %s16 = sadd.s32 %s9, 1
    %s17 = ssub.s32 %s9, %s16
    %p18 = scmp.eq.s32.totalorder %s17, 0
    %s20 = sadd.s32 %s19, 1
    %s21 = scalar_select %p18, %s19, %s20
    %p24 = pneg %p18
    %p25 = scmp.eq.s32.totalorder %s9, 1
    %p26 = por %p24, %p25
    %p27 = scmp.ne.s32.totalorder %s19, %s22
    %p28 = scmp.eq.s32.totalorder %s9, 0
    %p29 = por %p27, %p28
    %p30 = scmp.ne.s32.totalorder %s19, %s22
    %p31 = scmp.eq.s32.totalorder %s14, 1
    %p32 = por %p30, %p31
    %p33 = scmp.ne.s32.totalorder %s22, %s23
    %p34 = scmp.eq.s32.totalorder %s14, 0
    %p35 = por %p33, %p34
    %p36 = scmp.ne.s32.totalorder %s22, %s23
    %p37 = scmp.eq.s32.totalorder %s15, 1
    %p38 = por %p36, %p37
    %p40 = scmp.ne.s32.totalorder %s23, %s39
    %p41 = scmp.eq.s32.totalorder %s15, 0
    %p42 = por %p40, %p41
    %s44 = sadd.s32 %s43, 1
    %p47 = scmp.eq.s32.totalorder %s9, 1
    %p48 = scmp.ne.s32.totalorder %s43, %s45
    %p49 = scmp.eq.s32.totalorder %s9, 0
    %p50 = por %p48, %p49
    %p51 = scmp.ne.s32.totalorder %s43, %s45
    %p52 = scmp.eq.s32.totalorder %s14, 1
    %p53 = por %p51, %p52
    %p54 = scmp.ne.s32.totalorder %s45, %s46
    %p55 = scmp.eq.s32.totalorder %s14, 0
    %p56 = por %p54, %p55
    %p57 = scmp.ne.s32.totalorder %s45, %s46
    %p58 = scmp.eq.s32.totalorder %s15, 1
    %p59 = por %p57, %p58
    %p61 = scmp.ne.s32.totalorder %s46, %s60
    %p62 = scmp.eq.s32.totalorder %s15, 0
    %p63 = por %p61, %p62
    %s65 = sadd.s32 %s64, 1
    %p68 = scmp.eq.s32.totalorder %s9, 1
    %p69 = scmp.ne.s32.totalorder %s64, %s66
    %p70 = scmp.eq.s32.totalorder %s9, 0
    %p71 = por %p69, %p70
    %p72 = scmp.ne.s32.totalorder %s64, %s66
    %p73 = scmp.eq.s32.totalorder %s14, 1
    %p74 = por %p72, %p73
    %p75 = scmp.ne.s32.totalorder %s66, %s67
    %p76 = scmp.eq.s32.totalorder %s14, 0
    %p77 = por %p75, %p76
    %p78 = scmp.ne.s32.totalorder %s66, %s67
    %p79 = scmp.eq.s32.totalorder %s15, 1
    %p80 = por %p78, %p79
    %p82 = scmp.ne.s32.totalorder %s67, %s81
    %p83 = scmp.eq.s32.totalorder %s15, 0
    %p84 = por %p82, %p83
    %p85 = scmp.le.s32.totalorder 1, %s9
    %p86 = scmp.lt.s32.totalorder %s9, 3
    %p87 = pnand %p85, %p86
    %p88 = pneg %p87
    // Predicated region
    $region9: #{generator_forward.17} parent=5 // pred_check
      _
    $region10: #{generator_forward.17} parent=5 // pred_check_branch
      %90 = sbr.rel (%p87) target = $region12
    $region11: #{generator_forward.17} parent=5 // pred_region
      %s91 = ssub.s32 %s9, 1
    $region12: #{generator_forward.17} parent=5 // pred_fallthru
      _
    %p92 = scmp.lt.s32.totalorder %s9, 2
    // Predicated region
    $region13: #{generator_forward.17} parent=5 // pred_check
      %p93 = pneg %p92
    $region14: #{generator_forward.17} parent=5 // pred_check_branch
      %95 = sbr.rel (%p93) target = $region16
    $region15: #{generator_forward.17} parent=5 // pred_region
      // Predicated region
      $region17: #{generator_forward.17} parent=15 // pred_check
        %p96 = pneg %p29
      $region18: #{generator_forward.17} parent=15 // pred_check_branch
        %98 = sbr.rel (%p96) target = $region20
      $region19: #{generator_forward.17} parent=15 // pred_region
        %s99 = smul.u32 128, %s9
        %p100 = scmp.lt.s32.totalorder %s99, 255
        %s101 = scalar_select %p100, %s99, 255
        %s102 = smul.addr %s101, 8
        %s103 = scalar_lea.vmem %s0, %s102
        %s104 = smul.u32 128, %s9
      $region20: #{generator_forward.17} parent=15 // pred_fallthru
        _
    $region16: #{generator_forward.17} parent=5 // pred_fallthru
      _
    %p105 = scmp.le.s32.totalorder 1, %s9
    %p106 = scmp.lt.s32.totalorder %s9, 3
    %p107 = pnand %p105, %p106
    %p108 = pneg %p107
    // Predicated region
    $region21: #{generator_forward.17} parent=5 // pred_check
      _
    $region22: #{generator_forward.17} parent=5 // pred_check_branch
      %110 = sbr.rel (%p107) target = $region24
    $region23: #{generator_forward.17} parent=5 // pred_region
      %s111 = ssub.s32 %s9, 1
      %s112 = smul.u32 128, %s14
      %p113 = scmp.lt.s32.totalorder %s112, 255
      %s114 = scalar_select %p113, %s112, 255
      %s115 = smul.addr %s114, 8
      %s116 = scalar_lea.vmem %s0, %s115
      %p117 = pneg %p35
      %p118 = pneg %p32
      %p119 = pneg %p56
      %p120 = pneg %p53
      %p121 = pneg %p77
      %p122 = pneg %p74
      %s123 = smul.u32 128, %s14
      %p124 = scmp.lt.s32.totalorder %s123, 255
      %s125 = scalar_select %p124, %s123, 255
      %s126 = smul.addr %s125, 8
      %s127 = scalar_lea.vmem %s0, %s126
      %s128 = smul.u32 128, %s14
      %p129 = scmp.eq.s32.totalorder %s14, 0
      // Predicated region
      $region25: #{generator_forward.17} parent=23 // pred_check
        %p130 = pneg %p129
      $region26: #{generator_forward.17} parent=23 // pred_check_branch
        %132 = sbr.rel (%p130) target = $region28
      $region27: #{generator_forward.17} parent=23 // pred_region
        %vm133 = vcmask 516096
        %134 = vst.msk [vmem:[%s1] sm:$0x1] %vm133, 0.0
        %135 = vst.msk [vmem:[%s2] sm:$0x1] %vm133, 0.0
      $region28: #{generator_forward.17} parent=23 // pred_fallthru
        _
      %v136 = vld [vmem:[%s127] sm:$0xff]
      %v137 = vld [vmem:[%s127 + $0x8] sm:$0xff]
      %v138 = vld [vmem:[%s127 + $0x10] sm:$0xff]
      %v139 = vld [vmem:[%s127 + $0x18] sm:$0xff]
      %v140 = vld [vmem:[%s127 + $0x20] sm:$0xff]
      %v141 = vld [vmem:[%s127 + $0x28] sm:$0xff]
      %v142 = vld [vmem:[%s127 + $0x30] sm:$0xff]
      %v143 = vld [vmem:[%s127 + $0x38] sm:$0xff]
      %v144 = vld [vmem:[%s127 + $0x40] sm:$0xff]
      %v145 = vld [vmem:[%s127 + $0x48] sm:$0xff]
      %v146 = vld [vmem:[%s127 + $0x50] sm:$0xff]
      %v147 = vld [vmem:[%s127 + $0x58] sm:$0xff]
      %v148 = vld [vmem:[%s127 + $0x60] sm:$0xff]
      %v149 = vld [vmem:[%s127 + $0x68] sm:$0xff]
      %v150 = vld [vmem:[%s127 + $0x70] sm:$0xff]
      %v151 = vld [vmem:[%s127 + $0x78] sm:$0xff]
      %v152 = vld [vmem:[%s127 + $0x80] sm:$0xff]
      %v153 = vld [vmem:[%s127 + $0x88] sm:$0xff]
      %v154 = vld [vmem:[%s127 + $0x90] sm:$0xff]
      %v155 = vld [vmem:[%s127 + $0x98] sm:$0xff]
      %v156 = vld [vmem:[%s127 + $0xa0] sm:$0xff]
      %v157 = vld [vmem:[%s127 + $0xa8] sm:$0xff]
      %v158 = vld [vmem:[%s127 + $0xb0] sm:$0xff]
      %v159 = vld [vmem:[%s127 + $0xb8] sm:$0xff]
      %v160 = vld [vmem:[%s127 + $0xc0] sm:$0xff]
      %v161 = vld [vmem:[%s127 + $0xc8] sm:$0xff]
      %v162 = vld [vmem:[%s127 + $0xd0] sm:$0xff]
      %v163 = vld [vmem:[%s127 + $0xd8] sm:$0xff]
      %v164 = vld [vmem:[%s127 + $0xe0] sm:$0xff]
      %v165 = vld [vmem:[%s127 + $0xe8] sm:$0xff]
      %v166 = vld [vmem:[%s127 + $0xf0] sm:$0xff]
      %v167 = vld [vmem:[%s127 + $0xf8] sm:$0xff]
      %v168 = vld [vmem:[%s127 + $0x100] sm:$0xff]
      %v169 = vld [vmem:[%s127 + $0x108] sm:$0xff]
      %v170 = vld [vmem:[%s127 + $0x110] sm:$0xff]
      %v171 = vld [vmem:[%s127 + $0x118] sm:$0xff]
      %v172 = vld [vmem:[%s127 + $0x120] sm:$0xff]
      %v173 = vld [vmem:[%s127 + $0x128] sm:$0xff]
      %v174 = vld [vmem:[%s127 + $0x130] sm:$0xff]
      %v175 = vld [vmem:[%s127 + $0x138] sm:$0xff]
      %v176 = vld [vmem:[%s127 + $0x140] sm:$0xff]
      %v177 = vld [vmem:[%s127 + $0x148] sm:$0xff]
      %v178 = vld [vmem:[%s127 + $0x150] sm:$0xff]
      %v179 = vld [vmem:[%s127 + $0x158] sm:$0xff]
      %v180 = vld [vmem:[%s127 + $0x160] sm:$0xff]
      %v181 = vld [vmem:[%s127 + $0x168] sm:$0xff]
      %v182 = vld [vmem:[%s127 + $0x170] sm:$0xff]
      %v183 = vld [vmem:[%s127 + $0x178] sm:$0xff]
      %v184 = vld [vmem:[%s127 + $0x180] sm:$0xff]
      %v185 = vld [vmem:[%s127 + $0x188] sm:$0xff]
      %v186 = vld [vmem:[%s127 + $0x190] sm:$0xff]
      %v187 = vld [vmem:[%s127 + $0x198] sm:$0xff]
      %v188 = vld [vmem:[%s127 + $0x1a0] sm:$0xff]
      %v189 = vld [vmem:[%s127 + $0x1a8] sm:$0xff]
      %v190 = vld [vmem:[%s127 + $0x1b0] sm:$0xff]
      %v191 = vld [vmem:[%s127 + $0x1b8] sm:$0xff]
      %v192 = vld [vmem:[%s127 + $0x1c0] sm:$0xff]
      %v193 = vld [vmem:[%s127 + $0x1c8] sm:$0xff]
      %v194 = vld [vmem:[%s127 + $0x1d0] sm:$0xff]
      %v195 = vld [vmem:[%s127 + $0x1d8] sm:$0xff]
      %v196 = vld [vmem:[%s127 + $0x1e0] sm:$0xff]
      %v197 = vld [vmem:[%s127 + $0x1e8] sm:$0xff]
      %v198 = vld [vmem:[%s127 + $0x1f0] sm:$0xff]
      %v199 = vld [vmem:[%s127 + $0x1f8] sm:$0xff]
      %v200 = vld [vmem:[%s127 + $0x200] sm:$0xff]
      %v201 = vld [vmem:[%s127 + $0x208] sm:$0xff]
      %v202 = vld [vmem:[%s127 + $0x210] sm:$0xff]
      %v203 = vld [vmem:[%s127 + $0x218] sm:$0xff]
      %v204 = vld [vmem:[%s127 + $0x220] sm:$0xff]
      %v205 = vld [vmem:[%s127 + $0x228] sm:$0xff]
      %v206 = vld [vmem:[%s127 + $0x230] sm:$0xff]
      %v207 = vld [vmem:[%s127 + $0x238] sm:$0xff]
      %v208 = vld [vmem:[%s127 + $0x240] sm:$0xff]
      %v209 = vld [vmem:[%s127 + $0x248] sm:$0xff]
      %v210 = vld [vmem:[%s127 + $0x250] sm:$0xff]
      %v211 = vld [vmem:[%s127 + $0x258] sm:$0xff]
      %v212 = vld [vmem:[%s127 + $0x260] sm:$0xff]
      %v213 = vld [vmem:[%s127 + $0x268] sm:$0xff]
      %v214 = vld [vmem:[%s127 + $0x270] sm:$0xff]
      %v215 = vld [vmem:[%s127 + $0x278] sm:$0xff]
      %v216 = vld [vmem:[%s127 + $0x280] sm:$0xff]
      %v217 = vld [vmem:[%s127 + $0x288] sm:$0xff]
      %v218 = vld [vmem:[%s127 + $0x290] sm:$0xff]
      %v219 = vld [vmem:[%s127 + $0x298] sm:$0xff]
      %v220 = vld [vmem:[%s127 + $0x2a0] sm:$0xff]
      %v221 = vld [vmem:[%s127 + $0x2a8] sm:$0xff]
      %v222 = vld [vmem:[%s127 + $0x2b0] sm:$0xff]
      %v223 = vld [vmem:[%s127 + $0x2b8] sm:$0xff]
      %v224 = vld [vmem:[%s127 + $0x2c0] sm:$0xff]
      %v225 = vld [vmem:[%s127 + $0x2c8] sm:$0xff]
      %v226 = vld [vmem:[%s127 + $0x2d0] sm:$0xff]
      %v227 = vld [vmem:[%s127 + $0x2d8] sm:$0xff]
      %v228 = vld [vmem:[%s127 + $0x2e0] sm:$0xff]
      %v229 = vld [vmem:[%s127 + $0x2e8] sm:$0xff]
      %v230 = vld [vmem:[%s127 + $0x2f0] sm:$0xff]
      %v231 = vld [vmem:[%s127 + $0x2f8] sm:$0xff]
      %v232 = vld [vmem:[%s127 + $0x300] sm:$0xff]
      %v233 = vld [vmem:[%s127 + $0x308] sm:$0xff]
      %v234 = vld [vmem:[%s127 + $0x310] sm:$0xff]
      %v235 = vld [vmem:[%s127 + $0x318] sm:$0xff]
      %v236 = vld [vmem:[%s127 + $0x320] sm:$0xff]
      %v237 = vld [vmem:[%s127 + $0x328] sm:$0xff]
      %v238 = vld [vmem:[%s127 + $0x330] sm:$0xff]
      %v239 = vld [vmem:[%s127 + $0x338] sm:$0xff]
      %v240 = vld [vmem:[%s127 + $0x340] sm:$0xff]
      %v241 = vld [vmem:[%s127 + $0x348] sm:$0xff]
      %v242 = vld [vmem:[%s127 + $0x350] sm:$0xff]
      %v243 = vld [vmem:[%s127 + $0x358] sm:$0xff]
      %v244 = vld [vmem:[%s127 + $0x360] sm:$0xff]
      %v245 = vld [vmem:[%s127 + $0x368] sm:$0xff]
      %v246 = vld [vmem:[%s127 + $0x370] sm:$0xff]
      %v247 = vld [vmem:[%s127 + $0x378] sm:$0xff]
      %v248 = vld [vmem:[%s127 + $0x380] sm:$0xff]
      %v249 = vld [vmem:[%s127 + $0x388] sm:$0xff]
      %v250 = vld [vmem:[%s127 + $0x390] sm:$0xff]
      %v251 = vld [vmem:[%s127 + $0x398] sm:$0xff]
      %v252 = vld [vmem:[%s127 + $0x3a0] sm:$0xff]
      %v253 = vld [vmem:[%s127 + $0x3a8] sm:$0xff]
      %v254 = vld [vmem:[%s127 + $0x3b0] sm:$0xff]
      %v255 = vld [vmem:[%s127 + $0x3b8] sm:$0xff]
      %v256 = vld [vmem:[%s127 + $0x3c0] sm:$0xff]
      %v257 = vld [vmem:[%s127 + $0x3c8] sm:$0xff]
      %v258 = vld [vmem:[%s127 + $0x3d0] sm:$0xff]
      %v259 = vld [vmem:[%s127 + $0x3d8] sm:$0xff]
      %v260 = vld [vmem:[%s127 + $0x3e0] sm:$0xff]
      %v261 = vld [vmem:[%s127 + $0x3e8] sm:$0xff]
      %v262 = vld [vmem:[%s127 + $0x3f0] sm:$0xff]
      %v263 = vld [vmem:[%s127 + $0x3f8] sm:$0xff]
      %v264 = vld [vmem:[%s1] sm:$0x1]
      %vm265 = vcmask 523264
      %v266 = vsel %vm265, %v136, 0.0
      %v267 = vsel %vm265, %v137, 0.0
      %v268 = vadd.f32 %v266, %v267
      %v269 = vsel %vm265, %v138, 0.0
      %v270 = vadd.f32 %v268, %v269
      %v271 = vsel %vm265, %v139, 0.0
      %v272 = vadd.f32 %v270, %v271
      %v273 = vsel %vm265, %v140, 0.0
      %v274 = vadd.f32 %v272, %v273
      %v275 = vsel %vm265, %v141, 0.0
      %v276 = vadd.f32 %v274, %v275
      %v277 = vsel %vm265, %v142, 0.0
      %v278 = vadd.f32 %v276, %v277
      %v279 = vsel %vm265, %v143, 0.0
      %v280 = vadd.f32 %v278, %v279
      %v281 = vsel %vm265, %v144, 0.0
      %v282 = vadd.f32 %v280, %v281
      %v283 = vsel %vm265, %v145, 0.0
      %v284 = vadd.f32 %v282, %v283
      %v285 = vsel %vm265, %v146, 0.0
      %v286 = vadd.f32 %v284, %v285
      %v287 = vsel %vm265, %v147, 0.0
      %v288 = vadd.f32 %v286, %v287
      %v289 = vsel %vm265, %v148, 0.0
      %v290 = vadd.f32 %v288, %v289
      %v291 = vsel %vm265, %v149, 0.0
      %v292 = vadd.f32 %v290, %v291
      %v293 = vsel %vm265, %v150, 0.0
      %v294 = vadd.f32 %v292, %v293
      %v295 = vsel %vm265, %v151, 0.0
      %v296 = vadd.f32 %v294, %v295
      %v297 = vsel %vm265, %v152, 0.0
      %v298 = vadd.f32 %v296, %v297
      %v299 = vsel %vm265, %v153, 0.0
      %v300 = vadd.f32 %v298, %v299
      %v301 = vsel %vm265, %v154, 0.0
      %v302 = vadd.f32 %v300, %v301
      %v303 = vsel %vm265, %v155, 0.0
      %v304 = vadd.f32 %v302, %v303
      %v305 = vsel %vm265, %v156, 0.0
      %v306 = vadd.f32 %v304, %v305
      %v307 = vsel %vm265, %v157, 0.0
      %v308 = vadd.f32 %v306, %v307
      %v309 = vsel %vm265, %v158, 0.0
      %v310 = vadd.f32 %v308, %v309
      %v311 = vsel %vm265, %v159, 0.0
      %v312 = vadd.f32 %v310, %v311
      %v313 = vsel %vm265, %v160, 0.0
      %v314 = vadd.f32 %v312, %v313
      %v315 = vsel %vm265, %v161, 0.0
      %v316 = vadd.f32 %v314, %v315
      %v317 = vsel %vm265, %v162, 0.0
      %v318 = vadd.f32 %v316, %v317
      %v319 = vsel %vm265, %v163, 0.0
      %v320 = vadd.f32 %v318, %v319
      %v321 = vsel %vm265, %v164, 0.0
      %v322 = vadd.f32 %v320, %v321
      %v323 = vsel %vm265, %v165, 0.0
      %v324 = vadd.f32 %v322, %v323
      %v325 = vsel %vm265, %v166, 0.0
      %v326 = vadd.f32 %v324, %v325
      %v327 = vsel %vm265, %v167, 0.0
      %v328 = vadd.f32 %v326, %v327
      %v329 = vsel %vm265, %v168, 0.0
      %v330 = vadd.f32 %v328, %v329
      %v331 = vsel %vm265, %v169, 0.0
      %v332 = vadd.f32 %v330, %v331
      %v333 = vsel %vm265, %v170, 0.0
      %v334 = vadd.f32 %v332, %v333
      %v335 = vsel %vm265, %v171, 0.0
      %v336 = vadd.f32 %v334, %v335
      %v337 = vsel %vm265, %v172, 0.0
      %v338 = vadd.f32 %v336, %v337
      %v339 = vsel %vm265, %v173, 0.0
      %v340 = vadd.f32 %v338, %v339
      %v341 = vsel %vm265, %v174, 0.0
      %v342 = vadd.f32 %v340, %v341
      %v343 = vsel %vm265, %v175, 0.0
      %v344 = vadd.f32 %v342, %v343
      %v345 = vsel %vm265, %v176, 0.0
      %v346 = vadd.f32 %v344, %v345
      %v347 = vsel %vm265, %v177, 0.0
      %v348 = vadd.f32 %v346, %v347
      %v349 = vsel %vm265, %v178, 0.0
      %v350 = vadd.f32 %v348, %v349
      %v351 = vsel %vm265, %v179, 0.0
      %v352 = vadd.f32 %v350, %v351
      %v353 = vsel %vm265, %v180, 0.0
      %v354 = vadd.f32 %v352, %v353
      %v355 = vsel %vm265, %v181, 0.0
      %v356 = vadd.f32 %v354, %v355
      %v357 = vsel %vm265, %v182, 0.0
      %v358 = vadd.f32 %v356, %v357
      %v359 = vsel %vm265, %v183, 0.0
      %v360 = vadd.f32 %v358, %v359
      %v361 = vsel %vm265, %v184, 0.0
      %v362 = vadd.f32 %v360, %v361
      %v363 = vsel %vm265, %v185, 0.0
      %v364 = vadd.f32 %v362, %v363
      %v365 = vsel %vm265, %v186, 0.0
      %v366 = vadd.f32 %v364, %v365
      %v367 = vsel %vm265, %v187, 0.0
      %v368 = vadd.f32 %v366, %v367
      %v369 = vsel %vm265, %v188, 0.0
      %v370 = vadd.f32 %v368, %v369
      %v371 = vsel %vm265, %v189, 0.0
      %v372 = vadd.f32 %v370, %v371
      %v373 = vsel %vm265, %v190, 0.0
      %v374 = vadd.f32 %v372, %v373
      %v375 = vsel %vm265, %v191, 0.0
      %v376 = vadd.f32 %v374, %v375
      %v377 = vsel %vm265, %v192, 0.0
      %v378 = vadd.f32 %v376, %v377
      %v379 = vsel %vm265, %v193, 0.0
      %v380 = vadd.f32 %v378, %v379
      %v381 = vsel %vm265, %v194, 0.0
      %v382 = vadd.f32 %v380, %v381
      %v383 = vsel %vm265, %v195, 0.0
      %v384 = vadd.f32 %v382, %v383
      %v385 = vsel %vm265, %v196, 0.0
      %v386 = vadd.f32 %v384, %v385
      %v387 = vsel %vm265, %v197, 0.0
      %v388 = vadd.f32 %v386, %v387
      %v389 = vsel %vm265, %v198, 0.0
      %v390 = vadd.f32 %v388, %v389
      %v391 = vsel %vm265, %v199, 0.0
      %v392 = vadd.f32 %v390, %v391
      %v393 = vsel %vm265, %v200, 0.0
      %v394 = vadd.f32 %v392, %v393
      %v395 = vsel %vm265, %v201, 0.0
      %v396 = vadd.f32 %v394, %v395
      %v397 = vsel %vm265, %v202, 0.0
      %v398 = vadd.f32 %v396, %v397
      %v399 = vsel %vm265, %v203, 0.0
      %v400 = vadd.f32 %v398, %v399
      %v401 = vsel %vm265, %v204, 0.0
      %v402 = vadd.f32 %v400, %v401
      %v403 = vsel %vm265, %v205, 0.0
      %v404 = vadd.f32 %v402, %v403
      %v405 = vsel %vm265, %v206, 0.0
      %v406 = vadd.f32 %v404, %v405
      %v407 = vsel %vm265, %v207, 0.0
      %v408 = vadd.f32 %v406, %v407
      %v409 = vsel %vm265, %v208, 0.0
      %v410 = vadd.f32 %v408, %v409
      %v411 = vsel %vm265, %v209, 0.0
      %v412 = vadd.f32 %v410, %v411
      %v413 = vsel %vm265, %v210, 0.0
      %v414 = vadd.f32 %v412, %v413
      %v415 = vsel %vm265, %v211, 0.0
      %v416 = vadd.f32 %v414, %v415
      %v417 = vsel %vm265, %v212, 0.0
      %v418 = vadd.f32 %v416, %v417
      %v419 = vsel %vm265, %v213, 0.0
      %v420 = vadd.f32 %v418, %v419
      %v421 = vsel %vm265, %v214, 0.0
      %v422 = vadd.f32 %v420, %v421
      %v423 = vsel %vm265, %v215, 0.0
      %v424 = vadd.f32 %v422, %v423
      %v425 = vsel %vm265, %v216, 0.0
      %v426 = vadd.f32 %v424, %v425
      %v427 = vsel %vm265, %v217, 0.0
      %v428 = vadd.f32 %v426, %v427
      %v429 = vsel %vm265, %v218, 0.0
      %v430 = vadd.f32 %v428, %v429
      %v431 = vsel %vm265, %v219, 0.0
      %v432 = vadd.f32 %v430, %v431
      %v433 = vsel %vm265, %v220, 0.0
      %v434 = vadd.f32 %v432, %v433
      %v435 = vsel %vm265, %v221, 0.0
      %v436 = vadd.f32 %v434, %v435
      %v437 = vsel %vm265, %v222, 0.0
      %v438 = vadd.f32 %v436, %v437
      %v439 = vsel %vm265, %v223, 0.0
      %v440 = vadd.f32 %v438, %v439
      %v441 = vsel %vm265, %v224, 0.0
      %v442 = vadd.f32 %v440, %v441
      %v443 = vsel %vm265, %v225, 0.0
      %v444 = vadd.f32 %v442, %v443
      %v445 = vsel %vm265, %v226, 0.0
      %v446 = vadd.f32 %v444, %v445
      %v447 = vsel %vm265, %v227, 0.0
      %v448 = vadd.f32 %v446, %v447
      %v449 = vsel %vm265, %v228, 0.0
      %v450 = vadd.f32 %v448, %v449
      %v451 = vsel %vm265, %v229, 0.0
      %v452 = vadd.f32 %v450, %v451
      %v453 = vsel %vm265, %v230, 0.0
      %v454 = vadd.f32 %v452, %v453
      %v455 = vsel %vm265, %v231, 0.0
      %v456 = vadd.f32 %v454, %v455
      %v457 = vsel %vm265, %v232, 0.0
      %v458 = vadd.f32 %v456, %v457
      %v459 = vsel %vm265, %v233, 0.0
      %v460 = vadd.f32 %v458, %v459
      %v461 = vsel %vm265, %v234, 0.0
      %v462 = vadd.f32 %v460, %v461
      %v463 = vsel %vm265, %v235, 0.0
      %v464 = vadd.f32 %v462, %v463
      %v465 = vsel %vm265, %v236, 0.0
      %v466 = vadd.f32 %v464, %v465
      %v467 = vsel %vm265, %v237, 0.0
      %v468 = vadd.f32 %v466, %v467
      %v469 = vsel %vm265, %v238, 0.0
      %v470 = vadd.f32 %v468, %v469
      %v471 = vsel %vm265, %v239, 0.0
      %v472 = vadd.f32 %v470, %v471
      %v473 = vsel %vm265, %v240, 0.0
      %v474 = vadd.f32 %v472, %v473
      %v475 = vsel %vm265, %v241, 0.0
      %v476 = vadd.f32 %v474, %v475
      %v477 = vsel %vm265, %v242, 0.0
      %v478 = vadd.f32 %v476, %v477
      %v479 = vsel %vm265, %v243, 0.0
      %v480 = vadd.f32 %v478, %v479
      %v481 = vsel %vm265, %v244, 0.0
      %v482 = vadd.f32 %v480, %v481
      %v483 = vsel %vm265, %v245, 0.0
      %v484 = vadd.f32 %v482, %v483
      %v485 = vsel %vm265, %v246, 0.0
      %v486 = vadd.f32 %v484, %v485
      %v487 = vsel %vm265, %v247, 0.0
      %v488 = vadd.f32 %v486, %v487
      %v489 = vsel %vm265, %v248, 0.0
      %v490 = vadd.f32 %v488, %v489
      %v491 = vsel %vm265, %v249, 0.0
      %v492 = vadd.f32 %v490, %v491
      %v493 = vsel %vm265, %v250, 0.0
      %v494 = vadd.f32 %v492, %v493
      %v495 = vsel %vm265, %v251, 0.0
      %v496 = vadd.f32 %v494, %v495
      %v497 = vsel %vm265, %v252, 0.0
      %v498 = vadd.f32 %v496, %v497
      %v499 = vsel %vm265, %v253, 0.0
      %v500 = vadd.f32 %v498, %v499
      %v501 = vsel %vm265, %v254, 0.0
      %v502 = vadd.f32 %v500, %v501
      %v503 = vsel %vm265, %v255, 0.0
      %v504 = vadd.f32 %v502, %v503
      %v505 = vsel %vm265, %v256, 0.0
      %v506 = vadd.f32 %v504, %v505
      %v507 = vsel %vm265, %v257, 0.0
      %v508 = vadd.f32 %v506, %v507
      %v509 = vsel %vm265, %v258, 0.0
      %v510 = vadd.f32 %v508, %v509
      %v511 = vsel %vm265, %v259, 0.0
      %v512 = vadd.f32 %v510, %v511
      %v513 = vsel %vm265, %v260, 0.0
      %v514 = vadd.f32 %v512, %v513
      %v515 = vsel %vm265, %v261, 0.0
      %v516 = vadd.f32 %v514, %v515
      %v517 = vsel %vm265, %v262, 0.0
      %v518 = vadd.f32 %v516, %v517
      %v519 = vsel %vm265, %v263, 0.0
      %v520 = vadd.f32 %v518, %v519
      %v521 = vrot.slane %v520, 4
      %v522 = vadd.f32 %v520, %v521
      %v523 = vrot.slane %v522, 2
      %v524 = vadd.f32 %v522, %v523
      %v525 = vrot.slane %v524, 1
      %v526 = vadd.f32 %v524, %v525
      %v527 = vadd.f32 %v264, %v526
      %vm528 = vcmask 516096
      %529 = vst.msk [vmem:[%s1] sm:$0x1] %vm528, %v527
      %v530 = vld [vmem:[%s2] sm:$0x1]
      %v531 = vmul.f32 %v136, %v136
      %v532 = vmul.f32 %v137, %v137
      %v533 = vmul.f32 %v138, %v138
      %v534 = vmul.f32 %v139, %v139
      %v535 = vmul.f32 %v140, %v140
      %v536 = vmul.f32 %v141, %v141
      %v537 = vmul.f32 %v142, %v142
      %v538 = vmul.f32 %v143, %v143
      %v539 = vmul.f32 %v144, %v144
      %v540 = vmul.f32 %v145, %v145
      %v541 = vmul.f32 %v146, %v146
      %v542 = vmul.f32 %v147, %v147
      %v543 = vmul.f32 %v148, %v148
      %v544 = vmul.f32 %v149, %v149
      %v545 = vmul.f32 %v150, %v150
      %v546 = vmul.f32 %v151, %v151
      %v547 = vmul.f32 %v152, %v152
      %v548 = vmul.f32 %v153, %v153
      %v549 = vmul.f32 %v154, %v154
      %v550 = vmul.f32 %v155, %v155
      %v551 = vmul.f32 %v156, %v156
      %v552 = vmul.f32 %v157, %v157
      %v553 = vmul.f32 %v158, %v158
      %v554 = vmul.f32 %v159, %v159
      %v555 = vmul.f32 %v160, %v160
      %v556 = vmul.f32 %v161, %v161
      %v557 = vmul.f32 %v162, %v162
      %v558 = vmul.f32 %v163, %v163
      %v559 = vmul.f32 %v164, %v164
      %v560 = vmul.f32 %v165, %v165
      %v561 = vmul.f32 %v166, %v166
      %v562 = vmul.f32 %v167, %v167
      %v563 = vmul.f32 %v168, %v168
      %v564 = vmul.f32 %v169, %v169
      %v565 = vmul.f32 %v170, %v170
      %v566 = vmul.f32 %v171, %v171
      %v567 = vmul.f32 %v172, %v172
      %v568 = vmul.f32 %v173, %v173
      %v569 = vmul.f32 %v174, %v174
      %v570 = vmul.f32 %v175, %v175
      %v571 = vmul.f32 %v176, %v176
      %v572 = vmul.f32 %v177, %v177
      %v573 = vmul.f32 %v178, %v178
      %v574 = vmul.f32 %v179, %v179
      %v575 = vmul.f32 %v180, %v180
      %v576 = vmul.f32 %v181, %v181
      %v577 = vmul.f32 %v182, %v182
      %v578 = vmul.f32 %v183, %v183
      %v579 = vmul.f32 %v184, %v184
      %v580 = vmul.f32 %v185, %v185
      %v581 = vmul.f32 %v186, %v186
      %v582 = vmul.f32 %v187, %v187
      %v583 = vmul.f32 %v188, %v188
      %v584 = vmul.f32 %v189, %v189
      %v585 = vmul.f32 %v190, %v190
      %v586 = vmul.f32 %v191, %v191
      %v587 = vmul.f32 %v192, %v192
      %v588 = vmul.f32 %v193, %v193
      %v589 = vmul.f32 %v194, %v194
      %v590 = vmul.f32 %v195, %v195
      %v591 = vmul.f32 %v196, %v196
      %v592 = vmul.f32 %v197, %v197
      %v593 = vmul.f32 %v198, %v198
      %v594 = vmul.f32 %v199, %v199
      %v595 = vmul.f32 %v200, %v200
      %v596 = vmul.f32 %v201, %v201
      %v597 = vmul.f32 %v202, %v202
      %v598 = vmul.f32 %v203, %v203
      %v599 = vmul.f32 %v204, %v204
      %v600 = vmul.f32 %v205, %v205
      %v601 = vmul.f32 %v206, %v206
      %v602 = vmul.f32 %v207, %v207
      %v603 = vmul.f32 %v208, %v208
      %v604 = vmul.f32 %v209, %v209
      %v605 = vmul.f32 %v210, %v210
      %v606 = vmul.f32 %v211, %v211
      %v607 = vmul.f32 %v212, %v212
      %v608 = vmul.f32 %v213, %v213
      %v609 = vmul.f32 %v214, %v214
      %v610 = vmul.f32 %v215, %v215
      %v611 = vmul.f32 %v216, %v216
      %v612 = vmul.f32 %v217, %v217
      %v613 = vmul.f32 %v218, %v218
      %v614 = vmul.f32 %v219, %v219
      %v615 = vmul.f32 %v220, %v220
      %v616 = vmul.f32 %v221, %v221
      %v617 = vmul.f32 %v222, %v222
      %v618 = vmul.f32 %v223, %v223
      %v619 = vmul.f32 %v224, %v224
      %v620 = vmul.f32 %v225, %v225
      %v621 = vmul.f32 %v226, %v226
      %v622 = vmul.f32 %v227, %v227
      %v623 = vmul.f32 %v228, %v228
      %v624 = vmul.f32 %v229, %v229
      %v625 = vmul.f32 %v230, %v230
      %v626 = vmul.f32 %v231, %v231
      %v627 = vmul.f32 %v232, %v232
      %v628 = vmul.f32 %v233, %v233
      %v629 = vmul.f32 %v234, %v234
      %v630 = vmul.f32 %v235, %v235
      %v631 = vmul.f32 %v236, %v236
      %v632 = vmul.f32 %v237, %v237
      %v633 = vmul.f32 %v238, %v238
      %v634 = vmul.f32 %v239, %v239
      %v635 = vmul.f32 %v240, %v240
      %v636 = vmul.f32 %v241, %v241
      %v637 = vmul.f32 %v242, %v242
      %v638 = vmul.f32 %v243, %v243
      %v639 = vmul.f32 %v244, %v244
      %v640 = vmul.f32 %v245, %v245
      %v641 = vmul.f32 %v246, %v246
      %v642 = vmul.f32 %v247, %v247
      %v643 = vmul.f32 %v248, %v248
      %v644 = vmul.f32 %v249, %v249
      %v645 = vmul.f32 %v250, %v250
      %v646 = vmul.f32 %v251, %v251
      %v647 = vmul.f32 %v252, %v252
      %v648 = vmul.f32 %v253, %v253
      %v649 = vmul.f32 %v254, %v254
      %v650 = vmul.f32 %v255, %v255
      %v651 = vmul.f32 %v256, %v256
      %v652 = vmul.f32 %v257, %v257
      %v653 = vmul.f32 %v258, %v258
      %v654 = vmul.f32 %v259, %v259
      %v655 = vmul.f32 %v260, %v260
      %v656 = vmul.f32 %v261, %v261
      %v657 = vmul.f32 %v262, %v262
      %v658 = vmul.f32 %v263, %v263
      %v659 = vsel %vm265, %v531, 0.0
      %v660 = vsel %vm265, %v532, 0.0
      %v661 = vadd.f32 %v659, %v660
      %v662 = vsel %vm265, %v533, 0.0
      %v663 = vadd.f32 %v661, %v662
      %v664 = vsel %vm265, %v534, 0.0
      %v665 = vadd.f32 %v663, %v664
      %v666 = vsel %vm265, %v535, 0.0
      %v667 = vadd.f32 %v665, %v666
      %v668 = vsel %vm265, %v536, 0.0
      %v669 = vadd.f32 %v667, %v668
      %v670 = vsel %vm265, %v537, 0.0
      %v671 = vadd.f32 %v669, %v670
      %v672 = vsel %vm265, %v538, 0.0
      %v673 = vadd.f32 %v671, %v672
      %v674 = vsel %vm265, %v539, 0.0
      %v675 = vadd.f32 %v673, %v674
      %v676 = vsel %vm265, %v540, 0.0
      %v677 = vadd.f32 %v675, %v676
      %v678 = vsel %vm265, %v541, 0.0
      %v679 = vadd.f32 %v677, %v678
      %v680 = vsel %vm265, %v542, 0.0
      %v681 = vadd.f32 %v679, %v680
      %v682 = vsel %vm265, %v543, 0.0
      %v683 = vadd.f32 %v681, %v682
      %v684 = vsel %vm265, %v544, 0.0
      %v685 = vadd.f32 %v683, %v684
      %v686 = vsel %vm265, %v545, 0.0
      %v687 = vadd.f32 %v685, %v686
      %v688 = vsel %vm265, %v546, 0.0
      %v689 = vadd.f32 %v687, %v688
      %v690 = vsel %vm265, %v547, 0.0
      %v691 = vadd.f32 %v689, %v690
      %v692 = vsel %vm265, %v548, 0.0
      %v693 = vadd.f32 %v691, %v692
      %v694 = vsel %vm265, %v549, 0.0
      %v695 = vadd.f32 %v693, %v694
      %v696 = vsel %vm265, %v550, 0.0
      %v697 = vadd.f32 %v695, %v696
      %v698 = vsel %vm265, %v551, 0.0
      %v699 = vadd.f32 %v697, %v698
      %v700 = vsel %vm265, %v552, 0.0
      %v701 = vadd.f32 %v699, %v700
      %v702 = vsel %vm265, %v553, 0.0
      %v703 = vadd.f32 %v701, %v702
      %v704 = vsel %vm265, %v554, 0.0
      %v705 = vadd.f32 %v703, %v704
      %v706 = vsel %vm265, %v555, 0.0
      %v707 = vadd.f32 %v705, %v706
      %v708 = vsel %vm265, %v556, 0.0
      %v709 = vadd.f32 %v707, %v708
      %v710 = vsel %vm265, %v557, 0.0
      %v711 = vadd.f32 %v709, %v710
      %v712 = vsel %vm265, %v558, 0.0
      %v713 = vadd.f32 %v711, %v712
      %v714 = vsel %vm265, %v559, 0.0
      %v715 = vadd.f32 %v713, %v714
      %v716 = vsel %vm265, %v560, 0.0
      %v717 = vadd.f32 %v715, %v716
      %v718 = vsel %vm265, %v561, 0.0
      %v719 = vadd.f32 %v717, %v718
      %v720 = vsel %vm265, %v562, 0.0
      %v721 = vadd.f32 %v719, %v720
      %v722 = vsel %vm265, %v563, 0.0
      %v723 = vadd.f32 %v721, %v722
      %v724 = vsel %vm265, %v564, 0.0
      %v725 = vadd.f32 %v723, %v724
      %v726 = vsel %vm265, %v565, 0.0
      %v727 = vadd.f32 %v725, %v726
      %v728 = vsel %vm265, %v566, 0.0
      %v729 = vadd.f32 %v727, %v728
      %v730 = vsel %vm265, %v567, 0.0
      %v731 = vadd.f32 %v729, %v730
      %v732 = vsel %vm265, %v568, 0.0
      %v733 = vadd.f32 %v731, %v732
      %v734 = vsel %vm265, %v569, 0.0
      %v735 = vadd.f32 %v733, %v734
      %v736 = vsel %vm265, %v570, 0.0
      %v737 = vadd.f32 %v735, %v736
      %v738 = vsel %vm265, %v571, 0.0
      %v739 = vadd.f32 %v737, %v738
      %v740 = vsel %vm265, %v572, 0.0
      %v741 = vadd.f32 %v739, %v740
      %v742 = vsel %vm265, %v573, 0.0
      %v743 = vadd.f32 %v741, %v742
      %v744 = vsel %vm265, %v574, 0.0
      %v745 = vadd.f32 %v743, %v744
      %v746 = vsel %vm265, %v575, 0.0
      %v747 = vadd.f32 %v745, %v746
      %v748 = vsel %vm265, %v576, 0.0
      %v749 = vadd.f32 %v747, %v748
      %v750 = vsel %vm265, %v577, 0.0
      %v751 = vadd.f32 %v749, %v750
      %v752 = vsel %vm265, %v578, 0.0
      %v753 = vadd.f32 %v751, %v752
      %v754 = vsel %vm265, %v579, 0.0
      %v755 = vadd.f32 %v753, %v754
      %v756 = vsel %vm265, %v580, 0.0
      %v757 = vadd.f32 %v755, %v756
      %v758 = vsel %vm265, %v581, 0.0
      %v759 = vadd.f32 %v757, %v758
      %v760 = vsel %vm265, %v582, 0.0
      %v761 = vadd.f32 %v759, %v760
      %v762 = vsel %vm265, %v583, 0.0
      %v763 = vadd.f32 %v761, %v762
      %v764 = vsel %vm265, %v584, 0.0
      %v765 = vadd.f32 %v763, %v764
      %v766 = vsel %vm265, %v585, 0.0
      %v767 = vadd.f32 %v765, %v766
      %v768 = vsel %vm265, %v586, 0.0
      %v769 = vadd.f32 %v767, %v768
      %v770 = vsel %vm265, %v587, 0.0
      %v771 = vadd.f32 %v769, %v770
      %v772 = vsel %vm265, %v588, 0.0
      %v773 = vadd.f32 %v771, %v772
      %v774 = vsel %vm265, %v589, 0.0
      %v775 = vadd.f32 %v773, %v774
      %v776 = vsel %vm265, %v590, 0.0
      %v777 = vadd.f32 %v775, %v776
      %v778 = vsel %vm265, %v591, 0.0
      %v779 = vadd.f32 %v777, %v778
      %v780 = vsel %vm265, %v592, 0.0
      %v781 = vadd.f32 %v779, %v780
      %v782 = vsel %vm265, %v593, 0.0
      %v783 = vadd.f32 %v781, %v782
      %v784 = vsel %vm265, %v594, 0.0
      %v785 = vadd.f32 %v783, %v784
      %v786 = vsel %vm265, %v595, 0.0
      %v787 = vadd.f32 %v785, %v786
      %v788 = vsel %vm265, %v596, 0.0
      %v789 = vadd.f32 %v787, %v788
      %v790 = vsel %vm265, %v597, 0.0
      %v791 = vadd.f32 %v789, %v790
      %v792 = vsel %vm265, %v598, 0.0
      %v793 = vadd.f32 %v791, %v792
      %v794 = vsel %vm265, %v599, 0.0
      %v795 = vadd.f32 %v793, %v794
      %v796 = vsel %vm265, %v600, 0.0
      %v797 = vadd.f32 %v795, %v796
      %v798 = vsel %vm265, %v601, 0.0
      %v799 = vadd.f32 %v797, %v798
      %v800 = vsel %vm265, %v602, 0.0
      %v801 = vadd.f32 %v799, %v800
      %v802 = vsel %vm265, %v603, 0.0
      %v803 = vadd.f32 %v801, %v802
      %v804 = vsel %vm265, %v604, 0.0
      %v805 = vadd.f32 %v803, %v804
      %v806 = vsel %vm265, %v605, 0.0
      %v807 = vadd.f32 %v805, %v806
      %v808 = vsel %vm265, %v606, 0.0
      %v809 = vadd.f32 %v807, %v808
      %v810 = vsel %vm265, %v607, 0.0
      %v811 = vadd.f32 %v809, %v810
      %v812 = vsel %vm265, %v608, 0.0
      %v813 = vadd.f32 %v811, %v812
      %v814 = vsel %vm265, %v609, 0.0
      %v815 = vadd.f32 %v813, %v814
      %v816 = vsel %vm265, %v610, 0.0
      %v817 = vadd.f32 %v815, %v816
      %v818 = vsel %vm265, %v611, 0.0
      %v819 = vadd.f32 %v817, %v818
      %v820 = vsel %vm265, %v612, 0.0
      %v821 = vadd.f32 %v819, %v820
      %v822 = vsel %vm265, %v613, 0.0
      %v823 = vadd.f32 %v821, %v822
      %v824 = vsel %vm265, %v614, 0.0
      %v825 = vadd.f32 %v823, %v824
      %v826 = vsel %vm265, %v615, 0.0
      %v827 = vadd.f32 %v825, %v826
      %v828 = vsel %vm265, %v616, 0.0
      %v829 = vadd.f32 %v827, %v828
      %v830 = vsel %vm265, %v617, 0.0
      %v831 = vadd.f32 %v829, %v830
      %v832 = vsel %vm265, %v618, 0.0
      %v833 = vadd.f32 %v831, %v832
      %v834 = vsel %vm265, %v619, 0.0
      %v835 = vadd.f32 %v833, %v834
      %v836 = vsel %vm265, %v620, 0.0
      %v837 = vadd.f32 %v835, %v836
      %v838 = vsel %vm265, %v621, 0.0
      %v839 = vadd.f32 %v837, %v838
      %v840 = vsel %vm265, %v622, 0.0
      %v841 = vadd.f32 %v839, %v840
      %v842 = vsel %vm265, %v623, 0.0
      %v843 = vadd.f32 %v841, %v842
      %v844 = vsel %vm265, %v624, 0.0
      %v845 = vadd.f32 %v843, %v844
      %v846 = vsel %vm265, %v625, 0.0
      %v847 = vadd.f32 %v845, %v846
      %v848 = vsel %vm265, %v626, 0.0
      %v849 = vadd.f32 %v847, %v848
      %v850 = vsel %vm265, %v627, 0.0
      %v851 = vadd.f32 %v849, %v850
      %v852 = vsel %vm265, %v628, 0.0
      %v853 = vadd.f32 %v851, %v852
      %v854 = vsel %vm265, %v629, 0.0
      %v855 = vadd.f32 %v853, %v854
      %v856 = vsel %vm265, %v630, 0.0
      %v857 = vadd.f32 %v855, %v856
      %v858 = vsel %vm265, %v631, 0.0
      %v859 = vadd.f32 %v857, %v858
      %v860 = vsel %vm265, %v632, 0.0
      %v861 = vadd.f32 %v859, %v860
      %v862 = vsel %vm265, %v633, 0.0
      %v863 = vadd.f32 %v861, %v862
      %v864 = vsel %vm265, %v634, 0.0
      %v865 = vadd.f32 %v863, %v864
      %v866 = vsel %vm265, %v635, 0.0
      %v867 = vadd.f32 %v865, %v866
      %v868 = vsel %vm265, %v636, 0.0
      %v869 = vadd.f32 %v867, %v868
      %v870 = vsel %vm265, %v637, 0.0
      %v871 = vadd.f32 %v869, %v870
      %v872 = vsel %vm265, %v638, 0.0
      %v873 = vadd.f32 %v871, %v872
      %v874 = vsel %vm265, %v639, 0.0
      %v875 = vadd.f32 %v873, %v874
      %v876 = vsel %vm265, %v640, 0.0
      %v877 = vadd.f32 %v875, %v876
      %v878 = vsel %vm265, %v641, 0.0
      %v879 = vadd.f32 %v877, %v878
      %v880 = vsel %vm265, %v642, 0.0
      %v881 = vadd.f32 %v879, %v880
      %v882 = vsel %vm265, %v643, 0.0
      %v883 = vadd.f32 %v881, %v882
      %v884 = vsel %vm265, %v644, 0.0
      %v885 = vadd.f32 %v883, %v884
      %v886 = vsel %vm265, %v645, 0.0
      %v887 = vadd.f32 %v885, %v886
      %v888 = vsel %vm265, %v646, 0.0
      %v889 = vadd.f32 %v887, %v888
      %v890 = vsel %vm265, %v647, 0.0
      %v891 = vadd.f32 %v889, %v890
      %v892 = vsel %vm265, %v648, 0.0
      %v893 = vadd.f32 %v891, %v892
      %v894 = vsel %vm265, %v649, 0.0
      %v895 = vadd.f32 %v893, %v894
      %v896 = vsel %vm265, %v650, 0.0
      %v897 = vadd.f32 %v895, %v896
      %v898 = vsel %vm265, %v651, 0.0
      %v899 = vadd.f32 %v897, %v898
      %v900 = vsel %vm265, %v652, 0.0
      %v901 = vadd.f32 %v899, %v900
      %v902 = vsel %vm265, %v653, 0.0
      %v903 = vadd.f32 %v901, %v902
      %v904 = vsel %vm265, %v654, 0.0
      %v905 = vadd.f32 %v903, %v904
      %v906 = vsel %vm265, %v655, 0.0
      %v907 = vadd.f32 %v905, %v906
      %v908 = vsel %vm265, %v656, 0.0
      %v909 = vadd.f32 %v907, %v908
      %v910 = vsel %vm265, %v657, 0.0
      %v911 = vadd.f32 %v909, %v910
      %v912 = vsel %vm265, %v658, 0.0
      %v913 = vadd.f32 %v911, %v912
      %v914 = vrot.slane %v913, 4
      %v915 = vadd.f32 %v913, %v914
      %v916 = vrot.slane %v915, 2
      %v917 = vadd.f32 %v915, %v916
      %v918 = vrot.slane %v917, 1
      %v919 = vadd.f32 %v917, %v918
      %v920 = vadd.f32 %v530, %v919
      %921 = vst.msk [vmem:[%s2] sm:$0x1] %vm528, %v920
      // Predicated region
      $region29: #{generator_forward.17} parent=23 // pred_check
        %p922 = pneg %p53
      $region30: #{generator_forward.17} parent=23 // pred_check_branch
        %924 = sbr.rel (%p922) target = $region32
      $region31: #{generator_forward.17} parent=23 // pred_region
        _
      $region32: #{generator_forward.17} parent=23 // pred_fallthru
        _
      // Predicated region
      $region33: #{generator_forward.17} parent=23 // pred_check
        %p925 = pneg %p74
      $region34: #{generator_forward.17} parent=23 // pred_check_branch
        %927 = sbr.rel (%p925) target = $region36
      $region35: #{generator_forward.17} parent=23 // pred_region
        _
      $region36: #{generator_forward.17} parent=23 // pred_fallthru
        _
      // Predicated region
      $region37: #{generator_forward.17} parent=23 // pred_check
        %p928 = pneg %p53
      $region38: #{generator_forward.17} parent=23 // pred_check_branch
        %930 = sbr.rel (%p928) target = $region40
      $region39: #{generator_forward.17} parent=23 // pred_region
        _
      $region40: #{generator_forward.17} parent=23 // pred_fallthru
        _
      // Predicated region
      $region41: #{generator_forward.17} parent=23 // pred_check
        %p931 = pneg %p74
      $region42: #{generator_forward.17} parent=23 // pred_check_branch
        %933 = sbr.rel (%p931) target = $region44
      $region43: #{generator_forward.17} parent=23 // pred_region
        _
      $region44: #{generator_forward.17} parent=23 // pred_fallthru
        _
    $region24: #{generator_forward.17} parent=5 // pred_fallthru
      _
    %p934 = scmp.le.s32.totalorder 2, %s9
    // Predicated region
    $region45: #{generator_forward.17} parent=5 // pred_check
      %p935 = pneg %p934
    $region46: #{generator_forward.17} parent=5 // pred_check_branch
      %937 = sbr.rel (%p935) target = $region48
    $region47: #{generator_forward.17} parent=5 // pred_region
      %s938 = ssub.s32 %s9, 2
    $region48: #{generator_forward.17} parent=5 // pred_fallthru
      _
  $region6: #{generator_forward.17} parent=0 // loop_footer
    %s13 = sadd.s32 1, %s9
  $region7: #{generator_forward.17} parent=0 // loop_footer_branch
    %8 = sbr.rel target = $region3
  $region8: #{generator_forward.17} parent=0 // loop_exit
    _

// kernel: generator_forward.18
$region0: #{generator_forward.18}
  #allocation0 [shape = 'u32[]', space=smem, size = 0x4, offset = 0x4, fixed_abs, tag = 'smem constant byte address 0x4 - core index']
  #allocation1 [shape = 'u32[144,128]{1,0:T(1,128)}', space=vmem, size = 0x12000, scoped, tag = 'internal scratch']
  %s0 = inlined_call_operand.vmem [shape: f32[2048,64], index: 0, kind: input, shape index: {}]
  %s1 = inlined_call_operand.vmem [shape: f32[1,64], index: 1, kind: input, shape index: {}]
  %s2 = inlined_call_operand.vmem [shape: f32[1,64], index: 2, kind: input, shape index: {}]
  %s3 = inlined_call_operand.vmem [shape: bf16[64,128], index: 3, kind: input, shape index: {}]
  %s4 = inlined_call_operand.vmem [shape: f32[2048,128], index: 4, kind: output, shape index: {}]
  %s5 = sld [smem:[#allocation0]]
  $region49: #{generator_forward.18} parent=0
    _
  %s7 = ssub.s32 1, %s5
  %s8 = scalar_select 0, %s7, %s5
  loop: start=0, step=1, limit=6
  $region2: #{generator_forward.18} parent=0 // loop_pre_header
    _
  $region3: #{generator_forward.18} parent=0 // loop_header
    %s10 = sphi 0, %s14
    %p11 = scmp.ge.s32.totalorder %s10, 6
    %s17 = sphi 0, %s29
    %s18 = sphi 0, %s25
    %s19 = sphi 0, %s17
    %s20 = sphi 0, %s18
    %s21 = sphi 0, %s19
    %s22 = sphi 0, %s20
    %s32 = sphi 0, %s34
    %s35 = sphi 0, %s32
    %s36 = sphi 0, %s35
    %s52 = sphi 0, %s36
    %s56 = sphi 0, %s56
    %s58 = sphi 0, %s56
    %s59 = sphi 0, %s58
    %s73 = sphi 0, %s59
    %s77 = sphi 0, %s77
    %s79 = sphi 0, %s77
    %s80 = sphi 0, %s79
    %s94 = sphi 0, %s80
    %s100 = sphi 0, %s102
    %s103 = sphi 0, %s100
    %s104 = sphi 0, %s103
    %s120 = sphi 0, %s104
    %s128 = sphi 0, %s130
    %s131 = sphi 0, %s128
    %s132 = sphi 0, %s131
    %s148 = sphi 0, %s132
  $region4: #{generator_forward.18} parent=0 // loop_header_branch
    %13 = sbr.rel (%p11) target = $region8
  $region5: #{generator_forward.18} parent=0 // loop_body
    %s15 = ssub.s32 %s10, 1
    %s16 = ssub.s32 %s10, 2
    %s23 = sadd.s32 1, %s18
    %p24 = scmp.ge.s32.totalorder %s23, 1
    %s25 = scalar_select %p24, 0, %s23
    %s26 = sadd.s32 1, %s17
    %s27 = scalar_select %p24, %s26, %s17
    %p28 = scmp.ge.s32.totalorder %s27, 4
    %s29 = scalar_select %p28, 0, %s27
    %s30 = ssub.s32 %s17, %s29
    %p31 = scmp.eq.s32.totalorder %s30, 0
    %s33 = sadd.s32 %s32, 1
    %s34 = scalar_select %p31, %s32, %s33
    %p37 = pneg %p31
    %p38 = scmp.eq.s32.totalorder %s10, 3
    %p39 = por %p37, %p38
    %p40 = scmp.ne.s32.totalorder %s32, %s35
    %p41 = scmp.eq.s32.totalorder %s10, 0
    %p42 = por %p40, %p41
    %p43 = scmp.ne.s32.totalorder %s32, %s35
    %p44 = scmp.eq.s32.totalorder %s15, 3
    %p45 = por %p43, %p44
    %p46 = scmp.ne.s32.totalorder %s35, %s36
    %p47 = scmp.eq.s32.totalorder %s15, 0
    %p48 = por %p46, %p47
    %p49 = scmp.ne.s32.totalorder %s35, %s36
    %p50 = scmp.eq.s32.totalorder %s16, 3
    %p51 = por %p49, %p50
    %p53 = scmp.ne.s32.totalorder %s36, %s52
    %p54 = scmp.eq.s32.totalorder %s16, 0
    %p55 = por %p53, %p54
    %s57 = sadd.s32 %s56, 1
    %p60 = scmp.eq.s32.totalorder %s10, 3
    %p61 = scmp.ne.s32.totalorder %s56, %s58
    %p62 = scmp.eq.s32.totalorder %s10, 0
    %p63 = por %p61, %p62
    %p64 = scmp.ne.s32.totalorder %s56, %s58
    %p65 = scmp.eq.s32.totalorder %s15, 3
    %p66 = por %p64, %p65
    %p67 = scmp.ne.s32.totalorder %s58, %s59
    %p68 = scmp.eq.s32.totalorder %s15, 0
    %p69 = por %p67, %p68
    %p70 = scmp.ne.s32.totalorder %s58, %s59
    %p71 = scmp.eq.s32.totalorder %s16, 3
    %p72 = por %p70, %p71
    %p74 = scmp.ne.s32.totalorder %s59, %s73
    %p75 = scmp.eq.s32.totalorder %s16, 0
    %p76 = por %p74, %p75
    %s78 = sadd.s32 %s77, 1
    %p81 = scmp.eq.s32.totalorder %s10, 3
    %p82 = scmp.ne.s32.totalorder %s77, %s79
    %p83 = scmp.eq.s32.totalorder %s10, 0
    %p84 = por %p82, %p83
    %p85 = scmp.ne.s32.totalorder %s77, %s79
    %p86 = scmp.eq.s32.totalorder %s15, 3
    %p87 = por %p85, %p86
    %p88 = scmp.ne.s32.totalorder %s79, %s80
    %p89 = scmp.eq.s32.totalorder %s15, 0
    %p90 = por %p88, %p89
    %p91 = scmp.ne.s32.totalorder %s79, %s80
    %p92 = scmp.eq.s32.totalorder %s16, 3
    %p93 = por %p91, %p92
    %p95 = scmp.ne.s32.totalorder %s80, %s94
    %p96 = scmp.eq.s32.totalorder %s16, 0
    %p97 = por %p95, %p96
    %s98 = ssub.s32 %s18, %s25
    %p99 = scmp.eq.s32.totalorder %s98, 0
    %s101 = sadd.s32 %s100, 1
    %s102 = scalar_select %p99, %s100, %s101
    %p105 = pneg %p99
    %p106 = scmp.eq.s32.totalorder %s10, 3
    %p107 = por %p105, %p106
    %p108 = scmp.ne.s32.totalorder %s100, %s103
    %p109 = scmp.eq.s32.totalorder %s10, 0
    %p110 = por %p108, %p109
    %p111 = scmp.ne.s32.totalorder %s100, %s103
    %p112 = scmp.eq.s32.totalorder %s15, 3
    %p113 = por %p111, %p112
    %p114 = scmp.ne.s32.totalorder %s103, %s104
    %p115 = scmp.eq.s32.totalorder %s15, 0
    %p116 = por %p114, %p115
    %p117 = scmp.ne.s32.totalorder %s103, %s104
    %p118 = scmp.eq.s32.totalorder %s16, 3
    %p119 = por %p117, %p118
    %p121 = scmp.ne.s32.totalorder %s104, %s120
    %p122 = scmp.eq.s32.totalorder %s16, 0
    %p123 = por %p121, %p122
    %s124 = ssub.s32 %s17, %s29
    %s125 = ssub.s32 %s18, %s25
    %s126 = sor.u32 %s124, %s125
    %p127 = scmp.eq.s32.totalorder %s126, 0
    %s129 = sadd.s32 %s128, 1
    %s130 = scalar_select %p127, %s128, %s129
    %p133 = pneg %p127
    %p134 = scmp.eq.s32.totalorder %s10, 3
    %p135 = por %p133, %p134
    %p136 = scmp.ne.s32.totalorder %s128, %s131
    %p137 = scmp.eq.s32.totalorder %s10, 0
    %p138 = por %p136, %p137
    %p139 = scmp.ne.s32.totalorder %s128, %s131
    %p140 = scmp.eq.s32.totalorder %s15, 3
    %p141 = por %p139, %p140
    %p142 = scmp.ne.s32.totalorder %s131, %s132
    %p143 = scmp.eq.s32.totalorder %s15, 0
    %p144 = por %p142, %p143
    %p145 = scmp.ne.s32.totalorder %s131, %s132
    %p146 = scmp.eq.s32.totalorder %s16, 3
    %p147 = por %p145, %p146
    %p149 = scmp.ne.s32.totalorder %s132, %s148
    %p150 = scmp.eq.s32.totalorder %s16, 0
    %p151 = por %p149, %p150
    %p152 = scmp.le.s32.totalorder 1, %s10
    %p153 = scmp.lt.s32.totalorder %s10, 5
    %p154 = pnand %p152, %p153
    %p155 = pneg %p154
    // Predicated region
    $region9: #{generator_forward.18} parent=5 // pred_check
      _
    $region10: #{generator_forward.18} parent=5 // pred_check_branch
      %157 = sbr.rel (%p154) target = $region12
    $region11: #{generator_forward.18} parent=5 // pred_region
      %s158 = ssub.s32 %s10, 1
      // Predicated region
      $region13: #{generator_forward.18} parent=11 // pred_check
        %p159 = pneg %p69
      $region14: #{generator_forward.18} parent=11 // pred_check_branch
        %161 = sbr.rel (%p159) target = $region16
      $region15: #{generator_forward.18} parent=11 // pred_region
        _
      $region16: #{generator_forward.18} parent=11 // pred_fallthru
        _
      // Predicated region
      $region17: #{generator_forward.18} parent=11 // pred_check
        %p162 = pneg %p90
      $region18: #{generator_forward.18} parent=11 // pred_check_branch
        %164 = sbr.rel (%p162) target = $region20
      $region19: #{generator_forward.18} parent=11 // pred_region
        _
      $region20: #{generator_forward.18} parent=11 // pred_fallthru
        _
      // Predicated region
      $region21: #{generator_forward.18} parent=11 // pred_check
        %p165 = pneg %p116
      $region22: #{generator_forward.18} parent=11 // pred_check_branch
        %167 = sbr.rel (%p165) target = $region24
      $region23: #{generator_forward.18} parent=11 // pred_region
        %p168 = scmp.lt.s32.totalorder %s20, 0
        %s169 = scalar_select %p168, %s20, 0
        %s170 = smul.addr %s169, 4
        %s171 = scalar_lea.vmem %s3, %s170
      $region24: #{generator_forward.18} parent=11 // pred_fallthru
        _
    $region12: #{generator_forward.18} parent=5 // pred_fallthru
      _
    %p172 = scmp.lt.s32.totalorder %s10, 4
    // Predicated region
    $region25: #{generator_forward.18} parent=5 // pred_check
      %p173 = pneg %p172
    $region26: #{generator_forward.18} parent=5 // pred_check_branch
      %175 = sbr.rel (%p173) target = $region28
    $region27: #{generator_forward.18} parent=5 // pred_region
      // Predicated region
      $region29: #{generator_forward.18} parent=27 // pred_check
        %p176 = pneg %p42
      $region30: #{generator_forward.18} parent=27 // pred_check_branch
        %178 = sbr.rel (%p176) target = $region32
      $region31: #{generator_forward.18} parent=27 // pred_region
        %s179 = smul.u32 64, %s17
        %p180 = scmp.lt.s32.totalorder %s179, 255
        %s181 = scalar_select %p180, %s179, 255
        %s182 = smul.addr %s181, 8
        %s183 = scalar_lea.vmem %s0, %s182
        %s184 = smul.u32 64, %s17
      $region32: #{generator_forward.18} parent=27 // pred_fallthru
        _
    $region28: #{generator_forward.18} parent=5 // pred_fallthru
      _
    %p185 = scmp.le.s32.totalorder 1, %s10
    %p186 = scmp.lt.s32.totalorder %s10, 5
    %p187 = pnand %p185, %p186
    %p188 = pneg %p187
    // Predicated region
    $region33: #{generator_forward.18} parent=5 // pred_check
      _
    $region34: #{generator_forward.18} parent=5 // pred_check_branch
      %190 = sbr.rel (%p187) target = $region36
    $region35: #{generator_forward.18} parent=5 // pred_region
      %s191 = ssub.s32 %s10, 1
      %s192 = smul.u32 64, %s19
      %p193 = scmp.lt.s32.totalorder %s192, 255
      %s194 = scalar_select %p193, %s192, 255
      %s195 = smul.addr %s194, 8
      %s196 = scalar_lea.vmem %s0, %s195
      %p197 = pneg %p48
      %p198 = pneg %p45
      %p199 = pneg %p69
      %p200 = pneg %p66
      %p201 = pneg %p90
      %p202 = pneg %p87
      %p203 = scmp.lt.s32.totalorder %s20, 0
      %s204 = scalar_select %p203, %s20, 0
      %s205 = smul.addr %s204, 4
      %s206 = scalar_lea.vmem %s3, %s205
      %p207 = pneg %p116
      %p208 = pneg %p113
      %p209 = pneg %p144
      %p210 = pneg %p141
      %s211 = smul.u32 64, %s19
      %p212 = scmp.lt.s32.totalorder %s211, 255
      %s213 = scalar_select %p212, %s211, 255
      %p214 = scmp.lt.s32.totalorder %s20, 0
      %s215 = scalar_select %p214, %s20, 0
      %s216 = sadd.s32 %s215, %s213
      %s217 = smul.addr %s216, 8
      %s218 = scalar_lea.vmem %s4, %s217
      %s219 = smul.u32 64, %s19
      %p220 = scmp.lt.s32.totalorder %s219, 255
      %s221 = scalar_select %p220, %s219, 255
      %s222 = smul.addr %s221, 8
      %s223 = scalar_lea.vmem %s0, %s222
      %s224 = smul.u32 64, %s19
      %p225 = scmp.lt.s32.totalorder %s20, 0
      %s226 = scalar_select %p225, %s20, 0
      %s227 = smul.addr %s226, 4
      %s228 = scalar_lea.vmem %s3, %s227
      %s229 = smul.u32 64, %s19
      %p230 = scmp.lt.s32.totalorder %s229, 255
      %s231 = scalar_select %p230, %s229, 255
      %p232 = scmp.lt.s32.totalorder %s20, 0
      %s233 = scalar_select %p232, %s20, 0
      %s234 = sadd.s32 %s233, %s231
      %s235 = smul.addr %s234, 8
      %s236 = scalar_lea.vmem %s4, %s235
      %s237 = smul.u32 64, %s19
      %v239 = vld [vmem:[%s223] sm:$0xff]
      %v240 = vld [vmem:[%s223 + $0x8] sm:$0xff]
      %v241 = vld [vmem:[%s223 + $0x10] sm:$0xff]
      %v242 = vld [vmem:[%s223 + $0x18] sm:$0xff]
      %v243 = vld [vmem:[%s223 + $0x20] sm:$0xff]
      %v244 = vld [vmem:[%s223 + $0x28] sm:$0xff]
      %v245 = vld [vmem:[%s223 + $0x30] sm:$0xff]
      %v246 = vld [vmem:[%s223 + $0x38] sm:$0xff]
      %v247 = vld [vmem:[%s223 + $0x40] sm:$0xff]
      %v248 = vld [vmem:[%s223 + $0x48] sm:$0xff]
      %v249 = vld [vmem:[%s223 + $0x50] sm:$0xff]
      %v250 = vld [vmem:[%s223 + $0x58] sm:$0xff]
      %v251 = vld [vmem:[%s223 + $0x60] sm:$0xff]
      %v252 = vld [vmem:[%s223 + $0x68] sm:$0xff]
      %v253 = vld [vmem:[%s223 + $0x70] sm:$0xff]
      %v254 = vld [vmem:[%s223 + $0x78] sm:$0xff]
      %v255 = vld [vmem:[%s223 + $0x80] sm:$0xff]
      %v256 = vld [vmem:[%s223 + $0x88] sm:$0xff]
      %v257 = vld [vmem:[%s223 + $0x90] sm:$0xff]
      %v258 = vld [vmem:[%s223 + $0x98] sm:$0xff]
      %v259 = vld [vmem:[%s223 + $0xa0] sm:$0xff]
      %v260 = vld [vmem:[%s223 + $0xa8] sm:$0xff]
      %v261 = vld [vmem:[%s223 + $0xb0] sm:$0xff]
      %v262 = vld [vmem:[%s223 + $0xb8] sm:$0xff]
      %v263 = vld [vmem:[%s223 + $0xc0] sm:$0xff]
      %v264 = vld [vmem:[%s223 + $0xc8] sm:$0xff]
      %v265 = vld [vmem:[%s223 + $0xd0] sm:$0xff]
      %v266 = vld [vmem:[%s223 + $0xd8] sm:$0xff]
      %v267 = vld [vmem:[%s223 + $0xe0] sm:$0xff]
      %v268 = vld [vmem:[%s223 + $0xe8] sm:$0xff]
      %v269 = vld [vmem:[%s223 + $0xf0] sm:$0xff]
      %v270 = vld [vmem:[%s223 + $0xf8] sm:$0xff]
      %v271 = vld [vmem:[%s223 + $0x100] sm:$0xff]
      %v272 = vld [vmem:[%s223 + $0x108] sm:$0xff]
      %v273 = vld [vmem:[%s223 + $0x110] sm:$0xff]
      %v274 = vld [vmem:[%s223 + $0x118] sm:$0xff]
      %v275 = vld [vmem:[%s223 + $0x120] sm:$0xff]
      %v276 = vld [vmem:[%s223 + $0x128] sm:$0xff]
      %v277 = vld [vmem:[%s223 + $0x130] sm:$0xff]
      %v278 = vld [vmem:[%s223 + $0x138] sm:$0xff]
      %v279 = vld [vmem:[%s223 + $0x140] sm:$0xff]
      %v280 = vld [vmem:[%s223 + $0x148] sm:$0xff]
      %v281 = vld [vmem:[%s223 + $0x150] sm:$0xff]
      %v282 = vld [vmem:[%s223 + $0x158] sm:$0xff]
      %v283 = vld [vmem:[%s223 + $0x160] sm:$0xff]
      %v284 = vld [vmem:[%s223 + $0x168] sm:$0xff]
      %v285 = vld [vmem:[%s223 + $0x170] sm:$0xff]
      %v286 = vld [vmem:[%s223 + $0x178] sm:$0xff]
      %v287 = vld [vmem:[%s223 + $0x180] sm:$0xff]
      %v288 = vld [vmem:[%s223 + $0x188] sm:$0xff]
      %v289 = vld [vmem:[%s223 + $0x190] sm:$0xff]
      %v290 = vld [vmem:[%s223 + $0x198] sm:$0xff]
      %v291 = vld [vmem:[%s223 + $0x1a0] sm:$0xff]
      %v292 = vld [vmem:[%s223 + $0x1a8] sm:$0xff]
      %v293 = vld [vmem:[%s223 + $0x1b0] sm:$0xff]
      %v294 = vld [vmem:[%s223 + $0x1b8] sm:$0xff]
      %v295 = vld [vmem:[%s223 + $0x1c0] sm:$0xff]
      %v296 = vld [vmem:[%s223 + $0x1c8] sm:$0xff]
      %v297 = vld [vmem:[%s223 + $0x1d0] sm:$0xff]
      %v298 = vld [vmem:[%s223 + $0x1d8] sm:$0xff]
      %v299 = vld [vmem:[%s223 + $0x1e0] sm:$0xff]
      %v300 = vld [vmem:[%s223 + $0x1e8] sm:$0xff]
      %v301 = vld [vmem:[%s223 + $0x1f0] sm:$0xff]
      %v302 = vld [vmem:[%s223 + $0x1f8] sm:$0xff]
      %v303 = vld [vmem:[%s1] sm:$0x1]
      %v305 = vlaneseq
      %v306 = vshrl.u32 %v305, 7
      %v307 = vsub.s32 0, %v306
      %v308 = vrot.slane %v303, %v307
      %v310 = vmul.f32 %v239, %v308
      %v311 = vmul.f32 %v240, %v308
      %v312 = vmul.f32 %v241, %v308
      %v313 = vmul.f32 %v242, %v308
      %v314 = vmul.f32 %v243, %v308
      %v315 = vmul.f32 %v244, %v308
      %v316 = vmul.f32 %v245, %v308
      %v317 = vmul.f32 %v246, %v308
      %v318 = vmul.f32 %v247, %v308
      %v319 = vmul.f32 %v248, %v308
      %v320 = vmul.f32 %v249, %v308
      %v321 = vmul.f32 %v250, %v308
      %v322 = vmul.f32 %v251, %v308
      %v323 = vmul.f32 %v252, %v308
      %v324 = vmul.f32 %v253, %v308
      %v325 = vmul.f32 %v254, %v308
      %v326 = vmul.f32 %v255, %v308
      %v327 = vmul.f32 %v256, %v308
      %v328 = vmul.f32 %v257, %v308
      %v329 = vmul.f32 %v258, %v308
      %v330 = vmul.f32 %v259, %v308
      %v331 = vmul.f32 %v260, %v308
      %v332 = vmul.f32 %v261, %v308
      %v333 = vmul.f32 %v262, %v308
      %v334 = vmul.f32 %v263, %v308
      %v335 = vmul.f32 %v264, %v308
      %v336 = vmul.f32 %v265, %v308
      %v337 = vmul.f32 %v266, %v308
      %v338 = vmul.f32 %v267, %v308
      %v339 = vmul.f32 %v268, %v308
      %v340 = vmul.f32 %v269, %v308
      %v341 = vmul.f32 %v270, %v308
      %v342 = vmul.f32 %v271, %v308
      %v343 = vmul.f32 %v272, %v308
      %v344 = vmul.f32 %v273, %v308
      %v345 = vmul.f32 %v274, %v308
      %v346 = vmul.f32 %v275, %v308
      %v347 = vmul.f32 %v276, %v308
      %v348 = vmul.f32 %v277, %v308
      %v349 = vmul.f32 %v278, %v308
      %v350 = vmul.f32 %v279, %v308
      %v351 = vmul.f32 %v280, %v308
      %v352 = vmul.f32 %v281, %v308
      %v353 = vmul.f32 %v282, %v308
      %v354 = vmul.f32 %v283, %v308
      %v355 = vmul.f32 %v284, %v308
      %v356 = vmul.f32 %v285, %v308
      %v357 = vmul.f32 %v286, %v308
      %v358 = vmul.f32 %v287, %v308
      %v359 = vmul.f32 %v288, %v308
      %v360 = vmul.f32 %v289, %v308
      %v361 = vmul.f32 %v290, %v308
      %v362 = vmul.f32 %v291, %v308
      %v363 = vmul.f32 %v292, %v308
      %v364 = vmul.f32 %v293, %v308
      %v365 = vmul.f32 %v294, %v308
      %v366 = vmul.f32 %v295, %v308
      %v367 = vmul.f32 %v296, %v308
      %v368 = vmul.f32 %v297, %v308
      %v369 = vmul.f32 %v298, %v308
      %v370 = vmul.f32 %v299, %v308
      %v371 = vmul.f32 %v300, %v308
      %v372 = vmul.f32 %v301, %v308
      %v373 = vmul.f32 %v302, %v308
      %v374 = vld [vmem:[%s2] sm:$0x1]
      %v376 = vlaneseq
      %v377 = vshrl.u32 %v376, 7
      %v378 = vsub.s32 0, %v377
      %v379 = vrot.slane %v374, %v378
      %v381 = vadd.f32 %v310, %v379
      %v382 = vadd.f32 %v311, %v379
      %v383 = vadd.f32 %v312, %v379
      %v384 = vadd.f32 %v313, %v379
      %v385 = vadd.f32 %v314, %v379
      %v386 = vadd.f32 %v315, %v379
      %v387 = vadd.f32 %v316, %v379
      %v388 = vadd.f32 %v317, %v379
      %v389 = vadd.f32 %v318, %v379
      %v390 = vadd.f32 %v319, %v379
      %v391 = vadd.f32 %v320, %v379
      %v392 = vadd.f32 %v321, %v379
      %v393 = vadd.f32 %v322, %v379
      %v394 = vadd.f32 %v323, %v379
      %v395 = vadd.f32 %v324, %v379
      %v396 = vadd.f32 %v325, %v379
      %v397 = vadd.f32 %v326, %v379
      %v398 = vadd.f32 %v327, %v379
      %v399 = vadd.f32 %v328, %v379
      %v400 = vadd.f32 %v329, %v379
      %v401 = vadd.f32 %v330, %v379
      %v402 = vadd.f32 %v331, %v379
      %v403 = vadd.f32 %v332, %v379
      %v404 = vadd.f32 %v333, %v379
      %v405 = vadd.f32 %v334, %v379
      %v406 = vadd.f32 %v335, %v379
      %v407 = vadd.f32 %v336, %v379
      %v408 = vadd.f32 %v337, %v379
      %v409 = vadd.f32 %v338, %v379
      %v410 = vadd.f32 %v339, %v379
      %v411 = vadd.f32 %v340, %v379
      %v412 = vadd.f32 %v341, %v379
      %v413 = vadd.f32 %v342, %v379
      %v414 = vadd.f32 %v343, %v379
      %v415 = vadd.f32 %v344, %v379
      %v416 = vadd.f32 %v345, %v379
      %v417 = vadd.f32 %v346, %v379
      %v418 = vadd.f32 %v347, %v379
      %v419 = vadd.f32 %v348, %v379
      %v420 = vadd.f32 %v349, %v379
      %v421 = vadd.f32 %v350, %v379
      %v422 = vadd.f32 %v351, %v379
      %v423 = vadd.f32 %v352, %v379
      %v424 = vadd.f32 %v353, %v379
      %v425 = vadd.f32 %v354, %v379
      %v426 = vadd.f32 %v355, %v379
      %v427 = vadd.f32 %v356, %v379
      %v428 = vadd.f32 %v357, %v379
      %v429 = vadd.f32 %v358, %v379
      %v430 = vadd.f32 %v359, %v379
      %v431 = vadd.f32 %v360, %v379
      %v432 = vadd.f32 %v361, %v379
      %v433 = vadd.f32 %v362, %v379
      %v434 = vadd.f32 %v363, %v379
      %v435 = vadd.f32 %v364, %v379
      %v436 = vadd.f32 %v365, %v379
      %v437 = vadd.f32 %v366, %v379
      %v438 = vadd.f32 %v367, %v379
      %v439 = vadd.f32 %v368, %v379
      %v440 = vadd.f32 %v369, %v379
      %v441 = vadd.f32 %v370, %v379
      %v442 = vadd.f32 %v371, %v379
      %v443 = vadd.f32 %v372, %v379
      %v444 = vadd.f32 %v373, %v379
      %v445 = vmax.f32 %v381, 0.0
      %v446 = vmax.f32 %v382, 0.0
      %v447 = vmax.f32 %v383, 0.0
      %v448 = vmax.f32 %v384, 0.0
      %v449 = vmax.f32 %v385, 0.0
      %v450 = vmax.f32 %v386, 0.0
      %v451 = vmax.f32 %v387, 0.0
      %v452 = vmax.f32 %v388, 0.0
      %v453 = vmax.f32 %v389, 0.0
      %v454 = vmax.f32 %v390, 0.0
      %v455 = vmax.f32 %v391, 0.0
      %v456 = vmax.f32 %v392, 0.0
      %v457 = vmax.f32 %v393, 0.0
      %v458 = vmax.f32 %v394, 0.0
      %v459 = vmax.f32 %v395, 0.0
      %v460 = vmax.f32 %v396, 0.0
      %v461 = vmax.f32 %v397, 0.0
      %v462 = vmax.f32 %v398, 0.0
      %v463 = vmax.f32 %v399, 0.0
      %v464 = vmax.f32 %v400, 0.0
      %v465 = vmax.f32 %v401, 0.0
      %v466 = vmax.f32 %v402, 0.0
      %v467 = vmax.f32 %v403, 0.0
      %v468 = vmax.f32 %v404, 0.0
      %v469 = vmax.f32 %v405, 0.0
      %v470 = vmax.f32 %v406, 0.0
      %v471 = vmax.f32 %v407, 0.0
      %v472 = vmax.f32 %v408, 0.0
      %v473 = vmax.f32 %v409, 0.0
      %v474 = vmax.f32 %v410, 0.0
      %v475 = vmax.f32 %v411, 0.0
      %v476 = vmax.f32 %v412, 0.0
      %v477 = vmax.f32 %v413, 0.0
      %v478 = vmax.f32 %v414, 0.0
      %v479 = vmax.f32 %v415, 0.0
      %v480 = vmax.f32 %v416, 0.0
      %v481 = vmax.f32 %v417, 0.0
      %v482 = vmax.f32 %v418, 0.0
      %v483 = vmax.f32 %v419, 0.0
      %v484 = vmax.f32 %v420, 0.0
      %v485 = vmax.f32 %v421, 0.0
      %v486 = vmax.f32 %v422, 0.0
      %v487 = vmax.f32 %v423, 0.0
      %v488 = vmax.f32 %v424, 0.0
      %v489 = vmax.f32 %v425, 0.0
      %v490 = vmax.f32 %v426, 0.0
      %v491 = vmax.f32 %v427, 0.0
      %v492 = vmax.f32 %v428, 0.0
      %v493 = vmax.f32 %v429, 0.0
      %v494 = vmax.f32 %v430, 0.0
      %v495 = vmax.f32 %v431, 0.0
      %v496 = vmax.f32 %v432, 0.0
      %v497 = vmax.f32 %v433, 0.0
      %v498 = vmax.f32 %v434, 0.0
      %v499 = vmax.f32 %v435, 0.0
      %v500 = vmax.f32 %v436, 0.0
      %v501 = vmax.f32 %v437, 0.0
      %v502 = vmax.f32 %v438, 0.0
      %v503 = vmax.f32 %v439, 0.0
      %v504 = vmax.f32 %v440, 0.0
      %v505 = vmax.f32 %v441, 0.0
      %v506 = vmax.f32 %v442, 0.0
      %v507 = vmax.f32 %v443, 0.0
      %v508 = vmax.f32 %v444, 0.0
      %v509 = vpack.c.bf16 %v446, %v445
      %v510 = vpack.c.bf16 %v448, %v447
      %v511 = vpack.c.bf16 %v450, %v449
      %v512 = vpack.c.bf16 %v452, %v451
      %v513 = vpack.c.bf16 %v454, %v453
      %v514 = vpack.c.bf16 %v456, %v455
      %v515 = vpack.c.bf16 %v458, %v457
      %v516 = vpack.c.bf16 %v460, %v459
      %v517 = vpack.c.bf16 %v462, %v461
      %v518 = vpack.c.bf16 %v464, %v463
      %v519 = vpack.c.bf16 %v466, %v465
      %v520 = vpack.c.bf16 %v468, %v467
      %v521 = vpack.c.bf16 %v470, %v469
      %v522 = vpack.c.bf16 %v472, %v471
      %v523 = vpack.c.bf16 %v474, %v473
      %v524 = vpack.c.bf16 %v476, %v475
      %v525 = vpack.c.bf16 %v478, %v477
      %v526 = vpack.c.bf16 %v480, %v479
      %v527 = vpack.c.bf16 %v482, %v481
      %v528 = vpack.c.bf16 %v484, %v483
      %v529 = vpack.c.bf16 %v486, %v485
      %v530 = vpack.c.bf16 %v488, %v487
      %v531 = vpack.c.bf16 %v490, %v489
      %v532 = vpack.c.bf16 %v492, %v491
      %v533 = vpack.c.bf16 %v494, %v493
      %v534 = vpack.c.bf16 %v496, %v495
      %v535 = vpack.c.bf16 %v498, %v497
      %v536 = vpack.c.bf16 %v500, %v499
      %v537 = vpack.c.bf16 %v502, %v501
      %v538 = vpack.c.bf16 %v504, %v503
      %v539 = vpack.c.bf16 %v506, %v505
      %v540 = vpack.c.bf16 %v508, %v507
      %v541 = vld [vmem:[%s228] sm:$0xf]
      %v542 = vld [vmem:[%s228 + $0x4] sm:$0xf]
      %v543 = vld [vmem:[%s228 + $0x8] sm:$0xf]
      %v544 = vld [vmem:[%s228 + $0xc] sm:$0xf]
      %v545 = vld [vmem:[%s228 + $0x10] sm:$0xf]
      %v546 = vld [vmem:[%s228 + $0x14] sm:$0xf]
      %v547 = vld [vmem:[%s228 + $0x18] sm:$0xf]
      %v548 = vld [vmem:[%s228 + $0x1c] sm:$0xf]
      %v557 = vunpack.c.l.b16 %v541
      %v558 = vunpack.c.l.b16 %v542
      %v559 = vunpack.c.l.b16 %v543
      %v560 = vunpack.c.l.b16 %v544
      %v561 = vunpack.c.l.b16 %v545
      %v562 = vunpack.c.l.b16 %v546
      %v563 = vunpack.c.l.b16 %v547
      %v564 = vunpack.c.l.b16 %v548
      %v565 = vpack.c.b16 %v558, %v557
      %v566 = vpack.c.b16 %v560, %v559
      %v567 = vpack.c.b16 %v562, %v561
      %v568 = vpack.c.b16 %v564, %v563
      %vm573 = vcmask 523264
      %v575 = vsel %vm573, %v509, 0
      %v578 = vsel %vm573, %v510, 0
      %v581 = vsel %vm573, %v511, 0
      %v584 = vsel %vm573, %v512, 0
      %v587 = vsel %vm573, %v513, 0
      %v590 = vsel %vm573, %v514, 0
      %v593 = vsel %vm573, %v515, 0
      %v596 = vsel %vm573, %v516, 0
      %v599 = vsel %vm573, %v517, 0
      %v602 = vsel %vm573, %v518, 0
      %v605 = vsel %vm573, %v519, 0
      %v608 = vsel %vm573, %v520, 0
      %v611 = vsel %vm573, %v521, 0
      %v614 = vsel %vm573, %v522, 0
      %v617 = vsel %vm573, %v523, 0
      %v620 = vsel %vm573, %v524, 0
      %v623 = vsel %vm573, %v525, 0
      %v626 = vsel %vm573, %v526, 0
      %v629 = vsel %vm573, %v527, 0
      %v632 = vsel %vm573, %v528, 0
      %v635 = vsel %vm573, %v529, 0
      %v638 = vsel %vm573, %v530, 0
      %v641 = vsel %vm573, %v531, 0
      %v644 = vsel %vm573, %v532, 0
      %v647 = vsel %vm573, %v533, 0
      %v650 = vsel %vm573, %v534, 0
      %v653 = vsel %vm573, %v535, 0
      %v656 = vsel %vm573, %v536, 0
      %v659 = vsel %vm573, %v537, 0
      %v662 = vsel %vm573, %v538, 0
      %v665 = vsel %vm573, %v539, 0
      %v668 = vsel %vm573, %v540, 0
      %670 = vmatprep.subr.bf16.mxu0 0
      %671 = vmatpush1.bf16.msra.mxu0 0
      %672 = vmatprep.subr.bf16.mxu0 0
      %673 = vmatpush1.bf16.msra.mxu0 0
      %674 = vmatprep.subr.bf16.mxu0 0
      %675 = vmatpush1.bf16.msra.mxu0 0
      %676 = vmatprep.subr.bf16.mxu0 0
      %677 = vmatpush1.bf16.msra.mxu0 0
      %678 = vmatprep.subr.bf16.mxu0 0
      %679 = vmatpush1.bf16.msra.mxu0 %v568
      %680 = vmatprep.subr.bf16.mxu0 0
      %681 = vmatpush1.bf16.msra.mxu0 %v567
      %682 = vmatprep.subr.bf16.mxu0 0
      %683 = vmatpush1.bf16.msra.mxu0 %v566
      %684 = vmatprep.subr.bf16.mxu0 0
      %685 = vmatpush1.bf16.msra.mxu0 %v565
      %686 = vmatprep.subr.bf16.mxu0 0
      %687 = vmatpush2.bf16.msra.mxu0 0
      %688 = vmatprep.subr.bf16.mxu0 0
      %689 = vmatpush2.bf16.msra.mxu0 0
      %690 = vmatprep.subr.bf16.mxu0 0
      %691 = vmatpush2.bf16.msra.mxu0 0
      %692 = vmatprep.subr.bf16.mxu0 0
      %693 = vmatpush2.bf16.msra.mxu0 0
      %694 = vmatprep.subr.bf16.mxu0 0
      %695 = vmatpush2.bf16.msra.mxu0 0
      %696 = vmatprep.subr.bf16.mxu0 0
      %697 = vmatpush2.bf16.msra.mxu0 0
      %698 = vmatprep.subr.bf16.mxu0 0
      %699 = vmatpush2.bf16.msra.mxu0 0
      %700 = vmatprep.subr.bf16.mxu0 0
      %701 = vmatpush2.bf16.msra.mxu0 0
      %702 = vmatprep.mubr.bf16.mxu0 0
      %703 = vmatmul.mubr.bf16.gmra.mxu0 %v575
      %v704 = vpop.f32.mrf.mxu0
      %v705 = vadd.f32 0.0, %v704
      %v706 = vpop.f32.mrf.mxu0
      %v707 = vpop.f32.mrf.mxu0
      %v708 = vadd.f32 0.0, %v707
      %v709 = vpop.f32.mrf.mxu0
      %710 = vmatprep.mubr.bf16.mxu0 0
      %711 = vmatmul.mubr.bf16.gmra.mxu0 %v578
      %v712 = vpop.f32.mrf.mxu0
      %v713 = vadd.f32 0.0, %v712
      %v714 = vpop.f32.mrf.mxu0
      %v715 = vpop.f32.mrf.mxu0
      %v716 = vadd.f32 0.0, %v715
      %v717 = vpop.f32.mrf.mxu0
      %718 = vmatprep.mubr.bf16.mxu0 0
      %719 = vmatmul.mubr.bf16.gmra.mxu0 %v581
      %v720 = vpop.f32.mrf.mxu0
      %v721 = vadd.f32 0.0, %v720
      %v722 = vpop.f32.mrf.mxu0
      %v723 = vpop.f32.mrf.mxu0
      %v724 = vadd.f32 0.0, %v723
      %v725 = vpop.f32.mrf.mxu0
      %726 = vmatprep.mubr.bf16.mxu0 0
      %727 = vmatmul.mubr.bf16.gmra.mxu0 %v584
      %v728 = vpop.f32.mrf.mxu0
      %v729 = vadd.f32 0.0, %v728
      %v730 = vpop.f32.mrf.mxu0
      %v731 = vpop.f32.mrf.mxu0
      %v732 = vadd.f32 0.0, %v731
      %v733 = vpop.f32.mrf.mxu0
      %734 = vmatprep.mubr.bf16.mxu0 0
      %735 = vmatmul.mubr.bf16.gmra.mxu0 %v587
      %v736 = vpop.f32.mrf.mxu0
      %v737 = vadd.f32 0.0, %v736
      %v738 = vpop.f32.mrf.mxu0
      %v739 = vpop.f32.mrf.mxu0
      %v740 = vadd.f32 0.0, %v739
      %v741 = vpop.f32.mrf.mxu0
      %742 = vmatprep.mubr.bf16.mxu0 0
      %743 = vmatmul.mubr.bf16.gmra.mxu0 %v590
      %v744 = vpop.f32.mrf.mxu0
      %v745 = vadd.f32 0.0, %v744
      %v746 = vpop.f32.mrf.mxu0
      %v747 = vpop.f32.mrf.mxu0
      %v748 = vadd.f32 0.0, %v747
      %v749 = vpop.f32.mrf.mxu0
      %750 = vmatprep.mubr.bf16.mxu0 0
      %751 = vmatmul.mubr.bf16.gmra.mxu0 %v593
      %v752 = vpop.f32.mrf.mxu0
      %v753 = vadd.f32 0.0, %v752
      %v754 = vpop.f32.mrf.mxu0
      %v755 = vpop.f32.mrf.mxu0
      %v756 = vadd.f32 0.0, %v755
      %v757 = vpop.f32.mrf.mxu0
      %758 = vmatprep.mubr.bf16.mxu0 0
      %759 = vmatmul.mubr.bf16.gmra.mxu0 %v596
      %v760 = vpop.f32.mrf.mxu0
      %v761 = vadd.f32 0.0, %v760
      %v762 = vpop.f32.mrf.mxu0
      %v763 = vpop.f32.mrf.mxu0
      %v764 = vadd.f32 0.0, %v763
      %v765 = vpop.f32.mrf.mxu0
      %766 = vmatprep.mubr.bf16.mxu0 0
      %767 = vmatmul.mubr.bf16.gmra.mxu0 %v599
      %v768 = vpop.f32.mrf.mxu0
      %v769 = vadd.f32 0.0, %v768
      %v770 = vpop.f32.mrf.mxu0
      %v771 = vpop.f32.mrf.mxu0
      %v772 = vadd.f32 0.0, %v771
      %v773 = vpop.f32.mrf.mxu0
      %774 = vmatprep.mubr.bf16.mxu0 0
      %775 = vmatmul.mubr.bf16.gmra.mxu0 %v602
      %v776 = vpop.f32.mrf.mxu0
      %v777 = vadd.f32 0.0, %v776
      %v778 = vpop.f32.mrf.mxu0
      %v779 = vpop.f32.mrf.mxu0
      %v780 = vadd.f32 0.0, %v779
      %v781 = vpop.f32.mrf.mxu0
      %782 = vmatprep.mubr.bf16.mxu0 0
      %783 = vmatmul.mubr.bf16.gmra.mxu0 %v605
      %v784 = vpop.f32.mrf.mxu0
      %v785 = vadd.f32 0.0, %v784
      %v786 = vpop.f32.mrf.mxu0
      %v787 = vpop.f32.mrf.mxu0
      %v788 = vadd.f32 0.0, %v787
      %v789 = vpop.f32.mrf.mxu0
      %790 = vmatprep.mubr.bf16.mxu0 0
      %791 = vmatmul.mubr.bf16.gmra.mxu0 %v608
      %v792 = vpop.f32.mrf.mxu0
      %v793 = vadd.f32 0.0, %v792
      %v794 = vpop.f32.mrf.mxu0
      %v795 = vpop.f32.mrf.mxu0
      %v796 = vadd.f32 0.0, %v795
      %v797 = vpop.f32.mrf.mxu0
      %798 = vmatprep.mubr.bf16.mxu0 0
      %799 = vmatmul.mubr.bf16.gmra.mxu0 %v611
      %v800 = vpop.f32.mrf.mxu0
      %v801 = vadd.f32 0.0, %v800
      %v802 = vpop.f32.mrf.mxu0
      %v803 = vpop.f32.mrf.mxu0
      %v804 = vadd.f32 0.0, %v803
      %v805 = vpop.f32.mrf.mxu0
      %806 = vmatprep.mubr.bf16.mxu0 0
      %807 = vmatmul.mubr.bf16.gmra.mxu0 %v614
      %v808 = vpop.f32.mrf.mxu0
      %v809 = vadd.f32 0.0, %v808
      %v810 = vpop.f32.mrf.mxu0
      %v811 = vpop.f32.mrf.mxu0
      %v812 = vadd.f32 0.0, %v811
      %v813 = vpop.f32.mrf.mxu0
      %814 = vmatprep.mubr.bf16.mxu0 0
      %815 = vmatmul.mubr.bf16.gmra.mxu0 %v617
      %v816 = vpop.f32.mrf.mxu0
      %v817 = vadd.f32 0.0, %v816
      %v818 = vpop.f32.mrf.mxu0
      %v819 = vpop.f32.mrf.mxu0
      %v820 = vadd.f32 0.0, %v819
      %v821 = vpop.f32.mrf.mxu0
      %822 = vmatprep.mubr.bf16.mxu0 0
      %823 = vmatmul.mubr.bf16.gmra.mxu0 %v620
      %v824 = vpop.f32.mrf.mxu0
      %v825 = vadd.f32 0.0, %v824
      %v826 = vpop.f32.mrf.mxu0
      %v827 = vpop.f32.mrf.mxu0
      %v828 = vadd.f32 0.0, %v827
      %v829 = vpop.f32.mrf.mxu0
      %830 = vmatprep.mubr.bf16.mxu0 0
      %831 = vmatmul.mubr.bf16.gmra.mxu0 %v623
      %v832 = vpop.f32.mrf.mxu0
      %v833 = vadd.f32 0.0, %v832
      %v834 = vpop.f32.mrf.mxu0
      %v835 = vpop.f32.mrf.mxu0
      %v836 = vadd.f32 0.0, %v835
      %v837 = vpop.f32.mrf.mxu0
      %838 = vmatprep.mubr.bf16.mxu0 0
      %839 = vmatmul.mubr.bf16.gmra.mxu0 %v626
      %v840 = vpop.f32.mrf.mxu0
      %v841 = vadd.f32 0.0, %v840
      %v842 = vpop.f32.mrf.mxu0
      %v843 = vpop.f32.mrf.mxu0
      %v844 = vadd.f32 0.0, %v843
      %v845 = vpop.f32.mrf.mxu0
      %846 = vmatprep.mubr.bf16.mxu0 0
      %847 = vmatmul.mubr.bf16.gmra.mxu0 %v629
      %v848 = vpop.f32.mrf.mxu0
      %v849 = vadd.f32 0.0, %v848
      %v850 = vpop.f32.mrf.mxu0
      %v851 = vpop.f32.mrf.mxu0
      %v852 = vadd.f32 0.0, %v851
      %v853 = vpop.f32.mrf.mxu0
      %854 = vmatprep.mubr.bf16.mxu0 0
      %855 = vmatmul.mubr.bf16.gmra.mxu0 %v632
      %v856 = vpop.f32.mrf.mxu0
      %v857 = vadd.f32 0.0, %v856
      %v858 = vpop.f32.mrf.mxu0
      %v859 = vpop.f32.mrf.mxu0
      %v860 = vadd.f32 0.0, %v859
      %v861 = vpop.f32.mrf.mxu0
      %862 = vmatprep.mubr.bf16.mxu0 0
      %863 = vmatmul.mubr.bf16.gmra.mxu0 %v635
      %v864 = vpop.f32.mrf.mxu0
      %v865 = vadd.f32 0.0, %v864
      %v866 = vpop.f32.mrf.mxu0
      %v867 = vpop.f32.mrf.mxu0
      %v868 = vadd.f32 0.0, %v867
      %v869 = vpop.f32.mrf.mxu0
      %870 = vmatprep.mubr.bf16.mxu0 0
      %871 = vmatmul.mubr.bf16.gmra.mxu0 %v638
      %v872 = vpop.f32.mrf.mxu0
      %v873 = vadd.f32 0.0, %v872
      %v874 = vpop.f32.mrf.mxu0
      %v875 = vpop.f32.mrf.mxu0
      %v876 = vadd.f32 0.0, %v875
      %v877 = vpop.f32.mrf.mxu0
      %878 = vmatprep.mubr.bf16.mxu0 0
      %879 = vmatmul.mubr.bf16.gmra.mxu0 %v641
      %v880 = vpop.f32.mrf.mxu0
      %v881 = vadd.f32 0.0, %v880
      %v882 = vpop.f32.mrf.mxu0
      %v883 = vpop.f32.mrf.mxu0
      %v884 = vadd.f32 0.0, %v883
      %v885 = vpop.f32.mrf.mxu0
      %886 = vmatprep.mubr.bf16.mxu0 0
      %887 = vmatmul.mubr.bf16.gmra.mxu0 %v644
      %v888 = vpop.f32.mrf.mxu0
      %v889 = vadd.f32 0.0, %v888
      %v890 = vpop.f32.mrf.mxu0
      %v891 = vpop.f32.mrf.mxu0
      %v892 = vadd.f32 0.0, %v891
      %v893 = vpop.f32.mrf.mxu0
      %894 = vmatprep.mubr.bf16.mxu0 0
      %895 = vmatmul.mubr.bf16.gmra.mxu0 %v647
      %v896 = vpop.f32.mrf.mxu0
      %v897 = vadd.f32 0.0, %v896
      %v898 = vpop.f32.mrf.mxu0
      %v899 = vpop.f32.mrf.mxu0
      %v900 = vadd.f32 0.0, %v899
      %v901 = vpop.f32.mrf.mxu0
      %902 = vmatprep.mubr.bf16.mxu0 0
      %903 = vmatmul.mubr.bf16.gmra.mxu0 %v650
      %v904 = vpop.f32.mrf.mxu0
      %v905 = vadd.f32 0.0, %v904
      %v906 = vpop.f32.mrf.mxu0
      %v907 = vpop.f32.mrf.mxu0
      %v908 = vadd.f32 0.0, %v907
      %v909 = vpop.f32.mrf.mxu0
      %910 = vmatprep.mubr.bf16.mxu0 0
      %911 = vmatmul.mubr.bf16.gmra.mxu0 %v653
      %v912 = vpop.f32.mrf.mxu0
      %v913 = vadd.f32 0.0, %v912
      %v914 = vpop.f32.mrf.mxu0
      %v915 = vpop.f32.mrf.mxu0
      %v916 = vadd.f32 0.0, %v915
      %v917 = vpop.f32.mrf.mxu0
      %918 = vmatprep.mubr.bf16.mxu0 0
      %919 = vmatmul.mubr.bf16.gmra.mxu0 %v656
      %v920 = vpop.f32.mrf.mxu0
      %v921 = vadd.f32 0.0, %v920
      %v922 = vpop.f32.mrf.mxu0
      %v923 = vpop.f32.mrf.mxu0
      %v924 = vadd.f32 0.0, %v923
      %v925 = vpop.f32.mrf.mxu0
      %926 = vmatprep.mubr.bf16.mxu0 0
      %927 = vmatmul.mubr.bf16.gmra.mxu0 %v659
      %v928 = vpop.f32.mrf.mxu0
      %v929 = vadd.f32 0.0, %v928
      %v930 = vpop.f32.mrf.mxu0
      %v931 = vpop.f32.mrf.mxu0
      %v932 = vadd.f32 0.0, %v931
      %v933 = vpop.f32.mrf.mxu0
      %934 = vmatprep.mubr.bf16.mxu0 0
      %935 = vmatmul.mubr.bf16.gmra.mxu0 %v662
      %v936 = vpop.f32.mrf.mxu0
      %v937 = vadd.f32 0.0, %v936
      %v938 = vpop.f32.mrf.mxu0
      %v939 = vpop.f32.mrf.mxu0
      %v940 = vadd.f32 0.0, %v939
      %v941 = vpop.f32.mrf.mxu0
      %942 = vmatprep.mubr.bf16.mxu0 0
      %943 = vmatmul.mubr.bf16.gmra.mxu0 %v665
      %v944 = vpop.f32.mrf.mxu0
      %v945 = vadd.f32 0.0, %v944
      %v946 = vpop.f32.mrf.mxu0
      %v947 = vpop.f32.mrf.mxu0
      %v948 = vadd.f32 0.0, %v947
      %v949 = vpop.f32.mrf.mxu0
      %950 = vmatprep.mubr.bf16.mxu0 0
      %951 = vmatmul.mubr.bf16.gmra.mxu0 %v668
      %v952 = vpop.f32.mrf.mxu0
      %v953 = vadd.f32 0.0, %v952
      %v954 = vpop.f32.mrf.mxu0
      %v955 = vpop.f32.mrf.mxu0
      %v956 = vadd.f32 0.0, %v955
      %v957 = vpop.f32.mrf.mxu0
      %958 = vdwg.mxu0
      %959 = vst [vmem:[%s236] sm:$0xff] %v705
      %960 = vst [vmem:[%s236 + $0x8] sm:$0xff] %v708
      %961 = vst [vmem:[%s236 + $0x10] sm:$0xff] %v713
      %962 = vst [vmem:[%s236 + $0x18] sm:$0xff] %v716
      %963 = vst [vmem:[%s236 + $0x20] sm:$0xff] %v721
      %964 = vst [vmem:[%s236 + $0x28] sm:$0xff] %v724
      %965 = vst [vmem:[%s236 + $0x30] sm:$0xff] %v729
      %966 = vst [vmem:[%s236 + $0x38] sm:$0xff] %v732
      %967 = vst [vmem:[%s236 + $0x40] sm:$0xff] %v737
      %968 = vst [vmem:[%s236 + $0x48] sm:$0xff] %v740
      %969 = vst [vmem:[%s236 + $0x50] sm:$0xff] %v745
      %970 = vst [vmem:[%s236 + $0x58] sm:$0xff] %v748
      %971 = vst [vmem:[%s236 + $0x60] sm:$0xff] %v753
      %972 = vst [vmem:[%s236 + $0x68] sm:$0xff] %v756
      %973 = vst [vmem:[%s236 + $0x70] sm:$0xff] %v761
      %974 = vst [vmem:[%s236 + $0x78] sm:$0xff] %v764
      %975 = vst [vmem:[%s236 + $0x80] sm:$0xff] %v769
      %976 = vst [vmem:[%s236 + $0x88] sm:$0xff] %v772
      %977 = vst [vmem:[%s236 + $0x90] sm:$0xff] %v777
      %978 = vst [vmem:[%s236 + $0x98] sm:$0xff] %v780
      %979 = vst [vmem:[%s236 + $0xa0] sm:$0xff] %v785
      %980 = vst [vmem:[%s236 + $0xa8] sm:$0xff] %v788
      %981 = vst [vmem:[%s236 + $0xb0] sm:$0xff] %v793
      %982 = vst [vmem:[%s236 + $0xb8] sm:$0xff] %v796
      %983 = vst [vmem:[%s236 + $0xc0] sm:$0xff] %v801
      %984 = vst [vmem:[%s236 + $0xc8] sm:$0xff] %v804
      %985 = vst [vmem:[%s236 + $0xd0] sm:$0xff] %v809
      %986 = vst [vmem:[%s236 + $0xd8] sm:$0xff] %v812
      %987 = vst [vmem:[%s236 + $0xe0] sm:$0xff] %v817
      %988 = vst [vmem:[%s236 + $0xe8] sm:$0xff] %v820
      %989 = vst [vmem:[%s236 + $0xf0] sm:$0xff] %v825
      %990 = vst [vmem:[%s236 + $0xf8] sm:$0xff] %v828
      %991 = vst [vmem:[%s236 + $0x100] sm:$0xff] %v833
      %992 = vst [vmem:[%s236 + $0x108] sm:$0xff] %v836
      %993 = vst [vmem:[%s236 + $0x110] sm:$0xff] %v841
      %994 = vst [vmem:[%s236 + $0x118] sm:$0xff] %v844
      %995 = vst [vmem:[%s236 + $0x120] sm:$0xff] %v849
      %996 = vst [vmem:[%s236 + $0x128] sm:$0xff] %v852
      %997 = vst [vmem:[%s236 + $0x130] sm:$0xff] %v857
      %998 = vst [vmem:[%s236 + $0x138] sm:$0xff] %v860
      %999 = vst [vmem:[%s236 + $0x140] sm:$0xff] %v865
      %1000 = vst [vmem:[%s236 + $0x148] sm:$0xff] %v868
      %1001 = vst [vmem:[%s236 + $0x150] sm:$0xff] %v873
      %1002 = vst [vmem:[%s236 + $0x158] sm:$0xff] %v876
      %1003 = vst [vmem:[%s236 + $0x160] sm:$0xff] %v881
      %1004 = vst [vmem:[%s236 + $0x168] sm:$0xff] %v884
      %1005 = vst [vmem:[%s236 + $0x170] sm:$0xff] %v889
      %1006 = vst [vmem:[%s236 + $0x178] sm:$0xff] %v892
      %1007 = vst [vmem:[%s236 + $0x180] sm:$0xff] %v897
      %1008 = vst [vmem:[%s236 + $0x188] sm:$0xff] %v900
      %1009 = vst [vmem:[%s236 + $0x190] sm:$0xff] %v905
      %1010 = vst [vmem:[%s236 + $0x198] sm:$0xff] %v908
      %1011 = vst [vmem:[%s236 + $0x1a0] sm:$0xff] %v913
      %1012 = vst [vmem:[%s236 + $0x1a8] sm:$0xff] %v916
      %1013 = vst [vmem:[%s236 + $0x1b0] sm:$0xff] %v921
      %1014 = vst [vmem:[%s236 + $0x1b8] sm:$0xff] %v924
      %1015 = vst [vmem:[%s236 + $0x1c0] sm:$0xff] %v929
      %1016 = vst [vmem:[%s236 + $0x1c8] sm:$0xff] %v932
      %1017 = vst [vmem:[%s236 + $0x1d0] sm:$0xff] %v937
      %1018 = vst [vmem:[%s236 + $0x1d8] sm:$0xff] %v940
      %1019 = vst [vmem:[%s236 + $0x1e0] sm:$0xff] %v945
      %1020 = vst [vmem:[%s236 + $0x1e8] sm:$0xff] %v948
      %1021 = vst [vmem:[%s236 + $0x1f0] sm:$0xff] %v953
      %1022 = vst [vmem:[%s236 + $0x1f8] sm:$0xff] %v956
      %s1023 = smul.u32 64, %s19
      %p1024 = scmp.lt.s32.totalorder %s1023, 255
      %s1025 = scalar_select %p1024, %s1023, 255
      %p1026 = scmp.lt.s32.totalorder %s20, 0
      %s1027 = scalar_select %p1026, %s20, 0
      %s1028 = sadd.s32 %s1027, %s1025
      %s1029 = smul.addr %s1028, 8
      %s1030 = scalar_lea.vmem %s4, %s1029
      // Predicated region
      $region37: #{generator_forward.18} parent=35 // pred_check
        %p1031 = pneg %p141
      $region38: #{generator_forward.18} parent=35 // pred_check_branch
        %1033 = sbr.rel (%p1031) target = $region40
      $region39: #{generator_forward.18} parent=35 // pred_region
        %s1034 = smul.u32 64, %s19
      $region40: #{generator_forward.18} parent=35 // pred_fallthru
        _
    $region36: #{generator_forward.18} parent=5 // pred_fallthru
      _
    %p1035 = scmp.le.s32.totalorder 2, %s10
    // Predicated region
    $region41: #{generator_forward.18} parent=5 // pred_check
      %p1036 = pneg %p1035
    $region42: #{generator_forward.18} parent=5 // pred_check_branch
      %1038 = sbr.rel (%p1036) target = $region44
    $region43: #{generator_forward.18} parent=5 // pred_region
      %s1039 = ssub.s32 %s10, 2
      // Predicated region
      $region45: #{generator_forward.18} parent=43 // pred_check
        %p1040 = pneg %p147
      $region46: #{generator_forward.18} parent=43 // pred_check_branch
        %1042 = sbr.rel (%p1040) target = $region48
      $region47: #{generator_forward.18} parent=43 // pred_region
        %s1043 = smul.u32 64, %s21
        %p1044 = scmp.lt.s32.totalorder %s1043, 255
        %s1045 = scalar_select %p1044, %s1043, 255
        %p1046 = scmp.lt.s32.totalorder %s22, 0
        %s1047 = scalar_select %p1046, %s22, 0
        %s1048 = sadd.s32 %s1047, %s1045
        %s1049 = smul.addr %s1048, 8
        %s1050 = scalar_lea.vmem %s4, %s1049
      $region48: #{generator_forward.18} parent=43 // pred_fallthru
        _
    $region44: #{generator_forward.18} parent=5 // pred_fallthru
      _
  $region6: #{generator_forward.18} parent=0 // loop_footer
    %s14 = sadd.s32 1, %s10
  $region7: #{generator_forward.18} parent=0 // loop_footer_branch
    %9 = sbr.rel target = $region3
  $region8: #{generator_forward.18} parent=0 // loop_exit
    _

// kernel: generator_forward.19
$region0: #{generator_forward.19}
  #allocation0 [shape = 'u32[]', space=smem, size = 0x4, offset = 0x4, fixed_abs, tag = 'smem constant byte address 0x4 - core index']
  #allocation1 [shape = 'u32[144,128]{1,0:T(1,128)}', space=vmem, size = 0x12000, scoped, tag = 'internal scratch']
  %s0 = inlined_call_operand.vmem [shape: f32[24,1024], index: 0, kind: input, shape index: {}]
  %s1 = inlined_call_operand.vmem [shape: f32[24,1024], index: 1, kind: output, shape index: {}]
  %s2 = sld [smem:[#allocation0]]
  $region14: #{generator_forward.19} parent=0
    _
  %s4 = ssub.s32 1, %s2
  %s5 = scalar_select 0, %s4, %s2
  // Predicated region
  $region2: #{generator_forward.19} parent=0 // pred_check
    _
  $region3: #{generator_forward.19} parent=0 // pred_check_branch
    %7 = sbr.rel (0) target = $region5
  $region4: #{generator_forward.19} parent=0 // pred_region
    _
  $region5: #{generator_forward.19} parent=0 // pred_fallthru
    _
  %v8 = vld [vmem:[%s0] sm:$0xff]
  %v9 = vld [vmem:[%s0 + $0x8] sm:$0xff]
  %v10 = vld [vmem:[%s0 + $0x10] sm:$0xff]
  %v11 = vld [vmem:[%s0 + $0x18] sm:$0xff]
  %v12 = vld [vmem:[%s0 + $0x20] sm:$0xff]
  %v13 = vld [vmem:[%s0 + $0x28] sm:$0xff]
  %v14 = vld [vmem:[%s0 + $0x30] sm:$0xff]
  %v15 = vld [vmem:[%s0 + $0x38] sm:$0xff]
  %v16 = vld [vmem:[%s0 + $0x40] sm:$0xff]
  %v17 = vld [vmem:[%s0 + $0x48] sm:$0xff]
  %v18 = vld [vmem:[%s0 + $0x50] sm:$0xff]
  %v19 = vld [vmem:[%s0 + $0x58] sm:$0xff]
  %v20 = vld [vmem:[%s0 + $0x60] sm:$0xff]
  %v21 = vld [vmem:[%s0 + $0x68] sm:$0xff]
  %v22 = vld [vmem:[%s0 + $0x70] sm:$0xff]
  %v23 = vld [vmem:[%s0 + $0x78] sm:$0xff]
  %v24 = vld [vmem:[%s0 + $0x80] sm:$0xff]
  %v25 = vld [vmem:[%s0 + $0x88] sm:$0xff]
  %v26 = vld [vmem:[%s0 + $0x90] sm:$0xff]
  %v27 = vld [vmem:[%s0 + $0x98] sm:$0xff]
  %v28 = vld [vmem:[%s0 + $0xa0] sm:$0xff]
  %v29 = vld [vmem:[%s0 + $0xa8] sm:$0xff]
  %v30 = vld [vmem:[%s0 + $0xb0] sm:$0xff]
  %v31 = vld [vmem:[%s0 + $0xb8] sm:$0xff]
  %v32 = vtanh.pop %v8
  %v33 = vtanh.pop %v9
  %v34 = vtanh.pop %v10
  %v35 = vtanh.pop %v11
  %v36 = vtanh.pop %v12
  %v37 = vtanh.pop %v13
  %v38 = vtanh.pop %v14
  %v39 = vtanh.pop %v15
  %v40 = vtanh.pop %v16
  %v41 = vtanh.pop %v17
  %v42 = vtanh.pop %v18
  %v43 = vtanh.pop %v19
  %v44 = vtanh.pop %v20
  %v45 = vtanh.pop %v21
  %v46 = vtanh.pop %v22
  %v47 = vtanh.pop %v23
  %v48 = vtanh.pop %v24
  %v49 = vtanh.pop %v25
  %v50 = vtanh.pop %v26
  %v51 = vtanh.pop %v27
  %v52 = vtanh.pop %v28
  %v53 = vtanh.pop %v29
  %v54 = vtanh.pop %v30
  %v55 = vtanh.pop %v31
  %56 = vst [vmem:[%s1] sm:$0xff] %v32
  %57 = vst [vmem:[%s1 + $0x8] sm:$0xff] %v33
  %58 = vst [vmem:[%s1 + $0x10] sm:$0xff] %v34
  %59 = vst [vmem:[%s1 + $0x18] sm:$0xff] %v35
  %60 = vst [vmem:[%s1 + $0x20] sm:$0xff] %v36
  %61 = vst [vmem:[%s1 + $0x28] sm:$0xff] %v37
  %62 = vst [vmem:[%s1 + $0x30] sm:$0xff] %v38
  %63 = vst [vmem:[%s1 + $0x38] sm:$0xff] %v39
  %64 = vst [vmem:[%s1 + $0x40] sm:$0xff] %v40
  %65 = vst [vmem:[%s1 + $0x48] sm:$0xff] %v41
  %66 = vst [vmem:[%s1 + $0x50] sm:$0xff] %v42
  %67 = vst [vmem:[%s1 + $0x58] sm:$0xff] %v43
  %68 = vst [vmem:[%s1 + $0x60] sm:$0xff] %v44
  %69 = vst [vmem:[%s1 + $0x68] sm:$0xff] %v45
  %70 = vst [vmem:[%s1 + $0x70] sm:$0xff] %v46
  %71 = vst [vmem:[%s1 + $0x78] sm:$0xff] %v47
  %72 = vst [vmem:[%s1 + $0x80] sm:$0xff] %v48
  %73 = vst [vmem:[%s1 + $0x88] sm:$0xff] %v49
  %74 = vst [vmem:[%s1 + $0x90] sm:$0xff] %v50
  %75 = vst [vmem:[%s1 + $0x98] sm:$0xff] %v51
  %76 = vst [vmem:[%s1 + $0xa0] sm:$0xff] %v52
  %77 = vst [vmem:[%s1 + $0xa8] sm:$0xff] %v53
  %78 = vst [vmem:[%s1 + $0xb0] sm:$0xff] %v54
  %79 = vst [vmem:[%s1 + $0xb8] sm:$0xff] %v55
  // Predicated region
  $region6: #{generator_forward.19} parent=0 // pred_check
    _
  $region7: #{generator_forward.19} parent=0 // pred_check_branch
    %81 = sbr.rel (0) target = $region9
  $region8: #{generator_forward.19} parent=0 // pred_region
    _
  $region9: #{generator_forward.19} parent=0 // pred_fallthru
    _
  // Predicated region
  $region10: #{generator_forward.19} parent=0 // pred_check
    _
  $region11: #{generator_forward.19} parent=0 // pred_check_branch
    %83 = sbr.rel (0) target = $region13
  $region12: #{generator_forward.19} parent=0 // pred_region
    _
  $region13: #{generator_forward.19} parent=0 // pred_fallthru
    _

</llo_original>
